<compile_context>
chip_gen: v7x
topology: tpu7x:2x2x1
jax: 0.10.0
libtpu: 0.0.40
codegen_flags: <defaults>
</compile_context>

<pallas_src>
import jax
import jax.numpy as jnp
import numpy as np
from jax.experimental import pallas as pl
from jax.experimental.pallas import tpu as pltpu

EPS = 1e-5                 # nn.BatchNorm2d default eps
N_CHANNEL = 4
SIZE_Y, SIZE_X = 32, 40    # chosen so the flatten size == 4 * 8 * n_channel == 128
BATCH = 2
_KTAP_MAX, _COUT_MAX, _CIN_MAX = 12, 32, 16   # padded per-layer weight slot


# ---------------------------------------------------------------------------
# Static per-layer geometry (all Python ints -> everything in the kernel is
# static slicing / unrolled loops).
# ---------------------------------------------------------------------------
def _layer_geometry(batch, size_y, size_x, n_channel):
    cins = (1, n_channel, 2 * n_channel, 4 * n_channel)
    couts = (n_channel, 2 * n_channel, 4 * n_channel, 8 * n_channel)
    kernels = ((3, 3), (3, 3), (3, 3), (3, 4))
    layers = []
    h, w = size_y, size_x
    for li in range(4):
        kh, kw = kernels[li]
        hp, wp = h + 2, w + 2                       # Conv2d(..., padding=1)
        ho, wo = hp - kh + 1, wp - kw + 1           # stride-1 conv output
        mfull = batch * hp * wp                     # flat padded length
        smax = (kh - 1) * wp + (kw - 1)             # largest tap shift
        hpool, wpool = ho // 2, wo // 2             # MaxPool2d(2, 2)
        layers.append(dict(kh=kh, kw=kw, cin=cins[li], cout=couts[li],
                           hp=hp, wp=wp, ho=ho, wo=wo,
                           mfull=mfull, mv=mfull - smax,
                           hpool=hpool, wpool=wpool,
                           # per-image source span actually read by the pooling
                           lsrc=(ho - 2) * wp + wo - 1))
        h, w = hpool, wpool
    return layers, (h, w)


# ---------------------------------------------------------------------------
# Host-built 0/1 select/scatter matrices (static constants), packed into one
# array with 8-aligned row offsets so the kernel slices them cheaply.
#   layers 1..3: S[f, g] = 1  iff  f = 2*yo*wp + 2*xo  and  g = yo*nwp + xo + 1
#   layer  4   : G[f, n] = 1  at the pooled positions of image n (fc split)
# ---------------------------------------------------------------------------
def _build_static_tables(batch, layers):
    mats = []
    for li in range(3):
        d, nxt = layers[li], layers[li + 1]
        nwp = nxt["wp"]
        s = np.zeros((d["lsrc"], d["hpool"] * nwp), np.float32)
        for yo in range(d["hpool"]):
            for xo in range(d["wpool"]):
                s[2 * yo * d["wp"] + 2 * xo, yo * nwp + xo + 1] = 1.0
        mats.append(s)
    d4 = layers[3]
    hm_len4 = d4["mv"] - d4["wp"] - 1
    g = np.zeros((hm_len4, batch), np.float32)
    for n in range(batch):
        for h in range(d4["hpool"]):
            for w in range(d4["wpool"]):
                g[n * d4["hp"] * d4["wp"] + 2 * h * d4["wp"] + 2 * w, n] = 1.0
    mats.append(g)

    ncols = max(m.shape[1] for m in mats)
    offs, rows = [], 0
    for m in mats:
        offs.append(rows)
        rows += ((m.shape[0] + 7) // 8) * 8         # 8-aligned row offsets
    pack = np.zeros((rows, ncols), np.float32)
    for m, off in zip(mats, offs):
        pack[off:off + m.shape[0], :m.shape[1]] = m
    return pack, tuple(offs)


# ---------------------------------------------------------------------------
# Fully fused Pallas kernel (conv+bn+relu+pool x4 + fc1)
# ---------------------------------------------------------------------------
def _make_fused_kernel(batch, layers, s_offs, ktap_max):
    hm_len4 = layers[3]["mv"] - layers[3]["wp"] - 1

    def kernel(x_ref, w_ref, b_ref, s_ref, wboth_ref, fcb_ref, out_ref,
               a2, a3, a4):
        act_refs = (x_ref, a2, a3, a4)   # layer inputs (flat padded, channel-first)

        # Zero the padded activation buffers once: their untouched border is the
        # conv zero-padding seen by the next layer.
        for a in (a2, a3, a4):
            a[...] = jnp.zeros(a.shape, a.dtype)

        for li, d in enumerate(layers):
            src = act_refs[li]
            cin, cout = d["cin"], d["cout"]
            hp, wp, mv = d["hp"], d["wp"], d["mv"]

            bias = b_ref[li][:cout, :]                           # [cout, 1]

            # ---- conv + folded BN + ReLU: taps accumulated in vregs ----------
            acc = None
            for tap in range(d["kh"] * d["kw"]):
                dy, dx = divmod(tap, d["kw"])
                xs = src[:, pl.ds(dy * wp + dx, mv)]             # [cin, mv]
                wt = w_ref[li * ktap_max + tap][:cout, :cin]     # [cout, cin]
                part = (wt * xs if cin == 1 else                 # VPU bcast / MXU
                        jnp.dot(wt, xs, preferred_element_type=jnp.float32))
                acc = part if acc is None else acc + part
            y = jnp.maximum(acc + bias, 0.0)                     # [cout, mv]

            # ---- 2x2 stride-2 max-pool: two full-buffer pair maxes -----------
            vm = jnp.maximum(y[:, :mv - wp], y[:, wp:])          # vertical pairs
            hm = jnp.maximum(vm[:, :mv - wp - 1], vm[:, 1:])     # horizontal pairs

            if li < 3:
                # One select/scatter matmul per image: picks the even (row, col)
                # pooled positions and places them into the interior rows of the
                # next layer's zero-padded buffer (pad columns written as 0).
                nxt = layers[li + 1]
                nwp = nxt["wp"]
                ncols = d["hpool"] * nwp
                sel = s_ref[s_offs[li]:s_offs[li] + d["lsrc"], :ncols]
                dst = act_refs[li + 1]
                for n in range(batch):
                    blk = hm[:, n * hp * wp:n * hp * wp + d["lsrc"]]
                    rows = jnp.dot(blk, sel,
                                   preferred_element_type=jnp.float32)
                    dst[:, pl.ds(n * nxt["hp"] * nwp + nwp, ncols)] = rows
            else:
                # Fused pool4 + flatten + fc1: fc weights already sit at the
                # pooled positions of wboth; reduce channels, then one tiny
                # [1,L]x[L,batch] dot splits the per-image sums -> single store.
                g = s_ref[s_offs[3]:s_offs[3] + hm_len4, :batch]  # [L4, batch]
                colsum = jnp.sum(hm * wboth_ref[...], axis=0, keepdims=True)
                out_ref[...] = (jnp.dot(colsum, g,
                                        preferred_element_type=jnp.float32)
                                + fcb_ref[...])

    return kernel


# ---------------------------------------------------------------------------
# Wrapper: cheap one-time JAX glue (pad/flatten input, fold BN, pack weights)
# then a single pallas_call.
# ---------------------------------------------------------------------------
@jax.jit
def wakeup_forward(x_nchw, params):
    batch, _, size_y, size_x = x_nchw.shape
    layers, (hf, wf) = _layer_geometry(batch, size_y, size_x, N_CHANNEL)
    s_pack_np, s_offs = _build_static_tables(batch, layers)

    # padded, flattened, channel-first input: flat index = n*Hp*Wp + y*Wp + x
    xpad = jnp.pad(x_nchw[:, 0].astype(jnp.float32), ((0, 0), (1, 1), (1, 1)))
    x_flat = xpad.reshape(1, -1)

    # TODO(synk): BatchNorm implemented in inference mode (running stats folded
    # into conv weights/bias); PyTorch train() mode would use batch statistics.
    w_slots, b_slots = [], []
    for li, d in enumerate(layers):
        conv, bn = params[f"conv{li + 1}"], params[f"bn{li + 1}"]
        w = conv["w"].astype(jnp.float32)                        # (cout, cin, kh, kw)
        scale = bn["gamma"] * jax.lax.rsqrt(bn["var"] + EPS)
        wt = jnp.transpose(w * scale[:, None, None, None], (2, 3, 0, 1))
        wt = wt.reshape(d["kh"] * d["kw"], d["cout"], d["cin"])  # tap-major
        bias = (conv["b"] - bn["mean"]) * scale + bn["beta"]
        w_slot = jnp.zeros((_KTAP_MAX, _COUT_MAX, _CIN_MAX), jnp.float32)
        w_slots.append(w_slot.at[:wt.shape[0], :d["cout"], :d["cin"]].set(wt))
        b_slot = jnp.zeros((_COUT_MAX, 1), jnp.float32)
        b_slots.append(b_slot.at[:d["cout"], 0].set(bias))
    w_all = jnp.stack(w_slots).reshape(4 * _KTAP_MAX, _COUT_MAX, _CIN_MAX)
    b_all = jnp.stack(b_slots)                                   # [4, 32, 1]

    # fc1 weights scattered onto layer-4's pooled flat positions (both images).
    d4 = layers[3]
    hm_len4 = d4["mv"] - d4["wp"] - 1
    fcw = params["fc1"]["w"].reshape(d4["cout"], hf, wf).astype(jnp.float32)
    wboth = jnp.zeros((d4["cout"], hm_len4), jnp.float32)
    for n in range(batch):
        for h in range(hf):
            for w_ in range(wf):
                pos = n * d4["hp"] * d4["wp"] + 2 * h * d4["wp"] + 2 * w_
                wboth = wboth.at[:, pos].set(fcw[:, h, w_])
    fcb = params["fc1"]["b"].reshape(1, 1).astype(jnp.float32)

    inputs = [x_flat, w_all, b_all, jnp.asarray(s_pack_np), wboth, fcb]

    def full_spec(shape):
        nd = len(shape)
        return pl.BlockSpec(shape, lambda i, _nd=nd: (0,) * _nd)

    # next-layer padded activation buffers (interior written by the scatter
    # matmuls, border stays zero = conv padding)
    scratch = [pltpu.VMEM((layers[li]["cin"], layers[li]["mfull"]), jnp.float32)
               for li in range(1, 4)]

    out = pl.pallas_call(
        _make_fused_kernel(batch, layers, s_offs, _KTAP_MAX),
        out_shape=jax.ShapeDtypeStruct((1, batch), jnp.float32),
        grid=(1,),
        in_specs=[full_spec(a.shape) for a in inputs],
        out_specs=full_spec((1, batch)),
        scratch_shapes=scratch,
        compiler_params=pltpu.CompilerParams(dimension_semantics=("arbitrary",)),
    )(*inputs)
    return jnp.transpose(out)        # (batch, 1), matching the PyTorch module


# ---------------------------------------------------------------------------
# Parameters (deterministic synthetic init)
# ---------------------------------------------------------------------------
def init_params(key):
    nc = N_CHANNEL
    conv_shapes = {
        "conv1": (nc, 1, 3, 3),
        "conv2": (2 * nc, nc, 3, 3),
        "conv3": (4 * nc, 2 * nc, 3, 3),
        "conv4": (8 * nc, 4 * nc, 3, 4),
    }
    params = {}
    keys = jax.random.split(key, 16)
    ki = 0
    for name, shp in conv_shapes.items():
        cout = shp[0]
        params[name] = {
            "w": 0.1 * jax.random.normal(keys[ki], shp, jnp.float32),
            "b": 0.1 * jax.random.normal(keys[ki + 1], (cout,), jnp.float32),
        }
        bn_name = "bn" + name[-1]
        params[bn_name] = {
            "gamma": 1.0 + 0.1 * jax.random.normal(keys[ki + 2], (cout,), jnp.float32),
            "beta": 0.1 * jax.random.normal(keys[ki + 3], (cout,), jnp.float32),
            "mean": 0.05 * jax.random.normal(keys[ki + 2], (cout,), jnp.float32),
            "var": 0.5 + jax.random.uniform(keys[ki + 3], (cout,), jnp.float32),
        }
        ki += 4
    kw_, kb_ = jax.random.split(keys[-1])
    params["fc1"] = {
        "w": 0.1 * jax.random.normal(kw_, (1, 4 * 8 * nc), jnp.float32),  # (n_output, 128)
        "b": 0.1 * jax.random.normal(kb_, (1,), jnp.float32),
    }
    return params


if __name__ == "__main__":
    key = jax.random.PRNGKey(0)
    k_param, k_x = jax.random.split(key)
    params = init_params(k_param)
    x = jax.random.normal(k_x, (BATCH, 1, SIZE_Y, SIZE_X), jnp.float32)  # NCHW like PyTorch
    out = wakeup_forward(x, params)
    out = jax.block_until_ready(out)
    assert out.shape == (BATCH, 1), out.shape
    print("KERNEL_OK")
</pallas_src>

<mosaic_0001>
module attributes {stable_mosaic.version = 11 : i64} {
  func.func @kernel(%arg0: i32, %arg1: memref<1x2856xf32, #tpu.memory_space<vmem>>, %arg2: memref<48x32x16xf32, #tpu.memory_space<vmem>>, %arg3: memref<4x32x1xf32, #tpu.memory_space<vmem>>, %arg4: memref<1784x352xf32, #tpu.memory_space<vmem>>, %arg5: memref<32x59xf32, #tpu.memory_space<vmem>>, %arg6: memref<1x1xf32, #tpu.memory_space<vmem>>, %arg7: memref<1x2xf32, #tpu.memory_space<vmem>>, %arg8: memref<4x792xf32, #tpu.memory_space<vmem>>, %arg9: memref<8x240xf32, #tpu.memory_space<vmem>>, %arg10: memref<16x84xf32, #tpu.memory_space<vmem>>) attributes {dimension_semantics = [#tpu.dimension_semantics<arbitrary>], iteration_bounds = array<i64: 1>, scalar_prefetch = 0 : i64, scratch_operands = 3 : i64, tpu.core_type = #tpu.core_type<tc>, window_params = [{pipeline_mode = #tpu.pipeline_mode<synchronous>, transform_indices = @transform_0, window_bounds = array<i64: 1, 2856>}, {pipeline_mode = #tpu.pipeline_mode<synchronous>, transform_indices = @transform_1, window_bounds = array<i64: 48, 32, 16>}, {pipeline_mode = #tpu.pipeline_mode<synchronous>, transform_indices = @transform_2, window_bounds = array<i64: 4, 32, 1>}, {pipeline_mode = #tpu.pipeline_mode<synchronous>, transform_indices = @transform_3, window_bounds = array<i64: 1784, 352>}, {pipeline_mode = #tpu.pipeline_mode<synchronous>, transform_indices = @transform_4, window_bounds = array<i64: 32, 59>}, {pipeline_mode = #tpu.pipeline_mode<synchronous>, transform_indices = @transform_5, window_bounds = array<i64: 1, 1>}, {pipeline_mode = #tpu.pipeline_mode<synchronous>, transform_indices = @transform_6, window_bounds = array<i64: 1, 2>}]} {
    %cst = arith.constant 0.000000e+00 : f32
    %0 = vector.broadcast %cst : f32 to vector<4x792xf32>
    %c0 = arith.constant 0 : index
    %c0_0 = arith.constant 0 : index
    %1 = vector.load %arg8[%c0, %c0_0] : memref<4x792xf32, #tpu.memory_space<vmem>>, vector<4x792xf32>
    tpu.vector_store %arg8[%c0, %c0_0], %0 {strides = array<i32>} : memref<4x792xf32, #tpu.memory_space<vmem>>, vector<4x792xf32>,
    %cst_1 = arith.constant 0.000000e+00 : f32
    %2 = vector.broadcast %cst_1 : f32 to vector<8x240xf32>
    %c0_2 = arith.constant 0 : index
    %c0_3 = arith.constant 0 : index
    %3 = vector.load %arg9[%c0_2, %c0_3] : memref<8x240xf32, #tpu.memory_space<vmem>>, vector<8x240xf32>
    tpu.vector_store %arg9[%c0_2, %c0_3], %2 {strides = array<i32>} : memref<8x240xf32, #tpu.memory_space<vmem>>, vector<8x240xf32>,
    %cst_4 = arith.constant 0.000000e+00 : f32
    %4 = vector.broadcast %cst_4 : f32 to vector<16x84xf32>
    %c0_5 = arith.constant 0 : index
    %c0_6 = arith.constant 0 : index
    %5 = vector.load %arg10[%c0_5, %c0_6] : memref<16x84xf32, #tpu.memory_space<vmem>>, vector<16x84xf32>
    tpu.vector_store %arg10[%c0_5, %c0_6], %4 {strides = array<i32>} : memref<16x84xf32, #tpu.memory_space<vmem>>, vector<16x84xf32>,
    %c0_7 = arith.constant 0 : index
    %c0_8 = arith.constant 0 : index
    %c0_9 = arith.constant 0 : index
    %6 = vector.load %arg3[%c0_7, %c0_8, %c0_9] : memref<4x32x1xf32, #tpu.memory_space<vmem>>, vector<1x32x1xf32>
    %7 = vector.shape_cast %6 : vector<1x32x1xf32> to vector<32x1xf32>
    %8 = vector.extract_strided_slice %7 {offsets = [0, 0], sizes = [4, 1], strides = [1, 1]} : vector<32x1xf32> to vector<4x1xf32>
    %c0_10 = arith.constant 0 : index
    %c0_11 = arith.constant 0 : index
    %9 = vector.load %arg1[%c0_10, %c0_11] : memref<1x2856xf32, #tpu.memory_space<vmem>>, vector<1x2770xf32>
    %c0_12 = arith.constant 0 : index
    %c0_13 = arith.constant 0 : index
    %c0_14 = arith.constant 0 : index
    %10 = vector.load %arg2[%c0_12, %c0_13, %c0_14] : memref<48x32x16xf32, #tpu.memory_space<vmem>>, vector<1x32x16xf32>
    %11 = vector.shape_cast %10 : vector<1x32x16xf32> to vector<32x16xf32>
    %12 = vector.extract_strided_slice %11 {offsets = [0, 0], sizes = [4, 1], strides = [1, 1]} : vector<32x16xf32> to vector<4x1xf32>
    %13 = vector.broadcast %12 : vector<4x1xf32> to vector<4x2770xf32>
    %14 = vector.broadcast %9 : vector<1x2770xf32> to vector<4x2770xf32>
    %15 = arith.mulf %13, %14 : vector<4x2770xf32>
    %c0_15 = arith.constant 0 : index
    %c1 = arith.constant 1 : index
    %16 = vector.load %arg1[%c0_15, %c1] : memref<1x2856xf32, #tpu.memory_space<vmem>>, vector<1x2770xf32>
    %c1_16 = arith.constant 1 : index
    %c0_17 = arith.constant 0 : index
    %c0_18 = arith.constant 0 : index
    %17 = vector.load %arg2[%c1_16, %c0_17, %c0_18] : memref<48x32x16xf32, #tpu.memory_space<vmem>>, vector<1x32x16xf32>
    %18 = vector.shape_cast %17 : vector<1x32x16xf32> to vector<32x16xf32>
    %19 = vector.extract_strided_slice %18 {offsets = [0, 0], sizes = [4, 1], strides = [1, 1]} : vector<32x16xf32> to vector<4x1xf32>
    %20 = vector.broadcast %19 : vector<4x1xf32> to vector<4x2770xf32>
    %21 = vector.broadcast %16 : vector<1x2770xf32> to vector<4x2770xf32>
    %22 = arith.mulf %20, %21 : vector<4x2770xf32>
    %23 = arith.addf %15, %22 : vector<4x2770xf32>
    %c0_19 = arith.constant 0 : index
    %c2 = arith.constant 2 : index
    %24 = vector.load %arg1[%c0_19, %c2] : memref<1x2856xf32, #tpu.memory_space<vmem>>, vector<1x2770xf32>
    %c2_20 = arith.constant 2 : index
    %c0_21 = arith.constant 0 : index
    %c0_22 = arith.constant 0 : index
    %25 = vector.load %arg2[%c2_20, %c0_21, %c0_22] : memref<48x32x16xf32, #tpu.memory_space<vmem>>, vector<1x32x16xf32>
    %26 = vector.shape_cast %25 : vector<1x32x16xf32> to vector<32x16xf32>
    %27 = vector.extract_strided_slice %26 {offsets = [0, 0], sizes = [4, 1], strides = [1, 1]} : vector<32x16xf32> to vector<4x1xf32>
    %28 = vector.broadcast %27 : vector<4x1xf32> to vector<4x2770xf32>
    %29 = vector.broadcast %24 : vector<1x2770xf32> to vector<4x2770xf32>
    %30 = arith.mulf %28, %29 : vector<4x2770xf32>
    %31 = arith.addf %23, %30 : vector<4x2770xf32>
    %c0_23 = arith.constant 0 : index
    %c42 = arith.constant 42 : index
    %32 = vector.load %arg1[%c0_23, %c42] : memref<1x2856xf32, #tpu.memory_space<vmem>>, vector<1x2770xf32>
    %c3 = arith.constant 3 : index
    %c0_24 = arith.constant 0 : index
    %c0_25 = arith.constant 0 : index
    %33 = vector.load %arg2[%c3, %c0_24, %c0_25] : memref<48x32x16xf32, #tpu.memory_space<vmem>>, vector<1x32x16xf32>
    %34 = vector.shape_cast %33 : vector<1x32x16xf32> to vector<32x16xf32>
    %35 = vector.extract_strided_slice %34 {offsets = [0, 0], sizes = [4, 1], strides = [1, 1]} : vector<32x16xf32> to vector<4x1xf32>
    %36 = vector.broadcast %35 : vector<4x1xf32> to vector<4x2770xf32>
    %37 = vector.broadcast %32 : vector<1x2770xf32> to vector<4x2770xf32>
    %38 = arith.mulf %36, %37 : vector<4x2770xf32>
    %39 = arith.addf %31, %38 : vector<4x2770xf32>
    %c0_26 = arith.constant 0 : index
    %c43 = arith.constant 43 : index
    %40 = vector.load %arg1[%c0_26, %c43] : memref<1x2856xf32, #tpu.memory_space<vmem>>, vector<1x2770xf32>
    %c4 = arith.constant 4 : index
    %c0_27 = arith.constant 0 : index
    %c0_28 = arith.constant 0 : index
    %41 = vector.load %arg2[%c4, %c0_27, %c0_28] : memref<48x32x16xf32, #tpu.memory_space<vmem>>, vector<1x32x16xf32>
    %42 = vector.shape_cast %41 : vector<1x32x16xf32> to vector<32x16xf32>
    %43 = vector.extract_strided_slice %42 {offsets = [0, 0], sizes = [4, 1], strides = [1, 1]} : vector<32x16xf32> to vector<4x1xf32>
    %44 = vector.broadcast %43 : vector<4x1xf32> to vector<4x2770xf32>
    %45 = vector.broadcast %40 : vector<1x2770xf32> to vector<4x2770xf32>
    %46 = arith.mulf %44, %45 : vector<4x2770xf32>
    %47 = arith.addf %39, %46 : vector<4x2770xf32>
    %c0_29 = arith.constant 0 : index
    %c44 = arith.constant 44 : index
    %48 = vector.load %arg1[%c0_29, %c44] : memref<1x2856xf32, #tpu.memory_space<vmem>>, vector<1x2770xf32>
    %c5 = arith.constant 5 : index
    %c0_30 = arith.constant 0 : index
    %c0_31 = arith.constant 0 : index
    %49 = vector.load %arg2[%c5, %c0_30, %c0_31] : memref<48x32x16xf32, #tpu.memory_space<vmem>>, vector<1x32x16xf32>
    %50 = vector.shape_cast %49 : vector<1x32x16xf32> to vector<32x16xf32>
    %51 = vector.extract_strided_slice %50 {offsets = [0, 0], sizes = [4, 1], strides = [1, 1]} : vector<32x16xf32> to vector<4x1xf32>
    %52 = vector.broadcast %51 : vector<4x1xf32> to vector<4x2770xf32>
    %53 = vector.broadcast %48 : vector<1x2770xf32> to vector<4x2770xf32>
    %54 = arith.mulf %52, %53 : vector<4x2770xf32>
    %55 = arith.addf %47, %54 : vector<4x2770xf32>
    %c0_32 = arith.constant 0 : index
    %c84 = arith.constant 84 : index
    %56 = vector.load %arg1[%c0_32, %c84] : memref<1x2856xf32, #tpu.memory_space<vmem>>, vector<1x2770xf32>
    %c6 = arith.constant 6 : index
    %c0_33 = arith.constant 0 : index
    %c0_34 = arith.constant 0 : index
    %57 = vector.load %arg2[%c6, %c0_33, %c0_34] : memref<48x32x16xf32, #tpu.memory_space<vmem>>, vector<1x32x16xf32>
    %58 = vector.shape_cast %57 : vector<1x32x16xf32> to vector<32x16xf32>
    %59 = vector.extract_strided_slice %58 {offsets = [0, 0], sizes = [4, 1], strides = [1, 1]} : vector<32x16xf32> to vector<4x1xf32>
    %60 = vector.broadcast %59 : vector<4x1xf32> to vector<4x2770xf32>
    %61 = vector.broadcast %56 : vector<1x2770xf32> to vector<4x2770xf32>
    %62 = arith.mulf %60, %61 : vector<4x2770xf32>
    %63 = arith.addf %55, %62 : vector<4x2770xf32>
    %c0_35 = arith.constant 0 : index
    %c85 = arith.constant 85 : index
    %64 = vector.load %arg1[%c0_35, %c85] : memref<1x2856xf32, #tpu.memory_space<vmem>>, vector<1x2770xf32>
    %c7 = arith.constant 7 : index
    %c0_36 = arith.constant 0 : index
    %c0_37 = arith.constant 0 : index
    %65 = vector.load %arg2[%c7, %c0_36, %c0_37] : memref<48x32x16xf32, #tpu.memory_space<vmem>>, vector<1x32x16xf32>
    %66 = vector.shape_cast %65 : vector<1x32x16xf32> to vector<32x16xf32>
    %67 = vector.extract_strided_slice %66 {offsets = [0, 0], sizes = [4, 1], strides = [1, 1]} : vector<32x16xf32> to vector<4x1xf32>
    %68 = vector.broadcast %67 : vector<4x1xf32> to vector<4x2770xf32>
    %69 = vector.broadcast %64 : vector<1x2770xf32> to vector<4x2770xf32>
    %70 = arith.mulf %68, %69 : vector<4x2770xf32>
    %71 = arith.addf %63, %70 : vector<4x2770xf32>
    %c0_38 = arith.constant 0 : index
    %c86 = arith.constant 86 : index
    %72 = vector.load %arg1[%c0_38, %c86] : memref<1x2856xf32, #tpu.memory_space<vmem>>, vector<1x2770xf32>
    %c8 = arith.constant 8 : index
    %c0_39 = arith.constant 0 : index
    %c0_40 = arith.constant 0 : index
    %73 = vector.load %arg2[%c8, %c0_39, %c0_40] : memref<48x32x16xf32, #tpu.memory_space<vmem>>, vector<1x32x16xf32>
    %74 = vector.shape_cast %73 : vector<1x32x16xf32> to vector<32x16xf32>
    %75 = vector.extract_strided_slice %74 {offsets = [0, 0], sizes = [4, 1], strides = [1, 1]} : vector<32x16xf32> to vector<4x1xf32>
    %76 = vector.broadcast %75 : vector<4x1xf32> to vector<4x2770xf32>
    %77 = vector.broadcast %72 : vector<1x2770xf32> to vector<4x2770xf32>
    %78 = arith.mulf %76, %77 : vector<4x2770xf32>
    %79 = arith.addf %71, %78 : vector<4x2770xf32>
    %80 = vector.broadcast %8 : vector<4x1xf32> to vector<4x2770xf32>
    %81 = arith.addf %79, %80 : vector<4x2770xf32>
    %cst_41 = arith.constant 0.000000e+00 : f32
    %82 = vector.broadcast %cst_41 : f32 to vector<4x2770xf32>
    %83 = arith.maximumf %81, %82 : vector<4x2770xf32>
    %84 = vector.extract_strided_slice %83 {offsets = [0, 0], sizes = [4, 2728], strides = [1, 1]} : vector<4x2770xf32> to vector<4x2728xf32>
    %85 = vector.extract_strided_slice %83 {offsets = [0, 42], sizes = [4, 2728], strides = [1, 1]} : vector<4x2770xf32> to vector<4x2728xf32>
    %86 = arith.maximumf %84, %85 : vector<4x2728xf32>
    %87 = vector.extract_strided_slice %86 {offsets = [0, 0], sizes = [4, 2727], strides = [1, 1]} : vector<4x2728xf32> to vector<4x2727xf32>
    %88 = vector.extract_strided_slice %86 {offsets = [0, 1], sizes = [4, 2727], strides = [1, 1]} : vector<4x2728xf32> to vector<4x2727xf32>
    %89 = arith.maximumf %87, %88 : vector<4x2727xf32>
    %c0_42 = arith.constant 0 : index
    %c0_43 = arith.constant 0 : index
    %90 = vector.load %arg4[%c0_42, %c0_43] : memref<1784x352xf32, #tpu.memory_space<vmem>>, vector<1299x352xf32>
    %91 = vector.extract_strided_slice %89 {offsets = [0, 0], sizes = [4, 1299], strides = [1, 1]} : vector<4x2727xf32> to vector<4x1299xf32>
    %cst_44 = arith.constant dense<0.000000e+00> : vector<4x352xf32>
    %92 = tpu.matmul %91, %90, %cst_44 {dimension_numbers = #tpu.dot_dimension_numbers<[1], [0], [0], [1], [0, 0, 1, 1], [], []>} : vector<4x1299xf32>, vector<1299x352xf32>, vector<4x352xf32> -> vector<4x352xf32>
    %c0_45 = arith.constant 0 : index
    %c22 = arith.constant 22 : index
    %93 = vector.load %arg8[%c0_45, %c22] : memref<4x792xf32, #tpu.memory_space<vmem>>, vector<4x352xf32>
    tpu.vector_store %arg8[%c0_45, %c22], %92 {strides = array<i32>} : memref<4x792xf32, #tpu.memory_space<vmem>>, vector<4x352xf32>,
    %94 = vector.extract_strided_slice %89 {offsets = [0, 1428], sizes = [4, 1299], strides = [1, 1]} : vector<4x2727xf32> to vector<4x1299xf32>
    %cst_46 = arith.constant dense<0.000000e+00> : vector<4x352xf32>
    %95 = tpu.matmul %94, %90, %cst_46 {dimension_numbers = #tpu.dot_dimension_numbers<[1], [0], [0], [1], [0, 0, 1, 1], [], []>} : vector<4x1299xf32>, vector<1299x352xf32>, vector<4x352xf32> -> vector<4x352xf32>
    %c0_47 = arith.constant 0 : index
    %c418 = arith.constant 418 : index
    %96 = vector.load %arg8[%c0_47, %c418] : memref<4x792xf32, #tpu.memory_space<vmem>>, vector<4x352xf32>
    tpu.vector_store %arg8[%c0_47, %c418], %95 {strides = array<i32>} : memref<4x792xf32, #tpu.memory_space<vmem>>, vector<4x352xf32>,
    %c1_48 = arith.constant 1 : index
    %c0_49 = arith.constant 0 : index
    %c0_50 = arith.constant 0 : index
    %97 = vector.load %arg3[%c1_48, %c0_49, %c0_50] : memref<4x32x1xf32, #tpu.memory_space<vmem>>, vector<1x32x1xf32>
    %98 = vector.shape_cast %97 : vector<1x32x1xf32> to vector<32x1xf32>
    %99 = vector.extract_strided_slice %98 {offsets = [0, 0], sizes = [8, 1], strides = [1, 1]} : vector<32x1xf32> to vector<8x1xf32>
    %c0_51 = arith.constant 0 : index
    %c0_52 = arith.constant 0 : index
    %100 = vector.load %arg8[%c0_51, %c0_52] : memref<4x792xf32, #tpu.memory_space<vmem>>, vector<4x746xf32>
    %c12 = arith.constant 12 : index
    %c0_53 = arith.constant 0 : index
    %c0_54 = arith.constant 0 : index
    %101 = vector.load %arg2[%c12, %c0_53, %c0_54] : memref<48x32x16xf32, #tpu.memory_space<vmem>>, vector<1x32x16xf32>
    %102 = vector.shape_cast %101 : vector<1x32x16xf32> to vector<32x16xf32>
    %103 = vector.extract_strided_slice %102 {offsets = [0, 0], sizes = [8, 4], strides = [1, 1]} : vector<32x16xf32> to vector<8x4xf32>
    %cst_55 = arith.constant dense<0.000000e+00> : vector<8x746xf32>
    %104 = tpu.matmul %103, %100, %cst_55 {dimension_numbers = #tpu.dot_dimension_numbers<[1], [0], [0], [1], [0, 0, 1, 1], [], []>} : vector<8x4xf32>, vector<4x746xf32>, vector<8x746xf32> -> vector<8x746xf32>
    %c0_56 = arith.constant 0 : index
    %c1_57 = arith.constant 1 : index
    %105 = vector.load %arg8[%c0_56, %c1_57] : memref<4x792xf32, #tpu.memory_space<vmem>>, vector<4x746xf32>
    %c13 = arith.constant 13 : index
    %c0_58 = arith.constant 0 : index
    %c0_59 = arith.constant 0 : index
    %106 = vector.load %arg2[%c13, %c0_58, %c0_59] : memref<48x32x16xf32, #tpu.memory_space<vmem>>, vector<1x32x16xf32>
    %107 = vector.shape_cast %106 : vector<1x32x16xf32> to vector<32x16xf32>
    %108 = vector.extract_strided_slice %107 {offsets = [0, 0], sizes = [8, 4], strides = [1, 1]} : vector<32x16xf32> to vector<8x4xf32>
    %cst_60 = arith.constant dense<0.000000e+00> : vector<8x746xf32>
    %109 = tpu.matmul %108, %105, %cst_60 {dimension_numbers = #tpu.dot_dimension_numbers<[1], [0], [0], [1], [0, 0, 1, 1], [], []>} : vector<8x4xf32>, vector<4x746xf32>, vector<8x746xf32> -> vector<8x746xf32>
    %110 = arith.addf %104, %109 : vector<8x746xf32>
    %c0_61 = arith.constant 0 : index
    %c2_62 = arith.constant 2 : index
    %111 = vector.load %arg8[%c0_61, %c2_62] : memref<4x792xf32, #tpu.memory_space<vmem>>, vector<4x746xf32>
    %c14 = arith.constant 14 : index
    %c0_63 = arith.constant 0 : index
    %c0_64 = arith.constant 0 : index
    %112 = vector.load %arg2[%c14, %c0_63, %c0_64] : memref<48x32x16xf32, #tpu.memory_space<vmem>>, vector<1x32x16xf32>
    %113 = vector.shape_cast %112 : vector<1x32x16xf32> to vector<32x16xf32>
    %114 = vector.extract_strided_slice %113 {offsets = [0, 0], sizes = [8, 4], strides = [1, 1]} : vector<32x16xf32> to vector<8x4xf32>
    %cst_65 = arith.constant dense<0.000000e+00> : vector<8x746xf32>
    %115 = tpu.matmul %114, %111, %cst_65 {dimension_numbers = #tpu.dot_dimension_numbers<[1], [0], [0], [1], [0, 0, 1, 1], [], []>} : vector<8x4xf32>, vector<4x746xf32>, vector<8x746xf32> -> vector<8x746xf32>
    %116 = arith.addf %110, %115 : vector<8x746xf32>
    %c0_66 = arith.constant 0 : index
    %c22_67 = arith.constant 22 : index
    %117 = vector.load %arg8[%c0_66, %c22_67] : memref<4x792xf32, #tpu.memory_space<vmem>>, vector<4x746xf32>
    %c15 = arith.constant 15 : index
    %c0_68 = arith.constant 0 : index
    %c0_69 = arith.constant 0 : index
    %118 = vector.load %arg2[%c15, %c0_68, %c0_69] : memref<48x32x16xf32, #tpu.memory_space<vmem>>, vector<1x32x16xf32>
    %119 = vector.shape_cast %118 : vector<1x32x16xf32> to vector<32x16xf32>
    %120 = vector.extract_strided_slice %119 {offsets = [0, 0], sizes = [8, 4], strides = [1, 1]} : vector<32x16xf32> to vector<8x4xf32>
    %cst_70 = arith.constant dense<0.000000e+00> : vector<8x746xf32>
    %121 = tpu.matmul %120, %117, %cst_70 {dimension_numbers = #tpu.dot_dimension_numbers<[1], [0], [0], [1], [0, 0, 1, 1], [], []>} : vector<8x4xf32>, vector<4x746xf32>, vector<8x746xf32> -> vector<8x746xf32>
    %122 = arith.addf %116, %121 : vector<8x746xf32>
    %c0_71 = arith.constant 0 : index
    %c23 = arith.constant 23 : index
    %123 = vector.load %arg8[%c0_71, %c23] : memref<4x792xf32, #tpu.memory_space<vmem>>, vector<4x746xf32>
    %c16 = arith.constant 16 : index
    %c0_72 = arith.constant 0 : index
    %c0_73 = arith.constant 0 : index
    %124 = vector.load %arg2[%c16, %c0_72, %c0_73] : memref<48x32x16xf32, #tpu.memory_space<vmem>>, vector<1x32x16xf32>
    %125 = vector.shape_cast %124 : vector<1x32x16xf32> to vector<32x16xf32>
    %126 = vector.extract_strided_slice %125 {offsets = [0, 0], sizes = [8, 4], strides = [1, 1]} : vector<32x16xf32> to vector<8x4xf32>
    %cst_74 = arith.constant dense<0.000000e+00> : vector<8x746xf32>
    %127 = tpu.matmul %126, %123, %cst_74 {dimension_numbers = #tpu.dot_dimension_numbers<[1], [0], [0], [1], [0, 0, 1, 1], [], []>} : vector<8x4xf32>, vector<4x746xf32>, vector<8x746xf32> -> vector<8x746xf32>
    %128 = arith.addf %122, %127 : vector<8x746xf32>
    %c0_75 = arith.constant 0 : index
    %c24 = arith.constant 24 : index
    %129 = vector.load %arg8[%c0_75, %c24] : memref<4x792xf32, #tpu.memory_space<vmem>>, vector<4x746xf32>
    %c17 = arith.constant 17 : index
    %c0_76 = arith.constant 0 : index
    %c0_77 = arith.constant 0 : index
    %130 = vector.load %arg2[%c17, %c0_76, %c0_77] : memref<48x32x16xf32, #tpu.memory_space<vmem>>, vector<1x32x16xf32>
    %131 = vector.shape_cast %130 : vector<1x32x16xf32> to vector<32x16xf32>
    %132 = vector.extract_strided_slice %131 {offsets = [0, 0], sizes = [8, 4], strides = [1, 1]} : vector<32x16xf32> to vector<8x4xf32>
    %cst_78 = arith.constant dense<0.000000e+00> : vector<8x746xf32>
    %133 = tpu.matmul %132, %129, %cst_78 {dimension_numbers = #tpu.dot_dimension_numbers<[1], [0], [0], [1], [0, 0, 1, 1], [], []>} : vector<8x4xf32>, vector<4x746xf32>, vector<8x746xf32> -> vector<8x746xf32>
    %134 = arith.addf %128, %133 : vector<8x746xf32>
    %c0_79 = arith.constant 0 : index
    %c44_80 = arith.constant 44 : index
    %135 = vector.load %arg8[%c0_79, %c44_80] : memref<4x792xf32, #tpu.memory_space<vmem>>, vector<4x746xf32>
    %c18 = arith.constant 18 : index
    %c0_81 = arith.constant 0 : index
    %c0_82 = arith.constant 0 : index
    %136 = vector.load %arg2[%c18, %c0_81, %c0_82] : memref<48x32x16xf32, #tpu.memory_space<vmem>>, vector<1x32x16xf32>
    %137 = vector.shape_cast %136 : vector<1x32x16xf32> to vector<32x16xf32>
    %138 = vector.extract_strided_slice %137 {offsets = [0, 0], sizes = [8, 4], strides = [1, 1]} : vector<32x16xf32> to vector<8x4xf32>
    %cst_83 = arith.constant dense<0.000000e+00> : vector<8x746xf32>
    %139 = tpu.matmul %138, %135, %cst_83 {dimension_numbers = #tpu.dot_dimension_numbers<[1], [0], [0], [1], [0, 0, 1, 1], [], []>} : vector<8x4xf32>, vector<4x746xf32>, vector<8x746xf32> -> vector<8x746xf32>
    %140 = arith.addf %134, %139 : vector<8x746xf32>
    %c0_84 = arith.constant 0 : index
    %c45 = arith.constant 45 : index
    %141 = vector.load %arg8[%c0_84, %c45] : memref<4x792xf32, #tpu.memory_space<vmem>>, vector<4x746xf32>
    %c19 = arith.constant 19 : index
    %c0_85 = arith.constant 0 : index
    %c0_86 = arith.constant 0 : index
    %142 = vector.load %arg2[%c19, %c0_85, %c0_86] : memref<48x32x16xf32, #tpu.memory_space<vmem>>, vector<1x32x16xf32>
    %143 = vector.shape_cast %142 : vector<1x32x16xf32> to vector<32x16xf32>
    %144 = vector.extract_strided_slice %143 {offsets = [0, 0], sizes = [8, 4], strides = [1, 1]} : vector<32x16xf32> to vector<8x4xf32>
    %cst_87 = arith.constant dense<0.000000e+00> : vector<8x746xf32>
    %145 = tpu.matmul %144, %141, %cst_87 {dimension_numbers = #tpu.dot_dimension_numbers<[1], [0], [0], [1], [0, 0, 1, 1], [], []>} : vector<8x4xf32>, vector<4x746xf32>, vector<8x746xf32> -> vector<8x746xf32>
    %146 = arith.addf %140, %145 : vector<8x746xf32>
    %c0_88 = arith.constant 0 : index
    %c46 = arith.constant 46 : index
    %147 = vector.load %arg8[%c0_88, %c46] : memref<4x792xf32, #tpu.memory_space<vmem>>, vector<4x746xf32>
    %c20 = arith.constant 20 : index
    %c0_89 = arith.constant 0 : index
    %c0_90 = arith.constant 0 : index
    %148 = vector.load %arg2[%c20, %c0_89, %c0_90] : memref<48x32x16xf32, #tpu.memory_space<vmem>>, vector<1x32x16xf32>
    %149 = vector.shape_cast %148 : vector<1x32x16xf32> to vector<32x16xf32>
    %150 = vector.extract_strided_slice %149 {offsets = [0, 0], sizes = [8, 4], strides = [1, 1]} : vector<32x16xf32> to vector<8x4xf32>
    %cst_91 = arith.constant dense<0.000000e+00> : vector<8x746xf32>
    %151 = tpu.matmul %150, %147, %cst_91 {dimension_numbers = #tpu.dot_dimension_numbers<[1], [0], [0], [1], [0, 0, 1, 1], [], []>} : vector<8x4xf32>, vector<4x746xf32>, vector<8x746xf32> -> vector<8x746xf32>
    %152 = arith.addf %146, %151 : vector<8x746xf32>
    %153 = vector.broadcast %99 : vector<8x1xf32> to vector<8x746xf32>
    %154 = arith.addf %152, %153 : vector<8x746xf32>
    %cst_92 = arith.constant 0.000000e+00 : f32
    %155 = vector.broadcast %cst_92 : f32 to vector<8x746xf32>
    %156 = arith.maximumf %154, %155 : vector<8x746xf32>
    %157 = vector.extract_strided_slice %156 {offsets = [0, 0], sizes = [8, 724], strides = [1, 1]} : vector<8x746xf32> to vector<8x724xf32>
    %158 = vector.extract_strided_slice %156 {offsets = [0, 22], sizes = [8, 724], strides = [1, 1]} : vector<8x746xf32> to vector<8x724xf32>
    %159 = arith.maximumf %157, %158 : vector<8x724xf32>
    %160 = vector.extract_strided_slice %159 {offsets = [0, 0], sizes = [8, 723], strides = [1, 1]} : vector<8x724xf32> to vector<8x723xf32>
    %161 = vector.extract_strided_slice %159 {offsets = [0, 1], sizes = [8, 723], strides = [1, 1]} : vector<8x724xf32> to vector<8x723xf32>
    %162 = arith.maximumf %160, %161 : vector<8x723xf32>
    %c1304 = arith.constant 1304 : index
    %c0_93 = arith.constant 0 : index
    %163 = vector.load %arg4[%c1304, %c0_93] : memref<1784x352xf32, #tpu.memory_space<vmem>>, vector<327x96xf32>
    %164 = vector.extract_strided_slice %162 {offsets = [0, 0], sizes = [8, 327], strides = [1, 1]} : vector<8x723xf32> to vector<8x327xf32>
    %cst_94 = arith.constant dense<0.000000e+00> : vector<8x96xf32>
    %165 = tpu.matmul %164, %163, %cst_94 {dimension_numbers = #tpu.dot_dimension_numbers<[1], [0], [0], [1], [0, 0, 1, 1], [], []>} : vector<8x327xf32>, vector<327x96xf32>, vector<8x96xf32> -> vector<8x96xf32>
    %c0_95 = arith.constant 0 : index
    %c12_96 = arith.constant 12 : index
    %166 = vector.load %arg9[%c0_95, %c12_96] : memref<8x240xf32, #tpu.memory_space<vmem>>, vector<8x96xf32>
    tpu.vector_store %arg9[%c0_95, %c12_96], %165 {strides = array<i32>} : memref<8x240xf32, #tpu.memory_space<vmem>>, vector<8x96xf32>,
    %167 = vector.extract_strided_slice %162 {offsets = [0, 396], sizes = [8, 327], strides = [1, 1]} : vector<8x723xf32> to vector<8x327xf32>
    %cst_97 = arith.constant dense<0.000000e+00> : vector<8x96xf32>
    %168 = tpu.matmul %167, %163, %cst_97 {dimension_numbers = #tpu.dot_dimension_numbers<[1], [0], [0], [1], [0, 0, 1, 1], [], []>} : vector<8x327xf32>, vector<327x96xf32>, vector<8x96xf32> -> vector<8x96xf32>
    %c0_98 = arith.constant 0 : index
    %c132 = arith.constant 132 : index
    %169 = vector.load %arg9[%c0_98, %c132] : memref<8x240xf32, #tpu.memory_space<vmem>>, vector<8x96xf32>
    tpu.vector_store %arg9[%c0_98, %c132], %168 {strides = array<i32>} : memref<8x240xf32, #tpu.memory_space<vmem>>, vector<8x96xf32>,
    %c2_99 = arith.constant 2 : index
    %c0_100 = arith.constant 0 : index
    %c0_101 = arith.constant 0 : index
    %170 = vector.load %arg3[%c2_99, %c0_100, %c0_101] : memref<4x32x1xf32, #tpu.memory_space<vmem>>, vector<1x32x1xf32>
    %171 = vector.shape_cast %170 : vector<1x32x1xf32> to vector<32x1xf32>
    %172 = vector.extract_strided_slice %171 {offsets = [0, 0], sizes = [16, 1], strides = [1, 1]} : vector<32x1xf32> to vector<16x1xf32>
    %c0_102 = arith.constant 0 : index
    %c0_103 = arith.constant 0 : index
    %173 = vector.load %arg9[%c0_102, %c0_103] : memref<8x240xf32, #tpu.memory_space<vmem>>, vector<8x214xf32>
    %c24_104 = arith.constant 24 : index
    %c0_105 = arith.constant 0 : index
    %c0_106 = arith.constant 0 : index
    %174 = vector.load %arg2[%c24_104, %c0_105, %c0_106] : memref<48x32x16xf32, #tpu.memory_space<vmem>>, vector<1x32x16xf32>
    %175 = vector.shape_cast %174 : vector<1x32x16xf32> to vector<32x16xf32>
    %176 = vector.extract_strided_slice %175 {offsets = [0, 0], sizes = [16, 8], strides = [1, 1]} : vector<32x16xf32> to vector<16x8xf32>
    %cst_107 = arith.constant dense<0.000000e+00> : vector<16x214xf32>
    %177 = tpu.matmul %176, %173, %cst_107 {dimension_numbers = #tpu.dot_dimension_numbers<[1], [0], [0], [1], [0, 0, 1, 1], [], []>} : vector<16x8xf32>, vector<8x214xf32>, vector<16x214xf32> -> vector<16x214xf32>
    %c0_108 = arith.constant 0 : index
    %c1_109 = arith.constant 1 : index
    %178 = vector.load %arg9[%c0_108, %c1_109] : memref<8x240xf32, #tpu.memory_space<vmem>>, vector<8x214xf32>
    %c25 = arith.constant 25 : index
    %c0_110 = arith.constant 0 : index
    %c0_111 = arith.constant 0 : index
    %179 = vector.load %arg2[%c25, %c0_110, %c0_111] : memref<48x32x16xf32, #tpu.memory_space<vmem>>, vector<1x32x16xf32>
    %180 = vector.shape_cast %179 : vector<1x32x16xf32> to vector<32x16xf32>
    %181 = vector.extract_strided_slice %180 {offsets = [0, 0], sizes = [16, 8], strides = [1, 1]} : vector<32x16xf32> to vector<16x8xf32>
    %cst_112 = arith.constant dense<0.000000e+00> : vector<16x214xf32>
    %182 = tpu.matmul %181, %178, %cst_112 {dimension_numbers = #tpu.dot_dimension_numbers<[1], [0], [0], [1], [0, 0, 1, 1], [], []>} : vector<16x8xf32>, vector<8x214xf32>, vector<16x214xf32> -> vector<16x214xf32>
    %183 = arith.addf %177, %182 : vector<16x214xf32>
    %c0_113 = arith.constant 0 : index
    %c2_114 = arith.constant 2 : index
    %184 = vector.load %arg9[%c0_113, %c2_114] : memref<8x240xf32, #tpu.memory_space<vmem>>, vector<8x214xf32>
    %c26 = arith.constant 26 : index
    %c0_115 = arith.constant 0 : index
    %c0_116 = arith.constant 0 : index
    %185 = vector.load %arg2[%c26, %c0_115, %c0_116] : memref<48x32x16xf32, #tpu.memory_space<vmem>>, vector<1x32x16xf32>
    %186 = vector.shape_cast %185 : vector<1x32x16xf32> to vector<32x16xf32>
    %187 = vector.extract_strided_slice %186 {offsets = [0, 0], sizes = [16, 8], strides = [1, 1]} : vector<32x16xf32> to vector<16x8xf32>
    %cst_117 = arith.constant dense<0.000000e+00> : vector<16x214xf32>
    %188 = tpu.matmul %187, %184, %cst_117 {dimension_numbers = #tpu.dot_dimension_numbers<[1], [0], [0], [1], [0, 0, 1, 1], [], []>} : vector<16x8xf32>, vector<8x214xf32>, vector<16x214xf32> -> vector<16x214xf32>
    %189 = arith.addf %183, %188 : vector<16x214xf32>
    %c0_118 = arith.constant 0 : index
    %c12_119 = arith.constant 12 : index
    %190 = vector.load %arg9[%c0_118, %c12_119] : memref<8x240xf32, #tpu.memory_space<vmem>>, vector<8x214xf32>
    %c27 = arith.constant 27 : index
    %c0_120 = arith.constant 0 : index
    %c0_121 = arith.constant 0 : index
    %191 = vector.load %arg2[%c27, %c0_120, %c0_121] : memref<48x32x16xf32, #tpu.memory_space<vmem>>, vector<1x32x16xf32>
    %192 = vector.shape_cast %191 : vector<1x32x16xf32> to vector<32x16xf32>
    %193 = vector.extract_strided_slice %192 {offsets = [0, 0], sizes = [16, 8], strides = [1, 1]} : vector<32x16xf32> to vector<16x8xf32>
    %cst_122 = arith.constant dense<0.000000e+00> : vector<16x214xf32>
    %194 = tpu.matmul %193, %190, %cst_122 {dimension_numbers = #tpu.dot_dimension_numbers<[1], [0], [0], [1], [0, 0, 1, 1], [], []>} : vector<16x8xf32>, vector<8x214xf32>, vector<16x214xf32> -> vector<16x214xf32>
    %195 = arith.addf %189, %194 : vector<16x214xf32>
    %c0_123 = arith.constant 0 : index
    %c13_124 = arith.constant 13 : index
    %196 = vector.load %arg9[%c0_123, %c13_124] : memref<8x240xf32, #tpu.memory_space<vmem>>, vector<8x214xf32>
    %c28 = arith.constant 28 : index
    %c0_125 = arith.constant 0 : index
    %c0_126 = arith.constant 0 : index
    %197 = vector.load %arg2[%c28, %c0_125, %c0_126] : memref<48x32x16xf32, #tpu.memory_space<vmem>>, vector<1x32x16xf32>
    %198 = vector.shape_cast %197 : vector<1x32x16xf32> to vector<32x16xf32>
    %199 = vector.extract_strided_slice %198 {offsets = [0, 0], sizes = [16, 8], strides = [1, 1]} : vector<32x16xf32> to vector<16x8xf32>
    %cst_127 = arith.constant dense<0.000000e+00> : vector<16x214xf32>
    %200 = tpu.matmul %199, %196, %cst_127 {dimension_numbers = #tpu.dot_dimension_numbers<[1], [0], [0], [1], [0, 0, 1, 1], [], []>} : vector<16x8xf32>, vector<8x214xf32>, vector<16x214xf32> -> vector<16x214xf32>
    %201 = arith.addf %195, %200 : vector<16x214xf32>
    %c0_128 = arith.constant 0 : index
    %c14_129 = arith.constant 14 : index
    %202 = vector.load %arg9[%c0_128, %c14_129] : memref<8x240xf32, #tpu.memory_space<vmem>>, vector<8x214xf32>
    %c29 = arith.constant 29 : index
    %c0_130 = arith.constant 0 : index
    %c0_131 = arith.constant 0 : index
    %203 = vector.load %arg2[%c29, %c0_130, %c0_131] : memref<48x32x16xf32, #tpu.memory_space<vmem>>, vector<1x32x16xf32>
    %204 = vector.shape_cast %203 : vector<1x32x16xf32> to vector<32x16xf32>
    %205 = vector.extract_strided_slice %204 {offsets = [0, 0], sizes = [16, 8], strides = [1, 1]} : vector<32x16xf32> to vector<16x8xf32>
    %cst_132 = arith.constant dense<0.000000e+00> : vector<16x214xf32>
    %206 = tpu.matmul %205, %202, %cst_132 {dimension_numbers = #tpu.dot_dimension_numbers<[1], [0], [0], [1], [0, 0, 1, 1], [], []>} : vector<16x8xf32>, vector<8x214xf32>, vector<16x214xf32> -> vector<16x214xf32>
    %207 = arith.addf %201, %206 : vector<16x214xf32>
    %c0_133 = arith.constant 0 : index
    %c24_134 = arith.constant 24 : index
    %208 = vector.load %arg9[%c0_133, %c24_134] : memref<8x240xf32, #tpu.memory_space<vmem>>, vector<8x214xf32>
    %c30 = arith.constant 30 : index
    %c0_135 = arith.constant 0 : index
    %c0_136 = arith.constant 0 : index
    %209 = vector.load %arg2[%c30, %c0_135, %c0_136] : memref<48x32x16xf32, #tpu.memory_space<vmem>>, vector<1x32x16xf32>
    %210 = vector.shape_cast %209 : vector<1x32x16xf32> to vector<32x16xf32>
    %211 = vector.extract_strided_slice %210 {offsets = [0, 0], sizes = [16, 8], strides = [1, 1]} : vector<32x16xf32> to vector<16x8xf32>
    %cst_137 = arith.constant dense<0.000000e+00> : vector<16x214xf32>
    %212 = tpu.matmul %211, %208, %cst_137 {dimension_numbers = #tpu.dot_dimension_numbers<[1], [0], [0], [1], [0, 0, 1, 1], [], []>} : vector<16x8xf32>, vector<8x214xf32>, vector<16x214xf32> -> vector<16x214xf32>
    %213 = arith.addf %207, %212 : vector<16x214xf32>
    %c0_138 = arith.constant 0 : index
    %c25_139 = arith.constant 25 : index
    %214 = vector.load %arg9[%c0_138, %c25_139] : memref<8x240xf32, #tpu.memory_space<vmem>>, vector<8x214xf32>
    %c31 = arith.constant 31 : index
    %c0_140 = arith.constant 0 : index
    %c0_141 = arith.constant 0 : index
    %215 = vector.load %arg2[%c31, %c0_140, %c0_141] : memref<48x32x16xf32, #tpu.memory_space<vmem>>, vector<1x32x16xf32>
    %216 = vector.shape_cast %215 : vector<1x32x16xf32> to vector<32x16xf32>
    %217 = vector.extract_strided_slice %216 {offsets = [0, 0], sizes = [16, 8], strides = [1, 1]} : vector<32x16xf32> to vector<16x8xf32>
    %cst_142 = arith.constant dense<0.000000e+00> : vector<16x214xf32>
    %218 = tpu.matmul %217, %214, %cst_142 {dimension_numbers = #tpu.dot_dimension_numbers<[1], [0], [0], [1], [0, 0, 1, 1], [], []>} : vector<16x8xf32>, vector<8x214xf32>, vector<16x214xf32> -> vector<16x214xf32>
    %219 = arith.addf %213, %218 : vector<16x214xf32>
    %c0_143 = arith.constant 0 : index
    %c26_144 = arith.constant 26 : index
    %220 = vector.load %arg9[%c0_143, %c26_144] : memref<8x240xf32, #tpu.memory_space<vmem>>, vector<8x214xf32>
    %c32 = arith.constant 32 : index
    %c0_145 = arith.constant 0 : index
    %c0_146 = arith.constant 0 : index
    %221 = vector.load %arg2[%c32, %c0_145, %c0_146] : memref<48x32x16xf32, #tpu.memory_space<vmem>>, vector<1x32x16xf32>
    %222 = vector.shape_cast %221 : vector<1x32x16xf32> to vector<32x16xf32>
    %223 = vector.extract_strided_slice %222 {offsets = [0, 0], sizes = [16, 8], strides = [1, 1]} : vector<32x16xf32> to vector<16x8xf32>
    %cst_147 = arith.constant dense<0.000000e+00> : vector<16x214xf32>
    %224 = tpu.matmul %223, %220, %cst_147 {dimension_numbers = #tpu.dot_dimension_numbers<[1], [0], [0], [1], [0, 0, 1, 1], [], []>} : vector<16x8xf32>, vector<8x214xf32>, vector<16x214xf32> -> vector<16x214xf32>
    %225 = arith.addf %219, %224 : vector<16x214xf32>
    %226 = vector.broadcast %172 : vector<16x1xf32> to vector<16x214xf32>
    %227 = arith.addf %225, %226 : vector<16x214xf32>
    %cst_148 = arith.constant 0.000000e+00 : f32
    %228 = vector.broadcast %cst_148 : f32 to vector<16x214xf32>
    %229 = arith.maximumf %227, %228 : vector<16x214xf32>
    %230 = vector.extract_strided_slice %229 {offsets = [0, 0], sizes = [16, 202], strides = [1, 1]} : vector<16x214xf32> to vector<16x202xf32>
    %231 = vector.extract_strided_slice %229 {offsets = [0, 12], sizes = [16, 202], strides = [1, 1]} : vector<16x214xf32> to vector<16x202xf32>
    %232 = arith.maximumf %230, %231 : vector<16x202xf32>
    %233 = vector.extract_strided_slice %232 {offsets = [0, 0], sizes = [16, 201], strides = [1, 1]} : vector<16x202xf32> to vector<16x201xf32>
    %234 = vector.extract_strided_slice %232 {offsets = [0, 1], sizes = [16, 201], strides = [1, 1]} : vector<16x202xf32> to vector<16x201xf32>
    %235 = arith.maximumf %233, %234 : vector<16x201xf32>
    %c1632 = arith.constant 1632 : index
    %c0_149 = arith.constant 0 : index
    %236 = vector.load %arg4[%c1632, %c0_149] : memref<1784x352xf32, #tpu.memory_space<vmem>>, vector<81x28xf32>
    %237 = vector.extract_strided_slice %235 {offsets = [0, 0], sizes = [16, 81], strides = [1, 1]} : vector<16x201xf32> to vector<16x81xf32>
    %cst_150 = arith.constant dense<0.000000e+00> : vector<16x28xf32>
    %238 = tpu.matmul %237, %236, %cst_150 {dimension_numbers = #tpu.dot_dimension_numbers<[1], [0], [0], [1], [0, 0, 1, 1], [], []>} : vector<16x81xf32>, vector<81x28xf32>, vector<16x28xf32> -> vector<16x28xf32>
    %c0_151 = arith.constant 0 : index
    %c7_152 = arith.constant 7 : index
    %239 = vector.load %arg10[%c0_151, %c7_152] : memref<16x84xf32, #tpu.memory_space<vmem>>, vector<16x28xf32>
    tpu.vector_store %arg10[%c0_151, %c7_152], %238 {strides = array<i32>} : memref<16x84xf32, #tpu.memory_space<vmem>>, vector<16x28xf32>,
    %240 = vector.extract_strided_slice %235 {offsets = [0, 120], sizes = [16, 81], strides = [1, 1]} : vector<16x201xf32> to vector<16x81xf32>
    %cst_153 = arith.constant dense<0.000000e+00> : vector<16x28xf32>
    %241 = tpu.matmul %240, %236, %cst_153 {dimension_numbers = #tpu.dot_dimension_numbers<[1], [0], [0], [1], [0, 0, 1, 1], [], []>} : vector<16x81xf32>, vector<81x28xf32>, vector<16x28xf32> -> vector<16x28xf32>
    %c0_154 = arith.constant 0 : index
    %c49 = arith.constant 49 : index
    %242 = vector.load %arg10[%c0_154, %c49] : memref<16x84xf32, #tpu.memory_space<vmem>>, vector<16x28xf32>
    tpu.vector_store %arg10[%c0_154, %c49], %241 {strides = array<i32>} : memref<16x84xf32, #tpu.memory_space<vmem>>, vector<16x28xf32>,
    %c3_155 = arith.constant 3 : index
    %c0_156 = arith.constant 0 : index
    %c0_157 = arith.constant 0 : index
    %243 = vector.load %arg3[%c3_155, %c0_156, %c0_157] : memref<4x32x1xf32, #tpu.memory_space<vmem>>, vector<1x32x1xf32>
    %244 = vector.shape_cast %243 : vector<1x32x1xf32> to vector<32x1xf32>
    %c0_158 = arith.constant 0 : index
    %c0_159 = arith.constant 0 : index
    %245 = vector.load %arg10[%c0_158, %c0_159] : memref<16x84xf32, #tpu.memory_space<vmem>>, vector<16x67xf32>
    %c36 = arith.constant 36 : index
    %c0_160 = arith.constant 0 : index
    %c0_161 = arith.constant 0 : index
    %246 = vector.load %arg2[%c36, %c0_160, %c0_161] : memref<48x32x16xf32, #tpu.memory_space<vmem>>, vector<1x32x16xf32>
    %247 = vector.shape_cast %246 : vector<1x32x16xf32> to vector<32x16xf32>
    %cst_162 = arith.constant dense<0.000000e+00> : vector<32x67xf32>
    %248 = tpu.matmul %247, %245, %cst_162 {dimension_numbers = #tpu.dot_dimension_numbers<[1], [0], [0], [1], [0, 0, 1, 1], [], []>} : vector<32x16xf32>, vector<16x67xf32>, vector<32x67xf32> -> vector<32x67xf32>
    %c0_163 = arith.constant 0 : index
    %c1_164 = arith.constant 1 : index
    %249 = vector.load %arg10[%c0_163, %c1_164] : memref<16x84xf32, #tpu.memory_space<vmem>>, vector<16x67xf32>
    %c37 = arith.constant 37 : index
    %c0_165 = arith.constant 0 : index
    %c0_166 = arith.constant 0 : index
    %250 = vector.load %arg2[%c37, %c0_165, %c0_166] : memref<48x32x16xf32, #tpu.memory_space<vmem>>, vector<1x32x16xf32>
    %251 = vector.shape_cast %250 : vector<1x32x16xf32> to vector<32x16xf32>
    %cst_167 = arith.constant dense<0.000000e+00> : vector<32x67xf32>
    %252 = tpu.matmul %251, %249, %cst_167 {dimension_numbers = #tpu.dot_dimension_numbers<[1], [0], [0], [1], [0, 0, 1, 1], [], []>} : vector<32x16xf32>, vector<16x67xf32>, vector<32x67xf32> -> vector<32x67xf32>
    %253 = arith.addf %248, %252 : vector<32x67xf32>
    %c0_168 = arith.constant 0 : index
    %c2_169 = arith.constant 2 : index
    %254 = vector.load %arg10[%c0_168, %c2_169] : memref<16x84xf32, #tpu.memory_space<vmem>>, vector<16x67xf32>
    %c38 = arith.constant 38 : index
    %c0_170 = arith.constant 0 : index
    %c0_171 = arith.constant 0 : index
    %255 = vector.load %arg2[%c38, %c0_170, %c0_171] : memref<48x32x16xf32, #tpu.memory_space<vmem>>, vector<1x32x16xf32>
    %256 = vector.shape_cast %255 : vector<1x32x16xf32> to vector<32x16xf32>
    %cst_172 = arith.constant dense<0.000000e+00> : vector<32x67xf32>
    %257 = tpu.matmul %256, %254, %cst_172 {dimension_numbers = #tpu.dot_dimension_numbers<[1], [0], [0], [1], [0, 0, 1, 1], [], []>} : vector<32x16xf32>, vector<16x67xf32>, vector<32x67xf32> -> vector<32x67xf32>
    %258 = arith.addf %253, %257 : vector<32x67xf32>
    %c0_173 = arith.constant 0 : index
    %c3_174 = arith.constant 3 : index
    %259 = vector.load %arg10[%c0_173, %c3_174] : memref<16x84xf32, #tpu.memory_space<vmem>>, vector<16x67xf32>
    %c39 = arith.constant 39 : index
    %c0_175 = arith.constant 0 : index
    %c0_176 = arith.constant 0 : index
    %260 = vector.load %arg2[%c39, %c0_175, %c0_176] : memref<48x32x16xf32, #tpu.memory_space<vmem>>, vector<1x32x16xf32>
    %261 = vector.shape_cast %260 : vector<1x32x16xf32> to vector<32x16xf32>
    %cst_177 = arith.constant dense<0.000000e+00> : vector<32x67xf32>
    %262 = tpu.matmul %261, %259, %cst_177 {dimension_numbers = #tpu.dot_dimension_numbers<[1], [0], [0], [1], [0, 0, 1, 1], [], []>} : vector<32x16xf32>, vector<16x67xf32>, vector<32x67xf32> -> vector<32x67xf32>
    %263 = arith.addf %258, %262 : vector<32x67xf32>
    %c0_178 = arith.constant 0 : index
    %c7_179 = arith.constant 7 : index
    %264 = vector.load %arg10[%c0_178, %c7_179] : memref<16x84xf32, #tpu.memory_space<vmem>>, vector<16x67xf32>
    %c40 = arith.constant 40 : index
    %c0_180 = arith.constant 0 : index
    %c0_181 = arith.constant 0 : index
    %265 = vector.load %arg2[%c40, %c0_180, %c0_181] : memref<48x32x16xf32, #tpu.memory_space<vmem>>, vector<1x32x16xf32>
    %266 = vector.shape_cast %265 : vector<1x32x16xf32> to vector<32x16xf32>
    %cst_182 = arith.constant dense<0.000000e+00> : vector<32x67xf32>
    %267 = tpu.matmul %266, %264, %cst_182 {dimension_numbers = #tpu.dot_dimension_numbers<[1], [0], [0], [1], [0, 0, 1, 1], [], []>} : vector<32x16xf32>, vector<16x67xf32>, vector<32x67xf32> -> vector<32x67xf32>
    %268 = arith.addf %263, %267 : vector<32x67xf32>
    %c0_183 = arith.constant 0 : index
    %c8_184 = arith.constant 8 : index
    %269 = vector.load %arg10[%c0_183, %c8_184] : memref<16x84xf32, #tpu.memory_space<vmem>>, vector<16x67xf32>
    %c41 = arith.constant 41 : index
    %c0_185 = arith.constant 0 : index
    %c0_186 = arith.constant 0 : index
    %270 = vector.load %arg2[%c41, %c0_185, %c0_186] : memref<48x32x16xf32, #tpu.memory_space<vmem>>, vector<1x32x16xf32>
    %271 = vector.shape_cast %270 : vector<1x32x16xf32> to vector<32x16xf32>
    %cst_187 = arith.constant dense<0.000000e+00> : vector<32x67xf32>
    %272 = tpu.matmul %271, %269, %cst_187 {dimension_numbers = #tpu.dot_dimension_numbers<[1], [0], [0], [1], [0, 0, 1, 1], [], []>} : vector<32x16xf32>, vector<16x67xf32>, vector<32x67xf32> -> vector<32x67xf32>
    %273 = arith.addf %268, %272 : vector<32x67xf32>
    %c0_188 = arith.constant 0 : index
    %c9 = arith.constant 9 : index
    %274 = vector.load %arg10[%c0_188, %c9] : memref<16x84xf32, #tpu.memory_space<vmem>>, vector<16x67xf32>
    %c42_189 = arith.constant 42 : index
    %c0_190 = arith.constant 0 : index
    %c0_191 = arith.constant 0 : index
    %275 = vector.load %arg2[%c42_189, %c0_190, %c0_191] : memref<48x32x16xf32, #tpu.memory_space<vmem>>, vector<1x32x16xf32>
    %276 = vector.shape_cast %275 : vector<1x32x16xf32> to vector<32x16xf32>
    %cst_192 = arith.constant dense<0.000000e+00> : vector<32x67xf32>
    %277 = tpu.matmul %276, %274, %cst_192 {dimension_numbers = #tpu.dot_dimension_numbers<[1], [0], [0], [1], [0, 0, 1, 1], [], []>} : vector<32x16xf32>, vector<16x67xf32>, vector<32x67xf32> -> vector<32x67xf32>
    %278 = arith.addf %273, %277 : vector<32x67xf32>
    %c0_193 = arith.constant 0 : index
    %c10 = arith.constant 10 : index
    %279 = vector.load %arg10[%c0_193, %c10] : memref<16x84xf32, #tpu.memory_space<vmem>>, vector<16x67xf32>
    %c43_194 = arith.constant 43 : index
    %c0_195 = arith.constant 0 : index
    %c0_196 = arith.constant 0 : index
    %280 = vector.load %arg2[%c43_194, %c0_195, %c0_196] : memref<48x32x16xf32, #tpu.memory_space<vmem>>, vector<1x32x16xf32>
    %281 = vector.shape_cast %280 : vector<1x32x16xf32> to vector<32x16xf32>
    %cst_197 = arith.constant dense<0.000000e+00> : vector<32x67xf32>
    %282 = tpu.matmul %281, %279, %cst_197 {dimension_numbers = #tpu.dot_dimension_numbers<[1], [0], [0], [1], [0, 0, 1, 1], [], []>} : vector<32x16xf32>, vector<16x67xf32>, vector<32x67xf32> -> vector<32x67xf32>
    %283 = arith.addf %278, %282 : vector<32x67xf32>
    %c0_198 = arith.constant 0 : index
    %c14_199 = arith.constant 14 : index
    %284 = vector.load %arg10[%c0_198, %c14_199] : memref<16x84xf32, #tpu.memory_space<vmem>>, vector<16x67xf32>
    %c44_200 = arith.constant 44 : index
    %c0_201 = arith.constant 0 : index
    %c0_202 = arith.constant 0 : index
    %285 = vector.load %arg2[%c44_200, %c0_201, %c0_202] : memref<48x32x16xf32, #tpu.memory_space<vmem>>, vector<1x32x16xf32>
    %286 = vector.shape_cast %285 : vector<1x32x16xf32> to vector<32x16xf32>
    %cst_203 = arith.constant dense<0.000000e+00> : vector<32x67xf32>
    %287 = tpu.matmul %286, %284, %cst_203 {dimension_numbers = #tpu.dot_dimension_numbers<[1], [0], [0], [1], [0, 0, 1, 1], [], []>} : vector<32x16xf32>, vector<16x67xf32>, vector<32x67xf32> -> vector<32x67xf32>
    %288 = arith.addf %283, %287 : vector<32x67xf32>
    %c0_204 = arith.constant 0 : index
    %c15_205 = arith.constant 15 : index
    %289 = vector.load %arg10[%c0_204, %c15_205] : memref<16x84xf32, #tpu.memory_space<vmem>>, vector<16x67xf32>
    %c45_206 = arith.constant 45 : index
    %c0_207 = arith.constant 0 : index
    %c0_208 = arith.constant 0 : index
    %290 = vector.load %arg2[%c45_206, %c0_207, %c0_208] : memref<48x32x16xf32, #tpu.memory_space<vmem>>, vector<1x32x16xf32>
    %291 = vector.shape_cast %290 : vector<1x32x16xf32> to vector<32x16xf32>
    %cst_209 = arith.constant dense<0.000000e+00> : vector<32x67xf32>
    %292 = tpu.matmul %291, %289, %cst_209 {dimension_numbers = #tpu.dot_dimension_numbers<[1], [0], [0], [1], [0, 0, 1, 1], [], []>} : vector<32x16xf32>, vector<16x67xf32>, vector<32x67xf32> -> vector<32x67xf32>
    %293 = arith.addf %288, %292 : vector<32x67xf32>
    %c0_210 = arith.constant 0 : index
    %c16_211 = arith.constant 16 : index
    %294 = vector.load %arg10[%c0_210, %c16_211] : memref<16x84xf32, #tpu.memory_space<vmem>>, vector<16x67xf32>
    %c46_212 = arith.constant 46 : index
    %c0_213 = arith.constant 0 : index
    %c0_214 = arith.constant 0 : index
    %295 = vector.load %arg2[%c46_212, %c0_213, %c0_214] : memref<48x32x16xf32, #tpu.memory_space<vmem>>, vector<1x32x16xf32>
    %296 = vector.shape_cast %295 : vector<1x32x16xf32> to vector<32x16xf32>
    %cst_215 = arith.constant dense<0.000000e+00> : vector<32x67xf32>
    %297 = tpu.matmul %296, %294, %cst_215 {dimension_numbers = #tpu.dot_dimension_numbers<[1], [0], [0], [1], [0, 0, 1, 1], [], []>} : vector<32x16xf32>, vector<16x67xf32>, vector<32x67xf32> -> vector<32x67xf32>
    %298 = arith.addf %293, %297 : vector<32x67xf32>
    %c0_216 = arith.constant 0 : index
    %c17_217 = arith.constant 17 : index
    %299 = vector.load %arg10[%c0_216, %c17_217] : memref<16x84xf32, #tpu.memory_space<vmem>>, vector<16x67xf32>
    %c47 = arith.constant 47 : index
    %c0_218 = arith.constant 0 : index
    %c0_219 = arith.constant 0 : index
    %300 = vector.load %arg2[%c47, %c0_218, %c0_219] : memref<48x32x16xf32, #tpu.memory_space<vmem>>, vector<1x32x16xf32>
    %301 = vector.shape_cast %300 : vector<1x32x16xf32> to vector<32x16xf32>
    %cst_220 = arith.constant dense<0.000000e+00> : vector<32x67xf32>
    %302 = tpu.matmul %301, %299, %cst_220 {dimension_numbers = #tpu.dot_dimension_numbers<[1], [0], [0], [1], [0, 0, 1, 1], [], []>} : vector<32x16xf32>, vector<16x67xf32>, vector<32x67xf32> -> vector<32x67xf32>
    %303 = arith.addf %298, %302 : vector<32x67xf32>
    %304 = vector.broadcast %244 : vector<32x1xf32> to vector<32x67xf32>
    %305 = arith.addf %303, %304 : vector<32x67xf32>
    %cst_221 = arith.constant 0.000000e+00 : f32
    %306 = vector.broadcast %cst_221 : f32 to vector<32x67xf32>
    %307 = arith.maximumf %305, %306 : vector<32x67xf32>
    %308 = vector.extract_strided_slice %307 {offsets = [0, 0], sizes = [32, 60], strides = [1, 1]} : vector<32x67xf32> to vector<32x60xf32>
    %309 = vector.extract_strided_slice %307 {offsets = [0, 7], sizes = [32, 60], strides = [1, 1]} : vector<32x67xf32> to vector<32x60xf32>
    %310 = arith.maximumf %308, %309 : vector<32x60xf32>
    %311 = vector.extract_strided_slice %310 {offsets = [0, 0], sizes = [32, 59], strides = [1, 1]} : vector<32x60xf32> to vector<32x59xf32>
    %312 = vector.extract_strided_slice %310 {offsets = [0, 1], sizes = [32, 59], strides = [1, 1]} : vector<32x60xf32> to vector<32x59xf32>
    %313 = arith.maximumf %311, %312 : vector<32x59xf32>
    %c1720 = arith.constant 1720 : index
    %c0_222 = arith.constant 0 : index
    %314 = vector.load %arg4[%c1720, %c0_222] : memref<1784x352xf32, #tpu.memory_space<vmem>>, vector<59x2xf32>
    %c0_223 = arith.constant 0 : index
    %c0_224 = arith.constant 0 : index
    %315 = vector.load %arg5[%c0_223, %c0_224] : memref<32x59xf32, #tpu.memory_space<vmem>>, vector<32x59xf32>
    %316 = arith.mulf %313, %315 : vector<32x59xf32>
    %cst_225 = arith.constant dense<0.000000e+00> : vector<59xf32>
    %317 = vector.multi_reduction <add>, %316, %cst_225 [0] : vector<32x59xf32> to vector<59xf32>
    %318 = vector.shape_cast %317 : vector<59xf32> to vector<1x59xf32>
    %cst_226 = arith.constant dense<0.000000e+00> : vector<1x2xf32>
    %319 = tpu.matmul %318, %314, %cst_226 {dimension_numbers = #tpu.dot_dimension_numbers<[1], [0], [0], [1], [0, 0, 1, 1], [], []>} : vector<1x59xf32>, vector<59x2xf32>, vector<1x2xf32> -> vector<1x2xf32>
    %c0_227 = arith.constant 0 : index
    %c0_228 = arith.constant 0 : index
    %320 = vector.load %arg6[%c0_227, %c0_228] : memref<1x1xf32, #tpu.memory_space<vmem>>, vector<1x1xf32>
    %321 = vector.broadcast %320 : vector<1x1xf32> to vector<1x2xf32>
    %322 = arith.addf %319, %321 : vector<1x2xf32>
    %c0_229 = arith.constant 0 : index
    %c0_230 = arith.constant 0 : index
    %323 = vector.load %arg7[%c0_229, %c0_230] : memref<1x2xf32, #tpu.memory_space<vmem>>, vector<1x2xf32>
    tpu.vector_store %arg7[%c0_229, %c0_230], %322 {strides = array<i32>} : memref<1x2xf32, #tpu.memory_space<vmem>>, vector<1x2xf32>,
    return
  }
  func.func @transform_0(%arg0: i32) -> (i32, i32) {
    %c0_i32 = arith.constant 0 : i32
    %c0_i32_0 = arith.constant 0 : i32
    %c0_i32_1 = arith.constant 0 : i32
    return %c0_i32, %c0_i32_0 : i32, i32
  }
  func.func @transform_1(%arg0: i32) -> (i32, i32, i32) {
    %c0_i32 = arith.constant 0 : i32
    %c0_i32_0 = arith.constant 0 : i32
    %c0_i32_1 = arith.constant 0 : i32
    %c0_i32_2 = arith.constant 0 : i32
    return %c0_i32, %c0_i32_0, %c0_i32_1 : i32, i32, i32
  }
  func.func @transform_2(%arg0: i32) -> (i32, i32, i32) {
    %c0_i32 = arith.constant 0 : i32
    %c0_i32_0 = arith.constant 0 : i32
    %c0_i32_1 = arith.constant 0 : i32
    %c0_i32_2 = arith.constant 0 : i32
    return %c0_i32, %c0_i32_0, %c0_i32_1 : i32, i32, i32
  }
  func.func @transform_3(%arg0: i32) -> (i32, i32) {
    %c0_i32 = arith.constant 0 : i32
    %c0_i32_0 = arith.constant 0 : i32
    %c0_i32_1 = arith.constant 0 : i32
    return %c0_i32, %c0_i32_0 : i32, i32
  }
  func.func @transform_4(%arg0: i32) -> (i32, i32) {
    %c0_i32 = arith.constant 0 : i32
    %c0_i32_0 = arith.constant 0 : i32
    %c0_i32_1 = arith.constant 0 : i32
    return %c0_i32, %c0_i32_0 : i32, i32
  }
  func.func @transform_5(%arg0: i32) -> (i32, i32) {
    %c0_i32 = arith.constant 0 : i32
    %c0_i32_0 = arith.constant 0 : i32
    %c0_i32_1 = arith.constant 0 : i32
    return %c0_i32, %c0_i32_0 : i32, i32
  }
  func.func @transform_6(%arg0: i32) -> (i32, i32) {
    %c0_i32 = arith.constant 0 : i32
    %c0_i32_0 = arith.constant 0 : i32
    %c0_i32_1 = arith.constant 0 : i32
    return %c0_i32, %c0_i32_0 : i32, i32
  }
}

</mosaic_0001>

<llo_original>
// kernel: wakeup_forward.1
$region0: #{wakeup_forward.1}
  #allocation0 [shape = 'u32[]', space=smem, size = 0x4, offset = 0x4, fixed_abs, tag = 'smem constant byte address 0x4 - core index']
  #allocation1 [shape = 'u32[144,128]{1,0:T(1,128)}', space=vmem, size = 0x12000, scoped, tag = 'internal scratch']
  #allocation2 [shape = 'f32[4,792]{1,0:T(4,128)}', space=vmem, size = 0x3800, scoped, tag = 'scratch operand']
  #allocation3 [shape = 'f32[8,240]{1,0:T(8,128)}', space=vmem, size = 0x2000, scoped, tag = 'scratch operand']
  #allocation4 [shape = 'f32[16,84]{1,0:T(8,128)}', space=vmem, size = 0x2000, scoped, tag = 'scratch operand']
  #allocation5 [shape = 'f32[1,1]{1,0:T(1,128)S(1)}', space=vmem, size = 0x200, scoped, tag = 'scoped memory for wakeup_forward.1']
  %s0 = inlined_call_operand.vmem [shape: f32[1,2856], index: 0, kind: input, shape index: {}]
  %s1 = inlined_call_operand.vmem [shape: f32[48,32,16], index: 1, kind: input, shape index: {}]
  %s2 = inlined_call_operand.vmem [shape: f32[4,32,1], index: 2, kind: input, shape index: {}]
  %s3 = inlined_call_operand.vmem [shape: f32[1784,352], index: 3, kind: input, shape index: {}]
  %s4 = inlined_call_operand.vmem [shape: f32[32,59], index: 4, kind: input, shape index: {}]
  %s5 = inlined_call_operand.<no memory space> [shape: f32[1,1], index: 5, kind: input, shape index: {}]
  %s6 = inlined_call_operand.hbm [shape: f32[1,2], index: 6, kind: output, shape index: {}]
  %s7 = sld [smem:[#allocation0]]
  $region34: #{wakeup_forward.1} parent=0
    _
  %s9 = ssub.s32 1, %s7
  %s10 = scalar_select 0, %s9, %s7
  %v11 = vstv %s5
  %12 = vst [vmem:[#allocation5] sm:$0x1] %v11
  $region1: #{wakeup_forward.1} parent=0
    #allocation6 [shape = 'u8[512]{0}', space=vmem, size = 0x400, scoped, tag = 'output window, operand 0, single buffered']
    #allocation7 [shape = 's32[1]{0}', space=sflag, size = 0x4, scoped, tag = 'scoped memory for wakeup_forward.1']
    %13 = vsyncpa [#allocation7], 0
    // Predicated region
    $region2: #{wakeup_forward.1} parent=1 // pred_check
      _
    $region3: #{wakeup_forward.1} parent=1 // pred_check_branch
      %15 = sbr.rel (0) target = $region5
    $region4: #{wakeup_forward.1} parent=1 // pred_region
      _
    $region5: #{wakeup_forward.1} parent=1 // pred_fallthru
      _
    // Predicated region
    $region6: #{wakeup_forward.1} parent=1 // pred_check
      _
    $region7: #{wakeup_forward.1} parent=1 // pred_check_branch
      %17 = sbr.rel (0) target = $region9
    $region8: #{wakeup_forward.1} parent=1 // pred_region
      _
    $region9: #{wakeup_forward.1} parent=1 // pred_fallthru
      _
    // Predicated region
    $region10: #{wakeup_forward.1} parent=1 // pred_check
      _
    $region11: #{wakeup_forward.1} parent=1 // pred_check_branch
      %19 = sbr.rel (0) target = $region13
    $region12: #{wakeup_forward.1} parent=1 // pred_region
      _
    $region13: #{wakeup_forward.1} parent=1 // pred_fallthru
      _
    // Predicated region
    $region14: #{wakeup_forward.1} parent=1 // pred_check
      _
    $region15: #{wakeup_forward.1} parent=1 // pred_check_branch
      %21 = sbr.rel (0) target = $region17
    $region16: #{wakeup_forward.1} parent=1 // pred_region
      _
    $region17: #{wakeup_forward.1} parent=1 // pred_fallthru
      _
    // Predicated region
    $region18: #{wakeup_forward.1} parent=1 // pred_check
      _
    $region19: #{wakeup_forward.1} parent=1 // pred_check_branch
      %23 = sbr.rel (0) target = $region21
    $region20: #{wakeup_forward.1} parent=1 // pred_region
      _
    $region21: #{wakeup_forward.1} parent=1 // pred_fallthru
      _
    // Predicated region
    $region22: #{wakeup_forward.1} parent=1 // pred_check
      _
    $region23: #{wakeup_forward.1} parent=1 // pred_check_branch
      %25 = sbr.rel (0) target = $region25
    $region24: #{wakeup_forward.1} parent=1 // pred_region
      _
    $region25: #{wakeup_forward.1} parent=1 // pred_fallthru
      _
    %26 = vst [vmem:[#allocation2] sm:$0xff] 0.0
    %27 = vst [vmem:[#allocation2 + $0x8] sm:$0xff] 0.0
    %28 = vst [vmem:[#allocation2 + $0x10] sm:$0xff] 0.0
    %vm29 = vcmask 191488
    %30 = vst.msk [vmem:[#allocation2 + $0x18] sm:$0xf] %vm29, 0.0
    %31 = vst [vmem:[#allocation3] sm:$0xff] 0.0
    %vm32 = vcmask 916480
    %33 = vst.msk [vmem:[#allocation3 + $0x8] sm:$0xff] %vm32, 0.0
    %vm34 = vcmask 687104
    %35 = vst.msk [vmem:[#allocation4] sm:$0xff] %vm34, 0.0
    %36 = vst.msk [vmem:[#allocation4 + $0x8] sm:$0xff] %vm34, 0.0
    %v37 = vld [vmem:[%s2] sm:$0xff]
    %v38 = vld [vmem:[%s0] sm:$0xff]
    %v39 = vld [vmem:[%s0 + $0x8] sm:$0xff]
    %v40 = vld [vmem:[%s0 + $0x10] sm:$0x3f]
    %v41 = vld [vmem:[%s1] sm:$0xff]
    %43 = vset.pattern.permute.xlu0 0
    %44 = vperm.xlu0 %43, %v41
    %v45 = vpop.permute.xlu0 %44
    %v50 = vlaneseq
    %v51 = vshrl.u32 %v50, 7
    %v52 = vsub.s32 0, %v51
    %v53 = vrot.slane %v38, %v52
    %v54 = vlaneseq
    %v55 = vshrl.u32 %v54, 7
    %v56 = vsub.s32 1, %v55
    %v57 = vrot.slane %v38, %v56
    %v58 = vlaneseq
    %v59 = vshrl.u32 %v58, 7
    %v60 = vsub.s32 2, %v59
    %v61 = vrot.slane %v38, %v60
    %v62 = vlaneseq
    %v63 = vshrl.u32 %v62, 7
    %v64 = vsub.s32 3, %v63
    %v65 = vrot.slane %v38, %v64
    %v66 = vlaneseq
    %v67 = vshrl.u32 %v66, 7
    %v68 = vsub.s32 4, %v67
    %v69 = vrot.slane %v38, %v68
    %v70 = vlaneseq
    %v71 = vshrl.u32 %v70, 7
    %v72 = vsub.s32 5, %v71
    %v73 = vrot.slane %v38, %v72
    %v74 = vlaneseq
    %v75 = vshrl.u32 %v74, 7
    %v76 = vsub.s32 6, %v75
    %v77 = vrot.slane %v38, %v76
    %v78 = vlaneseq
    %v79 = vshrl.u32 %v78, 7
    %v80 = vsub.s32 7, %v79
    %v81 = vrot.slane %v38, %v80
    %v82 = vlaneseq
    %v83 = vshrl.u32 %v82, 7
    %v84 = vsub.s32 0, %v83
    %v85 = vrot.slane %v39, %v84
    %v86 = vlaneseq
    %v87 = vshrl.u32 %v86, 7
    %v88 = vsub.s32 1, %v87
    %v89 = vrot.slane %v39, %v88
    %v90 = vlaneseq
    %v91 = vshrl.u32 %v90, 7
    %v92 = vsub.s32 2, %v91
    %v93 = vrot.slane %v39, %v92
    %v94 = vlaneseq
    %v95 = vshrl.u32 %v94, 7
    %v96 = vsub.s32 3, %v95
    %v97 = vrot.slane %v39, %v96
    %v98 = vlaneseq
    %v99 = vshrl.u32 %v98, 7
    %v100 = vsub.s32 4, %v99
    %v101 = vrot.slane %v39, %v100
    %v102 = vlaneseq
    %v103 = vshrl.u32 %v102, 7
    %v104 = vsub.s32 5, %v103
    %v105 = vrot.slane %v39, %v104
    %v106 = vlaneseq
    %v107 = vshrl.u32 %v106, 7
    %v108 = vsub.s32 6, %v107
    %v109 = vrot.slane %v39, %v108
    %v110 = vlaneseq
    %v111 = vshrl.u32 %v110, 7
    %v112 = vsub.s32 7, %v111
    %v113 = vrot.slane %v39, %v112
    %v114 = vlaneseq
    %v115 = vshrl.u32 %v114, 7
    %v116 = vsub.s32 0, %v115
    %v117 = vrot.slane %v40, %v116
    %v118 = vlaneseq
    %v119 = vshrl.u32 %v118, 7
    %v120 = vsub.s32 1, %v119
    %v121 = vrot.slane %v40, %v120
    %v122 = vlaneseq
    %v123 = vshrl.u32 %v122, 7
    %v124 = vsub.s32 2, %v123
    %v125 = vrot.slane %v40, %v124
    %v126 = vlaneseq
    %v127 = vshrl.u32 %v126, 7
    %v128 = vsub.s32 3, %v127
    %v129 = vrot.slane %v40, %v128
    %v130 = vlaneseq
    %v131 = vshrl.u32 %v130, 7
    %v132 = vsub.s32 4, %v131
    %v133 = vrot.slane %v40, %v132
    %v134 = vlaneseq
    %v135 = vshrl.u32 %v134, 7
    %v136 = vsub.s32 5, %v135
    %v137 = vrot.slane %v40, %v136
    %v160 = vmul.f32 %v45, %v53
    %v161 = vmul.f32 %v45, %v57
    %v162 = vmul.f32 %v45, %v61
    %v163 = vmul.f32 %v45, %v65
    %v164 = vmul.f32 %v45, %v69
    %v165 = vmul.f32 %v45, %v73
    %v166 = vmul.f32 %v45, %v77
    %v167 = vmul.f32 %v45, %v81
    %v168 = vmul.f32 %v45, %v85
    %v169 = vmul.f32 %v45, %v89
    %v170 = vmul.f32 %v45, %v93
    %v171 = vmul.f32 %v45, %v97
    %v172 = vmul.f32 %v45, %v101
    %v173 = vmul.f32 %v45, %v105
    %v174 = vmul.f32 %v45, %v109
    %v175 = vmul.f32 %v45, %v113
    %v176 = vmul.f32 %v45, %v117
    %v177 = vmul.f32 %v45, %v121
    %v178 = vmul.f32 %v45, %v125
    %v179 = vmul.f32 %v45, %v129
    %v180 = vmul.f32 %v45, %v133
    %v181 = vmul.f32 %v45, %v137
    %s182 = scalar_lea.vmem %s1, 32
    %v183 = vld [vmem:[%s182] sm:$0xff]
    %185 = vset.pattern.permute.xlu0 0
    %186 = vperm.xlu0 %185, %v183
    %v187 = vpop.permute.xlu0 %186
    %v189 = vmul.f32 %v187, %v53
    %v190 = vmul.f32 %v187, %v57
    %v191 = vmul.f32 %v187, %v61
    %v192 = vmul.f32 %v187, %v65
    %v193 = vmul.f32 %v187, %v69
    %v194 = vmul.f32 %v187, %v73
    %v195 = vmul.f32 %v187, %v77
    %v196 = vmul.f32 %v187, %v81
    %v197 = vmul.f32 %v187, %v85
    %v198 = vmul.f32 %v187, %v89
    %v199 = vmul.f32 %v187, %v93
    %v200 = vmul.f32 %v187, %v97
    %v201 = vmul.f32 %v187, %v101
    %v202 = vmul.f32 %v187, %v105
    %v203 = vmul.f32 %v187, %v109
    %v204 = vmul.f32 %v187, %v113
    %v205 = vmul.f32 %v187, %v117
    %v206 = vmul.f32 %v187, %v121
    %v207 = vmul.f32 %v187, %v125
    %v208 = vmul.f32 %v187, %v129
    %v209 = vmul.f32 %v187, %v133
    %v210 = vmul.f32 %v187, %v137
    %233 = vrot.lane.b32.xlu0 %v189, 127
    %v234 = vpop.permute.xlu0 %233
    %235 = vrot.lane.b32.xlu0 %v190, 127
    %v236 = vpop.permute.xlu0 %235
    %237 = vrot.lane.b32.xlu0 %v191, 127
    %v238 = vpop.permute.xlu0 %237
    %239 = vrot.lane.b32.xlu0 %v192, 127
    %v240 = vpop.permute.xlu0 %239
    %241 = vrot.lane.b32.xlu0 %v193, 127
    %v242 = vpop.permute.xlu0 %241
    %243 = vrot.lane.b32.xlu0 %v194, 127
    %v244 = vpop.permute.xlu0 %243
    %245 = vrot.lane.b32.xlu0 %v195, 127
    %v246 = vpop.permute.xlu0 %245
    %247 = vrot.lane.b32.xlu0 %v196, 127
    %v248 = vpop.permute.xlu0 %247
    %249 = vrot.lane.b32.xlu0 %v197, 127
    %v250 = vpop.permute.xlu0 %249
    %251 = vrot.lane.b32.xlu0 %v198, 127
    %v252 = vpop.permute.xlu0 %251
    %253 = vrot.lane.b32.xlu0 %v199, 127
    %v254 = vpop.permute.xlu0 %253
    %255 = vrot.lane.b32.xlu0 %v200, 127
    %v256 = vpop.permute.xlu0 %255
    %257 = vrot.lane.b32.xlu0 %v201, 127
    %v258 = vpop.permute.xlu0 %257
    %259 = vrot.lane.b32.xlu0 %v202, 127
    %v260 = vpop.permute.xlu0 %259
    %261 = vrot.lane.b32.xlu0 %v203, 127
    %v262 = vpop.permute.xlu0 %261
    %263 = vrot.lane.b32.xlu0 %v204, 127
    %v264 = vpop.permute.xlu0 %263
    %265 = vrot.lane.b32.xlu0 %v205, 127
    %v266 = vpop.permute.xlu0 %265
    %267 = vrot.lane.b32.xlu0 %v206, 127
    %v268 = vpop.permute.xlu0 %267
    %269 = vrot.lane.b32.xlu0 %v207, 127
    %v270 = vpop.permute.xlu0 %269
    %271 = vrot.lane.b32.xlu0 %v208, 127
    %v272 = vpop.permute.xlu0 %271
    %273 = vrot.lane.b32.xlu0 %v209, 127
    %v274 = vpop.permute.xlu0 %273
    %275 = vrot.lane.b32.xlu0 %v210, 127
    %v276 = vpop.permute.xlu0 %275
    %vm277 = vcmask 1039360
    %v278 = vsel %vm277, %v234, %v236
    %v279 = vsel %vm277, %v236, %v238
    %v280 = vsel %vm277, %v238, %v240
    %v281 = vsel %vm277, %v240, %v242
    %v282 = vsel %vm277, %v242, %v244
    %v283 = vsel %vm277, %v244, %v246
    %v284 = vsel %vm277, %v246, %v248
    %v285 = vsel %vm277, %v248, %v250
    %v286 = vsel %vm277, %v250, %v252
    %v287 = vsel %vm277, %v252, %v254
    %v288 = vsel %vm277, %v254, %v256
    %v289 = vsel %vm277, %v256, %v258
    %v290 = vsel %vm277, %v258, %v260
    %v291 = vsel %vm277, %v260, %v262
    %v292 = vsel %vm277, %v262, %v264
    %v293 = vsel %vm277, %v264, %v266
    %v294 = vsel %vm277, %v266, %v268
    %v295 = vsel %vm277, %v268, %v270
    %v296 = vsel %vm277, %v270, %v272
    %v297 = vsel %vm277, %v272, %v274
    %v298 = vsel %vm277, %v274, %v276
    %v321 = vadd.f32 %v160, %v278
    %v322 = vadd.f32 %v161, %v279
    %v323 = vadd.f32 %v162, %v280
    %v324 = vadd.f32 %v163, %v281
    %v325 = vadd.f32 %v164, %v282
    %v326 = vadd.f32 %v165, %v283
    %v327 = vadd.f32 %v166, %v284
    %v328 = vadd.f32 %v167, %v285
    %v329 = vadd.f32 %v168, %v286
    %v330 = vadd.f32 %v169, %v287
    %v331 = vadd.f32 %v170, %v288
    %v332 = vadd.f32 %v171, %v289
    %v333 = vadd.f32 %v172, %v290
    %v334 = vadd.f32 %v173, %v291
    %v335 = vadd.f32 %v174, %v292
    %v336 = vadd.f32 %v175, %v293
    %v337 = vadd.f32 %v176, %v294
    %v338 = vadd.f32 %v177, %v295
    %v339 = vadd.f32 %v178, %v296
    %v340 = vadd.f32 %v179, %v297
    %v341 = vadd.f32 %v180, %v298
    %v342 = vadd.f32 %v181, %v276
    %s343 = scalar_lea.vmem %s1, 64
    %v344 = vld [vmem:[%s343] sm:$0xff]
    %346 = vset.pattern.permute.xlu0 0
    %347 = vperm.xlu0 %346, %v344
    %v348 = vpop.permute.xlu0 %347
    %v350 = vmul.f32 %v348, %v53
    %v351 = vmul.f32 %v348, %v57
    %v352 = vmul.f32 %v348, %v61
    %v353 = vmul.f32 %v348, %v65
    %v354 = vmul.f32 %v348, %v69
    %v355 = vmul.f32 %v348, %v73
    %v356 = vmul.f32 %v348, %v77
    %v357 = vmul.f32 %v348, %v81
    %v358 = vmul.f32 %v348, %v85
    %v359 = vmul.f32 %v348, %v89
    %v360 = vmul.f32 %v348, %v93
    %v361 = vmul.f32 %v348, %v97
    %v362 = vmul.f32 %v348, %v101
    %v363 = vmul.f32 %v348, %v105
    %v364 = vmul.f32 %v348, %v109
    %v365 = vmul.f32 %v348, %v113
    %v366 = vmul.f32 %v348, %v117
    %v367 = vmul.f32 %v348, %v121
    %v368 = vmul.f32 %v348, %v125
    %v369 = vmul.f32 %v348, %v129
    %v370 = vmul.f32 %v348, %v133
    %v371 = vmul.f32 %v348, %v137
    %394 = vrot.lane.b32.xlu0 %v350, 126
    %v395 = vpop.permute.xlu0 %394
    %396 = vrot.lane.b32.xlu0 %v351, 126
    %v397 = vpop.permute.xlu0 %396
    %398 = vrot.lane.b32.xlu0 %v352, 126
    %v399 = vpop.permute.xlu0 %398
    %400 = vrot.lane.b32.xlu0 %v353, 126
    %v401 = vpop.permute.xlu0 %400
    %402 = vrot.lane.b32.xlu0 %v354, 126
    %v403 = vpop.permute.xlu0 %402
    %404 = vrot.lane.b32.xlu0 %v355, 126
    %v405 = vpop.permute.xlu0 %404
    %406 = vrot.lane.b32.xlu0 %v356, 126
    %v407 = vpop.permute.xlu0 %406
    %408 = vrot.lane.b32.xlu0 %v357, 126
    %v409 = vpop.permute.xlu0 %408
    %410 = vrot.lane.b32.xlu0 %v358, 126
    %v411 = vpop.permute.xlu0 %410
    %412 = vrot.lane.b32.xlu0 %v359, 126
    %v413 = vpop.permute.xlu0 %412
    %414 = vrot.lane.b32.xlu0 %v360, 126
    %v415 = vpop.permute.xlu0 %414
    %416 = vrot.lane.b32.xlu0 %v361, 126
    %v417 = vpop.permute.xlu0 %416
    %418 = vrot.lane.b32.xlu0 %v362, 126
    %v419 = vpop.permute.xlu0 %418
    %420 = vrot.lane.b32.xlu0 %v363, 126
    %v421 = vpop.permute.xlu0 %420
    %422 = vrot.lane.b32.xlu0 %v364, 126
    %v423 = vpop.permute.xlu0 %422
    %424 = vrot.lane.b32.xlu0 %v365, 126
    %v425 = vpop.permute.xlu0 %424
    %426 = vrot.lane.b32.xlu0 %v366, 126
    %v427 = vpop.permute.xlu0 %426
    %428 = vrot.lane.b32.xlu0 %v367, 126
    %v429 = vpop.permute.xlu0 %428
    %430 = vrot.lane.b32.xlu0 %v368, 126
    %v431 = vpop.permute.xlu0 %430
    %432 = vrot.lane.b32.xlu0 %v369, 126
    %v433 = vpop.permute.xlu0 %432
    %434 = vrot.lane.b32.xlu0 %v370, 126
    %v435 = vpop.permute.xlu0 %434
    %436 = vrot.lane.b32.xlu0 %v371, 126
    %v437 = vpop.permute.xlu0 %436
    %vm438 = vcmask 1031168
    %v439 = vsel %vm438, %v395, %v397
    %v440 = vsel %vm438, %v397, %v399
    %v441 = vsel %vm438, %v399, %v401
    %v442 = vsel %vm438, %v401, %v403
    %v443 = vsel %vm438, %v403, %v405
    %v444 = vsel %vm438, %v405, %v407
    %v445 = vsel %vm438, %v407, %v409
    %v446 = vsel %vm438, %v409, %v411
    %v447 = vsel %vm438, %v411, %v413
    %v448 = vsel %vm438, %v413, %v415
    %v449 = vsel %vm438, %v415, %v417
    %v450 = vsel %vm438, %v417, %v419
    %v451 = vsel %vm438, %v419, %v421
    %v452 = vsel %vm438, %v421, %v423
    %v453 = vsel %vm438, %v423, %v425
    %v454 = vsel %vm438, %v425, %v427
    %v455 = vsel %vm438, %v427, %v429
    %v456 = vsel %vm438, %v429, %v431
    %v457 = vsel %vm438, %v431, %v433
    %v458 = vsel %vm438, %v433, %v435
    %v459 = vsel %vm438, %v435, %v437
    %v482 = vadd.f32 %v321, %v439
    %v483 = vadd.f32 %v322, %v440
    %v484 = vadd.f32 %v323, %v441
    %v485 = vadd.f32 %v324, %v442
    %v486 = vadd.f32 %v325, %v443
    %v487 = vadd.f32 %v326, %v444
    %v488 = vadd.f32 %v327, %v445
    %v489 = vadd.f32 %v328, %v446
    %v490 = vadd.f32 %v329, %v447
    %v491 = vadd.f32 %v330, %v448
    %v492 = vadd.f32 %v331, %v449
    %v493 = vadd.f32 %v332, %v450
    %v494 = vadd.f32 %v333, %v451
    %v495 = vadd.f32 %v334, %v452
    %v496 = vadd.f32 %v335, %v453
    %v497 = vadd.f32 %v336, %v454
    %v498 = vadd.f32 %v337, %v455
    %v499 = vadd.f32 %v338, %v456
    %v500 = vadd.f32 %v339, %v457
    %v501 = vadd.f32 %v340, %v458
    %v502 = vadd.f32 %v341, %v459
    %v503 = vadd.f32 %v342, %v437
    %s504 = scalar_lea.vmem %s1, 96
    %v505 = vld [vmem:[%s504] sm:$0xff]
    %507 = vset.pattern.permute.xlu0 0
    %508 = vperm.xlu0 %507, %v505
    %v509 = vpop.permute.xlu0 %508
    %v511 = vmul.f32 %v509, %v53
    %v512 = vmul.f32 %v509, %v57
    %v513 = vmul.f32 %v509, %v61
    %v514 = vmul.f32 %v509, %v65
    %v515 = vmul.f32 %v509, %v69
    %v516 = vmul.f32 %v509, %v73
    %v517 = vmul.f32 %v509, %v77
    %v518 = vmul.f32 %v509, %v81
    %v519 = vmul.f32 %v509, %v85
    %v520 = vmul.f32 %v509, %v89
    %v521 = vmul.f32 %v509, %v93
    %v522 = vmul.f32 %v509, %v97
    %v523 = vmul.f32 %v509, %v101
    %v524 = vmul.f32 %v509, %v105
    %v525 = vmul.f32 %v509, %v109
    %v526 = vmul.f32 %v509, %v113
    %v527 = vmul.f32 %v509, %v117
    %v528 = vmul.f32 %v509, %v121
    %v529 = vmul.f32 %v509, %v125
    %v530 = vmul.f32 %v509, %v129
    %v531 = vmul.f32 %v509, %v133
    %v532 = vmul.f32 %v509, %v137
    %555 = vrot.lane.b32.xlu0 %v511, 86
    %v556 = vpop.permute.xlu0 %555
    %557 = vrot.lane.b32.xlu0 %v512, 86
    %v558 = vpop.permute.xlu0 %557
    %559 = vrot.lane.b32.xlu0 %v513, 86
    %v560 = vpop.permute.xlu0 %559
    %561 = vrot.lane.b32.xlu0 %v514, 86
    %v562 = vpop.permute.xlu0 %561
    %563 = vrot.lane.b32.xlu0 %v515, 86
    %v564 = vpop.permute.xlu0 %563
    %565 = vrot.lane.b32.xlu0 %v516, 86
    %v566 = vpop.permute.xlu0 %565
    %567 = vrot.lane.b32.xlu0 %v517, 86
    %v568 = vpop.permute.xlu0 %567
    %569 = vrot.lane.b32.xlu0 %v518, 86
    %v570 = vpop.permute.xlu0 %569
    %571 = vrot.lane.b32.xlu0 %v519, 86
    %v572 = vpop.permute.xlu0 %571
    %573 = vrot.lane.b32.xlu0 %v520, 86
    %v574 = vpop.permute.xlu0 %573
    %575 = vrot.lane.b32.xlu0 %v521, 86
    %v576 = vpop.permute.xlu0 %575
    %577 = vrot.lane.b32.xlu0 %v522, 86
    %v578 = vpop.permute.xlu0 %577
    %579 = vrot.lane.b32.xlu0 %v523, 86
    %v580 = vpop.permute.xlu0 %579
    %581 = vrot.lane.b32.xlu0 %v524, 86
    %v582 = vpop.permute.xlu0 %581
    %583 = vrot.lane.b32.xlu0 %v525, 86
    %v584 = vpop.permute.xlu0 %583
    %585 = vrot.lane.b32.xlu0 %v526, 86
    %v586 = vpop.permute.xlu0 %585
    %587 = vrot.lane.b32.xlu0 %v527, 86
    %v588 = vpop.permute.xlu0 %587
    %589 = vrot.lane.b32.xlu0 %v528, 86
    %v590 = vpop.permute.xlu0 %589
    %591 = vrot.lane.b32.xlu0 %v529, 86
    %v592 = vpop.permute.xlu0 %591
    %593 = vrot.lane.b32.xlu0 %v530, 86
    %v594 = vpop.permute.xlu0 %593
    %595 = vrot.lane.b32.xlu0 %v531, 86
    %v596 = vpop.permute.xlu0 %595
    %597 = vrot.lane.b32.xlu0 %v532, 86
    %v598 = vpop.permute.xlu0 %597
    %vm599 = vcmask 703488
    %v600 = vsel %vm599, %v556, %v558
    %v601 = vsel %vm599, %v558, %v560
    %v602 = vsel %vm599, %v560, %v562
    %v603 = vsel %vm599, %v562, %v564
    %v604 = vsel %vm599, %v564, %v566
    %v605 = vsel %vm599, %v566, %v568
    %v606 = vsel %vm599, %v568, %v570
    %v607 = vsel %vm599, %v570, %v572
    %v608 = vsel %vm599, %v572, %v574
    %v609 = vsel %vm599, %v574, %v576
    %v610 = vsel %vm599, %v576, %v578
    %v611 = vsel %vm599, %v578, %v580
    %v612 = vsel %vm599, %v580, %v582
    %v613 = vsel %vm599, %v582, %v584
    %v614 = vsel %vm599, %v584, %v586
    %v615 = vsel %vm599, %v586, %v588
    %v616 = vsel %vm599, %v588, %v590
    %v617 = vsel %vm599, %v590, %v592
    %v618 = vsel %vm599, %v592, %v594
    %v619 = vsel %vm599, %v594, %v596
    %v620 = vsel %vm599, %v596, %v598
    %v643 = vadd.f32 %v482, %v600
    %v644 = vadd.f32 %v483, %v601
    %v645 = vadd.f32 %v484, %v602
    %v646 = vadd.f32 %v485, %v603
    %v647 = vadd.f32 %v486, %v604
    %v648 = vadd.f32 %v487, %v605
    %v649 = vadd.f32 %v488, %v606
    %v650 = vadd.f32 %v489, %v607
    %v651 = vadd.f32 %v490, %v608
    %v652 = vadd.f32 %v491, %v609
    %v653 = vadd.f32 %v492, %v610
    %v654 = vadd.f32 %v493, %v611
    %v655 = vadd.f32 %v494, %v612
    %v656 = vadd.f32 %v495, %v613
    %v657 = vadd.f32 %v496, %v614
    %v658 = vadd.f32 %v497, %v615
    %v659 = vadd.f32 %v498, %v616
    %v660 = vadd.f32 %v499, %v617
    %v661 = vadd.f32 %v500, %v618
    %v662 = vadd.f32 %v501, %v619
    %v663 = vadd.f32 %v502, %v620
    %v664 = vadd.f32 %v503, %v598
    %s665 = scalar_lea.vmem %s1, 128
    %v666 = vld [vmem:[%s665] sm:$0xff]
    %668 = vset.pattern.permute.xlu0 0
    %669 = vperm.xlu0 %668, %v666
    %v670 = vpop.permute.xlu0 %669
    %v672 = vmul.f32 %v670, %v53
    %v673 = vmul.f32 %v670, %v57
    %v674 = vmul.f32 %v670, %v61
    %v675 = vmul.f32 %v670, %v65
    %v676 = vmul.f32 %v670, %v69
    %v677 = vmul.f32 %v670, %v73
    %v678 = vmul.f32 %v670, %v77
    %v679 = vmul.f32 %v670, %v81
    %v680 = vmul.f32 %v670, %v85
    %v681 = vmul.f32 %v670, %v89
    %v682 = vmul.f32 %v670, %v93
    %v683 = vmul.f32 %v670, %v97
    %v684 = vmul.f32 %v670, %v101
    %v685 = vmul.f32 %v670, %v105
    %v686 = vmul.f32 %v670, %v109
    %v687 = vmul.f32 %v670, %v113
    %v688 = vmul.f32 %v670, %v117
    %v689 = vmul.f32 %v670, %v121
    %v690 = vmul.f32 %v670, %v125
    %v691 = vmul.f32 %v670, %v129
    %v692 = vmul.f32 %v670, %v133
    %v693 = vmul.f32 %v670, %v137
    %716 = vrot.lane.b32.xlu0 %v672, 85
    %v717 = vpop.permute.xlu0 %716
    %718 = vrot.lane.b32.xlu0 %v673, 85
    %v719 = vpop.permute.xlu0 %718
    %720 = vrot.lane.b32.xlu0 %v674, 85
    %v721 = vpop.permute.xlu0 %720
    %722 = vrot.lane.b32.xlu0 %v675, 85
    %v723 = vpop.permute.xlu0 %722
    %724 = vrot.lane.b32.xlu0 %v676, 85
    %v725 = vpop.permute.xlu0 %724
    %726 = vrot.lane.b32.xlu0 %v677, 85
    %v727 = vpop.permute.xlu0 %726
    %728 = vrot.lane.b32.xlu0 %v678, 85
    %v729 = vpop.permute.xlu0 %728
    %730 = vrot.lane.b32.xlu0 %v679, 85
    %v731 = vpop.permute.xlu0 %730
    %732 = vrot.lane.b32.xlu0 %v680, 85
    %v733 = vpop.permute.xlu0 %732
    %734 = vrot.lane.b32.xlu0 %v681, 85
    %v735 = vpop.permute.xlu0 %734
    %736 = vrot.lane.b32.xlu0 %v682, 85
    %v737 = vpop.permute.xlu0 %736
    %738 = vrot.lane.b32.xlu0 %v683, 85
    %v739 = vpop.permute.xlu0 %738
    %740 = vrot.lane.b32.xlu0 %v684, 85
    %v741 = vpop.permute.xlu0 %740
    %742 = vrot.lane.b32.xlu0 %v685, 85
    %v743 = vpop.permute.xlu0 %742
    %744 = vrot.lane.b32.xlu0 %v686, 85
    %v745 = vpop.permute.xlu0 %744
    %746 = vrot.lane.b32.xlu0 %v687, 85
    %v747 = vpop.permute.xlu0 %746
    %748 = vrot.lane.b32.xlu0 %v688, 85
    %v749 = vpop.permute.xlu0 %748
    %750 = vrot.lane.b32.xlu0 %v689, 85
    %v751 = vpop.permute.xlu0 %750
    %752 = vrot.lane.b32.xlu0 %v690, 85
    %v753 = vpop.permute.xlu0 %752
    %754 = vrot.lane.b32.xlu0 %v691, 85
    %v755 = vpop.permute.xlu0 %754
    %756 = vrot.lane.b32.xlu0 %v692, 85
    %v757 = vpop.permute.xlu0 %756
    %758 = vrot.lane.b32.xlu0 %v693, 85
    %v759 = vpop.permute.xlu0 %758
    %vm760 = vcmask 695296
    %v761 = vsel %vm760, %v717, %v719
    %v762 = vsel %vm760, %v719, %v721
    %v763 = vsel %vm760, %v721, %v723
    %v764 = vsel %vm760, %v723, %v725
    %v765 = vsel %vm760, %v725, %v727
    %v766 = vsel %vm760, %v727, %v729
    %v767 = vsel %vm760, %v729, %v731
    %v768 = vsel %vm760, %v731, %v733
    %v769 = vsel %vm760, %v733, %v735
    %v770 = vsel %vm760, %v735, %v737
    %v771 = vsel %vm760, %v737, %v739
    %v772 = vsel %vm760, %v739, %v741
    %v773 = vsel %vm760, %v741, %v743
    %v774 = vsel %vm760, %v743, %v745
    %v775 = vsel %vm760, %v745, %v747
    %v776 = vsel %vm760, %v747, %v749
    %v777 = vsel %vm760, %v749, %v751
    %v778 = vsel %vm760, %v751, %v753
    %v779 = vsel %vm760, %v753, %v755
    %v780 = vsel %vm760, %v755, %v757
    %v781 = vsel %vm760, %v757, %v759
    %v804 = vadd.f32 %v643, %v761
    %v805 = vadd.f32 %v644, %v762
    %v806 = vadd.f32 %v645, %v763
    %v807 = vadd.f32 %v646, %v764
    %v808 = vadd.f32 %v647, %v765
    %v809 = vadd.f32 %v648, %v766
    %v810 = vadd.f32 %v649, %v767
    %v811 = vadd.f32 %v650, %v768
    %v812 = vadd.f32 %v651, %v769
    %v813 = vadd.f32 %v652, %v770
    %v814 = vadd.f32 %v653, %v771
    %v815 = vadd.f32 %v654, %v772
    %v816 = vadd.f32 %v655, %v773
    %v817 = vadd.f32 %v656, %v774
    %v818 = vadd.f32 %v657, %v775
    %v819 = vadd.f32 %v658, %v776
    %v820 = vadd.f32 %v659, %v777
    %v821 = vadd.f32 %v660, %v778
    %v822 = vadd.f32 %v661, %v779
    %v823 = vadd.f32 %v662, %v780
    %v824 = vadd.f32 %v663, %v781
    %v825 = vadd.f32 %v664, %v759
    %s826 = scalar_lea.vmem %s1, 160
    %v827 = vld [vmem:[%s826] sm:$0xff]
    %829 = vset.pattern.permute.xlu0 0
    %830 = vperm.xlu0 %829, %v827
    %v831 = vpop.permute.xlu0 %830
    %v833 = vmul.f32 %v831, %v53
    %v834 = vmul.f32 %v831, %v57
    %v835 = vmul.f32 %v831, %v61
    %v836 = vmul.f32 %v831, %v65
    %v837 = vmul.f32 %v831, %v69
    %v838 = vmul.f32 %v831, %v73
    %v839 = vmul.f32 %v831, %v77
    %v840 = vmul.f32 %v831, %v81
    %v841 = vmul.f32 %v831, %v85
    %v842 = vmul.f32 %v831, %v89
    %v843 = vmul.f32 %v831, %v93
    %v844 = vmul.f32 %v831, %v97
    %v845 = vmul.f32 %v831, %v101
    %v846 = vmul.f32 %v831, %v105
    %v847 = vmul.f32 %v831, %v109
    %v848 = vmul.f32 %v831, %v113
    %v849 = vmul.f32 %v831, %v117
    %v850 = vmul.f32 %v831, %v121
    %v851 = vmul.f32 %v831, %v125
    %v852 = vmul.f32 %v831, %v129
    %v853 = vmul.f32 %v831, %v133
    %v854 = vmul.f32 %v831, %v137
    %877 = vrot.lane.b32.xlu0 %v833, 84
    %v878 = vpop.permute.xlu0 %877
    %879 = vrot.lane.b32.xlu0 %v834, 84
    %v880 = vpop.permute.xlu0 %879
    %881 = vrot.lane.b32.xlu0 %v835, 84
    %v882 = vpop.permute.xlu0 %881
    %883 = vrot.lane.b32.xlu0 %v836, 84
    %v884 = vpop.permute.xlu0 %883
    %885 = vrot.lane.b32.xlu0 %v837, 84
    %v886 = vpop.permute.xlu0 %885
    %887 = vrot.lane.b32.xlu0 %v838, 84
    %v888 = vpop.permute.xlu0 %887
    %889 = vrot.lane.b32.xlu0 %v839, 84
    %v890 = vpop.permute.xlu0 %889
    %891 = vrot.lane.b32.xlu0 %v840, 84
    %v892 = vpop.permute.xlu0 %891
    %893 = vrot.lane.b32.xlu0 %v841, 84
    %v894 = vpop.permute.xlu0 %893
    %895 = vrot.lane.b32.xlu0 %v842, 84
    %v896 = vpop.permute.xlu0 %895
    %897 = vrot.lane.b32.xlu0 %v843, 84
    %v898 = vpop.permute.xlu0 %897
    %899 = vrot.lane.b32.xlu0 %v844, 84
    %v900 = vpop.permute.xlu0 %899
    %901 = vrot.lane.b32.xlu0 %v845, 84
    %v902 = vpop.permute.xlu0 %901
    %903 = vrot.lane.b32.xlu0 %v846, 84
    %v904 = vpop.permute.xlu0 %903
    %905 = vrot.lane.b32.xlu0 %v847, 84
    %v906 = vpop.permute.xlu0 %905
    %907 = vrot.lane.b32.xlu0 %v848, 84
    %v908 = vpop.permute.xlu0 %907
    %909 = vrot.lane.b32.xlu0 %v849, 84
    %v910 = vpop.permute.xlu0 %909
    %911 = vrot.lane.b32.xlu0 %v850, 84
    %v912 = vpop.permute.xlu0 %911
    %913 = vrot.lane.b32.xlu0 %v851, 84
    %v914 = vpop.permute.xlu0 %913
    %915 = vrot.lane.b32.xlu0 %v852, 84
    %v916 = vpop.permute.xlu0 %915
    %917 = vrot.lane.b32.xlu0 %v853, 84
    %v918 = vpop.permute.xlu0 %917
    %919 = vrot.lane.b32.xlu0 %v854, 84
    %v920 = vpop.permute.xlu0 %919
    %v921 = vsel %vm34, %v878, %v880
    %v922 = vsel %vm34, %v880, %v882
    %v923 = vsel %vm34, %v882, %v884
    %v924 = vsel %vm34, %v884, %v886
    %v925 = vsel %vm34, %v886, %v888
    %v926 = vsel %vm34, %v888, %v890
    %v927 = vsel %vm34, %v890, %v892
    %v928 = vsel %vm34, %v892, %v894
    %v929 = vsel %vm34, %v894, %v896
    %v930 = vsel %vm34, %v896, %v898
    %v931 = vsel %vm34, %v898, %v900
    %v932 = vsel %vm34, %v900, %v902
    %v933 = vsel %vm34, %v902, %v904
    %v934 = vsel %vm34, %v904, %v906
    %v935 = vsel %vm34, %v906, %v908
    %v936 = vsel %vm34, %v908, %v910
    %v937 = vsel %vm34, %v910, %v912
    %v938 = vsel %vm34, %v912, %v914
    %v939 = vsel %vm34, %v914, %v916
    %v940 = vsel %vm34, %v916, %v918
    %v941 = vsel %vm34, %v918, %v920
    %v964 = vadd.f32 %v804, %v921
    %v965 = vadd.f32 %v805, %v922
    %v966 = vadd.f32 %v806, %v923
    %v967 = vadd.f32 %v807, %v924
    %v968 = vadd.f32 %v808, %v925
    %v969 = vadd.f32 %v809, %v926
    %v970 = vadd.f32 %v810, %v927
    %v971 = vadd.f32 %v811, %v928
    %v972 = vadd.f32 %v812, %v929
    %v973 = vadd.f32 %v813, %v930
    %v974 = vadd.f32 %v814, %v931
    %v975 = vadd.f32 %v815, %v932
    %v976 = vadd.f32 %v816, %v933
    %v977 = vadd.f32 %v817, %v934
    %v978 = vadd.f32 %v818, %v935
    %v979 = vadd.f32 %v819, %v936
    %v980 = vadd.f32 %v820, %v937
    %v981 = vadd.f32 %v821, %v938
    %v982 = vadd.f32 %v822, %v939
    %v983 = vadd.f32 %v823, %v940
    %v984 = vadd.f32 %v824, %v941
    %v985 = vadd.f32 %v825, %v920
    %v986 = vld [vmem:[%s0] sm:$0xff]
    %v987 = vld [vmem:[%s0 + $0x8] sm:$0xff]
    %v988 = vld [vmem:[%s0 + $0x10] sm:$0x7f]
    %s989 = scalar_lea.vmem %s1, 192
    %v990 = vld [vmem:[%s989] sm:$0xff]
    %992 = vset.pattern.permute.xlu0 0
    %993 = vperm.xlu0 %992, %v990
    %v994 = vpop.permute.xlu0 %993
    %v999 = vlaneseq
    %v1000 = vshrl.u32 %v999, 7
    %v1001 = vsub.s32 0, %v1000
    %v1002 = vrot.slane %v986, %v1001
    %v1003 = vlaneseq
    %v1004 = vshrl.u32 %v1003, 7
    %v1005 = vsub.s32 1, %v1004
    %v1006 = vrot.slane %v986, %v1005
    %v1007 = vlaneseq
    %v1008 = vshrl.u32 %v1007, 7
    %v1009 = vsub.s32 2, %v1008
    %v1010 = vrot.slane %v986, %v1009
    %v1011 = vlaneseq
    %v1012 = vshrl.u32 %v1011, 7
    %v1013 = vsub.s32 3, %v1012
    %v1014 = vrot.slane %v986, %v1013
    %v1015 = vlaneseq
    %v1016 = vshrl.u32 %v1015, 7
    %v1017 = vsub.s32 4, %v1016
    %v1018 = vrot.slane %v986, %v1017
    %v1019 = vlaneseq
    %v1020 = vshrl.u32 %v1019, 7
    %v1021 = vsub.s32 5, %v1020
    %v1022 = vrot.slane %v986, %v1021
    %v1023 = vlaneseq
    %v1024 = vshrl.u32 %v1023, 7
    %v1025 = vsub.s32 6, %v1024
    %v1026 = vrot.slane %v986, %v1025
    %v1027 = vlaneseq
    %v1028 = vshrl.u32 %v1027, 7
    %v1029 = vsub.s32 7, %v1028
    %v1030 = vrot.slane %v986, %v1029
    %v1031 = vlaneseq
    %v1032 = vshrl.u32 %v1031, 7
    %v1033 = vsub.s32 0, %v1032
    %v1034 = vrot.slane %v987, %v1033
    %v1035 = vlaneseq
    %v1036 = vshrl.u32 %v1035, 7
    %v1037 = vsub.s32 1, %v1036
    %v1038 = vrot.slane %v987, %v1037
    %v1039 = vlaneseq
    %v1040 = vshrl.u32 %v1039, 7
    %v1041 = vsub.s32 2, %v1040
    %v1042 = vrot.slane %v987, %v1041
    %v1043 = vlaneseq
    %v1044 = vshrl.u32 %v1043, 7
    %v1045 = vsub.s32 3, %v1044
    %v1046 = vrot.slane %v987, %v1045
    %v1047 = vlaneseq
    %v1048 = vshrl.u32 %v1047, 7
    %v1049 = vsub.s32 4, %v1048
    %v1050 = vrot.slane %v987, %v1049
    %v1051 = vlaneseq
    %v1052 = vshrl.u32 %v1051, 7
    %v1053 = vsub.s32 5, %v1052
    %v1054 = vrot.slane %v987, %v1053
    %v1055 = vlaneseq
    %v1056 = vshrl.u32 %v1055, 7
    %v1057 = vsub.s32 6, %v1056
    %v1058 = vrot.slane %v987, %v1057
    %v1059 = vlaneseq
    %v1060 = vshrl.u32 %v1059, 7
    %v1061 = vsub.s32 7, %v1060
    %v1062 = vrot.slane %v987, %v1061
    %v1063 = vlaneseq
    %v1064 = vshrl.u32 %v1063, 7
    %v1065 = vsub.s32 0, %v1064
    %v1066 = vrot.slane %v988, %v1065
    %v1067 = vlaneseq
    %v1068 = vshrl.u32 %v1067, 7
    %v1069 = vsub.s32 1, %v1068
    %v1070 = vrot.slane %v988, %v1069
    %v1071 = vlaneseq
    %v1072 = vshrl.u32 %v1071, 7
    %v1073 = vsub.s32 2, %v1072
    %v1074 = vrot.slane %v988, %v1073
    %v1075 = vlaneseq
    %v1076 = vshrl.u32 %v1075, 7
    %v1077 = vsub.s32 3, %v1076
    %v1078 = vrot.slane %v988, %v1077
    %v1079 = vlaneseq
    %v1080 = vshrl.u32 %v1079, 7
    %v1081 = vsub.s32 4, %v1080
    %v1082 = vrot.slane %v988, %v1081
    %v1083 = vlaneseq
    %v1084 = vshrl.u32 %v1083, 7
    %v1085 = vsub.s32 5, %v1084
    %v1086 = vrot.slane %v988, %v1085
    %v1087 = vlaneseq
    %v1088 = vshrl.u32 %v1087, 7
    %v1089 = vsub.s32 6, %v1088
    %v1090 = vrot.slane %v988, %v1089
    %v1114 = vmul.f32 %v994, %v1002
    %v1115 = vmul.f32 %v994, %v1006
    %v1116 = vmul.f32 %v994, %v1010
    %v1117 = vmul.f32 %v994, %v1014
    %v1118 = vmul.f32 %v994, %v1018
    %v1119 = vmul.f32 %v994, %v1022
    %v1120 = vmul.f32 %v994, %v1026
    %v1121 = vmul.f32 %v994, %v1030
    %v1122 = vmul.f32 %v994, %v1034
    %v1123 = vmul.f32 %v994, %v1038
    %v1124 = vmul.f32 %v994, %v1042
    %v1125 = vmul.f32 %v994, %v1046
    %v1126 = vmul.f32 %v994, %v1050
    %v1127 = vmul.f32 %v994, %v1054
    %v1128 = vmul.f32 %v994, %v1058
    %v1129 = vmul.f32 %v994, %v1062
    %v1130 = vmul.f32 %v994, %v1066
    %v1131 = vmul.f32 %v994, %v1070
    %v1132 = vmul.f32 %v994, %v1074
    %v1133 = vmul.f32 %v994, %v1078
    %v1134 = vmul.f32 %v994, %v1082
    %v1135 = vmul.f32 %v994, %v1086
    %v1136 = vmul.f32 %v994, %v1090
    %1160 = vrot.lane.b32.xlu0 %v1114, 44
    %v1161 = vpop.permute.xlu0 %1160
    %1162 = vrot.lane.b32.xlu0 %v1115, 44
    %v1163 = vpop.permute.xlu0 %1162
    %1164 = vrot.lane.b32.xlu0 %v1116, 44
    %v1165 = vpop.permute.xlu0 %1164
    %1166 = vrot.lane.b32.xlu0 %v1117, 44
    %v1167 = vpop.permute.xlu0 %1166
    %1168 = vrot.lane.b32.xlu0 %v1118, 44
    %v1169 = vpop.permute.xlu0 %1168
    %1170 = vrot.lane.b32.xlu0 %v1119, 44
    %v1171 = vpop.permute.xlu0 %1170
    %1172 = vrot.lane.b32.xlu0 %v1120, 44
    %v1173 = vpop.permute.xlu0 %1172
    %1174 = vrot.lane.b32.xlu0 %v1121, 44
    %v1175 = vpop.permute.xlu0 %1174
    %1176 = vrot.lane.b32.xlu0 %v1122, 44
    %v1177 = vpop.permute.xlu0 %1176
    %1178 = vrot.lane.b32.xlu0 %v1123, 44
    %v1179 = vpop.permute.xlu0 %1178
    %1180 = vrot.lane.b32.xlu0 %v1124, 44
    %v1181 = vpop.permute.xlu0 %1180
    %1182 = vrot.lane.b32.xlu0 %v1125, 44
    %v1183 = vpop.permute.xlu0 %1182
    %1184 = vrot.lane.b32.xlu0 %v1126, 44
    %v1185 = vpop.permute.xlu0 %1184
    %1186 = vrot.lane.b32.xlu0 %v1127, 44
    %v1187 = vpop.permute.xlu0 %1186
    %1188 = vrot.lane.b32.xlu0 %v1128, 44
    %v1189 = vpop.permute.xlu0 %1188
    %1190 = vrot.lane.b32.xlu0 %v1129, 44
    %v1191 = vpop.permute.xlu0 %1190
    %1192 = vrot.lane.b32.xlu0 %v1130, 44
    %v1193 = vpop.permute.xlu0 %1192
    %1194 = vrot.lane.b32.xlu0 %v1131, 44
    %v1195 = vpop.permute.xlu0 %1194
    %1196 = vrot.lane.b32.xlu0 %v1132, 44
    %v1197 = vpop.permute.xlu0 %1196
    %1198 = vrot.lane.b32.xlu0 %v1133, 44
    %v1199 = vpop.permute.xlu0 %1198
    %1200 = vrot.lane.b32.xlu0 %v1134, 44
    %v1201 = vpop.permute.xlu0 %1200
    %1202 = vrot.lane.b32.xlu0 %v1135, 44
    %v1203 = vpop.permute.xlu0 %1202
    %1204 = vrot.lane.b32.xlu0 %v1136, 44
    %v1205 = vpop.permute.xlu0 %1204
    %vm1206 = vcmask 359424
    %v1207 = vsel %vm1206, %v1161, %v1163
    %v1208 = vsel %vm1206, %v1163, %v1165
    %v1209 = vsel %vm1206, %v1165, %v1167
    %v1210 = vsel %vm1206, %v1167, %v1169
    %v1211 = vsel %vm1206, %v1169, %v1171
    %v1212 = vsel %vm1206, %v1171, %v1173
    %v1213 = vsel %vm1206, %v1173, %v1175
    %v1214 = vsel %vm1206, %v1175, %v1177
    %v1215 = vsel %vm1206, %v1177, %v1179
    %v1216 = vsel %vm1206, %v1179, %v1181
    %v1217 = vsel %vm1206, %v1181, %v1183
    %v1218 = vsel %vm1206, %v1183, %v1185
    %v1219 = vsel %vm1206, %v1185, %v1187
    %v1220 = vsel %vm1206, %v1187, %v1189
    %v1221 = vsel %vm1206, %v1189, %v1191
    %v1222 = vsel %vm1206, %v1191, %v1193
    %v1223 = vsel %vm1206, %v1193, %v1195
    %v1224 = vsel %vm1206, %v1195, %v1197
    %v1225 = vsel %vm1206, %v1197, %v1199
    %v1226 = vsel %vm1206, %v1199, %v1201
    %v1227 = vsel %vm1206, %v1201, %v1203
    %v1228 = vsel %vm1206, %v1203, %v1205
    %v1251 = vadd.f32 %v964, %v1207
    %v1252 = vadd.f32 %v965, %v1208
    %v1253 = vadd.f32 %v966, %v1209
    %v1254 = vadd.f32 %v967, %v1210
    %v1255 = vadd.f32 %v968, %v1211
    %v1256 = vadd.f32 %v969, %v1212
    %v1257 = vadd.f32 %v970, %v1213
    %v1258 = vadd.f32 %v971, %v1214
    %v1259 = vadd.f32 %v972, %v1215
    %v1260 = vadd.f32 %v973, %v1216
    %v1261 = vadd.f32 %v974, %v1217
    %v1262 = vadd.f32 %v975, %v1218
    %v1263 = vadd.f32 %v976, %v1219
    %v1264 = vadd.f32 %v977, %v1220
    %v1265 = vadd.f32 %v978, %v1221
    %v1266 = vadd.f32 %v979, %v1222
    %v1267 = vadd.f32 %v980, %v1223
    %v1268 = vadd.f32 %v981, %v1224
    %v1269 = vadd.f32 %v982, %v1225
    %v1270 = vadd.f32 %v983, %v1226
    %v1271 = vadd.f32 %v984, %v1227
    %v1272 = vadd.f32 %v985, %v1228
    %s1273 = scalar_lea.vmem %s1, 224
    %v1274 = vld [vmem:[%s1273] sm:$0xff]
    %1276 = vset.pattern.permute.xlu0 0
    %1277 = vperm.xlu0 %1276, %v1274
    %v1278 = vpop.permute.xlu0 %1277
    %v1280 = vmul.f32 %v1278, %v1002
    %v1281 = vmul.f32 %v1278, %v1006
    %v1282 = vmul.f32 %v1278, %v1010
    %v1283 = vmul.f32 %v1278, %v1014
    %v1284 = vmul.f32 %v1278, %v1018
    %v1285 = vmul.f32 %v1278, %v1022
    %v1286 = vmul.f32 %v1278, %v1026
    %v1287 = vmul.f32 %v1278, %v1030
    %v1288 = vmul.f32 %v1278, %v1034
    %v1289 = vmul.f32 %v1278, %v1038
    %v1290 = vmul.f32 %v1278, %v1042
    %v1291 = vmul.f32 %v1278, %v1046
    %v1292 = vmul.f32 %v1278, %v1050
    %v1293 = vmul.f32 %v1278, %v1054
    %v1294 = vmul.f32 %v1278, %v1058
    %v1295 = vmul.f32 %v1278, %v1062
    %v1296 = vmul.f32 %v1278, %v1066
    %v1297 = vmul.f32 %v1278, %v1070
    %v1298 = vmul.f32 %v1278, %v1074
    %v1299 = vmul.f32 %v1278, %v1078
    %v1300 = vmul.f32 %v1278, %v1082
    %v1301 = vmul.f32 %v1278, %v1086
    %v1302 = vmul.f32 %v1278, %v1090
    %1326 = vrot.lane.b32.xlu0 %v1280, 43
    %v1327 = vpop.permute.xlu0 %1326
    %1328 = vrot.lane.b32.xlu0 %v1281, 43
    %v1329 = vpop.permute.xlu0 %1328
    %1330 = vrot.lane.b32.xlu0 %v1282, 43
    %v1331 = vpop.permute.xlu0 %1330
    %1332 = vrot.lane.b32.xlu0 %v1283, 43
    %v1333 = vpop.permute.xlu0 %1332
    %1334 = vrot.lane.b32.xlu0 %v1284, 43
    %v1335 = vpop.permute.xlu0 %1334
    %1336 = vrot.lane.b32.xlu0 %v1285, 43
    %v1337 = vpop.permute.xlu0 %1336
    %1338 = vrot.lane.b32.xlu0 %v1286, 43
    %v1339 = vpop.permute.xlu0 %1338
    %1340 = vrot.lane.b32.xlu0 %v1287, 43
    %v1341 = vpop.permute.xlu0 %1340
    %1342 = vrot.lane.b32.xlu0 %v1288, 43
    %v1343 = vpop.permute.xlu0 %1342
    %1344 = vrot.lane.b32.xlu0 %v1289, 43
    %v1345 = vpop.permute.xlu0 %1344
    %1346 = vrot.lane.b32.xlu0 %v1290, 43
    %v1347 = vpop.permute.xlu0 %1346
    %1348 = vrot.lane.b32.xlu0 %v1291, 43
    %v1349 = vpop.permute.xlu0 %1348
    %1350 = vrot.lane.b32.xlu0 %v1292, 43
    %v1351 = vpop.permute.xlu0 %1350
    %1352 = vrot.lane.b32.xlu0 %v1293, 43
    %v1353 = vpop.permute.xlu0 %1352
    %1354 = vrot.lane.b32.xlu0 %v1294, 43
    %v1355 = vpop.permute.xlu0 %1354
    %1356 = vrot.lane.b32.xlu0 %v1295, 43
    %v1357 = vpop.permute.xlu0 %1356
    %1358 = vrot.lane.b32.xlu0 %v1296, 43
    %v1359 = vpop.permute.xlu0 %1358
    %1360 = vrot.lane.b32.xlu0 %v1297, 43
    %v1361 = vpop.permute.xlu0 %1360
    %1362 = vrot.lane.b32.xlu0 %v1298, 43
    %v1363 = vpop.permute.xlu0 %1362
    %1364 = vrot.lane.b32.xlu0 %v1299, 43
    %v1365 = vpop.permute.xlu0 %1364
    %1366 = vrot.lane.b32.xlu0 %v1300, 43
    %v1367 = vpop.permute.xlu0 %1366
    %1368 = vrot.lane.b32.xlu0 %v1301, 43
    %v1369 = vpop.permute.xlu0 %1368
    %1370 = vrot.lane.b32.xlu0 %v1302, 43
    %v1371 = vpop.permute.xlu0 %1370
    %vm1372 = vcmask 351232
    %v1373 = vsel %vm1372, %v1327, %v1329
    %v1374 = vsel %vm1372, %v1329, %v1331
    %v1375 = vsel %vm1372, %v1331, %v1333
    %v1376 = vsel %vm1372, %v1333, %v1335
    %v1377 = vsel %vm1372, %v1335, %v1337
    %v1378 = vsel %vm1372, %v1337, %v1339
    %v1379 = vsel %vm1372, %v1339, %v1341
    %v1380 = vsel %vm1372, %v1341, %v1343
    %v1381 = vsel %vm1372, %v1343, %v1345
    %v1382 = vsel %vm1372, %v1345, %v1347
    %v1383 = vsel %vm1372, %v1347, %v1349
    %v1384 = vsel %vm1372, %v1349, %v1351
    %v1385 = vsel %vm1372, %v1351, %v1353
    %v1386 = vsel %vm1372, %v1353, %v1355
    %v1387 = vsel %vm1372, %v1355, %v1357
    %v1388 = vsel %vm1372, %v1357, %v1359
    %v1389 = vsel %vm1372, %v1359, %v1361
    %v1390 = vsel %vm1372, %v1361, %v1363
    %v1391 = vsel %vm1372, %v1363, %v1365
    %v1392 = vsel %vm1372, %v1365, %v1367
    %v1393 = vsel %vm1372, %v1367, %v1369
    %v1394 = vsel %vm1372, %v1369, %v1371
    %v1417 = vadd.f32 %v1251, %v1373
    %v1418 = vadd.f32 %v1252, %v1374
    %v1419 = vadd.f32 %v1253, %v1375
    %v1420 = vadd.f32 %v1254, %v1376
    %v1421 = vadd.f32 %v1255, %v1377
    %v1422 = vadd.f32 %v1256, %v1378
    %v1423 = vadd.f32 %v1257, %v1379
    %v1424 = vadd.f32 %v1258, %v1380
    %v1425 = vadd.f32 %v1259, %v1381
    %v1426 = vadd.f32 %v1260, %v1382
    %v1427 = vadd.f32 %v1261, %v1383
    %v1428 = vadd.f32 %v1262, %v1384
    %v1429 = vadd.f32 %v1263, %v1385
    %v1430 = vadd.f32 %v1264, %v1386
    %v1431 = vadd.f32 %v1265, %v1387
    %v1432 = vadd.f32 %v1266, %v1388
    %v1433 = vadd.f32 %v1267, %v1389
    %v1434 = vadd.f32 %v1268, %v1390
    %v1435 = vadd.f32 %v1269, %v1391
    %v1436 = vadd.f32 %v1270, %v1392
    %v1437 = vadd.f32 %v1271, %v1393
    %v1438 = vadd.f32 %v1272, %v1394
    %s1439 = scalar_lea.vmem %s1, 256
    %v1440 = vld [vmem:[%s1439] sm:$0xff]
    %1442 = vset.pattern.permute.xlu0 0
    %1443 = vperm.xlu0 %1442, %v1440
    %v1444 = vpop.permute.xlu0 %1443
    %v1446 = vmul.f32 %v1444, %v1002
    %v1447 = vmul.f32 %v1444, %v1006
    %v1448 = vmul.f32 %v1444, %v1010
    %v1449 = vmul.f32 %v1444, %v1014
    %v1450 = vmul.f32 %v1444, %v1018
    %v1451 = vmul.f32 %v1444, %v1022
    %v1452 = vmul.f32 %v1444, %v1026
    %v1453 = vmul.f32 %v1444, %v1030
    %v1454 = vmul.f32 %v1444, %v1034
    %v1455 = vmul.f32 %v1444, %v1038
    %v1456 = vmul.f32 %v1444, %v1042
    %v1457 = vmul.f32 %v1444, %v1046
    %v1458 = vmul.f32 %v1444, %v1050
    %v1459 = vmul.f32 %v1444, %v1054
    %v1460 = vmul.f32 %v1444, %v1058
    %v1461 = vmul.f32 %v1444, %v1062
    %v1462 = vmul.f32 %v1444, %v1066
    %v1463 = vmul.f32 %v1444, %v1070
    %v1464 = vmul.f32 %v1444, %v1074
    %v1465 = vmul.f32 %v1444, %v1078
    %v1466 = vmul.f32 %v1444, %v1082
    %v1467 = vmul.f32 %v1444, %v1086
    %v1468 = vmul.f32 %v1444, %v1090
    %1492 = vrot.lane.b32.xlu0 %v1446, 42
    %v1493 = vpop.permute.xlu0 %1492
    %1494 = vrot.lane.b32.xlu0 %v1447, 42
    %v1495 = vpop.permute.xlu0 %1494
    %1496 = vrot.lane.b32.xlu0 %v1448, 42
    %v1497 = vpop.permute.xlu0 %1496
    %1498 = vrot.lane.b32.xlu0 %v1449, 42
    %v1499 = vpop.permute.xlu0 %1498
    %1500 = vrot.lane.b32.xlu0 %v1450, 42
    %v1501 = vpop.permute.xlu0 %1500
    %1502 = vrot.lane.b32.xlu0 %v1451, 42
    %v1503 = vpop.permute.xlu0 %1502
    %1504 = vrot.lane.b32.xlu0 %v1452, 42
    %v1505 = vpop.permute.xlu0 %1504
    %1506 = vrot.lane.b32.xlu0 %v1453, 42
    %v1507 = vpop.permute.xlu0 %1506
    %1508 = vrot.lane.b32.xlu0 %v1454, 42
    %v1509 = vpop.permute.xlu0 %1508
    %1510 = vrot.lane.b32.xlu0 %v1455, 42
    %v1511 = vpop.permute.xlu0 %1510
    %1512 = vrot.lane.b32.xlu0 %v1456, 42
    %v1513 = vpop.permute.xlu0 %1512
    %1514 = vrot.lane.b32.xlu0 %v1457, 42
    %v1515 = vpop.permute.xlu0 %1514
    %1516 = vrot.lane.b32.xlu0 %v1458, 42
    %v1517 = vpop.permute.xlu0 %1516
    %1518 = vrot.lane.b32.xlu0 %v1459, 42
    %v1519 = vpop.permute.xlu0 %1518
    %1520 = vrot.lane.b32.xlu0 %v1460, 42
    %v1521 = vpop.permute.xlu0 %1520
    %1522 = vrot.lane.b32.xlu0 %v1461, 42
    %v1523 = vpop.permute.xlu0 %1522
    %1524 = vrot.lane.b32.xlu0 %v1462, 42
    %v1525 = vpop.permute.xlu0 %1524
    %1526 = vrot.lane.b32.xlu0 %v1463, 42
    %v1527 = vpop.permute.xlu0 %1526
    %1528 = vrot.lane.b32.xlu0 %v1464, 42
    %v1529 = vpop.permute.xlu0 %1528
    %1530 = vrot.lane.b32.xlu0 %v1465, 42
    %v1531 = vpop.permute.xlu0 %1530
    %1532 = vrot.lane.b32.xlu0 %v1466, 42
    %v1533 = vpop.permute.xlu0 %1532
    %1534 = vrot.lane.b32.xlu0 %v1467, 42
    %v1535 = vpop.permute.xlu0 %1534
    %1536 = vrot.lane.b32.xlu0 %v1468, 42
    %v1537 = vpop.permute.xlu0 %1536
    %vm1538 = vcmask 343040
    %v1539 = vsel %vm1538, %v1493, %v1495
    %v1540 = vsel %vm1538, %v1495, %v1497
    %v1541 = vsel %vm1538, %v1497, %v1499
    %v1542 = vsel %vm1538, %v1499, %v1501
    %v1543 = vsel %vm1538, %v1501, %v1503
    %v1544 = vsel %vm1538, %v1503, %v1505
    %v1545 = vsel %vm1538, %v1505, %v1507
    %v1546 = vsel %vm1538, %v1507, %v1509
    %v1547 = vsel %vm1538, %v1509, %v1511
    %v1548 = vsel %vm1538, %v1511, %v1513
    %v1549 = vsel %vm1538, %v1513, %v1515
    %v1550 = vsel %vm1538, %v1515, %v1517
    %v1551 = vsel %vm1538, %v1517, %v1519
    %v1552 = vsel %vm1538, %v1519, %v1521
    %v1553 = vsel %vm1538, %v1521, %v1523
    %v1554 = vsel %vm1538, %v1523, %v1525
    %v1555 = vsel %vm1538, %v1525, %v1527
    %v1556 = vsel %vm1538, %v1527, %v1529
    %v1557 = vsel %vm1538, %v1529, %v1531
    %v1558 = vsel %vm1538, %v1531, %v1533
    %v1559 = vsel %vm1538, %v1533, %v1535
    %v1560 = vsel %vm1538, %v1535, %v1537
    %v1583 = vadd.f32 %v1417, %v1539
    %v1584 = vadd.f32 %v1418, %v1540
    %v1585 = vadd.f32 %v1419, %v1541
    %v1586 = vadd.f32 %v1420, %v1542
    %v1587 = vadd.f32 %v1421, %v1543
    %v1588 = vadd.f32 %v1422, %v1544
    %v1589 = vadd.f32 %v1423, %v1545
    %v1590 = vadd.f32 %v1424, %v1546
    %v1591 = vadd.f32 %v1425, %v1547
    %v1592 = vadd.f32 %v1426, %v1548
    %v1593 = vadd.f32 %v1427, %v1549
    %v1594 = vadd.f32 %v1428, %v1550
    %v1595 = vadd.f32 %v1429, %v1551
    %v1596 = vadd.f32 %v1430, %v1552
    %v1597 = vadd.f32 %v1431, %v1553
    %v1598 = vadd.f32 %v1432, %v1554
    %v1599 = vadd.f32 %v1433, %v1555
    %v1600 = vadd.f32 %v1434, %v1556
    %v1601 = vadd.f32 %v1435, %v1557
    %v1602 = vadd.f32 %v1436, %v1558
    %v1603 = vadd.f32 %v1437, %v1559
    %v1604 = vadd.f32 %v1438, %v1560
    %1606 = vset.pattern.permute.xlu0 0
    %1607 = vperm.xlu0 %1606, %v37
    %v1608 = vpop.permute.xlu0 %1607
    %v1610 = vadd.f32 %v1583, %v1608
    %v1611 = vadd.f32 %v1584, %v1608
    %v1612 = vadd.f32 %v1585, %v1608
    %v1613 = vadd.f32 %v1586, %v1608
    %v1614 = vadd.f32 %v1587, %v1608
    %v1615 = vadd.f32 %v1588, %v1608
    %v1616 = vadd.f32 %v1589, %v1608
    %v1617 = vadd.f32 %v1590, %v1608
    %v1618 = vadd.f32 %v1591, %v1608
    %v1619 = vadd.f32 %v1592, %v1608
    %v1620 = vadd.f32 %v1593, %v1608
    %v1621 = vadd.f32 %v1594, %v1608
    %v1622 = vadd.f32 %v1595, %v1608
    %v1623 = vadd.f32 %v1596, %v1608
    %v1624 = vadd.f32 %v1597, %v1608
    %v1625 = vadd.f32 %v1598, %v1608
    %v1626 = vadd.f32 %v1599, %v1608
    %v1627 = vadd.f32 %v1600, %v1608
    %v1628 = vadd.f32 %v1601, %v1608
    %v1629 = vadd.f32 %v1602, %v1608
    %v1630 = vadd.f32 %v1603, %v1608
    %v1631 = vadd.f32 %v1604, %v1608
    %v1632 = vmax.f32 %v1610, 0.0
    %v1633 = vmax.f32 %v1611, 0.0
    %v1634 = vmax.f32 %v1612, 0.0
    %v1635 = vmax.f32 %v1613, 0.0
    %v1636 = vmax.f32 %v1614, 0.0
    %v1637 = vmax.f32 %v1615, 0.0
    %v1638 = vmax.f32 %v1616, 0.0
    %v1639 = vmax.f32 %v1617, 0.0
    %v1640 = vmax.f32 %v1618, 0.0
    %v1641 = vmax.f32 %v1619, 0.0
    %v1642 = vmax.f32 %v1620, 0.0
    %v1643 = vmax.f32 %v1621, 0.0
    %v1644 = vmax.f32 %v1622, 0.0
    %v1645 = vmax.f32 %v1623, 0.0
    %v1646 = vmax.f32 %v1624, 0.0
    %v1647 = vmax.f32 %v1625, 0.0
    %v1648 = vmax.f32 %v1626, 0.0
    %v1649 = vmax.f32 %v1627, 0.0
    %v1650 = vmax.f32 %v1628, 0.0
    %v1651 = vmax.f32 %v1629, 0.0
    %v1652 = vmax.f32 %v1630, 0.0
    %v1653 = vmax.f32 %v1631, 0.0
    %1676 = vrot.lane.b32.xlu0 %v1632, 86
    %v1677 = vpop.permute.xlu0 %1676
    %1678 = vrot.lane.b32.xlu0 %v1633, 86
    %v1679 = vpop.permute.xlu0 %1678
    %1680 = vrot.lane.b32.xlu0 %v1634, 86
    %v1681 = vpop.permute.xlu0 %1680
    %1682 = vrot.lane.b32.xlu0 %v1635, 86
    %v1683 = vpop.permute.xlu0 %1682
    %1684 = vrot.lane.b32.xlu0 %v1636, 86
    %v1685 = vpop.permute.xlu0 %1684
    %1686 = vrot.lane.b32.xlu0 %v1637, 86
    %v1687 = vpop.permute.xlu0 %1686
    %1688 = vrot.lane.b32.xlu0 %v1638, 86
    %v1689 = vpop.permute.xlu0 %1688
    %1690 = vrot.lane.b32.xlu0 %v1639, 86
    %v1691 = vpop.permute.xlu0 %1690
    %1692 = vrot.lane.b32.xlu0 %v1640, 86
    %v1693 = vpop.permute.xlu0 %1692
    %1694 = vrot.lane.b32.xlu0 %v1641, 86
    %v1695 = vpop.permute.xlu0 %1694
    %1696 = vrot.lane.b32.xlu0 %v1642, 86
    %v1697 = vpop.permute.xlu0 %1696
    %1698 = vrot.lane.b32.xlu0 %v1643, 86
    %v1699 = vpop.permute.xlu0 %1698
    %1700 = vrot.lane.b32.xlu0 %v1644, 86
    %v1701 = vpop.permute.xlu0 %1700
    %1702 = vrot.lane.b32.xlu0 %v1645, 86
    %v1703 = vpop.permute.xlu0 %1702
    %1704 = vrot.lane.b32.xlu0 %v1646, 86
    %v1705 = vpop.permute.xlu0 %1704
    %1706 = vrot.lane.b32.xlu0 %v1647, 86
    %v1707 = vpop.permute.xlu0 %1706
    %1708 = vrot.lane.b32.xlu0 %v1648, 86
    %v1709 = vpop.permute.xlu0 %1708
    %1710 = vrot.lane.b32.xlu0 %v1649, 86
    %v1711 = vpop.permute.xlu0 %1710
    %1712 = vrot.lane.b32.xlu0 %v1650, 86
    %v1713 = vpop.permute.xlu0 %1712
    %1714 = vrot.lane.b32.xlu0 %v1651, 86
    %v1715 = vpop.permute.xlu0 %1714
    %1716 = vrot.lane.b32.xlu0 %v1652, 86
    %v1717 = vpop.permute.xlu0 %1716
    %1718 = vrot.lane.b32.xlu0 %v1653, 86
    %v1719 = vpop.permute.xlu0 %1718
    %v1720 = vsel %vm599, %v1677, %v1679
    %v1721 = vsel %vm599, %v1679, %v1681
    %v1722 = vsel %vm599, %v1681, %v1683
    %v1723 = vsel %vm599, %v1683, %v1685
    %v1724 = vsel %vm599, %v1685, %v1687
    %v1725 = vsel %vm599, %v1687, %v1689
    %v1726 = vsel %vm599, %v1689, %v1691
    %v1727 = vsel %vm599, %v1691, %v1693
    %v1728 = vsel %vm599, %v1693, %v1695
    %v1729 = vsel %vm599, %v1695, %v1697
    %v1730 = vsel %vm599, %v1697, %v1699
    %v1731 = vsel %vm599, %v1699, %v1701
    %v1732 = vsel %vm599, %v1701, %v1703
    %v1733 = vsel %vm599, %v1703, %v1705
    %v1734 = vsel %vm599, %v1705, %v1707
    %v1735 = vsel %vm599, %v1707, %v1709
    %v1736 = vsel %vm599, %v1709, %v1711
    %v1737 = vsel %vm599, %v1711, %v1713
    %v1738 = vsel %vm599, %v1713, %v1715
    %v1739 = vsel %vm599, %v1715, %v1717
    %v1740 = vsel %vm599, %v1717, %v1719
    %v1763 = vmax.f32 %v1632, %v1720
    %v1764 = vmax.f32 %v1633, %v1721
    %v1765 = vmax.f32 %v1634, %v1722
    %v1766 = vmax.f32 %v1635, %v1723
    %v1767 = vmax.f32 %v1636, %v1724
    %v1768 = vmax.f32 %v1637, %v1725
    %v1769 = vmax.f32 %v1638, %v1726
    %v1770 = vmax.f32 %v1639, %v1727
    %v1771 = vmax.f32 %v1640, %v1728
    %v1772 = vmax.f32 %v1641, %v1729
    %v1773 = vmax.f32 %v1642, %v1730
    %v1774 = vmax.f32 %v1643, %v1731
    %v1775 = vmax.f32 %v1644, %v1732
    %v1776 = vmax.f32 %v1645, %v1733
    %v1777 = vmax.f32 %v1646, %v1734
    %v1778 = vmax.f32 %v1647, %v1735
    %v1779 = vmax.f32 %v1648, %v1736
    %v1780 = vmax.f32 %v1649, %v1737
    %v1781 = vmax.f32 %v1650, %v1738
    %v1782 = vmax.f32 %v1651, %v1739
    %v1783 = vmax.f32 %v1652, %v1740
    %v1784 = vmax.f32 %v1653, %v1719
    %1807 = vrot.lane.b32.xlu0 %v1763, 127
    %v1808 = vpop.permute.xlu0 %1807
    %1809 = vrot.lane.b32.xlu0 %v1764, 127
    %v1810 = vpop.permute.xlu0 %1809
    %1811 = vrot.lane.b32.xlu0 %v1765, 127
    %v1812 = vpop.permute.xlu0 %1811
    %1813 = vrot.lane.b32.xlu0 %v1766, 127
    %v1814 = vpop.permute.xlu0 %1813
    %1815 = vrot.lane.b32.xlu0 %v1767, 127
    %v1816 = vpop.permute.xlu0 %1815
    %1817 = vrot.lane.b32.xlu0 %v1768, 127
    %v1818 = vpop.permute.xlu0 %1817
    %1819 = vrot.lane.b32.xlu0 %v1769, 127
    %v1820 = vpop.permute.xlu0 %1819
    %1821 = vrot.lane.b32.xlu0 %v1770, 127
    %v1822 = vpop.permute.xlu0 %1821
    %1823 = vrot.lane.b32.xlu0 %v1771, 127
    %v1824 = vpop.permute.xlu0 %1823
    %1825 = vrot.lane.b32.xlu0 %v1772, 127
    %v1826 = vpop.permute.xlu0 %1825
    %1827 = vrot.lane.b32.xlu0 %v1773, 127
    %v1828 = vpop.permute.xlu0 %1827
    %1829 = vrot.lane.b32.xlu0 %v1774, 127
    %v1830 = vpop.permute.xlu0 %1829
    %1831 = vrot.lane.b32.xlu0 %v1775, 127
    %v1832 = vpop.permute.xlu0 %1831
    %1833 = vrot.lane.b32.xlu0 %v1776, 127
    %v1834 = vpop.permute.xlu0 %1833
    %1835 = vrot.lane.b32.xlu0 %v1777, 127
    %v1836 = vpop.permute.xlu0 %1835
    %1837 = vrot.lane.b32.xlu0 %v1778, 127
    %v1838 = vpop.permute.xlu0 %1837
    %1839 = vrot.lane.b32.xlu0 %v1779, 127
    %v1840 = vpop.permute.xlu0 %1839
    %1841 = vrot.lane.b32.xlu0 %v1780, 127
    %v1842 = vpop.permute.xlu0 %1841
    %1843 = vrot.lane.b32.xlu0 %v1781, 127
    %v1844 = vpop.permute.xlu0 %1843
    %1845 = vrot.lane.b32.xlu0 %v1782, 127
    %v1846 = vpop.permute.xlu0 %1845
    %1847 = vrot.lane.b32.xlu0 %v1783, 127
    %v1848 = vpop.permute.xlu0 %1847
    %1849 = vrot.lane.b32.xlu0 %v1784, 127
    %v1850 = vpop.permute.xlu0 %1849
    %v1851 = vsel %vm277, %v1808, %v1810
    %v1852 = vsel %vm277, %v1810, %v1812
    %v1853 = vsel %vm277, %v1812, %v1814
    %v1854 = vsel %vm277, %v1814, %v1816
    %v1855 = vsel %vm277, %v1816, %v1818
    %v1856 = vsel %vm277, %v1818, %v1820
    %v1857 = vsel %vm277, %v1820, %v1822
    %v1858 = vsel %vm277, %v1822, %v1824
    %v1859 = vsel %vm277, %v1824, %v1826
    %v1860 = vsel %vm277, %v1826, %v1828
    %v1861 = vsel %vm277, %v1828, %v1830
    %v1862 = vsel %vm277, %v1830, %v1832
    %v1863 = vsel %vm277, %v1832, %v1834
    %v1864 = vsel %vm277, %v1834, %v1836
    %v1865 = vsel %vm277, %v1836, %v1838
    %v1866 = vsel %vm277, %v1838, %v1840
    %v1867 = vsel %vm277, %v1840, %v1842
    %v1868 = vsel %vm277, %v1842, %v1844
    %v1869 = vsel %vm277, %v1844, %v1846
    %v1870 = vsel %vm277, %v1846, %v1848
    %v1871 = vsel %vm277, %v1848, %v1850
    %v1894 = vmax.f32 %v1763, %v1851
    %v1895 = vmax.f32 %v1764, %v1852
    %v1896 = vmax.f32 %v1765, %v1853
    %v1897 = vmax.f32 %v1766, %v1854
    %v1898 = vmax.f32 %v1767, %v1855
    %v1899 = vmax.f32 %v1768, %v1856
    %v1900 = vmax.f32 %v1769, %v1857
    %v1901 = vmax.f32 %v1770, %v1858
    %v1902 = vmax.f32 %v1771, %v1859
    %v1903 = vmax.f32 %v1772, %v1860
    %v1904 = vmax.f32 %v1773, %v1861
    %v1905 = vmax.f32 %v1774, %v1862
    %v1906 = vmax.f32 %v1775, %v1863
    %v1907 = vmax.f32 %v1776, %v1864
    %v1908 = vmax.f32 %v1777, %v1865
    %v1909 = vmax.f32 %v1778, %v1866
    %v1910 = vmax.f32 %v1779, %v1867
    %v1911 = vmax.f32 %v1780, %v1868
    %v1912 = vmax.f32 %v1781, %v1869
    %v1913 = vmax.f32 %v1782, %v1870
    %v1914 = vmax.f32 %v1783, %v1871
    %v1915 = vmax.f32 %v1784, %v1850
    %v1916 = vld [vmem:[%s3] sm:$0xff]
    %v1917 = vld [vmem:[%s3 + $0x8] sm:$0xff]
    %v1918 = vld [vmem:[%s3 + $0x10] sm:$0xff]
    %v1919 = vld [vmem:[%s3 + $0x18] sm:$0xff]
    %v1920 = vld [vmem:[%s3 + $0x20] sm:$0xff]
    %v1921 = vld [vmem:[%s3 + $0x28] sm:$0xff]
    %v1922 = vld [vmem:[%s3 + $0x30] sm:$0xff]
    %v1923 = vld [vmem:[%s3 + $0x38] sm:$0xff]
    %v1924 = vld [vmem:[%s3 + $0x40] sm:$0xff]
    %v1925 = vld [vmem:[%s3 + $0x48] sm:$0xff]
    %v1926 = vld [vmem:[%s3 + $0x50] sm:$0xff]
    %v1927 = vld [vmem:[%s3 + $0x58] sm:$0xff]
    %v1928 = vld [vmem:[%s3 + $0x60] sm:$0xff]
    %v1929 = vld [vmem:[%s3 + $0x68] sm:$0xff]
    %v1930 = vld [vmem:[%s3 + $0x70] sm:$0xff]
    %v1931 = vld [vmem:[%s3 + $0x78] sm:$0xff]
    %v1932 = vld [vmem:[%s3 + $0x80] sm:$0xff]
    %v1933 = vld [vmem:[%s3 + $0x88] sm:$0xff]
    %v1934 = vld [vmem:[%s3 + $0x90] sm:$0xff]
    %v1935 = vld [vmem:[%s3 + $0x98] sm:$0xff]
    %v1936 = vld [vmem:[%s3 + $0xa0] sm:$0xff]
    %v1937 = vld [vmem:[%s3 + $0xa8] sm:$0xff]
    %v1938 = vld [vmem:[%s3 + $0xb0] sm:$0xff]
    %v1939 = vld [vmem:[%s3 + $0xb8] sm:$0xff]
    %v1940 = vld [vmem:[%s3 + $0xc0] sm:$0xff]
    %v1941 = vld [vmem:[%s3 + $0xc8] sm:$0xff]
    %v1942 = vld [vmem:[%s3 + $0xd0] sm:$0xff]
    %v1943 = vld [vmem:[%s3 + $0xd8] sm:$0xff]
    %v1944 = vld [vmem:[%s3 + $0xe0] sm:$0xff]
    %v1945 = vld [vmem:[%s3 + $0xe8] sm:$0xff]
    %v1946 = vld [vmem:[%s3 + $0xf0] sm:$0xff]
    %v1947 = vld [vmem:[%s3 + $0xf8] sm:$0xff]
    %v1948 = vld [vmem:[%s3 + $0x100] sm:$0xff]
    %v1949 = vld [vmem:[%s3 + $0x108] sm:$0xff]
    %v1950 = vld [vmem:[%s3 + $0x110] sm:$0xff]
    %v1951 = vld [vmem:[%s3 + $0x118] sm:$0xff]
    %v1952 = vld [vmem:[%s3 + $0x120] sm:$0xff]
    %v1953 = vld [vmem:[%s3 + $0x128] sm:$0xff]
    %v1954 = vld [vmem:[%s3 + $0x130] sm:$0xff]
    %v1955 = vld [vmem:[%s3 + $0x138] sm:$0xff]
    %v1956 = vld [vmem:[%s3 + $0x140] sm:$0xff]
    %v1957 = vld [vmem:[%s3 + $0x148] sm:$0xff]
    %v1958 = vld [vmem:[%s3 + $0x150] sm:$0xff]
    %v1959 = vld [vmem:[%s3 + $0x158] sm:$0xff]
    %v1960 = vld [vmem:[%s3 + $0x160] sm:$0xff]
    %v1961 = vld [vmem:[%s3 + $0x168] sm:$0xff]
    %v1962 = vld [vmem:[%s3 + $0x170] sm:$0xff]
    %v1963 = vld [vmem:[%s3 + $0x178] sm:$0xff]
    %v1964 = vld [vmem:[%s3 + $0x180] sm:$0xff]
    %v1965 = vld [vmem:[%s3 + $0x188] sm:$0xff]
    %v1966 = vld [vmem:[%s3 + $0x190] sm:$0xff]
    %v1967 = vld [vmem:[%s3 + $0x198] sm:$0xff]
    %v1968 = vld [vmem:[%s3 + $0x1a0] sm:$0xff]
    %v1969 = vld [vmem:[%s3 + $0x1a8] sm:$0xff]
    %v1970 = vld [vmem:[%s3 + $0x1b0] sm:$0xff]
    %v1971 = vld [vmem:[%s3 + $0x1b8] sm:$0xff]
    %v1972 = vld [vmem:[%s3 + $0x1c0] sm:$0xff]
    %v1973 = vld [vmem:[%s3 + $0x1c8] sm:$0xff]
    %v1974 = vld [vmem:[%s3 + $0x1d0] sm:$0xff]
    %v1975 = vld [vmem:[%s3 + $0x1d8] sm:$0xff]
    %v1976 = vld [vmem:[%s3 + $0x1e0] sm:$0xff]
    %v1977 = vld [vmem:[%s3 + $0x1e8] sm:$0xff]
    %v1978 = vld [vmem:[%s3 + $0x1f0] sm:$0xff]
    %v1979 = vld [vmem:[%s3 + $0x1f8] sm:$0xff]
    %v1980 = vld [vmem:[%s3 + $0x200] sm:$0xff]
    %v1981 = vld [vmem:[%s3 + $0x208] sm:$0xff]
    %v1982 = vld [vmem:[%s3 + $0x210] sm:$0xff]
    %v1983 = vld [vmem:[%s3 + $0x218] sm:$0xff]
    %v1984 = vld [vmem:[%s3 + $0x220] sm:$0xff]
    %v1985 = vld [vmem:[%s3 + $0x228] sm:$0xff]
    %v1986 = vld [vmem:[%s3 + $0x230] sm:$0xff]
    %v1987 = vld [vmem:[%s3 + $0x238] sm:$0xff]
    %v1988 = vld [vmem:[%s3 + $0x240] sm:$0xff]
    %v1989 = vld [vmem:[%s3 + $0x248] sm:$0xff]
    %v1990 = vld [vmem:[%s3 + $0x250] sm:$0xff]
    %v1991 = vld [vmem:[%s3 + $0x258] sm:$0xff]
    %v1992 = vld [vmem:[%s3 + $0x260] sm:$0xff]
    %v1993 = vld [vmem:[%s3 + $0x268] sm:$0xff]
    %v1994 = vld [vmem:[%s3 + $0x270] sm:$0xff]
    %v1995 = vld [vmem:[%s3 + $0x278] sm:$0xff]
    %v1996 = vld [vmem:[%s3 + $0x280] sm:$0xff]
    %v1997 = vld [vmem:[%s3 + $0x288] sm:$0xff]
    %v1998 = vld [vmem:[%s3 + $0x290] sm:$0xff]
    %v1999 = vld [vmem:[%s3 + $0x298] sm:$0xff]
    %v2000 = vld [vmem:[%s3 + $0x2a0] sm:$0xff]
    %v2001 = vld [vmem:[%s3 + $0x2a8] sm:$0xff]
    %v2002 = vld [vmem:[%s3 + $0x2b0] sm:$0xff]
    %v2003 = vld [vmem:[%s3 + $0x2b8] sm:$0xff]
    %v2004 = vld [vmem:[%s3 + $0x2c0] sm:$0xff]
    %v2005 = vld [vmem:[%s3 + $0x2c8] sm:$0xff]
    %v2006 = vld [vmem:[%s3 + $0x2d0] sm:$0xff]
    %v2007 = vld [vmem:[%s3 + $0x2d8] sm:$0xff]
    %v2008 = vld [vmem:[%s3 + $0x2e0] sm:$0xff]
    %v2009 = vld [vmem:[%s3 + $0x2e8] sm:$0xff]
    %v2010 = vld [vmem:[%s3 + $0x2f0] sm:$0xff]
    %v2011 = vld [vmem:[%s3 + $0x2f8] sm:$0xff]
    %v2012 = vld [vmem:[%s3 + $0x300] sm:$0xff]
    %v2013 = vld [vmem:[%s3 + $0x308] sm:$0xff]
    %v2014 = vld [vmem:[%s3 + $0x310] sm:$0xff]
    %v2015 = vld [vmem:[%s3 + $0x318] sm:$0xff]
    %v2016 = vld [vmem:[%s3 + $0x320] sm:$0xff]
    %v2017 = vld [vmem:[%s3 + $0x328] sm:$0xff]
    %v2018 = vld [vmem:[%s3 + $0x330] sm:$0xff]
    %v2019 = vld [vmem:[%s3 + $0x338] sm:$0xff]
    %v2020 = vld [vmem:[%s3 + $0x340] sm:$0xff]
    %v2021 = vld [vmem:[%s3 + $0x348] sm:$0xff]
    %v2022 = vld [vmem:[%s3 + $0x350] sm:$0xff]
    %v2023 = vld [vmem:[%s3 + $0x358] sm:$0xff]
    %v2024 = vld [vmem:[%s3 + $0x360] sm:$0xff]
    %v2025 = vld [vmem:[%s3 + $0x368] sm:$0xff]
    %v2026 = vld [vmem:[%s3 + $0x370] sm:$0xff]
    %v2027 = vld [vmem:[%s3 + $0x378] sm:$0xff]
    %v2028 = vld [vmem:[%s3 + $0x380] sm:$0xff]
    %v2029 = vld [vmem:[%s3 + $0x388] sm:$0xff]
    %v2030 = vld [vmem:[%s3 + $0x390] sm:$0xff]
    %v2031 = vld [vmem:[%s3 + $0x398] sm:$0xff]
    %v2032 = vld [vmem:[%s3 + $0x3a0] sm:$0xff]
    %v2033 = vld [vmem:[%s3 + $0x3a8] sm:$0xff]
    %v2034 = vld [vmem:[%s3 + $0x3b0] sm:$0xff]
    %v2035 = vld [vmem:[%s3 + $0x3b8] sm:$0xff]
    %v2036 = vld [vmem:[%s3 + $0x3c0] sm:$0xff]
    %v2037 = vld [vmem:[%s3 + $0x3c8] sm:$0xff]
    %v2038 = vld [vmem:[%s3 + $0x3d0] sm:$0xff]
    %v2039 = vld [vmem:[%s3 + $0x3d8] sm:$0xff]
    %v2040 = vld [vmem:[%s3 + $0x3e0] sm:$0xff]
    %v2041 = vld [vmem:[%s3 + $0x3e8] sm:$0xff]
    %v2042 = vld [vmem:[%s3 + $0x3f0] sm:$0xff]
    %v2043 = vld [vmem:[%s3 + $0x3f8] sm:$0xff]
    %v2044 = vld [vmem:[%s3 + $0x400] sm:$0xff]
    %v2045 = vld [vmem:[%s3 + $0x408] sm:$0xff]
    %v2046 = vld [vmem:[%s3 + $0x410] sm:$0xff]
    %v2047 = vld [vmem:[%s3 + $0x418] sm:$0xff]
    %v2048 = vld [vmem:[%s3 + $0x420] sm:$0xff]
    %v2049 = vld [vmem:[%s3 + $0x428] sm:$0xff]
    %v2050 = vld [vmem:[%s3 + $0x430] sm:$0xff]
    %v2051 = vld [vmem:[%s3 + $0x438] sm:$0xff]
    %v2052 = vld [vmem:[%s3 + $0x440] sm:$0xff]
    %v2053 = vld [vmem:[%s3 + $0x448] sm:$0xff]
    %v2054 = vld [vmem:[%s3 + $0x450] sm:$0xff]
    %v2055 = vld [vmem:[%s3 + $0x458] sm:$0xff]
    %v2056 = vld [vmem:[%s3 + $0x460] sm:$0xff]
    %v2057 = vld [vmem:[%s3 + $0x468] sm:$0xff]
    %v2058 = vld [vmem:[%s3 + $0x470] sm:$0xff]
    %v2059 = vld [vmem:[%s3 + $0x478] sm:$0xff]
    %v2060 = vld [vmem:[%s3 + $0x480] sm:$0xff]
    %v2061 = vld [vmem:[%s3 + $0x488] sm:$0xff]
    %v2062 = vld [vmem:[%s3 + $0x490] sm:$0xff]
    %v2063 = vld [vmem:[%s3 + $0x498] sm:$0xff]
    %v2064 = vld [vmem:[%s3 + $0x4a0] sm:$0xff]
    %v2065 = vld [vmem:[%s3 + $0x4a8] sm:$0xff]
    %v2066 = vld [vmem:[%s3 + $0x4b0] sm:$0xff]
    %v2067 = vld [vmem:[%s3 + $0x4b8] sm:$0xff]
    %v2068 = vld [vmem:[%s3 + $0x4c0] sm:$0xff]
    %v2069 = vld [vmem:[%s3 + $0x4c8] sm:$0xff]
    %v2070 = vld [vmem:[%s3 + $0x4d0] sm:$0xff]
    %v2071 = vld [vmem:[%s3 + $0x4d8] sm:$0xff]
    %v2072 = vld [vmem:[%s3 + $0x4e0] sm:$0xff]
    %v2073 = vld [vmem:[%s3 + $0x4e8] sm:$0xff]
    %v2074 = vld [vmem:[%s3 + $0x4f0] sm:$0xff]
    %v2075 = vld [vmem:[%s3 + $0x4f8] sm:$0xff]
    %v2076 = vld [vmem:[%s3 + $0x500] sm:$0xff]
    %v2077 = vld [vmem:[%s3 + $0x508] sm:$0xff]
    %v2078 = vld [vmem:[%s3 + $0x510] sm:$0xff]
    %v2079 = vld [vmem:[%s3 + $0x518] sm:$0xff]
    %v2080 = vld [vmem:[%s3 + $0x520] sm:$0xff]
    %v2081 = vld [vmem:[%s3 + $0x528] sm:$0xff]
    %v2082 = vld [vmem:[%s3 + $0x530] sm:$0xff]
    %v2083 = vld [vmem:[%s3 + $0x538] sm:$0xff]
    %v2084 = vld [vmem:[%s3 + $0x540] sm:$0xff]
    %v2085 = vld [vmem:[%s3 + $0x548] sm:$0xff]
    %v2086 = vld [vmem:[%s3 + $0x550] sm:$0xff]
    %v2087 = vld [vmem:[%s3 + $0x558] sm:$0xff]
    %v2088 = vld [vmem:[%s3 + $0x560] sm:$0xff]
    %v2089 = vld [vmem:[%s3 + $0x568] sm:$0xff]
    %v2090 = vld [vmem:[%s3 + $0x570] sm:$0xff]
    %v2091 = vld [vmem:[%s3 + $0x578] sm:$0xff]
    %v2092 = vld [vmem:[%s3 + $0x580] sm:$0xff]
    %v2093 = vld [vmem:[%s3 + $0x588] sm:$0xff]
    %v2094 = vld [vmem:[%s3 + $0x590] sm:$0xff]
    %v2095 = vld [vmem:[%s3 + $0x598] sm:$0xff]
    %v2096 = vld [vmem:[%s3 + $0x5a0] sm:$0xff]
    %v2097 = vld [vmem:[%s3 + $0x5a8] sm:$0xff]
    %v2098 = vld [vmem:[%s3 + $0x5b0] sm:$0xff]
    %v2099 = vld [vmem:[%s3 + $0x5b8] sm:$0xff]
    %v2100 = vld [vmem:[%s3 + $0x5c0] sm:$0xff]
    %v2101 = vld [vmem:[%s3 + $0x5c8] sm:$0xff]
    %v2102 = vld [vmem:[%s3 + $0x5d0] sm:$0xff]
    %v2103 = vld [vmem:[%s3 + $0x5d8] sm:$0xff]
    %v2104 = vld [vmem:[%s3 + $0x5e0] sm:$0xff]
    %v2105 = vld [vmem:[%s3 + $0x5e8] sm:$0xff]
    %v2106 = vld [vmem:[%s3 + $0x5f0] sm:$0xff]
    %v2107 = vld [vmem:[%s3 + $0x5f8] sm:$0xff]
    %v2108 = vld [vmem:[%s3 + $0x600] sm:$0xff]
    %v2109 = vld [vmem:[%s3 + $0x608] sm:$0xff]
    %v2110 = vld [vmem:[%s3 + $0x610] sm:$0xff]
    %v2111 = vld [vmem:[%s3 + $0x618] sm:$0xff]
    %v2112 = vld [vmem:[%s3 + $0x620] sm:$0xff]
    %v2113 = vld [vmem:[%s3 + $0x628] sm:$0xff]
    %v2114 = vld [vmem:[%s3 + $0x630] sm:$0xff]
    %v2115 = vld [vmem:[%s3 + $0x638] sm:$0xff]
    %v2116 = vld [vmem:[%s3 + $0x640] sm:$0xff]
    %v2117 = vld [vmem:[%s3 + $0x648] sm:$0xff]
    %v2118 = vld [vmem:[%s3 + $0x650] sm:$0xff]
    %v2119 = vld [vmem:[%s3 + $0x658] sm:$0xff]
    %v2120 = vld [vmem:[%s3 + $0x660] sm:$0xff]
    %v2121 = vld [vmem:[%s3 + $0x668] sm:$0xff]
    %v2122 = vld [vmem:[%s3 + $0x670] sm:$0xff]
    %v2123 = vld [vmem:[%s3 + $0x678] sm:$0xff]
    %v2124 = vld [vmem:[%s3 + $0x680] sm:$0xff]
    %v2125 = vld [vmem:[%s3 + $0x688] sm:$0xff]
    %v2126 = vld [vmem:[%s3 + $0x690] sm:$0xff]
    %v2127 = vld [vmem:[%s3 + $0x698] sm:$0xff]
    %v2128 = vld [vmem:[%s3 + $0x6a0] sm:$0xff]
    %v2129 = vld [vmem:[%s3 + $0x6a8] sm:$0xff]
    %v2130 = vld [vmem:[%s3 + $0x6b0] sm:$0xff]
    %v2131 = vld [vmem:[%s3 + $0x6b8] sm:$0xff]
    %v2132 = vld [vmem:[%s3 + $0x6c0] sm:$0xff]
    %v2133 = vld [vmem:[%s3 + $0x6c8] sm:$0xff]
    %v2134 = vld [vmem:[%s3 + $0x6d0] sm:$0xff]
    %v2135 = vld [vmem:[%s3 + $0x6d8] sm:$0xff]
    %v2136 = vld [vmem:[%s3 + $0x6e0] sm:$0xff]
    %v2137 = vld [vmem:[%s3 + $0x6e8] sm:$0xff]
    %v2138 = vld [vmem:[%s3 + $0x6f0] sm:$0xff]
    %v2139 = vld [vmem:[%s3 + $0x6f8] sm:$0xff]
    %v2140 = vld [vmem:[%s3 + $0x700] sm:$0xff]
    %v2141 = vld [vmem:[%s3 + $0x708] sm:$0xff]
    %v2142 = vld [vmem:[%s3 + $0x710] sm:$0xff]
    %v2143 = vld [vmem:[%s3 + $0x718] sm:$0xff]
    %v2144 = vld [vmem:[%s3 + $0x720] sm:$0xff]
    %v2145 = vld [vmem:[%s3 + $0x728] sm:$0xff]
    %v2146 = vld [vmem:[%s3 + $0x730] sm:$0xff]
    %v2147 = vld [vmem:[%s3 + $0x738] sm:$0xff]
    %v2148 = vld [vmem:[%s3 + $0x740] sm:$0xff]
    %v2149 = vld [vmem:[%s3 + $0x748] sm:$0xff]
    %v2150 = vld [vmem:[%s3 + $0x750] sm:$0xff]
    %v2151 = vld [vmem:[%s3 + $0x758] sm:$0xff]
    %v2152 = vld [vmem:[%s3 + $0x760] sm:$0xff]
    %v2153 = vld [vmem:[%s3 + $0x768] sm:$0xff]
    %v2154 = vld [vmem:[%s3 + $0x770] sm:$0xff]
    %v2155 = vld [vmem:[%s3 + $0x778] sm:$0xff]
    %v2156 = vld [vmem:[%s3 + $0x780] sm:$0xff]
    %v2157 = vld [vmem:[%s3 + $0x788] sm:$0xff]
    %v2158 = vld [vmem:[%s3 + $0x790] sm:$0xff]
    %v2159 = vld [vmem:[%s3 + $0x798] sm:$0xff]
    %v2160 = vld [vmem:[%s3 + $0x7a0] sm:$0xff]
    %v2161 = vld [vmem:[%s3 + $0x7a8] sm:$0xff]
    %v2162 = vld [vmem:[%s3 + $0x7b0] sm:$0xff]
    %v2163 = vld [vmem:[%s3 + $0x7b8] sm:$0xff]
    %v2164 = vld [vmem:[%s3 + $0x7c0] sm:$0xff]
    %v2165 = vld [vmem:[%s3 + $0x7c8] sm:$0xff]
    %v2166 = vld [vmem:[%s3 + $0x7d0] sm:$0xff]
    %v2167 = vld [vmem:[%s3 + $0x7d8] sm:$0xff]
    %v2168 = vld [vmem:[%s3 + $0x7e0] sm:$0xff]
    %v2169 = vld [vmem:[%s3 + $0x7e8] sm:$0xff]
    %v2170 = vld [vmem:[%s3 + $0x7f0] sm:$0xff]
    %v2171 = vld [vmem:[%s3 + $0x7f8] sm:$0xff]
    %v2172 = vld [vmem:[%s3 + $0x800] sm:$0xff]
    %v2173 = vld [vmem:[%s3 + $0x808] sm:$0xff]
    %v2174 = vld [vmem:[%s3 + $0x810] sm:$0xff]
    %v2175 = vld [vmem:[%s3 + $0x818] sm:$0xff]
    %v2176 = vld [vmem:[%s3 + $0x820] sm:$0xff]
    %v2177 = vld [vmem:[%s3 + $0x828] sm:$0xff]
    %v2178 = vld [vmem:[%s3 + $0x830] sm:$0xff]
    %v2179 = vld [vmem:[%s3 + $0x838] sm:$0xff]
    %v2180 = vld [vmem:[%s3 + $0x840] sm:$0xff]
    %v2181 = vld [vmem:[%s3 + $0x848] sm:$0xff]
    %v2182 = vld [vmem:[%s3 + $0x850] sm:$0xff]
    %v2183 = vld [vmem:[%s3 + $0x858] sm:$0xff]
    %v2184 = vld [vmem:[%s3 + $0x860] sm:$0xff]
    %v2185 = vld [vmem:[%s3 + $0x868] sm:$0xff]
    %v2186 = vld [vmem:[%s3 + $0x870] sm:$0xff]
    %v2187 = vld [vmem:[%s3 + $0x878] sm:$0xff]
    %v2188 = vld [vmem:[%s3 + $0x880] sm:$0xff]
    %v2189 = vld [vmem:[%s3 + $0x888] sm:$0xff]
    %v2190 = vld [vmem:[%s3 + $0x890] sm:$0xff]
    %v2191 = vld [vmem:[%s3 + $0x898] sm:$0xff]
    %v2192 = vld [vmem:[%s3 + $0x8a0] sm:$0xff]
    %v2193 = vld [vmem:[%s3 + $0x8a8] sm:$0xff]
    %v2194 = vld [vmem:[%s3 + $0x8b0] sm:$0xff]
    %v2195 = vld [vmem:[%s3 + $0x8b8] sm:$0xff]
    %v2196 = vld [vmem:[%s3 + $0x8c0] sm:$0xff]
    %v2197 = vld [vmem:[%s3 + $0x8c8] sm:$0xff]
    %v2198 = vld [vmem:[%s3 + $0x8d0] sm:$0xff]
    %v2199 = vld [vmem:[%s3 + $0x8d8] sm:$0xff]
    %v2200 = vld [vmem:[%s3 + $0x8e0] sm:$0xff]
    %v2201 = vld [vmem:[%s3 + $0x8e8] sm:$0xff]
    %v2202 = vld [vmem:[%s3 + $0x8f0] sm:$0xff]
    %v2203 = vld [vmem:[%s3 + $0x8f8] sm:$0xff]
    %v2204 = vld [vmem:[%s3 + $0x900] sm:$0xff]
    %v2205 = vld [vmem:[%s3 + $0x908] sm:$0xff]
    %v2206 = vld [vmem:[%s3 + $0x910] sm:$0xff]
    %v2207 = vld [vmem:[%s3 + $0x918] sm:$0xff]
    %v2208 = vld [vmem:[%s3 + $0x920] sm:$0xff]
    %v2209 = vld [vmem:[%s3 + $0x928] sm:$0xff]
    %v2210 = vld [vmem:[%s3 + $0x930] sm:$0xff]
    %v2211 = vld [vmem:[%s3 + $0x938] sm:$0xff]
    %v2212 = vld [vmem:[%s3 + $0x940] sm:$0xff]
    %v2213 = vld [vmem:[%s3 + $0x948] sm:$0xff]
    %v2214 = vld [vmem:[%s3 + $0x950] sm:$0xff]
    %v2215 = vld [vmem:[%s3 + $0x958] sm:$0xff]
    %v2216 = vld [vmem:[%s3 + $0x960] sm:$0xff]
    %v2217 = vld [vmem:[%s3 + $0x968] sm:$0xff]
    %v2218 = vld [vmem:[%s3 + $0x970] sm:$0xff]
    %v2219 = vld [vmem:[%s3 + $0x978] sm:$0xff]
    %v2220 = vld [vmem:[%s3 + $0x980] sm:$0xff]
    %v2221 = vld [vmem:[%s3 + $0x988] sm:$0xff]
    %v2222 = vld [vmem:[%s3 + $0x990] sm:$0xff]
    %v2223 = vld [vmem:[%s3 + $0x998] sm:$0xff]
    %v2224 = vld [vmem:[%s3 + $0x9a0] sm:$0xff]
    %v2225 = vld [vmem:[%s3 + $0x9a8] sm:$0xff]
    %v2226 = vld [vmem:[%s3 + $0x9b0] sm:$0xff]
    %v2227 = vld [vmem:[%s3 + $0x9b8] sm:$0xff]
    %v2228 = vld [vmem:[%s3 + $0x9c0] sm:$0xff]
    %v2229 = vld [vmem:[%s3 + $0x9c8] sm:$0xff]
    %v2230 = vld [vmem:[%s3 + $0x9d0] sm:$0xff]
    %v2231 = vld [vmem:[%s3 + $0x9d8] sm:$0xff]
    %v2232 = vld [vmem:[%s3 + $0x9e0] sm:$0xff]
    %v2233 = vld [vmem:[%s3 + $0x9e8] sm:$0xff]
    %v2234 = vld [vmem:[%s3 + $0x9f0] sm:$0xff]
    %v2235 = vld [vmem:[%s3 + $0x9f8] sm:$0xff]
    %v2236 = vld [vmem:[%s3 + $0xa00] sm:$0xff]
    %v2237 = vld [vmem:[%s3 + $0xa08] sm:$0xff]
    %v2238 = vld [vmem:[%s3 + $0xa10] sm:$0xff]
    %v2239 = vld [vmem:[%s3 + $0xa18] sm:$0xff]
    %v2240 = vld [vmem:[%s3 + $0xa20] sm:$0xff]
    %v2241 = vld [vmem:[%s3 + $0xa28] sm:$0xff]
    %v2242 = vld [vmem:[%s3 + $0xa30] sm:$0xff]
    %v2243 = vld [vmem:[%s3 + $0xa38] sm:$0xff]
    %v2244 = vld [vmem:[%s3 + $0xa40] sm:$0xff]
    %v2245 = vld [vmem:[%s3 + $0xa48] sm:$0xff]
    %v2246 = vld [vmem:[%s3 + $0xa50] sm:$0xff]
    %v2247 = vld [vmem:[%s3 + $0xa58] sm:$0xff]
    %v2248 = vld [vmem:[%s3 + $0xa60] sm:$0xff]
    %v2249 = vld [vmem:[%s3 + $0xa68] sm:$0xff]
    %v2250 = vld [vmem:[%s3 + $0xa70] sm:$0xff]
    %v2251 = vld [vmem:[%s3 + $0xa78] sm:$0xff]
    %v2252 = vld [vmem:[%s3 + $0xa80] sm:$0xff]
    %v2253 = vld [vmem:[%s3 + $0xa88] sm:$0xff]
    %v2254 = vld [vmem:[%s3 + $0xa90] sm:$0xff]
    %v2255 = vld [vmem:[%s3 + $0xa98] sm:$0xff]
    %v2256 = vld [vmem:[%s3 + $0xaa0] sm:$0xff]
    %v2257 = vld [vmem:[%s3 + $0xaa8] sm:$0xff]
    %v2258 = vld [vmem:[%s3 + $0xab0] sm:$0xff]
    %v2259 = vld [vmem:[%s3 + $0xab8] sm:$0xff]
    %v2260 = vld [vmem:[%s3 + $0xac0] sm:$0xff]
    %v2261 = vld [vmem:[%s3 + $0xac8] sm:$0xff]
    %v2262 = vld [vmem:[%s3 + $0xad0] sm:$0xff]
    %v2263 = vld [vmem:[%s3 + $0xad8] sm:$0xff]
    %v2264 = vld [vmem:[%s3 + $0xae0] sm:$0xff]
    %v2265 = vld [vmem:[%s3 + $0xae8] sm:$0xff]
    %v2266 = vld [vmem:[%s3 + $0xaf0] sm:$0xff]
    %v2267 = vld [vmem:[%s3 + $0xaf8] sm:$0xff]
    %v2268 = vld [vmem:[%s3 + $0xb00] sm:$0xff]
    %v2269 = vld [vmem:[%s3 + $0xb08] sm:$0xff]
    %v2270 = vld [vmem:[%s3 + $0xb10] sm:$0xff]
    %v2271 = vld [vmem:[%s3 + $0xb18] sm:$0xff]
    %v2272 = vld [vmem:[%s3 + $0xb20] sm:$0xff]
    %v2273 = vld [vmem:[%s3 + $0xb28] sm:$0xff]
    %v2274 = vld [vmem:[%s3 + $0xb30] sm:$0xff]
    %v2275 = vld [vmem:[%s3 + $0xb38] sm:$0xff]
    %v2276 = vld [vmem:[%s3 + $0xb40] sm:$0xff]
    %v2277 = vld [vmem:[%s3 + $0xb48] sm:$0xff]
    %v2278 = vld [vmem:[%s3 + $0xb50] sm:$0xff]
    %v2279 = vld [vmem:[%s3 + $0xb58] sm:$0xff]
    %v2280 = vld [vmem:[%s3 + $0xb60] sm:$0xff]
    %v2281 = vld [vmem:[%s3 + $0xb68] sm:$0xff]
    %v2282 = vld [vmem:[%s3 + $0xb70] sm:$0xff]
    %v2283 = vld [vmem:[%s3 + $0xb78] sm:$0xff]
    %v2284 = vld [vmem:[%s3 + $0xb80] sm:$0xff]
    %v2285 = vld [vmem:[%s3 + $0xb88] sm:$0xff]
    %v2286 = vld [vmem:[%s3 + $0xb90] sm:$0xff]
    %v2287 = vld [vmem:[%s3 + $0xb98] sm:$0xff]
    %v2288 = vld [vmem:[%s3 + $0xba0] sm:$0xff]
    %v2289 = vld [vmem:[%s3 + $0xba8] sm:$0xff]
    %v2290 = vld [vmem:[%s3 + $0xbb0] sm:$0xff]
    %v2291 = vld [vmem:[%s3 + $0xbb8] sm:$0xff]
    %v2292 = vld [vmem:[%s3 + $0xbc0] sm:$0xff]
    %v2293 = vld [vmem:[%s3 + $0xbc8] sm:$0xff]
    %v2294 = vld [vmem:[%s3 + $0xbd0] sm:$0xff]
    %v2295 = vld [vmem:[%s3 + $0xbd8] sm:$0xff]
    %v2296 = vld [vmem:[%s3 + $0xbe0] sm:$0xff]
    %v2297 = vld [vmem:[%s3 + $0xbe8] sm:$0xff]
    %v2298 = vld [vmem:[%s3 + $0xbf0] sm:$0xff]
    %v2299 = vld [vmem:[%s3 + $0xbf8] sm:$0xff]
    %v2300 = vld [vmem:[%s3 + $0xc00] sm:$0xff]
    %v2301 = vld [vmem:[%s3 + $0xc08] sm:$0xff]
    %v2302 = vld [vmem:[%s3 + $0xc10] sm:$0xff]
    %v2303 = vld [vmem:[%s3 + $0xc18] sm:$0xff]
    %v2304 = vld [vmem:[%s3 + $0xc20] sm:$0xff]
    %v2305 = vld [vmem:[%s3 + $0xc28] sm:$0xff]
    %v2306 = vld [vmem:[%s3 + $0xc30] sm:$0xff]
    %v2307 = vld [vmem:[%s3 + $0xc38] sm:$0xff]
    %v2308 = vld [vmem:[%s3 + $0xc40] sm:$0xff]
    %v2309 = vld [vmem:[%s3 + $0xc48] sm:$0xff]
    %v2310 = vld [vmem:[%s3 + $0xc50] sm:$0xff]
    %v2311 = vld [vmem:[%s3 + $0xc58] sm:$0xff]
    %v2312 = vld [vmem:[%s3 + $0xc60] sm:$0xff]
    %v2313 = vld [vmem:[%s3 + $0xc68] sm:$0xff]
    %v2314 = vld [vmem:[%s3 + $0xc70] sm:$0xff]
    %v2315 = vld [vmem:[%s3 + $0xc78] sm:$0xff]
    %v2316 = vld [vmem:[%s3 + $0xc80] sm:$0xff]
    %v2317 = vld [vmem:[%s3 + $0xc88] sm:$0xff]
    %v2318 = vld [vmem:[%s3 + $0xc90] sm:$0xff]
    %v2319 = vld [vmem:[%s3 + $0xc98] sm:$0xff]
    %v2320 = vld [vmem:[%s3 + $0xca0] sm:$0xff]
    %v2321 = vld [vmem:[%s3 + $0xca8] sm:$0xff]
    %v2322 = vld [vmem:[%s3 + $0xcb0] sm:$0xff]
    %v2323 = vld [vmem:[%s3 + $0xcb8] sm:$0xff]
    %v2324 = vld [vmem:[%s3 + $0xcc0] sm:$0xff]
    %v2325 = vld [vmem:[%s3 + $0xcc8] sm:$0xff]
    %v2326 = vld [vmem:[%s3 + $0xcd0] sm:$0xff]
    %v2327 = vld [vmem:[%s3 + $0xcd8] sm:$0xff]
    %v2328 = vld [vmem:[%s3 + $0xce0] sm:$0xff]
    %v2329 = vld [vmem:[%s3 + $0xce8] sm:$0xff]
    %v2330 = vld [vmem:[%s3 + $0xcf0] sm:$0xff]
    %v2331 = vld [vmem:[%s3 + $0xcf8] sm:$0xff]
    %v2332 = vld [vmem:[%s3 + $0xd00] sm:$0xff]
    %v2333 = vld [vmem:[%s3 + $0xd08] sm:$0xff]
    %v2334 = vld [vmem:[%s3 + $0xd10] sm:$0xff]
    %v2335 = vld [vmem:[%s3 + $0xd18] sm:$0xff]
    %v2336 = vld [vmem:[%s3 + $0xd20] sm:$0xff]
    %v2337 = vld [vmem:[%s3 + $0xd28] sm:$0xff]
    %v2338 = vld [vmem:[%s3 + $0xd30] sm:$0xff]
    %v2339 = vld [vmem:[%s3 + $0xd38] sm:$0xff]
    %v2340 = vld [vmem:[%s3 + $0xd40] sm:$0xff]
    %v2341 = vld [vmem:[%s3 + $0xd48] sm:$0xff]
    %v2342 = vld [vmem:[%s3 + $0xd50] sm:$0xff]
    %v2343 = vld [vmem:[%s3 + $0xd58] sm:$0xff]
    %v2344 = vld [vmem:[%s3 + $0xd60] sm:$0xff]
    %v2345 = vld [vmem:[%s3 + $0xd68] sm:$0xff]
    %v2346 = vld [vmem:[%s3 + $0xd70] sm:$0xff]
    %v2347 = vld [vmem:[%s3 + $0xd78] sm:$0xff]
    %v2348 = vld [vmem:[%s3 + $0xd80] sm:$0xff]
    %v2349 = vld [vmem:[%s3 + $0xd88] sm:$0xff]
    %v2350 = vld [vmem:[%s3 + $0xd90] sm:$0xff]
    %v2351 = vld [vmem:[%s3 + $0xd98] sm:$0xff]
    %v2352 = vld [vmem:[%s3 + $0xda0] sm:$0xff]
    %v2353 = vld [vmem:[%s3 + $0xda8] sm:$0xff]
    %v2354 = vld [vmem:[%s3 + $0xdb0] sm:$0xff]
    %v2355 = vld [vmem:[%s3 + $0xdb8] sm:$0xff]
    %v2356 = vld [vmem:[%s3 + $0xdc0] sm:$0xff]
    %v2357 = vld [vmem:[%s3 + $0xdc8] sm:$0xff]
    %v2358 = vld [vmem:[%s3 + $0xdd0] sm:$0xff]
    %v2359 = vld [vmem:[%s3 + $0xdd8] sm:$0xff]
    %v2360 = vld [vmem:[%s3 + $0xde0] sm:$0xff]
    %v2361 = vld [vmem:[%s3 + $0xde8] sm:$0xff]
    %v2362 = vld [vmem:[%s3 + $0xdf0] sm:$0xff]
    %v2363 = vld [vmem:[%s3 + $0xdf8] sm:$0xff]
    %v2364 = vld [vmem:[%s3 + $0xe00] sm:$0xff]
    %v2365 = vld [vmem:[%s3 + $0xe08] sm:$0xff]
    %v2366 = vld [vmem:[%s3 + $0xe10] sm:$0xff]
    %v2367 = vld [vmem:[%s3 + $0xe18] sm:$0xff]
    %v2368 = vld [vmem:[%s3 + $0xe20] sm:$0xff]
    %v2369 = vld [vmem:[%s3 + $0xe28] sm:$0xff]
    %v2370 = vld [vmem:[%s3 + $0xe30] sm:$0xff]
    %v2371 = vld [vmem:[%s3 + $0xe38] sm:$0xff]
    %v2372 = vld [vmem:[%s3 + $0xe40] sm:$0xff]
    %v2373 = vld [vmem:[%s3 + $0xe48] sm:$0xff]
    %v2374 = vld [vmem:[%s3 + $0xe50] sm:$0xff]
    %v2375 = vld [vmem:[%s3 + $0xe58] sm:$0xff]
    %v2376 = vld [vmem:[%s3 + $0xe60] sm:$0xff]
    %v2377 = vld [vmem:[%s3 + $0xe68] sm:$0xff]
    %v2378 = vld [vmem:[%s3 + $0xe70] sm:$0xff]
    %v2379 = vld [vmem:[%s3 + $0xe78] sm:$0xff]
    %v2380 = vld [vmem:[%s3 + $0xe80] sm:$0xff]
    %v2381 = vld [vmem:[%s3 + $0xe88] sm:$0xff]
    %v2382 = vld [vmem:[%s3 + $0xe90] sm:$0xff]
    %v2383 = vld [vmem:[%s3 + $0xe98] sm:$0xff]
    %v2384 = vld [vmem:[%s3 + $0xea0] sm:$0xff]
    %v2385 = vld [vmem:[%s3 + $0xea8] sm:$0xff]
    %v2386 = vld [vmem:[%s3 + $0xeb0] sm:$0xff]
    %v2387 = vld [vmem:[%s3 + $0xeb8] sm:$0xff]
    %v2388 = vld [vmem:[%s3 + $0xec0] sm:$0xff]
    %v2389 = vld [vmem:[%s3 + $0xec8] sm:$0xff]
    %v2390 = vld [vmem:[%s3 + $0xed0] sm:$0xff]
    %v2391 = vld [vmem:[%s3 + $0xed8] sm:$0xff]
    %v2392 = vld [vmem:[%s3 + $0xee0] sm:$0xff]
    %v2393 = vld [vmem:[%s3 + $0xee8] sm:$0xff]
    %v2394 = vld [vmem:[%s3 + $0xef0] sm:$0xff]
    %v2395 = vld [vmem:[%s3 + $0xef8] sm:$0xff]
    %v2396 = vld [vmem:[%s3 + $0xf00] sm:$0xff]
    %v2397 = vld [vmem:[%s3 + $0xf08] sm:$0xff]
    %v2398 = vld [vmem:[%s3 + $0xf10] sm:$0xff]
    %v2399 = vld [vmem:[%s3 + $0xf18] sm:$0xff]
    %v2400 = vld [vmem:[%s3 + $0xf20] sm:$0xff]
    %v2401 = vld [vmem:[%s3 + $0xf28] sm:$0xff]
    %v2402 = vld [vmem:[%s3 + $0xf30] sm:$0x7]
    %v2403 = vld [vmem:[%s3 + $0xf38] sm:$0x7]
    %v2404 = vld [vmem:[%s3 + $0xf40] sm:$0x7]
    %vm2405 = vcmask 154624
    %v2407 = vsel %vm2405, %v1904, 0
    %vm2409 = vcmask 1042432
    %v2411 = vsel %vm2409, %v2402, 0
    %v2414 = vsel %vm2409, %v2403, 0
    %v2417 = vsel %vm2409, %v2404, 0
    %2419 = vmatprep.subr.mxu0 %v1917
    %2420 = vmatpush1.msra.mxu0 %v1916
    %2421 = vmatprep.subr.mxu0 %v1920
    %2422 = vmatpush1.msra.mxu0 %v1919
    %2423 = vmatprep.subr.mxu0 %v1923
    %2424 = vmatpush1.msra.mxu0 %v1922
    %2425 = vmatprep.subr.mxu0 %v1926
    %2426 = vmatpush1.msra.mxu0 %v1925
    %2427 = vmatprep.subr.mxu0 %v1929
    %2428 = vmatpush1.msra.mxu0 %v1928
    %2429 = vmatprep.subr.mxu0 %v1932
    %2430 = vmatpush1.msra.mxu0 %v1931
    %2431 = vmatprep.subr.mxu0 %v1935
    %2432 = vmatpush1.msra.mxu0 %v1934
    %2433 = vmatprep.subr.mxu0 %v1938
    %2434 = vmatpush1.msra.mxu0 %v1937
    %2435 = vmatprep.subr.mxu0 %v1941
    %2436 = vmatpush1.msra.mxu0 %v1940
    %2437 = vmatprep.subr.mxu0 %v1944
    %2438 = vmatpush1.msra.mxu0 %v1943
    %2439 = vmatprep.subr.mxu0 %v1947
    %2440 = vmatpush1.msra.mxu0 %v1946
    %2441 = vmatprep.subr.mxu0 %v1950
    %2442 = vmatpush1.msra.mxu0 %v1949
    %2443 = vmatprep.subr.mxu0 %v1953
    %2444 = vmatpush1.msra.mxu0 %v1952
    %2445 = vmatprep.subr.mxu0 %v1956
    %2446 = vmatpush1.msra.mxu0 %v1955
    %2447 = vmatprep.subr.mxu0 %v1959
    %2448 = vmatpush1.msra.mxu0 %v1958
    %2449 = vmatprep.subr.mxu0 %v1962
    %2450 = vmatpush1.msra.mxu0 %v1961
    %2451 = vmatprep.subr.mxu0 %v1965
    %2452 = vmatpush1.msra.mxu0 %v1964
    %2453 = vmatprep.subr.mxu0 %v1968
    %2454 = vmatpush1.msra.mxu0 %v1967
    %2455 = vmatprep.subr.mxu0 %v1971
    %2456 = vmatpush1.msra.mxu0 %v1970
    %2457 = vmatprep.subr.mxu0 %v1974
    %2458 = vmatpush1.msra.mxu0 %v1973
    %2459 = vmatprep.subr.mxu0 %v1977
    %2460 = vmatpush1.msra.mxu0 %v1976
    %2461 = vmatprep.subr.mxu0 %v1980
    %2462 = vmatpush1.msra.mxu0 %v1979
    %2463 = vmatprep.subr.mxu0 %v1983
    %2464 = vmatpush1.msra.mxu0 %v1982
    %2465 = vmatprep.subr.mxu0 %v1986
    %2466 = vmatpush1.msra.mxu0 %v1985
    %2467 = vmatprep.subr.mxu0 %v1989
    %2468 = vmatpush1.msra.mxu0 %v1988
    %2469 = vmatprep.subr.mxu0 %v1992
    %2470 = vmatpush1.msra.mxu0 %v1991
    %2471 = vmatprep.subr.mxu0 %v1995
    %2472 = vmatpush1.msra.mxu0 %v1994
    %2473 = vmatprep.subr.mxu0 %v1998
    %2474 = vmatpush1.msra.mxu0 %v1997
    %2475 = vmatprep.subr.mxu0 %v2001
    %2476 = vmatpush1.msra.mxu0 %v2000
    %2477 = vmatprep.subr.mxu0 %v2004
    %2478 = vmatpush1.msra.mxu0 %v2003
    %2479 = vmatprep.subr.mxu0 %v2007
    %2480 = vmatpush1.msra.mxu0 %v2006
    %2481 = vmatprep.subr.mxu0 %v2010
    %2482 = vmatpush1.msra.mxu0 %v2009
    %2483 = vmatprep.mubr.f32.mxu0 %v1895
    %2484 = vmatmul.mubr.f32.gmra.mrb[0].mxu0 %v1894
    %v2485 = vpop.f32.mrb[0].mxu0
    %v2486 = vadd.f32 0.0, %v2485
    %v2487 = vpop.f32.mrb[0].mxu0
    %v2488 = vadd.f32 0.0, %v2487
    %2489 = vdwg.mxu0
    %2490 = vmatprep.subr.mxu0 %v2013
    %2491 = vmatpush1.msra.mxu0 %v2012
    %2492 = vmatprep.subr.mxu0 %v2016
    %2493 = vmatpush1.msra.mxu0 %v2015
    %2494 = vmatprep.subr.mxu0 %v2019
    %2495 = vmatpush1.msra.mxu0 %v2018
    %2496 = vmatprep.subr.mxu0 %v2022
    %2497 = vmatpush1.msra.mxu0 %v2021
    %2498 = vmatprep.subr.mxu0 %v2025
    %2499 = vmatpush1.msra.mxu0 %v2024
    %2500 = vmatprep.subr.mxu0 %v2028
    %2501 = vmatpush1.msra.mxu0 %v2027
    %2502 = vmatprep.subr.mxu0 %v2031
    %2503 = vmatpush1.msra.mxu0 %v2030
    %2504 = vmatprep.subr.mxu0 %v2034
    %2505 = vmatpush1.msra.mxu0 %v2033
    %2506 = vmatprep.subr.mxu0 %v2037
    %2507 = vmatpush1.msra.mxu0 %v2036
    %2508 = vmatprep.subr.mxu0 %v2040
    %2509 = vmatpush1.msra.mxu0 %v2039
    %2510 = vmatprep.subr.mxu0 %v2043
    %2511 = vmatpush1.msra.mxu0 %v2042
    %2512 = vmatprep.subr.mxu0 %v2046
    %2513 = vmatpush1.msra.mxu0 %v2045
    %2514 = vmatprep.subr.mxu0 %v2049
    %2515 = vmatpush1.msra.mxu0 %v2048
    %2516 = vmatprep.subr.mxu0 %v2052
    %2517 = vmatpush1.msra.mxu0 %v2051
    %2518 = vmatprep.subr.mxu0 %v2055
    %2519 = vmatpush1.msra.mxu0 %v2054
    %2520 = vmatprep.subr.mxu0 %v2058
    %2521 = vmatpush1.msra.mxu0 %v2057
    %2522 = vmatprep.subr.mxu0 %v2061
    %2523 = vmatpush1.msra.mxu0 %v2060
    %2524 = vmatprep.subr.mxu0 %v2064
    %2525 = vmatpush1.msra.mxu0 %v2063
    %2526 = vmatprep.subr.mxu0 %v2067
    %2527 = vmatpush1.msra.mxu0 %v2066
    %2528 = vmatprep.subr.mxu0 %v2070
    %2529 = vmatpush1.msra.mxu0 %v2069
    %2530 = vmatprep.subr.mxu0 %v2073
    %2531 = vmatpush1.msra.mxu0 %v2072
    %2532 = vmatprep.subr.mxu0 %v2076
    %2533 = vmatpush1.msra.mxu0 %v2075
    %2534 = vmatprep.subr.mxu0 %v2079
    %2535 = vmatpush1.msra.mxu0 %v2078
    %2536 = vmatprep.subr.mxu0 %v2082
    %2537 = vmatpush1.msra.mxu0 %v2081
    %2538 = vmatprep.subr.mxu0 %v2085
    %2539 = vmatpush1.msra.mxu0 %v2084
    %2540 = vmatprep.subr.mxu0 %v2088
    %2541 = vmatpush1.msra.mxu0 %v2087
    %2542 = vmatprep.subr.mxu0 %v2091
    %2543 = vmatpush1.msra.mxu0 %v2090
    %2544 = vmatprep.subr.mxu0 %v2094
    %2545 = vmatpush1.msra.mxu0 %v2093
    %2546 = vmatprep.subr.mxu0 %v2097
    %2547 = vmatpush1.msra.mxu0 %v2096
    %2548 = vmatprep.subr.mxu0 %v2100
    %2549 = vmatpush1.msra.mxu0 %v2099
    %2550 = vmatprep.subr.mxu0 %v2103
    %2551 = vmatpush1.msra.mxu0 %v2102
    %2552 = vmatprep.subr.mxu0 %v2106
    %2553 = vmatpush1.msra.mxu0 %v2105
    %2554 = vmatprep.mubr.f32.mxu0 %v1897
    %2555 = vmatmul.mubr.f32.gmra.mrb[0].mxu0 %v1896
    %v2556 = vpop.f32.mrb[0].mxu0
    %v2557 = vadd.f32 %v2486, %v2556
    %v2558 = vpop.f32.mrb[0].mxu0
    %v2559 = vadd.f32 %v2488, %v2558
    %2560 = vdwg.mxu0
    %2561 = vmatprep.subr.mxu0 %v2109
    %2562 = vmatpush1.msra.mxu0 %v2108
    %2563 = vmatprep.subr.mxu0 %v2112
    %2564 = vmatpush1.msra.mxu0 %v2111
    %2565 = vmatprep.subr.mxu0 %v2115
    %2566 = vmatpush1.msra.mxu0 %v2114
    %2567 = vmatprep.subr.mxu0 %v2118
    %2568 = vmatpush1.msra.mxu0 %v2117
    %2569 = vmatprep.subr.mxu0 %v2121
    %2570 = vmatpush1.msra.mxu0 %v2120
    %2571 = vmatprep.subr.mxu0 %v2124
    %2572 = vmatpush1.msra.mxu0 %v2123
    %2573 = vmatprep.subr.mxu0 %v2127
    %2574 = vmatpush1.msra.mxu0 %v2126
    %2575 = vmatprep.subr.mxu0 %v2130
    %2576 = vmatpush1.msra.mxu0 %v2129
    %2577 = vmatprep.subr.mxu0 %v2133
    %2578 = vmatpush1.msra.mxu0 %v2132
    %2579 = vmatprep.subr.mxu0 %v2136
    %2580 = vmatpush1.msra.mxu0 %v2135
    %2581 = vmatprep.subr.mxu0 %v2139
    %2582 = vmatpush1.msra.mxu0 %v2138
    %2583 = vmatprep.subr.mxu0 %v2142
    %2584 = vmatpush1.msra.mxu0 %v2141
    %2585 = vmatprep.subr.mxu0 %v2145
    %2586 = vmatpush1.msra.mxu0 %v2144
    %2587 = vmatprep.subr.mxu0 %v2148
    %2588 = vmatpush1.msra.mxu0 %v2147
    %2589 = vmatprep.subr.mxu0 %v2151
    %2590 = vmatpush1.msra.mxu0 %v2150
    %2591 = vmatprep.subr.mxu0 %v2154
    %2592 = vmatpush1.msra.mxu0 %v2153
    %2593 = vmatprep.subr.mxu0 %v2157
    %2594 = vmatpush1.msra.mxu0 %v2156
    %2595 = vmatprep.subr.mxu0 %v2160
    %2596 = vmatpush1.msra.mxu0 %v2159
    %2597 = vmatprep.subr.mxu0 %v2163
    %2598 = vmatpush1.msra.mxu0 %v2162
    %2599 = vmatprep.subr.mxu0 %v2166
    %2600 = vmatpush1.msra.mxu0 %v2165
    %2601 = vmatprep.subr.mxu0 %v2169
    %2602 = vmatpush1.msra.mxu0 %v2168
    %2603 = vmatprep.subr.mxu0 %v2172
    %2604 = vmatpush1.msra.mxu0 %v2171
    %2605 = vmatprep.subr.mxu0 %v2175
    %2606 = vmatpush1.msra.mxu0 %v2174
    %2607 = vmatprep.subr.mxu0 %v2178
    %2608 = vmatpush1.msra.mxu0 %v2177
    %2609 = vmatprep.subr.mxu0 %v2181
    %2610 = vmatpush1.msra.mxu0 %v2180
    %2611 = vmatprep.subr.mxu0 %v2184
    %2612 = vmatpush1.msra.mxu0 %v2183
    %2613 = vmatprep.subr.mxu0 %v2187
    %2614 = vmatpush1.msra.mxu0 %v2186
    %2615 = vmatprep.subr.mxu0 %v2190
    %2616 = vmatpush1.msra.mxu0 %v2189
    %2617 = vmatprep.subr.mxu0 %v2193
    %2618 = vmatpush1.msra.mxu0 %v2192
    %2619 = vmatprep.subr.mxu0 %v2196
    %2620 = vmatpush1.msra.mxu0 %v2195
    %2621 = vmatprep.subr.mxu0 %v2199
    %2622 = vmatpush1.msra.mxu0 %v2198
    %2623 = vmatprep.subr.mxu0 %v2202
    %2624 = vmatpush1.msra.mxu0 %v2201
    %2625 = vmatprep.mubr.f32.mxu0 %v1899
    %2626 = vmatmul.mubr.f32.gmra.mrb[0].mxu0 %v1898
    %v2627 = vpop.f32.mrb[0].mxu0
    %v2628 = vadd.f32 %v2557, %v2627
    %v2629 = vpop.f32.mrb[0].mxu0
    %v2630 = vadd.f32 %v2559, %v2629
    %2631 = vdwg.mxu0
    %2632 = vmatprep.subr.mxu0 %v2205
    %2633 = vmatpush1.msra.mxu0 %v2204
    %2634 = vmatprep.subr.mxu0 %v2208
    %2635 = vmatpush1.msra.mxu0 %v2207
    %2636 = vmatprep.subr.mxu0 %v2211
    %2637 = vmatpush1.msra.mxu0 %v2210
    %2638 = vmatprep.subr.mxu0 %v2214
    %2639 = vmatpush1.msra.mxu0 %v2213
    %2640 = vmatprep.subr.mxu0 %v2217
    %2641 = vmatpush1.msra.mxu0 %v2216
    %2642 = vmatprep.subr.mxu0 %v2220
    %2643 = vmatpush1.msra.mxu0 %v2219
    %2644 = vmatprep.subr.mxu0 %v2223
    %2645 = vmatpush1.msra.mxu0 %v2222
    %2646 = vmatprep.subr.mxu0 %v2226
    %2647 = vmatpush1.msra.mxu0 %v2225
    %2648 = vmatprep.subr.mxu0 %v2229
    %2649 = vmatpush1.msra.mxu0 %v2228
    %2650 = vmatprep.subr.mxu0 %v2232
    %2651 = vmatpush1.msra.mxu0 %v2231
    %2652 = vmatprep.subr.mxu0 %v2235
    %2653 = vmatpush1.msra.mxu0 %v2234
    %2654 = vmatprep.subr.mxu0 %v2238
    %2655 = vmatpush1.msra.mxu0 %v2237
    %2656 = vmatprep.subr.mxu0 %v2241
    %2657 = vmatpush1.msra.mxu0 %v2240
    %2658 = vmatprep.subr.mxu0 %v2244
    %2659 = vmatpush1.msra.mxu0 %v2243
    %2660 = vmatprep.subr.mxu0 %v2247
    %2661 = vmatpush1.msra.mxu0 %v2246
    %2662 = vmatprep.subr.mxu0 %v2250
    %2663 = vmatpush1.msra.mxu0 %v2249
    %2664 = vmatprep.subr.mxu0 %v2253
    %2665 = vmatpush1.msra.mxu0 %v2252
    %2666 = vmatprep.subr.mxu0 %v2256
    %2667 = vmatpush1.msra.mxu0 %v2255
    %2668 = vmatprep.subr.mxu0 %v2259
    %2669 = vmatpush1.msra.mxu0 %v2258
    %2670 = vmatprep.subr.mxu0 %v2262
    %2671 = vmatpush1.msra.mxu0 %v2261
    %2672 = vmatprep.subr.mxu0 %v2265
    %2673 = vmatpush1.msra.mxu0 %v2264
    %2674 = vmatprep.subr.mxu0 %v2268
    %2675 = vmatpush1.msra.mxu0 %v2267
    %2676 = vmatprep.subr.mxu0 %v2271
    %2677 = vmatpush1.msra.mxu0 %v2270
    %2678 = vmatprep.subr.mxu0 %v2274
    %2679 = vmatpush1.msra.mxu0 %v2273
    %2680 = vmatprep.subr.mxu0 %v2277
    %2681 = vmatpush1.msra.mxu0 %v2276
    %2682 = vmatprep.subr.mxu0 %v2280
    %2683 = vmatpush1.msra.mxu0 %v2279
    %2684 = vmatprep.subr.mxu0 %v2283
    %2685 = vmatpush1.msra.mxu0 %v2282
    %2686 = vmatprep.subr.mxu0 %v2286
    %2687 = vmatpush1.msra.mxu0 %v2285
    %2688 = vmatprep.subr.mxu0 %v2289
    %2689 = vmatpush1.msra.mxu0 %v2288
    %2690 = vmatprep.subr.mxu0 %v2292
    %2691 = vmatpush1.msra.mxu0 %v2291
    %2692 = vmatprep.subr.mxu0 %v2295
    %2693 = vmatpush1.msra.mxu0 %v2294
    %2694 = vmatprep.subr.mxu0 %v2298
    %2695 = vmatpush1.msra.mxu0 %v2297
    %2696 = vmatprep.mubr.f32.mxu0 %v1901
    %2697 = vmatmul.mubr.f32.gmra.mrb[0].mxu0 %v1900
    %v2698 = vpop.f32.mrb[0].mxu0
    %v2699 = vadd.f32 %v2628, %v2698
    %v2700 = vpop.f32.mrb[0].mxu0
    %v2701 = vadd.f32 %v2630, %v2700
    %2702 = vdwg.mxu0
    %2703 = vmatprep.subr.mxu0 %v2301
    %2704 = vmatpush1.msra.mxu0 %v2300
    %2705 = vmatprep.subr.mxu0 %v2304
    %2706 = vmatpush1.msra.mxu0 %v2303
    %2707 = vmatprep.subr.mxu0 %v2307
    %2708 = vmatpush1.msra.mxu0 %v2306
    %2709 = vmatprep.subr.mxu0 %v2310
    %2710 = vmatpush1.msra.mxu0 %v2309
    %2711 = vmatprep.subr.mxu0 %v2313
    %2712 = vmatpush1.msra.mxu0 %v2312
    %2713 = vmatprep.subr.mxu0 %v2316
    %2714 = vmatpush1.msra.mxu0 %v2315
    %2715 = vmatprep.subr.mxu0 %v2319
    %2716 = vmatpush1.msra.mxu0 %v2318
    %2717 = vmatprep.subr.mxu0 %v2322
    %2718 = vmatpush1.msra.mxu0 %v2321
    %2719 = vmatprep.subr.mxu0 %v2325
    %2720 = vmatpush1.msra.mxu0 %v2324
    %2721 = vmatprep.subr.mxu0 %v2328
    %2722 = vmatpush1.msra.mxu0 %v2327
    %2723 = vmatprep.subr.mxu0 %v2331
    %2724 = vmatpush1.msra.mxu0 %v2330
    %2725 = vmatprep.subr.mxu0 %v2334
    %2726 = vmatpush1.msra.mxu0 %v2333
    %2727 = vmatprep.subr.mxu0 %v2337
    %2728 = vmatpush1.msra.mxu0 %v2336
    %2729 = vmatprep.subr.mxu0 %v2340
    %2730 = vmatpush1.msra.mxu0 %v2339
    %2731 = vmatprep.subr.mxu0 %v2343
    %2732 = vmatpush1.msra.mxu0 %v2342
    %2733 = vmatprep.subr.mxu0 %v2346
    %2734 = vmatpush1.msra.mxu0 %v2345
    %2735 = vmatprep.subr.mxu0 %v2349
    %2736 = vmatpush1.msra.mxu0 %v2348
    %2737 = vmatprep.subr.mxu0 %v2352
    %2738 = vmatpush1.msra.mxu0 %v2351
    %2739 = vmatprep.subr.mxu0 %v2355
    %2740 = vmatpush1.msra.mxu0 %v2354
    %2741 = vmatprep.subr.mxu0 %v2358
    %2742 = vmatpush1.msra.mxu0 %v2357
    %2743 = vmatprep.subr.mxu0 %v2361
    %2744 = vmatpush1.msra.mxu0 %v2360
    %2745 = vmatprep.subr.mxu0 %v2364
    %2746 = vmatpush1.msra.mxu0 %v2363
    %2747 = vmatprep.subr.mxu0 %v2367
    %2748 = vmatpush1.msra.mxu0 %v2366
    %2749 = vmatprep.subr.mxu0 %v2370
    %2750 = vmatpush1.msra.mxu0 %v2369
    %2751 = vmatprep.subr.mxu0 %v2373
    %2752 = vmatpush1.msra.mxu0 %v2372
    %2753 = vmatprep.subr.mxu0 %v2376
    %2754 = vmatpush1.msra.mxu0 %v2375
    %2755 = vmatprep.subr.mxu0 %v2379
    %2756 = vmatpush1.msra.mxu0 %v2378
    %2757 = vmatprep.subr.mxu0 %v2382
    %2758 = vmatpush1.msra.mxu0 %v2381
    %2759 = vmatprep.subr.mxu0 %v2385
    %2760 = vmatpush1.msra.mxu0 %v2384
    %2761 = vmatprep.subr.mxu0 %v2388
    %2762 = vmatpush1.msra.mxu0 %v2387
    %2763 = vmatprep.subr.mxu0 %v2391
    %2764 = vmatpush1.msra.mxu0 %v2390
    %2765 = vmatprep.subr.mxu0 %v2394
    %2766 = vmatpush1.msra.mxu0 %v2393
    %2767 = vmatprep.mubr.f32.mxu0 %v1903
    %2768 = vmatmul.mubr.f32.gmra.mrb[0].mxu0 %v1902
    %v2769 = vpop.f32.mrb[0].mxu0
    %v2770 = vadd.f32 %v2699, %v2769
    %v2771 = vpop.f32.mrb[0].mxu0
    %v2772 = vadd.f32 %v2701, %v2771
    %2773 = vdwg.mxu0
    %2774 = vmatprep.subr.mxu0 %v2397
    %2775 = vmatpush1.msra.mxu0 %v2396
    %2776 = vmatprep.subr.mxu0 %v2400
    %2777 = vmatpush1.msra.mxu0 %v2399
    %2778 = vmatprep.subr.mxu0 %v2414
    %2779 = vmatpush1.msra.mxu0 %v2411
    %2780 = vmatprep.subr.mxu0 0.0
    %2781 = vmatpush1.msra.mxu0 0.0
    %2782 = vmatprep.subr.mxu0 0.0
    %2783 = vmatpush1.msra.mxu0 0.0
    %2784 = vmatprep.subr.mxu0 0.0
    %2785 = vmatpush1.msra.mxu0 0.0
    %2786 = vmatprep.subr.mxu0 0.0
    %2787 = vmatpush1.msra.mxu0 0.0
    %2788 = vmatprep.subr.mxu0 0.0
    %2789 = vmatpush1.msra.mxu0 0.0
    %2790 = vmatprep.subr.mxu0 0.0
    %2791 = vmatpush1.msra.mxu0 0.0
    %2792 = vmatprep.subr.mxu0 0.0
    %2793 = vmatpush1.msra.mxu0 0.0
    %2794 = vmatprep.subr.mxu0 0.0
    %2795 = vmatpush1.msra.mxu0 0.0
    %2796 = vmatprep.subr.mxu0 0.0
    %2797 = vmatpush1.msra.mxu0 0.0
    %2798 = vmatprep.subr.mxu0 0.0
    %2799 = vmatpush1.msra.mxu0 0.0
    %2800 = vmatprep.subr.mxu0 0.0
    %2801 = vmatpush1.msra.mxu0 0.0
    %2802 = vmatprep.subr.mxu0 0.0
    %2803 = vmatpush1.msra.mxu0 0.0
    %2804 = vmatprep.subr.mxu0 0.0
    %2805 = vmatpush1.msra.mxu0 0.0
    %2806 = vmatprep.subr.mxu0 0.0
    %2807 = vmatpush1.msra.mxu0 0.0
    %2808 = vmatprep.subr.mxu0 0.0
    %2809 = vmatpush1.msra.mxu0 0.0
    %2810 = vmatprep.subr.mxu0 0.0
    %2811 = vmatpush1.msra.mxu0 0.0
    %2812 = vmatprep.subr.mxu0 0.0
    %2813 = vmatpush1.msra.mxu0 0.0
    %2814 = vmatprep.subr.mxu0 0.0
    %2815 = vmatpush1.msra.mxu0 0.0
    %2816 = vmatprep.subr.mxu0 0.0
    %2817 = vmatpush1.msra.mxu0 0.0
    %2818 = vmatprep.subr.mxu0 0.0
    %2819 = vmatpush1.msra.mxu0 0.0
    %2820 = vmatprep.subr.mxu0 0.0
    %2821 = vmatpush1.msra.mxu0 0.0
    %2822 = vmatprep.subr.mxu0 0.0
    %2823 = vmatpush1.msra.mxu0 0.0
    %2824 = vmatprep.subr.mxu0 0.0
    %2825 = vmatpush1.msra.mxu0 0.0
    %2826 = vmatprep.subr.mxu0 0.0
    %2827 = vmatpush1.msra.mxu0 0.0
    %2828 = vmatprep.subr.mxu0 0.0
    %2829 = vmatpush1.msra.mxu0 0.0
    %2830 = vmatprep.subr.mxu0 0.0
    %2831 = vmatpush1.msra.mxu0 0.0
    %2832 = vmatprep.subr.mxu0 0.0
    %2833 = vmatpush1.msra.mxu0 0.0
    %2834 = vmatprep.subr.mxu0 0.0
    %2835 = vmatpush1.msra.mxu0 0.0
    %2836 = vmatprep.subr.mxu0 0.0
    %2837 = vmatpush1.msra.mxu0 0.0
    %2838 = vmatprep.mubr.f32.mxu0 0.0
    %2839 = vmatmul.mubr.f32.gmra.mrb[0].mxu0 %v2407
    %v2840 = vpop.f32.mrb[0].mxu0
    %v2841 = vadd.f32 %v2770, %v2840
    %v2842 = vpop.f32.mrb[0].mxu0
    %v2843 = vadd.f32 %v2772, %v2842
    %2844 = vdwg.mxu0
    %2845 = vmatprep.subr.mxu0 0.0
    %2846 = vmatpush1.msra.mxu0 %v1918
    %2847 = vmatprep.subr.mxu0 0.0
    %2848 = vmatpush1.msra.mxu0 %v1921
    %2849 = vmatprep.subr.mxu0 0.0
    %2850 = vmatpush1.msra.mxu0 %v1924
    %2851 = vmatprep.subr.mxu0 0.0
    %2852 = vmatpush1.msra.mxu0 %v1927
    %2853 = vmatprep.subr.mxu0 0.0
    %2854 = vmatpush1.msra.mxu0 %v1930
    %2855 = vmatprep.subr.mxu0 0.0
    %2856 = vmatpush1.msra.mxu0 %v1933
    %2857 = vmatprep.subr.mxu0 0.0
    %2858 = vmatpush1.msra.mxu0 %v1936
    %2859 = vmatprep.subr.mxu0 0.0
    %2860 = vmatpush1.msra.mxu0 %v1939
    %2861 = vmatprep.subr.mxu0 0.0
    %2862 = vmatpush1.msra.mxu0 %v1942
    %2863 = vmatprep.subr.mxu0 0.0
    %2864 = vmatpush1.msra.mxu0 %v1945
    %2865 = vmatprep.subr.mxu0 0.0
    %2866 = vmatpush1.msra.mxu0 %v1948
    %2867 = vmatprep.subr.mxu0 0.0
    %2868 = vmatpush1.msra.mxu0 %v1951
    %2869 = vmatprep.subr.mxu0 0.0
    %2870 = vmatpush1.msra.mxu0 %v1954
    %2871 = vmatprep.subr.mxu0 0.0
    %2872 = vmatpush1.msra.mxu0 %v1957
    %2873 = vmatprep.subr.mxu0 0.0
    %2874 = vmatpush1.msra.mxu0 %v1960
    %2875 = vmatprep.subr.mxu0 0.0
    %2876 = vmatpush1.msra.mxu0 %v1963
    %2877 = vmatprep.subr.mxu0 0.0
    %2878 = vmatpush1.msra.mxu0 %v1966
    %2879 = vmatprep.subr.mxu0 0.0
    %2880 = vmatpush1.msra.mxu0 %v1969
    %2881 = vmatprep.subr.mxu0 0.0
    %2882 = vmatpush1.msra.mxu0 %v1972
    %2883 = vmatprep.subr.mxu0 0.0
    %2884 = vmatpush1.msra.mxu0 %v1975
    %2885 = vmatprep.subr.mxu0 0.0
    %2886 = vmatpush1.msra.mxu0 %v1978
    %2887 = vmatprep.subr.mxu0 0.0
    %2888 = vmatpush1.msra.mxu0 %v1981
    %2889 = vmatprep.subr.mxu0 0.0
    %2890 = vmatpush1.msra.mxu0 %v1984
    %2891 = vmatprep.subr.mxu0 0.0
    %2892 = vmatpush1.msra.mxu0 %v1987
    %2893 = vmatprep.subr.mxu0 0.0
    %2894 = vmatpush1.msra.mxu0 %v1990
    %2895 = vmatprep.subr.mxu0 0.0
    %2896 = vmatpush1.msra.mxu0 %v1993
    %2897 = vmatprep.subr.mxu0 0.0
    %2898 = vmatpush1.msra.mxu0 %v1996
    %2899 = vmatprep.subr.mxu0 0.0
    %2900 = vmatpush1.msra.mxu0 %v1999
    %2901 = vmatprep.subr.mxu0 0.0
    %2902 = vmatpush1.msra.mxu0 %v2002
    %2903 = vmatprep.subr.mxu0 0.0
    %2904 = vmatpush1.msra.mxu0 %v2005
    %2905 = vmatprep.subr.mxu0 0.0
    %2906 = vmatpush1.msra.mxu0 %v2008
    %2907 = vmatprep.subr.mxu0 0.0
    %2908 = vmatpush1.msra.mxu0 %v2011
    %2909 = vmatprep.mubr.f32.mxu0 %v1895
    %2910 = vmatmul.mubr.f32.gmra.mrb[0].mxu0 %v1894
    %v2911 = vpop.f32.mrb[0].mxu0
    %v2912 = vadd.f32 0.0, %v2911
    %v2913 = vpop.f32.mrb[0].mxu0
    %2914 = vdwg.mxu0
    %2915 = vmatprep.subr.mxu0 0.0
    %2916 = vmatpush1.msra.mxu0 %v2014
    %2917 = vmatprep.subr.mxu0 0.0
    %2918 = vmatpush1.msra.mxu0 %v2017
    %2919 = vmatprep.subr.mxu0 0.0
    %2920 = vmatpush1.msra.mxu0 %v2020
    %2921 = vmatprep.subr.mxu0 0.0
    %2922 = vmatpush1.msra.mxu0 %v2023
    %2923 = vmatprep.subr.mxu0 0.0
    %2924 = vmatpush1.msra.mxu0 %v2026
    %2925 = vmatprep.subr.mxu0 0.0
    %2926 = vmatpush1.msra.mxu0 %v2029
    %2927 = vmatprep.subr.mxu0 0.0
    %2928 = vmatpush1.msra.mxu0 %v2032
    %2929 = vmatprep.subr.mxu0 0.0
    %2930 = vmatpush1.msra.mxu0 %v2035
    %2931 = vmatprep.subr.mxu0 0.0
    %2932 = vmatpush1.msra.mxu0 %v2038
    %2933 = vmatprep.subr.mxu0 0.0
    %2934 = vmatpush1.msra.mxu0 %v2041
    %2935 = vmatprep.subr.mxu0 0.0
    %2936 = vmatpush1.msra.mxu0 %v2044
    %2937 = vmatprep.subr.mxu0 0.0
    %2938 = vmatpush1.msra.mxu0 %v2047
    %2939 = vmatprep.subr.mxu0 0.0
    %2940 = vmatpush1.msra.mxu0 %v2050
    %2941 = vmatprep.subr.mxu0 0.0
    %2942 = vmatpush1.msra.mxu0 %v2053
    %2943 = vmatprep.subr.mxu0 0.0
    %2944 = vmatpush1.msra.mxu0 %v2056
    %2945 = vmatprep.subr.mxu0 0.0
    %2946 = vmatpush1.msra.mxu0 %v2059
    %2947 = vmatprep.subr.mxu0 0.0
    %2948 = vmatpush1.msra.mxu0 %v2062
    %2949 = vmatprep.subr.mxu0 0.0
    %2950 = vmatpush1.msra.mxu0 %v2065
    %2951 = vmatprep.subr.mxu0 0.0
    %2952 = vmatpush1.msra.mxu0 %v2068
    %2953 = vmatprep.subr.mxu0 0.0
    %2954 = vmatpush1.msra.mxu0 %v2071
    %2955 = vmatprep.subr.mxu0 0.0
    %2956 = vmatpush1.msra.mxu0 %v2074
    %2957 = vmatprep.subr.mxu0 0.0
    %2958 = vmatpush1.msra.mxu0 %v2077
    %2959 = vmatprep.subr.mxu0 0.0
    %2960 = vmatpush1.msra.mxu0 %v2080
    %2961 = vmatprep.subr.mxu0 0.0
    %2962 = vmatpush1.msra.mxu0 %v2083
    %2963 = vmatprep.subr.mxu0 0.0
    %2964 = vmatpush1.msra.mxu0 %v2086
    %2965 = vmatprep.subr.mxu0 0.0
    %2966 = vmatpush1.msra.mxu0 %v2089
    %2967 = vmatprep.subr.mxu0 0.0
    %2968 = vmatpush1.msra.mxu0 %v2092
    %2969 = vmatprep.subr.mxu0 0.0
    %2970 = vmatpush1.msra.mxu0 %v2095
    %2971 = vmatprep.subr.mxu0 0.0
    %2972 = vmatpush1.msra.mxu0 %v2098
    %2973 = vmatprep.subr.mxu0 0.0
    %2974 = vmatpush1.msra.mxu0 %v2101
    %2975 = vmatprep.subr.mxu0 0.0
    %2976 = vmatpush1.msra.mxu0 %v2104
    %2977 = vmatprep.subr.mxu0 0.0
    %2978 = vmatpush1.msra.mxu0 %v2107
    %2979 = vmatprep.mubr.f32.mxu0 %v1897
    %2980 = vmatmul.mubr.f32.gmra.mrb[0].mxu0 %v1896
    %v2981 = vpop.f32.mrb[0].mxu0
    %v2982 = vadd.f32 %v2912, %v2981
    %v2983 = vpop.f32.mrb[0].mxu0
    %2984 = vdwg.mxu0
    %2985 = vmatprep.subr.mxu0 0.0
    %2986 = vmatpush1.msra.mxu0 %v2110
    %2987 = vmatprep.subr.mxu0 0.0
    %2988 = vmatpush1.msra.mxu0 %v2113
    %2989 = vmatprep.subr.mxu0 0.0
    %2990 = vmatpush1.msra.mxu0 %v2116
    %2991 = vmatprep.subr.mxu0 0.0
    %2992 = vmatpush1.msra.mxu0 %v2119
    %2993 = vmatprep.subr.mxu0 0.0
    %2994 = vmatpush1.msra.mxu0 %v2122
    %2995 = vmatprep.subr.mxu0 0.0
    %2996 = vmatpush1.msra.mxu0 %v2125
    %2997 = vmatprep.subr.mxu0 0.0
    %2998 = vmatpush1.msra.mxu0 %v2128
    %2999 = vmatprep.subr.mxu0 0.0
    %3000 = vmatpush1.msra.mxu0 %v2131
    %3001 = vmatprep.subr.mxu0 0.0
    %3002 = vmatpush1.msra.mxu0 %v2134
    %3003 = vmatprep.subr.mxu0 0.0
    %3004 = vmatpush1.msra.mxu0 %v2137
    %3005 = vmatprep.subr.mxu0 0.0
    %3006 = vmatpush1.msra.mxu0 %v2140
    %3007 = vmatprep.subr.mxu0 0.0
    %3008 = vmatpush1.msra.mxu0 %v2143
    %3009 = vmatprep.subr.mxu0 0.0
    %3010 = vmatpush1.msra.mxu0 %v2146
    %3011 = vmatprep.subr.mxu0 0.0
    %3012 = vmatpush1.msra.mxu0 %v2149
    %3013 = vmatprep.subr.mxu0 0.0
    %3014 = vmatpush1.msra.mxu0 %v2152
    %3015 = vmatprep.subr.mxu0 0.0
    %3016 = vmatpush1.msra.mxu0 %v2155
    %3017 = vmatprep.subr.mxu0 0.0
    %3018 = vmatpush1.msra.mxu0 %v2158
    %3019 = vmatprep.subr.mxu0 0.0
    %3020 = vmatpush1.msra.mxu0 %v2161
    %3021 = vmatprep.subr.mxu0 0.0
    %3022 = vmatpush1.msra.mxu0 %v2164
    %3023 = vmatprep.subr.mxu0 0.0
    %3024 = vmatpush1.msra.mxu0 %v2167
    %3025 = vmatprep.subr.mxu0 0.0
    %3026 = vmatpush1.msra.mxu0 %v2170
    %3027 = vmatprep.subr.mxu0 0.0
    %3028 = vmatpush1.msra.mxu0 %v2173
    %3029 = vmatprep.subr.mxu0 0.0
    %3030 = vmatpush1.msra.mxu0 %v2176
    %3031 = vmatprep.subr.mxu0 0.0
    %3032 = vmatpush1.msra.mxu0 %v2179
    %3033 = vmatprep.subr.mxu0 0.0
    %3034 = vmatpush1.msra.mxu0 %v2182
    %3035 = vmatprep.subr.mxu0 0.0
    %3036 = vmatpush1.msra.mxu0 %v2185
    %3037 = vmatprep.subr.mxu0 0.0
    %3038 = vmatpush1.msra.mxu0 %v2188
    %3039 = vmatprep.subr.mxu0 0.0
    %3040 = vmatpush1.msra.mxu0 %v2191
    %3041 = vmatprep.subr.mxu0 0.0
    %3042 = vmatpush1.msra.mxu0 %v2194
    %3043 = vmatprep.subr.mxu0 0.0
    %3044 = vmatpush1.msra.mxu0 %v2197
    %3045 = vmatprep.subr.mxu0 0.0
    %3046 = vmatpush1.msra.mxu0 %v2200
    %3047 = vmatprep.subr.mxu0 0.0
    %3048 = vmatpush1.msra.mxu0 %v2203
    %3049 = vmatprep.mubr.f32.mxu0 %v1899
    %3050 = vmatmul.mubr.f32.gmra.mrb[0].mxu0 %v1898
    %v3051 = vpop.f32.mrb[0].mxu0
    %v3052 = vadd.f32 %v2982, %v3051
    %v3053 = vpop.f32.mrb[0].mxu0
    %3054 = vdwg.mxu0
    %3055 = vmatprep.subr.mxu0 0.0
    %3056 = vmatpush1.msra.mxu0 %v2206
    %3057 = vmatprep.subr.mxu0 0.0
    %3058 = vmatpush1.msra.mxu0 %v2209
    %3059 = vmatprep.subr.mxu0 0.0
    %3060 = vmatpush1.msra.mxu0 %v2212
    %3061 = vmatprep.subr.mxu0 0.0
    %3062 = vmatpush1.msra.mxu0 %v2215
    %3063 = vmatprep.subr.mxu0 0.0
    %3064 = vmatpush1.msra.mxu0 %v2218
    %3065 = vmatprep.subr.mxu0 0.0
    %3066 = vmatpush1.msra.mxu0 %v2221
    %3067 = vmatprep.subr.mxu0 0.0
    %3068 = vmatpush1.msra.mxu0 %v2224
    %3069 = vmatprep.subr.mxu0 0.0
    %3070 = vmatpush1.msra.mxu0 %v2227
    %3071 = vmatprep.subr.mxu0 0.0
    %3072 = vmatpush1.msra.mxu0 %v2230
    %3073 = vmatprep.subr.mxu0 0.0
    %3074 = vmatpush1.msra.mxu0 %v2233
    %3075 = vmatprep.subr.mxu0 0.0
    %3076 = vmatpush1.msra.mxu0 %v2236
    %3077 = vmatprep.subr.mxu0 0.0
    %3078 = vmatpush1.msra.mxu0 %v2239
    %3079 = vmatprep.subr.mxu0 0.0
    %3080 = vmatpush1.msra.mxu0 %v2242
    %3081 = vmatprep.subr.mxu0 0.0
    %3082 = vmatpush1.msra.mxu0 %v2245
    %3083 = vmatprep.subr.mxu0 0.0
    %3084 = vmatpush1.msra.mxu0 %v2248
    %3085 = vmatprep.subr.mxu0 0.0
    %3086 = vmatpush1.msra.mxu0 %v2251
    %3087 = vmatprep.subr.mxu0 0.0
    %3088 = vmatpush1.msra.mxu0 %v2254
    %3089 = vmatprep.subr.mxu0 0.0
    %3090 = vmatpush1.msra.mxu0 %v2257
    %3091 = vmatprep.subr.mxu0 0.0
    %3092 = vmatpush1.msra.mxu0 %v2260
    %3093 = vmatprep.subr.mxu0 0.0
    %3094 = vmatpush1.msra.mxu0 %v2263
    %3095 = vmatprep.subr.mxu0 0.0
    %3096 = vmatpush1.msra.mxu0 %v2266
    %3097 = vmatprep.subr.mxu0 0.0
    %3098 = vmatpush1.msra.mxu0 %v2269
    %3099 = vmatprep.subr.mxu0 0.0
    %3100 = vmatpush1.msra.mxu0 %v2272
    %3101 = vmatprep.subr.mxu0 0.0
    %3102 = vmatpush1.msra.mxu0 %v2275
    %3103 = vmatprep.subr.mxu0 0.0
    %3104 = vmatpush1.msra.mxu0 %v2278
    %3105 = vmatprep.subr.mxu0 0.0
    %3106 = vmatpush1.msra.mxu0 %v2281
    %3107 = vmatprep.subr.mxu0 0.0
    %3108 = vmatpush1.msra.mxu0 %v2284
    %3109 = vmatprep.subr.mxu0 0.0
    %3110 = vmatpush1.msra.mxu0 %v2287
    %3111 = vmatprep.subr.mxu0 0.0
    %3112 = vmatpush1.msra.mxu0 %v2290
    %3113 = vmatprep.subr.mxu0 0.0
    %3114 = vmatpush1.msra.mxu0 %v2293
    %3115 = vmatprep.subr.mxu0 0.0
    %3116 = vmatpush1.msra.mxu0 %v2296
    %3117 = vmatprep.subr.mxu0 0.0
    %3118 = vmatpush1.msra.mxu0 %v2299
    %3119 = vmatprep.mubr.f32.mxu0 %v1901
    %3120 = vmatmul.mubr.f32.gmra.mrb[0].mxu0 %v1900
    %v3121 = vpop.f32.mrb[0].mxu0
    %v3122 = vadd.f32 %v3052, %v3121
    %v3123 = vpop.f32.mrb[0].mxu0
    %3124 = vdwg.mxu0
    %3125 = vmatprep.subr.mxu0 0.0
    %3126 = vmatpush1.msra.mxu0 %v2302
    %3127 = vmatprep.subr.mxu0 0.0
    %3128 = vmatpush1.msra.mxu0 %v2305
    %3129 = vmatprep.subr.mxu0 0.0
    %3130 = vmatpush1.msra.mxu0 %v2308
    %3131 = vmatprep.subr.mxu0 0.0
    %3132 = vmatpush1.msra.mxu0 %v2311
    %3133 = vmatprep.subr.mxu0 0.0
    %3134 = vmatpush1.msra.mxu0 %v2314
    %3135 = vmatprep.subr.mxu0 0.0
    %3136 = vmatpush1.msra.mxu0 %v2317
    %3137 = vmatprep.subr.mxu0 0.0
    %3138 = vmatpush1.msra.mxu0 %v2320
    %3139 = vmatprep.subr.mxu0 0.0
    %3140 = vmatpush1.msra.mxu0 %v2323
    %3141 = vmatprep.subr.mxu0 0.0
    %3142 = vmatpush1.msra.mxu0 %v2326
    %3143 = vmatprep.subr.mxu0 0.0
    %3144 = vmatpush1.msra.mxu0 %v2329
    %3145 = vmatprep.subr.mxu0 0.0
    %3146 = vmatpush1.msra.mxu0 %v2332
    %3147 = vmatprep.subr.mxu0 0.0
    %3148 = vmatpush1.msra.mxu0 %v2335
    %3149 = vmatprep.subr.mxu0 0.0
    %3150 = vmatpush1.msra.mxu0 %v2338
    %3151 = vmatprep.subr.mxu0 0.0
    %3152 = vmatpush1.msra.mxu0 %v2341
    %3153 = vmatprep.subr.mxu0 0.0
    %3154 = vmatpush1.msra.mxu0 %v2344
    %3155 = vmatprep.subr.mxu0 0.0
    %3156 = vmatpush1.msra.mxu0 %v2347
    %3157 = vmatprep.subr.mxu0 0.0
    %3158 = vmatpush1.msra.mxu0 %v2350
    %3159 = vmatprep.subr.mxu0 0.0
    %3160 = vmatpush1.msra.mxu0 %v2353
    %3161 = vmatprep.subr.mxu0 0.0
    %3162 = vmatpush1.msra.mxu0 %v2356
    %3163 = vmatprep.subr.mxu0 0.0
    %3164 = vmatpush1.msra.mxu0 %v2359
    %3165 = vmatprep.subr.mxu0 0.0
    %3166 = vmatpush1.msra.mxu0 %v2362
    %3167 = vmatprep.subr.mxu0 0.0
    %3168 = vmatpush1.msra.mxu0 %v2365
    %3169 = vmatprep.subr.mxu0 0.0
    %3170 = vmatpush1.msra.mxu0 %v2368
    %3171 = vmatprep.subr.mxu0 0.0
    %3172 = vmatpush1.msra.mxu0 %v2371
    %3173 = vmatprep.subr.mxu0 0.0
    %3174 = vmatpush1.msra.mxu0 %v2374
    %3175 = vmatprep.subr.mxu0 0.0
    %3176 = vmatpush1.msra.mxu0 %v2377
    %3177 = vmatprep.subr.mxu0 0.0
    %3178 = vmatpush1.msra.mxu0 %v2380
    %3179 = vmatprep.subr.mxu0 0.0
    %3180 = vmatpush1.msra.mxu0 %v2383
    %3181 = vmatprep.subr.mxu0 0.0
    %3182 = vmatpush1.msra.mxu0 %v2386
    %3183 = vmatprep.subr.mxu0 0.0
    %3184 = vmatpush1.msra.mxu0 %v2389
    %3185 = vmatprep.subr.mxu0 0.0
    %3186 = vmatpush1.msra.mxu0 %v2392
    %3187 = vmatprep.subr.mxu0 0.0
    %3188 = vmatpush1.msra.mxu0 %v2395
    %3189 = vmatprep.mubr.f32.mxu0 %v1903
    %3190 = vmatmul.mubr.f32.gmra.mrb[0].mxu0 %v1902
    %v3191 = vpop.f32.mrb[0].mxu0
    %v3192 = vadd.f32 %v3122, %v3191
    %v3193 = vpop.f32.mrb[0].mxu0
    %3194 = vdwg.mxu0
    %3195 = vmatprep.subr.mxu0 0.0
    %3196 = vmatpush1.msra.mxu0 %v2398
    %3197 = vmatprep.subr.mxu0 0.0
    %3198 = vmatpush1.msra.mxu0 %v2401
    %3199 = vmatprep.subr.mxu0 0.0
    %3200 = vmatpush1.msra.mxu0 %v2417
    %3201 = vmatprep.subr.mxu0 0.0
    %3202 = vmatpush1.msra.mxu0 0.0
    %3203 = vmatprep.subr.mxu0 0.0
    %3204 = vmatpush1.msra.mxu0 0.0
    %3205 = vmatprep.subr.mxu0 0.0
    %3206 = vmatpush1.msra.mxu0 0.0
    %3207 = vmatprep.subr.mxu0 0.0
    %3208 = vmatpush1.msra.mxu0 0.0
    %3209 = vmatprep.subr.mxu0 0.0
    %3210 = vmatpush1.msra.mxu0 0.0
    %3211 = vmatprep.subr.mxu0 0.0
    %3212 = vmatpush1.msra.mxu0 0.0
    %3213 = vmatprep.subr.mxu0 0.0
    %3214 = vmatpush1.msra.mxu0 0.0
    %3215 = vmatprep.subr.mxu0 0.0
    %3216 = vmatpush1.msra.mxu0 0.0
    %3217 = vmatprep.subr.mxu0 0.0
    %3218 = vmatpush1.msra.mxu0 0.0
    %3219 = vmatprep.subr.mxu0 0.0
    %3220 = vmatpush1.msra.mxu0 0.0
    %3221 = vmatprep.subr.mxu0 0.0
    %3222 = vmatpush1.msra.mxu0 0.0
    %3223 = vmatprep.subr.mxu0 0.0
    %3224 = vmatpush1.msra.mxu0 0.0
    %3225 = vmatprep.subr.mxu0 0.0
    %3226 = vmatpush1.msra.mxu0 0.0
    %3227 = vmatprep.subr.mxu0 0.0
    %3228 = vmatpush1.msra.mxu0 0.0
    %3229 = vmatprep.subr.mxu0 0.0
    %3230 = vmatpush1.msra.mxu0 0.0
    %3231 = vmatprep.subr.mxu0 0.0
    %3232 = vmatpush1.msra.mxu0 0.0
    %3233 = vmatprep.subr.mxu0 0.0
    %3234 = vmatpush1.msra.mxu0 0.0
    %3235 = vmatprep.subr.mxu0 0.0
    %3236 = vmatpush1.msra.mxu0 0.0
    %3237 = vmatprep.subr.mxu0 0.0
    %3238 = vmatpush1.msra.mxu0 0.0
    %3239 = vmatprep.subr.mxu0 0.0
    %3240 = vmatpush1.msra.mxu0 0.0
    %3241 = vmatprep.subr.mxu0 0.0
    %3242 = vmatpush1.msra.mxu0 0.0
    %3243 = vmatprep.subr.mxu0 0.0
    %3244 = vmatpush1.msra.mxu0 0.0
    %3245 = vmatprep.subr.mxu0 0.0
    %3246 = vmatpush1.msra.mxu0 0.0
    %3247 = vmatprep.subr.mxu0 0.0
    %3248 = vmatpush1.msra.mxu0 0.0
    %3249 = vmatprep.subr.mxu0 0.0
    %3250 = vmatpush1.msra.mxu0 0.0
    %3251 = vmatprep.subr.mxu0 0.0
    %3252 = vmatpush1.msra.mxu0 0.0
    %3253 = vmatprep.subr.mxu0 0.0
    %3254 = vmatpush1.msra.mxu0 0.0
    %3255 = vmatprep.subr.mxu0 0.0
    %3256 = vmatpush1.msra.mxu0 0.0
    %3257 = vmatprep.subr.mxu0 0.0
    %3258 = vmatpush1.msra.mxu0 0.0
    %3259 = vmatprep.mubr.f32.mxu0 0.0
    %3260 = vmatmul.mubr.f32.gmra.mrb[0].mxu0 %v2407
    %v3261 = vpop.f32.mrb[0].mxu0
    %v3262 = vadd.f32 %v3192, %v3261
    %v3263 = vpop.f32.mrb[0].mxu0
    %3264 = vdwg.mxu0
    %v3268 = vcombine.low %v2841, %v2843
    %3269 = vrot.lane.b32.xlu0 %v3268, 22
    %v3270 = vpop.permute.xlu0 %3269
    %3271 = vrot.lane.b32.xlu0 %v3262, 22
    %v3272 = vpop.permute.xlu0 %3271
    %v3273 = vrot.slane %v3270, 4
    %vm3274 = vcmask 179200
    %v3275 = vsel %vm3274, %v3273, %v3270
    %v3276 = vsel %vm3274, %v3273, %v3272
    %vm3279 = vcmask 1043632
    %vm3280 = vcmask 1047556
    %vm3281 = vmor %vm3280, %vm3279
    %3282 = vst.msk [vmem:[#allocation2] sm:$0xff] %vm3281, %v3275
    %vm3283 = vcmask 961536
    %3284 = vst.msk [vmem:[#allocation2 + $0x8] sm:$0xf] %vm3283, %v3276
    %3296 = vrot.lane.b32.xlu0 %v1905, 108
    %v3297 = vpop.permute.xlu0 %3296
    %3298 = vrot.lane.b32.xlu0 %v1906, 108
    %v3299 = vpop.permute.xlu0 %3298
    %3300 = vrot.lane.b32.xlu0 %v1907, 108
    %v3301 = vpop.permute.xlu0 %3300
    %3302 = vrot.lane.b32.xlu0 %v1908, 108
    %v3303 = vpop.permute.xlu0 %3302
    %3304 = vrot.lane.b32.xlu0 %v1909, 108
    %v3305 = vpop.permute.xlu0 %3304
    %3306 = vrot.lane.b32.xlu0 %v1910, 108
    %v3307 = vpop.permute.xlu0 %3306
    %3308 = vrot.lane.b32.xlu0 %v1911, 108
    %v3309 = vpop.permute.xlu0 %3308
    %3310 = vrot.lane.b32.xlu0 %v1912, 108
    %v3311 = vpop.permute.xlu0 %3310
    %3312 = vrot.lane.b32.xlu0 %v1913, 108
    %v3313 = vpop.permute.xlu0 %3312
    %3314 = vrot.lane.b32.xlu0 %v1914, 108
    %v3315 = vpop.permute.xlu0 %3314
    %3316 = vrot.lane.b32.xlu0 %v1915, 108
    %v3317 = vpop.permute.xlu0 %3316
    %vm3318 = vcmask 883712
    %v3319 = vsel %vm3318, %v3297, %v3299
    %v3320 = vsel %vm3318, %v3299, %v3301
    %v3321 = vsel %vm3318, %v3301, %v3303
    %v3322 = vsel %vm3318, %v3303, %v3305
    %v3323 = vsel %vm3318, %v3305, %v3307
    %v3324 = vsel %vm3318, %v3307, %v3309
    %v3325 = vsel %vm3318, %v3309, %v3311
    %v3326 = vsel %vm3318, %v3311, %v3313
    %v3327 = vsel %vm3318, %v3313, %v3315
    %v3328 = vsel %vm3318, %v3315, %v3317
    %v3339 = vsel %vm2405, %v3317, 0
    %3341 = vmatprep.subr.mxu0 %v1917
    %3342 = vmatpush1.msra.mxu0 %v1916
    %3343 = vmatprep.subr.mxu0 %v1920
    %3344 = vmatpush1.msra.mxu0 %v1919
    %3345 = vmatprep.subr.mxu0 %v1923
    %3346 = vmatpush1.msra.mxu0 %v1922
    %3347 = vmatprep.subr.mxu0 %v1926
    %3348 = vmatpush1.msra.mxu0 %v1925
    %3349 = vmatprep.subr.mxu0 %v1929
    %3350 = vmatpush1.msra.mxu0 %v1928
    %3351 = vmatprep.subr.mxu0 %v1932
    %3352 = vmatpush1.msra.mxu0 %v1931
    %3353 = vmatprep.subr.mxu0 %v1935
    %3354 = vmatpush1.msra.mxu0 %v1934
    %3355 = vmatprep.subr.mxu0 %v1938
    %3356 = vmatpush1.msra.mxu0 %v1937
    %3357 = vmatprep.subr.mxu0 %v1941
    %3358 = vmatpush1.msra.mxu0 %v1940
    %3359 = vmatprep.subr.mxu0 %v1944
    %3360 = vmatpush1.msra.mxu0 %v1943
    %3361 = vmatprep.subr.mxu0 %v1947
    %3362 = vmatpush1.msra.mxu0 %v1946
    %3363 = vmatprep.subr.mxu0 %v1950
    %3364 = vmatpush1.msra.mxu0 %v1949
    %3365 = vmatprep.subr.mxu0 %v1953
    %3366 = vmatpush1.msra.mxu0 %v1952
    %3367 = vmatprep.subr.mxu0 %v1956
    %3368 = vmatpush1.msra.mxu0 %v1955
    %3369 = vmatprep.subr.mxu0 %v1959
    %3370 = vmatpush1.msra.mxu0 %v1958
    %3371 = vmatprep.subr.mxu0 %v1962
    %3372 = vmatpush1.msra.mxu0 %v1961
    %3373 = vmatprep.subr.mxu0 %v1965
    %3374 = vmatpush1.msra.mxu0 %v1964
    %3375 = vmatprep.subr.mxu0 %v1968
    %3376 = vmatpush1.msra.mxu0 %v1967
    %3377 = vmatprep.subr.mxu0 %v1971
    %3378 = vmatpush1.msra.mxu0 %v1970
    %3379 = vmatprep.subr.mxu0 %v1974
    %3380 = vmatpush1.msra.mxu0 %v1973
    %3381 = vmatprep.subr.mxu0 %v1977
    %3382 = vmatpush1.msra.mxu0 %v1976
    %3383 = vmatprep.subr.mxu0 %v1980
    %3384 = vmatpush1.msra.mxu0 %v1979
    %3385 = vmatprep.subr.mxu0 %v1983
    %3386 = vmatpush1.msra.mxu0 %v1982
    %3387 = vmatprep.subr.mxu0 %v1986
    %3388 = vmatpush1.msra.mxu0 %v1985
    %3389 = vmatprep.subr.mxu0 %v1989
    %3390 = vmatpush1.msra.mxu0 %v1988
    %3391 = vmatprep.subr.mxu0 %v1992
    %3392 = vmatpush1.msra.mxu0 %v1991
    %3393 = vmatprep.subr.mxu0 %v1995
    %3394 = vmatpush1.msra.mxu0 %v1994
    %3395 = vmatprep.subr.mxu0 %v1998
    %3396 = vmatpush1.msra.mxu0 %v1997
    %3397 = vmatprep.subr.mxu0 %v2001
    %3398 = vmatpush1.msra.mxu0 %v2000
    %3399 = vmatprep.subr.mxu0 %v2004
    %3400 = vmatpush1.msra.mxu0 %v2003
    %3401 = vmatprep.subr.mxu0 %v2007
    %3402 = vmatpush1.msra.mxu0 %v2006
    %3403 = vmatprep.subr.mxu0 %v2010
    %3404 = vmatpush1.msra.mxu0 %v2009
    %3405 = vmatprep.mubr.f32.mxu0 %v3320
    %3406 = vmatmul.mubr.f32.gmra.mrb[0].mxu0 %v3319
    %v3407 = vpop.f32.mrb[0].mxu0
    %v3408 = vadd.f32 0.0, %v3407
    %v3409 = vpop.f32.mrb[0].mxu0
    %v3410 = vadd.f32 0.0, %v3409
    %3411 = vdwg.mxu0
    %3412 = vmatprep.subr.mxu0 %v2013
    %3413 = vmatpush1.msra.mxu0 %v2012
    %3414 = vmatprep.subr.mxu0 %v2016
    %3415 = vmatpush1.msra.mxu0 %v2015
    %3416 = vmatprep.subr.mxu0 %v2019
    %3417 = vmatpush1.msra.mxu0 %v2018
    %3418 = vmatprep.subr.mxu0 %v2022
    %3419 = vmatpush1.msra.mxu0 %v2021
    %3420 = vmatprep.subr.mxu0 %v2025
    %3421 = vmatpush1.msra.mxu0 %v2024
    %3422 = vmatprep.subr.mxu0 %v2028
    %3423 = vmatpush1.msra.mxu0 %v2027
    %3424 = vmatprep.subr.mxu0 %v2031
    %3425 = vmatpush1.msra.mxu0 %v2030
    %3426 = vmatprep.subr.mxu0 %v2034
    %3427 = vmatpush1.msra.mxu0 %v2033
    %3428 = vmatprep.subr.mxu0 %v2037
    %3429 = vmatpush1.msra.mxu0 %v2036
    %3430 = vmatprep.subr.mxu0 %v2040
    %3431 = vmatpush1.msra.mxu0 %v2039
    %3432 = vmatprep.subr.mxu0 %v2043
    %3433 = vmatpush1.msra.mxu0 %v2042
    %3434 = vmatprep.subr.mxu0 %v2046
    %3435 = vmatpush1.msra.mxu0 %v2045
    %3436 = vmatprep.subr.mxu0 %v2049
    %3437 = vmatpush1.msra.mxu0 %v2048
    %3438 = vmatprep.subr.mxu0 %v2052
    %3439 = vmatpush1.msra.mxu0 %v2051
    %3440 = vmatprep.subr.mxu0 %v2055
    %3441 = vmatpush1.msra.mxu0 %v2054
    %3442 = vmatprep.subr.mxu0 %v2058
    %3443 = vmatpush1.msra.mxu0 %v2057
    %3444 = vmatprep.subr.mxu0 %v2061
    %3445 = vmatpush1.msra.mxu0 %v2060
    %3446 = vmatprep.subr.mxu0 %v2064
    %3447 = vmatpush1.msra.mxu0 %v2063
    %3448 = vmatprep.subr.mxu0 %v2067
    %3449 = vmatpush1.msra.mxu0 %v2066
    %3450 = vmatprep.subr.mxu0 %v2070
    %3451 = vmatpush1.msra.mxu0 %v2069
    %3452 = vmatprep.subr.mxu0 %v2073
    %3453 = vmatpush1.msra.mxu0 %v2072
    %3454 = vmatprep.subr.mxu0 %v2076
    %3455 = vmatpush1.msra.mxu0 %v2075
    %3456 = vmatprep.subr.mxu0 %v2079
    %3457 = vmatpush1.msra.mxu0 %v2078
    %3458 = vmatprep.subr.mxu0 %v2082
    %3459 = vmatpush1.msra.mxu0 %v2081
    %3460 = vmatprep.subr.mxu0 %v2085
    %3461 = vmatpush1.msra.mxu0 %v2084
    %3462 = vmatprep.subr.mxu0 %v2088
    %3463 = vmatpush1.msra.mxu0 %v2087
    %3464 = vmatprep.subr.mxu0 %v2091
    %3465 = vmatpush1.msra.mxu0 %v2090
    %3466 = vmatprep.subr.mxu0 %v2094
    %3467 = vmatpush1.msra.mxu0 %v2093
    %3468 = vmatprep.subr.mxu0 %v2097
    %3469 = vmatpush1.msra.mxu0 %v2096
    %3470 = vmatprep.subr.mxu0 %v2100
    %3471 = vmatpush1.msra.mxu0 %v2099
    %3472 = vmatprep.subr.mxu0 %v2103
    %3473 = vmatpush1.msra.mxu0 %v2102
    %3474 = vmatprep.subr.mxu0 %v2106
    %3475 = vmatpush1.msra.mxu0 %v2105
    %3476 = vmatprep.mubr.f32.mxu0 %v3322
    %3477 = vmatmul.mubr.f32.gmra.mrb[0].mxu0 %v3321
    %v3478 = vpop.f32.mrb[0].mxu0
    %v3479 = vadd.f32 %v3408, %v3478
    %v3480 = vpop.f32.mrb[0].mxu0
    %v3481 = vadd.f32 %v3410, %v3480
    %3482 = vdwg.mxu0
    %3483 = vmatprep.subr.mxu0 %v2109
    %3484 = vmatpush1.msra.mxu0 %v2108
    %3485 = vmatprep.subr.mxu0 %v2112
    %3486 = vmatpush1.msra.mxu0 %v2111
    %3487 = vmatprep.subr.mxu0 %v2115
    %3488 = vmatpush1.msra.mxu0 %v2114
    %3489 = vmatprep.subr.mxu0 %v2118
    %3490 = vmatpush1.msra.mxu0 %v2117
    %3491 = vmatprep.subr.mxu0 %v2121
    %3492 = vmatpush1.msra.mxu0 %v2120
    %3493 = vmatprep.subr.mxu0 %v2124
    %3494 = vmatpush1.msra.mxu0 %v2123
    %3495 = vmatprep.subr.mxu0 %v2127
    %3496 = vmatpush1.msra.mxu0 %v2126
    %3497 = vmatprep.subr.mxu0 %v2130
    %3498 = vmatpush1.msra.mxu0 %v2129
    %3499 = vmatprep.subr.mxu0 %v2133
    %3500 = vmatpush1.msra.mxu0 %v2132
    %3501 = vmatprep.subr.mxu0 %v2136
    %3502 = vmatpush1.msra.mxu0 %v2135
    %3503 = vmatprep.subr.mxu0 %v2139
    %3504 = vmatpush1.msra.mxu0 %v2138
    %3505 = vmatprep.subr.mxu0 %v2142
    %3506 = vmatpush1.msra.mxu0 %v2141
    %3507 = vmatprep.subr.mxu0 %v2145
    %3508 = vmatpush1.msra.mxu0 %v2144
    %3509 = vmatprep.subr.mxu0 %v2148
    %3510 = vmatpush1.msra.mxu0 %v2147
    %3511 = vmatprep.subr.mxu0 %v2151
    %3512 = vmatpush1.msra.mxu0 %v2150
    %3513 = vmatprep.subr.mxu0 %v2154
    %3514 = vmatpush1.msra.mxu0 %v2153
    %3515 = vmatprep.subr.mxu0 %v2157
    %3516 = vmatpush1.msra.mxu0 %v2156
    %3517 = vmatprep.subr.mxu0 %v2160
    %3518 = vmatpush1.msra.mxu0 %v2159
    %3519 = vmatprep.subr.mxu0 %v2163
    %3520 = vmatpush1.msra.mxu0 %v2162
    %3521 = vmatprep.subr.mxu0 %v2166
    %3522 = vmatpush1.msra.mxu0 %v2165
    %3523 = vmatprep.subr.mxu0 %v2169
    %3524 = vmatpush1.msra.mxu0 %v2168
    %3525 = vmatprep.subr.mxu0 %v2172
    %3526 = vmatpush1.msra.mxu0 %v2171
    %3527 = vmatprep.subr.mxu0 %v2175
    %3528 = vmatpush1.msra.mxu0 %v2174
    %3529 = vmatprep.subr.mxu0 %v2178
    %3530 = vmatpush1.msra.mxu0 %v2177
    %3531 = vmatprep.subr.mxu0 %v2181
    %3532 = vmatpush1.msra.mxu0 %v2180
    %3533 = vmatprep.subr.mxu0 %v2184
    %3534 = vmatpush1.msra.mxu0 %v2183
    %3535 = vmatprep.subr.mxu0 %v2187
    %3536 = vmatpush1.msra.mxu0 %v2186
    %3537 = vmatprep.subr.mxu0 %v2190
    %3538 = vmatpush1.msra.mxu0 %v2189
    %3539 = vmatprep.subr.mxu0 %v2193
    %3540 = vmatpush1.msra.mxu0 %v2192
    %3541 = vmatprep.subr.mxu0 %v2196
    %3542 = vmatpush1.msra.mxu0 %v2195
    %3543 = vmatprep.subr.mxu0 %v2199
    %3544 = vmatpush1.msra.mxu0 %v2198
    %3545 = vmatprep.subr.mxu0 %v2202
    %3546 = vmatpush1.msra.mxu0 %v2201
    %3547 = vmatprep.mubr.f32.mxu0 %v3324
    %3548 = vmatmul.mubr.f32.gmra.mrb[0].mxu0 %v3323
    %v3549 = vpop.f32.mrb[0].mxu0
    %v3550 = vadd.f32 %v3479, %v3549
    %v3551 = vpop.f32.mrb[0].mxu0
    %v3552 = vadd.f32 %v3481, %v3551
    %3553 = vdwg.mxu0
    %3554 = vmatprep.subr.mxu0 %v2205
    %3555 = vmatpush1.msra.mxu0 %v2204
    %3556 = vmatprep.subr.mxu0 %v2208
    %3557 = vmatpush1.msra.mxu0 %v2207
    %3558 = vmatprep.subr.mxu0 %v2211
    %3559 = vmatpush1.msra.mxu0 %v2210
    %3560 = vmatprep.subr.mxu0 %v2214
    %3561 = vmatpush1.msra.mxu0 %v2213
    %3562 = vmatprep.subr.mxu0 %v2217
    %3563 = vmatpush1.msra.mxu0 %v2216
    %3564 = vmatprep.subr.mxu0 %v2220
    %3565 = vmatpush1.msra.mxu0 %v2219
    %3566 = vmatprep.subr.mxu0 %v2223
    %3567 = vmatpush1.msra.mxu0 %v2222
    %3568 = vmatprep.subr.mxu0 %v2226
    %3569 = vmatpush1.msra.mxu0 %v2225
    %3570 = vmatprep.subr.mxu0 %v2229
    %3571 = vmatpush1.msra.mxu0 %v2228
    %3572 = vmatprep.subr.mxu0 %v2232
    %3573 = vmatpush1.msra.mxu0 %v2231
    %3574 = vmatprep.subr.mxu0 %v2235
    %3575 = vmatpush1.msra.mxu0 %v2234
    %3576 = vmatprep.subr.mxu0 %v2238
    %3577 = vmatpush1.msra.mxu0 %v2237
    %3578 = vmatprep.subr.mxu0 %v2241
    %3579 = vmatpush1.msra.mxu0 %v2240
    %3580 = vmatprep.subr.mxu0 %v2244
    %3581 = vmatpush1.msra.mxu0 %v2243
    %3582 = vmatprep.subr.mxu0 %v2247
    %3583 = vmatpush1.msra.mxu0 %v2246
    %3584 = vmatprep.subr.mxu0 %v2250
    %3585 = vmatpush1.msra.mxu0 %v2249
    %3586 = vmatprep.subr.mxu0 %v2253
    %3587 = vmatpush1.msra.mxu0 %v2252
    %3588 = vmatprep.subr.mxu0 %v2256
    %3589 = vmatpush1.msra.mxu0 %v2255
    %3590 = vmatprep.subr.mxu0 %v2259
    %3591 = vmatpush1.msra.mxu0 %v2258
    %3592 = vmatprep.subr.mxu0 %v2262
    %3593 = vmatpush1.msra.mxu0 %v2261
    %3594 = vmatprep.subr.mxu0 %v2265
    %3595 = vmatpush1.msra.mxu0 %v2264
    %3596 = vmatprep.subr.mxu0 %v2268
    %3597 = vmatpush1.msra.mxu0 %v2267
    %3598 = vmatprep.subr.mxu0 %v2271
    %3599 = vmatpush1.msra.mxu0 %v2270
    %3600 = vmatprep.subr.mxu0 %v2274
    %3601 = vmatpush1.msra.mxu0 %v2273
    %3602 = vmatprep.subr.mxu0 %v2277
    %3603 = vmatpush1.msra.mxu0 %v2276
    %3604 = vmatprep.subr.mxu0 %v2280
    %3605 = vmatpush1.msra.mxu0 %v2279
    %3606 = vmatprep.subr.mxu0 %v2283
    %3607 = vmatpush1.msra.mxu0 %v2282
    %3608 = vmatprep.subr.mxu0 %v2286
    %3609 = vmatpush1.msra.mxu0 %v2285
    %3610 = vmatprep.subr.mxu0 %v2289
    %3611 = vmatpush1.msra.mxu0 %v2288
    %3612 = vmatprep.subr.mxu0 %v2292
    %3613 = vmatpush1.msra.mxu0 %v2291
    %3614 = vmatprep.subr.mxu0 %v2295
    %3615 = vmatpush1.msra.mxu0 %v2294
    %3616 = vmatprep.subr.mxu0 %v2298
    %3617 = vmatpush1.msra.mxu0 %v2297
    %3618 = vmatprep.mubr.f32.mxu0 %v3326
    %3619 = vmatmul.mubr.f32.gmra.mrb[0].mxu0 %v3325
    %v3620 = vpop.f32.mrb[0].mxu0
    %v3621 = vadd.f32 %v3550, %v3620
    %v3622 = vpop.f32.mrb[0].mxu0
    %v3623 = vadd.f32 %v3552, %v3622
    %3624 = vdwg.mxu0
    %3625 = vmatprep.subr.mxu0 %v2301
    %3626 = vmatpush1.msra.mxu0 %v2300
    %3627 = vmatprep.subr.mxu0 %v2304
    %3628 = vmatpush1.msra.mxu0 %v2303
    %3629 = vmatprep.subr.mxu0 %v2307
    %3630 = vmatpush1.msra.mxu0 %v2306
    %3631 = vmatprep.subr.mxu0 %v2310
    %3632 = vmatpush1.msra.mxu0 %v2309
    %3633 = vmatprep.subr.mxu0 %v2313
    %3634 = vmatpush1.msra.mxu0 %v2312
    %3635 = vmatprep.subr.mxu0 %v2316
    %3636 = vmatpush1.msra.mxu0 %v2315
    %3637 = vmatprep.subr.mxu0 %v2319
    %3638 = vmatpush1.msra.mxu0 %v2318
    %3639 = vmatprep.subr.mxu0 %v2322
    %3640 = vmatpush1.msra.mxu0 %v2321
    %3641 = vmatprep.subr.mxu0 %v2325
    %3642 = vmatpush1.msra.mxu0 %v2324
    %3643 = vmatprep.subr.mxu0 %v2328
    %3644 = vmatpush1.msra.mxu0 %v2327
    %3645 = vmatprep.subr.mxu0 %v2331
    %3646 = vmatpush1.msra.mxu0 %v2330
    %3647 = vmatprep.subr.mxu0 %v2334
    %3648 = vmatpush1.msra.mxu0 %v2333
    %3649 = vmatprep.subr.mxu0 %v2337
    %3650 = vmatpush1.msra.mxu0 %v2336
    %3651 = vmatprep.subr.mxu0 %v2340
    %3652 = vmatpush1.msra.mxu0 %v2339
    %3653 = vmatprep.subr.mxu0 %v2343
    %3654 = vmatpush1.msra.mxu0 %v2342
    %3655 = vmatprep.subr.mxu0 %v2346
    %3656 = vmatpush1.msra.mxu0 %v2345
    %3657 = vmatprep.subr.mxu0 %v2349
    %3658 = vmatpush1.msra.mxu0 %v2348
    %3659 = vmatprep.subr.mxu0 %v2352
    %3660 = vmatpush1.msra.mxu0 %v2351
    %3661 = vmatprep.subr.mxu0 %v2355
    %3662 = vmatpush1.msra.mxu0 %v2354
    %3663 = vmatprep.subr.mxu0 %v2358
    %3664 = vmatpush1.msra.mxu0 %v2357
    %3665 = vmatprep.subr.mxu0 %v2361
    %3666 = vmatpush1.msra.mxu0 %v2360
    %3667 = vmatprep.subr.mxu0 %v2364
    %3668 = vmatpush1.msra.mxu0 %v2363
    %3669 = vmatprep.subr.mxu0 %v2367
    %3670 = vmatpush1.msra.mxu0 %v2366
    %3671 = vmatprep.subr.mxu0 %v2370
    %3672 = vmatpush1.msra.mxu0 %v2369
    %3673 = vmatprep.subr.mxu0 %v2373
    %3674 = vmatpush1.msra.mxu0 %v2372
    %3675 = vmatprep.subr.mxu0 %v2376
    %3676 = vmatpush1.msra.mxu0 %v2375
    %3677 = vmatprep.subr.mxu0 %v2379
    %3678 = vmatpush1.msra.mxu0 %v2378
    %3679 = vmatprep.subr.mxu0 %v2382
    %3680 = vmatpush1.msra.mxu0 %v2381
    %3681 = vmatprep.subr.mxu0 %v2385
    %3682 = vmatpush1.msra.mxu0 %v2384
    %3683 = vmatprep.subr.mxu0 %v2388
    %3684 = vmatpush1.msra.mxu0 %v2387
    %3685 = vmatprep.subr.mxu0 %v2391
    %3686 = vmatpush1.msra.mxu0 %v2390
    %3687 = vmatprep.subr.mxu0 %v2394
    %3688 = vmatpush1.msra.mxu0 %v2393
    %3689 = vmatprep.mubr.f32.mxu0 %v3328
    %3690 = vmatmul.mubr.f32.gmra.mrb[0].mxu0 %v3327
    %v3691 = vpop.f32.mrb[0].mxu0
    %v3692 = vadd.f32 %v3621, %v3691
    %v3693 = vpop.f32.mrb[0].mxu0
    %v3694 = vadd.f32 %v3623, %v3693
    %3695 = vdwg.mxu0
    %3696 = vmatprep.subr.mxu0 %v2397
    %3697 = vmatpush1.msra.mxu0 %v2396
    %3698 = vmatprep.subr.mxu0 %v2400
    %3699 = vmatpush1.msra.mxu0 %v2399
    %3700 = vmatprep.subr.mxu0 %v2414
    %3701 = vmatpush1.msra.mxu0 %v2411
    %3702 = vmatprep.subr.mxu0 0.0
    %3703 = vmatpush1.msra.mxu0 0.0
    %3704 = vmatprep.subr.mxu0 0.0
    %3705 = vmatpush1.msra.mxu0 0.0
    %3706 = vmatprep.subr.mxu0 0.0
    %3707 = vmatpush1.msra.mxu0 0.0
    %3708 = vmatprep.subr.mxu0 0.0
    %3709 = vmatpush1.msra.mxu0 0.0
    %3710 = vmatprep.subr.mxu0 0.0
    %3711 = vmatpush1.msra.mxu0 0.0
    %3712 = vmatprep.subr.mxu0 0.0
    %3713 = vmatpush1.msra.mxu0 0.0
    %3714 = vmatprep.subr.mxu0 0.0
    %3715 = vmatpush1.msra.mxu0 0.0
    %3716 = vmatprep.subr.mxu0 0.0
    %3717 = vmatpush1.msra.mxu0 0.0
    %3718 = vmatprep.subr.mxu0 0.0
    %3719 = vmatpush1.msra.mxu0 0.0
    %3720 = vmatprep.subr.mxu0 0.0
    %3721 = vmatpush1.msra.mxu0 0.0
    %3722 = vmatprep.subr.mxu0 0.0
    %3723 = vmatpush1.msra.mxu0 0.0
    %3724 = vmatprep.subr.mxu0 0.0
    %3725 = vmatpush1.msra.mxu0 0.0
    %3726 = vmatprep.subr.mxu0 0.0
    %3727 = vmatpush1.msra.mxu0 0.0
    %3728 = vmatprep.subr.mxu0 0.0
    %3729 = vmatpush1.msra.mxu0 0.0
    %3730 = vmatprep.subr.mxu0 0.0
    %3731 = vmatpush1.msra.mxu0 0.0
    %3732 = vmatprep.subr.mxu0 0.0
    %3733 = vmatpush1.msra.mxu0 0.0
    %3734 = vmatprep.subr.mxu0 0.0
    %3735 = vmatpush1.msra.mxu0 0.0
    %3736 = vmatprep.subr.mxu0 0.0
    %3737 = vmatpush1.msra.mxu0 0.0
    %3738 = vmatprep.subr.mxu0 0.0
    %3739 = vmatpush1.msra.mxu0 0.0
    %3740 = vmatprep.subr.mxu0 0.0
    %3741 = vmatpush1.msra.mxu0 0.0
    %3742 = vmatprep.subr.mxu0 0.0
    %3743 = vmatpush1.msra.mxu0 0.0
    %3744 = vmatprep.subr.mxu0 0.0
    %3745 = vmatpush1.msra.mxu0 0.0
    %3746 = vmatprep.subr.mxu0 0.0
    %3747 = vmatpush1.msra.mxu0 0.0
    %3748 = vmatprep.subr.mxu0 0.0
    %3749 = vmatpush1.msra.mxu0 0.0
    %3750 = vmatprep.subr.mxu0 0.0
    %3751 = vmatpush1.msra.mxu0 0.0
    %3752 = vmatprep.subr.mxu0 0.0
    %3753 = vmatpush1.msra.mxu0 0.0
    %3754 = vmatprep.subr.mxu0 0.0
    %3755 = vmatpush1.msra.mxu0 0.0
    %3756 = vmatprep.subr.mxu0 0.0
    %3757 = vmatpush1.msra.mxu0 0.0
    %3758 = vmatprep.subr.mxu0 0.0
    %3759 = vmatpush1.msra.mxu0 0.0
    %3760 = vmatprep.mubr.f32.mxu0 0.0
    %3761 = vmatmul.mubr.f32.gmra.mrb[0].mxu0 %v3339
    %v3762 = vpop.f32.mrb[0].mxu0
    %v3763 = vadd.f32 %v3692, %v3762
    %v3764 = vpop.f32.mrb[0].mxu0
    %v3765 = vadd.f32 %v3694, %v3764
    %3766 = vdwg.mxu0
    %3767 = vmatprep.subr.mxu0 0.0
    %3768 = vmatpush1.msra.mxu0 %v1918
    %3769 = vmatprep.subr.mxu0 0.0
    %3770 = vmatpush1.msra.mxu0 %v1921
    %3771 = vmatprep.subr.mxu0 0.0
    %3772 = vmatpush1.msra.mxu0 %v1924
    %3773 = vmatprep.subr.mxu0 0.0
    %3774 = vmatpush1.msra.mxu0 %v1927
    %3775 = vmatprep.subr.mxu0 0.0
    %3776 = vmatpush1.msra.mxu0 %v1930
    %3777 = vmatprep.subr.mxu0 0.0
    %3778 = vmatpush1.msra.mxu0 %v1933
    %3779 = vmatprep.subr.mxu0 0.0
    %3780 = vmatpush1.msra.mxu0 %v1936
    %3781 = vmatprep.subr.mxu0 0.0
    %3782 = vmatpush1.msra.mxu0 %v1939
    %3783 = vmatprep.subr.mxu0 0.0
    %3784 = vmatpush1.msra.mxu0 %v1942
    %3785 = vmatprep.subr.mxu0 0.0
    %3786 = vmatpush1.msra.mxu0 %v1945
    %3787 = vmatprep.subr.mxu0 0.0
    %3788 = vmatpush1.msra.mxu0 %v1948
    %3789 = vmatprep.subr.mxu0 0.0
    %3790 = vmatpush1.msra.mxu0 %v1951
    %3791 = vmatprep.subr.mxu0 0.0
    %3792 = vmatpush1.msra.mxu0 %v1954
    %3793 = vmatprep.subr.mxu0 0.0
    %3794 = vmatpush1.msra.mxu0 %v1957
    %3795 = vmatprep.subr.mxu0 0.0
    %3796 = vmatpush1.msra.mxu0 %v1960
    %3797 = vmatprep.subr.mxu0 0.0
    %3798 = vmatpush1.msra.mxu0 %v1963
    %3799 = vmatprep.subr.mxu0 0.0
    %3800 = vmatpush1.msra.mxu0 %v1966
    %3801 = vmatprep.subr.mxu0 0.0
    %3802 = vmatpush1.msra.mxu0 %v1969
    %3803 = vmatprep.subr.mxu0 0.0
    %3804 = vmatpush1.msra.mxu0 %v1972
    %3805 = vmatprep.subr.mxu0 0.0
    %3806 = vmatpush1.msra.mxu0 %v1975
    %3807 = vmatprep.subr.mxu0 0.0
    %3808 = vmatpush1.msra.mxu0 %v1978
    %3809 = vmatprep.subr.mxu0 0.0
    %3810 = vmatpush1.msra.mxu0 %v1981
    %3811 = vmatprep.subr.mxu0 0.0
    %3812 = vmatpush1.msra.mxu0 %v1984
    %3813 = vmatprep.subr.mxu0 0.0
    %3814 = vmatpush1.msra.mxu0 %v1987
    %3815 = vmatprep.subr.mxu0 0.0
    %3816 = vmatpush1.msra.mxu0 %v1990
    %3817 = vmatprep.subr.mxu0 0.0
    %3818 = vmatpush1.msra.mxu0 %v1993
    %3819 = vmatprep.subr.mxu0 0.0
    %3820 = vmatpush1.msra.mxu0 %v1996
    %3821 = vmatprep.subr.mxu0 0.0
    %3822 = vmatpush1.msra.mxu0 %v1999
    %3823 = vmatprep.subr.mxu0 0.0
    %3824 = vmatpush1.msra.mxu0 %v2002
    %3825 = vmatprep.subr.mxu0 0.0
    %3826 = vmatpush1.msra.mxu0 %v2005
    %3827 = vmatprep.subr.mxu0 0.0
    %3828 = vmatpush1.msra.mxu0 %v2008
    %3829 = vmatprep.subr.mxu0 0.0
    %3830 = vmatpush1.msra.mxu0 %v2011
    %3831 = vmatprep.mubr.f32.mxu0 %v3320
    %3832 = vmatmul.mubr.f32.gmra.mrb[0].mxu0 %v3319
    %v3833 = vpop.f32.mrb[0].mxu0
    %v3834 = vadd.f32 0.0, %v3833
    %v3835 = vpop.f32.mrb[0].mxu0
    %3836 = vdwg.mxu0
    %3837 = vmatprep.subr.mxu0 0.0
    %3838 = vmatpush1.msra.mxu0 %v2014
    %3839 = vmatprep.subr.mxu0 0.0
    %3840 = vmatpush1.msra.mxu0 %v2017
    %3841 = vmatprep.subr.mxu0 0.0
    %3842 = vmatpush1.msra.mxu0 %v2020
    %3843 = vmatprep.subr.mxu0 0.0
    %3844 = vmatpush1.msra.mxu0 %v2023
    %3845 = vmatprep.subr.mxu0 0.0
    %3846 = vmatpush1.msra.mxu0 %v2026
    %3847 = vmatprep.subr.mxu0 0.0
    %3848 = vmatpush1.msra.mxu0 %v2029
    %3849 = vmatprep.subr.mxu0 0.0
    %3850 = vmatpush1.msra.mxu0 %v2032
    %3851 = vmatprep.subr.mxu0 0.0
    %3852 = vmatpush1.msra.mxu0 %v2035
    %3853 = vmatprep.subr.mxu0 0.0
    %3854 = vmatpush1.msra.mxu0 %v2038
    %3855 = vmatprep.subr.mxu0 0.0
    %3856 = vmatpush1.msra.mxu0 %v2041
    %3857 = vmatprep.subr.mxu0 0.0
    %3858 = vmatpush1.msra.mxu0 %v2044
    %3859 = vmatprep.subr.mxu0 0.0
    %3860 = vmatpush1.msra.mxu0 %v2047
    %3861 = vmatprep.subr.mxu0 0.0
    %3862 = vmatpush1.msra.mxu0 %v2050
    %3863 = vmatprep.subr.mxu0 0.0
    %3864 = vmatpush1.msra.mxu0 %v2053
    %3865 = vmatprep.subr.mxu0 0.0
    %3866 = vmatpush1.msra.mxu0 %v2056
    %3867 = vmatprep.subr.mxu0 0.0
    %3868 = vmatpush1.msra.mxu0 %v2059
    %3869 = vmatprep.subr.mxu0 0.0
    %3870 = vmatpush1.msra.mxu0 %v2062
    %3871 = vmatprep.subr.mxu0 0.0
    %3872 = vmatpush1.msra.mxu0 %v2065
    %3873 = vmatprep.subr.mxu0 0.0
    %3874 = vmatpush1.msra.mxu0 %v2068
    %3875 = vmatprep.subr.mxu0 0.0
    %3876 = vmatpush1.msra.mxu0 %v2071
    %3877 = vmatprep.subr.mxu0 0.0
    %3878 = vmatpush1.msra.mxu0 %v2074
    %3879 = vmatprep.subr.mxu0 0.0
    %3880 = vmatpush1.msra.mxu0 %v2077
    %3881 = vmatprep.subr.mxu0 0.0
    %3882 = vmatpush1.msra.mxu0 %v2080
    %3883 = vmatprep.subr.mxu0 0.0
    %3884 = vmatpush1.msra.mxu0 %v2083
    %3885 = vmatprep.subr.mxu0 0.0
    %3886 = vmatpush1.msra.mxu0 %v2086
    %3887 = vmatprep.subr.mxu0 0.0
    %3888 = vmatpush1.msra.mxu0 %v2089
    %3889 = vmatprep.subr.mxu0 0.0
    %3890 = vmatpush1.msra.mxu0 %v2092
    %3891 = vmatprep.subr.mxu0 0.0
    %3892 = vmatpush1.msra.mxu0 %v2095
    %3893 = vmatprep.subr.mxu0 0.0
    %3894 = vmatpush1.msra.mxu0 %v2098
    %3895 = vmatprep.subr.mxu0 0.0
    %3896 = vmatpush1.msra.mxu0 %v2101
    %3897 = vmatprep.subr.mxu0 0.0
    %3898 = vmatpush1.msra.mxu0 %v2104
    %3899 = vmatprep.subr.mxu0 0.0
    %3900 = vmatpush1.msra.mxu0 %v2107
    %3901 = vmatprep.mubr.f32.mxu0 %v3322
    %3902 = vmatmul.mubr.f32.gmra.mrb[0].mxu0 %v3321
    %v3903 = vpop.f32.mrb[0].mxu0
    %v3904 = vadd.f32 %v3834, %v3903
    %v3905 = vpop.f32.mrb[0].mxu0
    %3906 = vdwg.mxu0
    %3907 = vmatprep.subr.mxu0 0.0
    %3908 = vmatpush1.msra.mxu0 %v2110
    %3909 = vmatprep.subr.mxu0 0.0
    %3910 = vmatpush1.msra.mxu0 %v2113
    %3911 = vmatprep.subr.mxu0 0.0
    %3912 = vmatpush1.msra.mxu0 %v2116
    %3913 = vmatprep.subr.mxu0 0.0
    %3914 = vmatpush1.msra.mxu0 %v2119
    %3915 = vmatprep.subr.mxu0 0.0
    %3916 = vmatpush1.msra.mxu0 %v2122
    %3917 = vmatprep.subr.mxu0 0.0
    %3918 = vmatpush1.msra.mxu0 %v2125
    %3919 = vmatprep.subr.mxu0 0.0
    %3920 = vmatpush1.msra.mxu0 %v2128
    %3921 = vmatprep.subr.mxu0 0.0
    %3922 = vmatpush1.msra.mxu0 %v2131
    %3923 = vmatprep.subr.mxu0 0.0
    %3924 = vmatpush1.msra.mxu0 %v2134
    %3925 = vmatprep.subr.mxu0 0.0
    %3926 = vmatpush1.msra.mxu0 %v2137
    %3927 = vmatprep.subr.mxu0 0.0
    %3928 = vmatpush1.msra.mxu0 %v2140
    %3929 = vmatprep.subr.mxu0 0.0
    %3930 = vmatpush1.msra.mxu0 %v2143
    %3931 = vmatprep.subr.mxu0 0.0
    %3932 = vmatpush1.msra.mxu0 %v2146
    %3933 = vmatprep.subr.mxu0 0.0
    %3934 = vmatpush1.msra.mxu0 %v2149
    %3935 = vmatprep.subr.mxu0 0.0
    %3936 = vmatpush1.msra.mxu0 %v2152
    %3937 = vmatprep.subr.mxu0 0.0
    %3938 = vmatpush1.msra.mxu0 %v2155
    %3939 = vmatprep.subr.mxu0 0.0
    %3940 = vmatpush1.msra.mxu0 %v2158
    %3941 = vmatprep.subr.mxu0 0.0
    %3942 = vmatpush1.msra.mxu0 %v2161
    %3943 = vmatprep.subr.mxu0 0.0
    %3944 = vmatpush1.msra.mxu0 %v2164
    %3945 = vmatprep.subr.mxu0 0.0
    %3946 = vmatpush1.msra.mxu0 %v2167
    %3947 = vmatprep.subr.mxu0 0.0
    %3948 = vmatpush1.msra.mxu0 %v2170
    %3949 = vmatprep.subr.mxu0 0.0
    %3950 = vmatpush1.msra.mxu0 %v2173
    %3951 = vmatprep.subr.mxu0 0.0
    %3952 = vmatpush1.msra.mxu0 %v2176
    %3953 = vmatprep.subr.mxu0 0.0
    %3954 = vmatpush1.msra.mxu0 %v2179
    %3955 = vmatprep.subr.mxu0 0.0
    %3956 = vmatpush1.msra.mxu0 %v2182
    %3957 = vmatprep.subr.mxu0 0.0
    %3958 = vmatpush1.msra.mxu0 %v2185
    %3959 = vmatprep.subr.mxu0 0.0
    %3960 = vmatpush1.msra.mxu0 %v2188
    %3961 = vmatprep.subr.mxu0 0.0
    %3962 = vmatpush1.msra.mxu0 %v2191
    %3963 = vmatprep.subr.mxu0 0.0
    %3964 = vmatpush1.msra.mxu0 %v2194
    %3965 = vmatprep.subr.mxu0 0.0
    %3966 = vmatpush1.msra.mxu0 %v2197
    %3967 = vmatprep.subr.mxu0 0.0
    %3968 = vmatpush1.msra.mxu0 %v2200
    %3969 = vmatprep.subr.mxu0 0.0
    %3970 = vmatpush1.msra.mxu0 %v2203
    %3971 = vmatprep.mubr.f32.mxu0 %v3324
    %3972 = vmatmul.mubr.f32.gmra.mrb[0].mxu0 %v3323
    %v3973 = vpop.f32.mrb[0].mxu0
    %v3974 = vadd.f32 %v3904, %v3973
    %v3975 = vpop.f32.mrb[0].mxu0
    %3976 = vdwg.mxu0
    %3977 = vmatprep.subr.mxu0 0.0
    %3978 = vmatpush1.msra.mxu0 %v2206
    %3979 = vmatprep.subr.mxu0 0.0
    %3980 = vmatpush1.msra.mxu0 %v2209
    %3981 = vmatprep.subr.mxu0 0.0
    %3982 = vmatpush1.msra.mxu0 %v2212
    %3983 = vmatprep.subr.mxu0 0.0
    %3984 = vmatpush1.msra.mxu0 %v2215
    %3985 = vmatprep.subr.mxu0 0.0
    %3986 = vmatpush1.msra.mxu0 %v2218
    %3987 = vmatprep.subr.mxu0 0.0
    %3988 = vmatpush1.msra.mxu0 %v2221
    %3989 = vmatprep.subr.mxu0 0.0
    %3990 = vmatpush1.msra.mxu0 %v2224
    %3991 = vmatprep.subr.mxu0 0.0
    %3992 = vmatpush1.msra.mxu0 %v2227
    %3993 = vmatprep.subr.mxu0 0.0
    %3994 = vmatpush1.msra.mxu0 %v2230
    %3995 = vmatprep.subr.mxu0 0.0
    %3996 = vmatpush1.msra.mxu0 %v2233
    %3997 = vmatprep.subr.mxu0 0.0
    %3998 = vmatpush1.msra.mxu0 %v2236
    %3999 = vmatprep.subr.mxu0 0.0
    %4000 = vmatpush1.msra.mxu0 %v2239
    %4001 = vmatprep.subr.mxu0 0.0
    %4002 = vmatpush1.msra.mxu0 %v2242
    %4003 = vmatprep.subr.mxu0 0.0
    %4004 = vmatpush1.msra.mxu0 %v2245
    %4005 = vmatprep.subr.mxu0 0.0
    %4006 = vmatpush1.msra.mxu0 %v2248
    %4007 = vmatprep.subr.mxu0 0.0
    %4008 = vmatpush1.msra.mxu0 %v2251
    %4009 = vmatprep.subr.mxu0 0.0
    %4010 = vmatpush1.msra.mxu0 %v2254
    %4011 = vmatprep.subr.mxu0 0.0
    %4012 = vmatpush1.msra.mxu0 %v2257
    %4013 = vmatprep.subr.mxu0 0.0
    %4014 = vmatpush1.msra.mxu0 %v2260
    %4015 = vmatprep.subr.mxu0 0.0
    %4016 = vmatpush1.msra.mxu0 %v2263
    %4017 = vmatprep.subr.mxu0 0.0
    %4018 = vmatpush1.msra.mxu0 %v2266
    %4019 = vmatprep.subr.mxu0 0.0
    %4020 = vmatpush1.msra.mxu0 %v2269
    %4021 = vmatprep.subr.mxu0 0.0
    %4022 = vmatpush1.msra.mxu0 %v2272
    %4023 = vmatprep.subr.mxu0 0.0
    %4024 = vmatpush1.msra.mxu0 %v2275
    %4025 = vmatprep.subr.mxu0 0.0
    %4026 = vmatpush1.msra.mxu0 %v2278
    %4027 = vmatprep.subr.mxu0 0.0
    %4028 = vmatpush1.msra.mxu0 %v2281
    %4029 = vmatprep.subr.mxu0 0.0
    %4030 = vmatpush1.msra.mxu0 %v2284
    %4031 = vmatprep.subr.mxu0 0.0
    %4032 = vmatpush1.msra.mxu0 %v2287
    %4033 = vmatprep.subr.mxu0 0.0
    %4034 = vmatpush1.msra.mxu0 %v2290
    %4035 = vmatprep.subr.mxu0 0.0
    %4036 = vmatpush1.msra.mxu0 %v2293
    %4037 = vmatprep.subr.mxu0 0.0
    %4038 = vmatpush1.msra.mxu0 %v2296
    %4039 = vmatprep.subr.mxu0 0.0
    %4040 = vmatpush1.msra.mxu0 %v2299
    %4041 = vmatprep.mubr.f32.mxu0 %v3326
    %4042 = vmatmul.mubr.f32.gmra.mrb[0].mxu0 %v3325
    %v4043 = vpop.f32.mrb[0].mxu0
    %v4044 = vadd.f32 %v3974, %v4043
    %v4045 = vpop.f32.mrb[0].mxu0
    %4046 = vdwg.mxu0
    %4047 = vmatprep.subr.mxu0 0.0
    %4048 = vmatpush1.msra.mxu0 %v2302
    %4049 = vmatprep.subr.mxu0 0.0
    %4050 = vmatpush1.msra.mxu0 %v2305
    %4051 = vmatprep.subr.mxu0 0.0
    %4052 = vmatpush1.msra.mxu0 %v2308
    %4053 = vmatprep.subr.mxu0 0.0
    %4054 = vmatpush1.msra.mxu0 %v2311
    %4055 = vmatprep.subr.mxu0 0.0
    %4056 = vmatpush1.msra.mxu0 %v2314
    %4057 = vmatprep.subr.mxu0 0.0
    %4058 = vmatpush1.msra.mxu0 %v2317
    %4059 = vmatprep.subr.mxu0 0.0
    %4060 = vmatpush1.msra.mxu0 %v2320
    %4061 = vmatprep.subr.mxu0 0.0
    %4062 = vmatpush1.msra.mxu0 %v2323
    %4063 = vmatprep.subr.mxu0 0.0
    %4064 = vmatpush1.msra.mxu0 %v2326
    %4065 = vmatprep.subr.mxu0 0.0
    %4066 = vmatpush1.msra.mxu0 %v2329
    %4067 = vmatprep.subr.mxu0 0.0
    %4068 = vmatpush1.msra.mxu0 %v2332
    %4069 = vmatprep.subr.mxu0 0.0
    %4070 = vmatpush1.msra.mxu0 %v2335
    %4071 = vmatprep.subr.mxu0 0.0
    %4072 = vmatpush1.msra.mxu0 %v2338
    %4073 = vmatprep.subr.mxu0 0.0
    %4074 = vmatpush1.msra.mxu0 %v2341
    %4075 = vmatprep.subr.mxu0 0.0
    %4076 = vmatpush1.msra.mxu0 %v2344
    %4077 = vmatprep.subr.mxu0 0.0
    %4078 = vmatpush1.msra.mxu0 %v2347
    %4079 = vmatprep.subr.mxu0 0.0
    %4080 = vmatpush1.msra.mxu0 %v2350
    %4081 = vmatprep.subr.mxu0 0.0
    %4082 = vmatpush1.msra.mxu0 %v2353
    %4083 = vmatprep.subr.mxu0 0.0
    %4084 = vmatpush1.msra.mxu0 %v2356
    %4085 = vmatprep.subr.mxu0 0.0
    %4086 = vmatpush1.msra.mxu0 %v2359
    %4087 = vmatprep.subr.mxu0 0.0
    %4088 = vmatpush1.msra.mxu0 %v2362
    %4089 = vmatprep.subr.mxu0 0.0
    %4090 = vmatpush1.msra.mxu0 %v2365
    %4091 = vmatprep.subr.mxu0 0.0
    %4092 = vmatpush1.msra.mxu0 %v2368
    %4093 = vmatprep.subr.mxu0 0.0
    %4094 = vmatpush1.msra.mxu0 %v2371
    %4095 = vmatprep.subr.mxu0 0.0
    %4096 = vmatpush1.msra.mxu0 %v2374
    %4097 = vmatprep.subr.mxu0 0.0
    %4098 = vmatpush1.msra.mxu0 %v2377
    %4099 = vmatprep.subr.mxu0 0.0
    %4100 = vmatpush1.msra.mxu0 %v2380
    %4101 = vmatprep.subr.mxu0 0.0
    %4102 = vmatpush1.msra.mxu0 %v2383
    %4103 = vmatprep.subr.mxu0 0.0
    %4104 = vmatpush1.msra.mxu0 %v2386
    %4105 = vmatprep.subr.mxu0 0.0
    %4106 = vmatpush1.msra.mxu0 %v2389
    %4107 = vmatprep.subr.mxu0 0.0
    %4108 = vmatpush1.msra.mxu0 %v2392
    %4109 = vmatprep.subr.mxu0 0.0
    %4110 = vmatpush1.msra.mxu0 %v2395
    %4111 = vmatprep.mubr.f32.mxu0 %v3328
    %4112 = vmatmul.mubr.f32.gmra.mrb[0].mxu0 %v3327
    %v4113 = vpop.f32.mrb[0].mxu0
    %v4114 = vadd.f32 %v4044, %v4113
    %v4115 = vpop.f32.mrb[0].mxu0
    %4116 = vdwg.mxu0
    %4117 = vmatprep.subr.mxu0 0.0
    %4118 = vmatpush1.msra.mxu0 %v2398
    %4119 = vmatprep.subr.mxu0 0.0
    %4120 = vmatpush1.msra.mxu0 %v2401
    %4121 = vmatprep.subr.mxu0 0.0
    %4122 = vmatpush1.msra.mxu0 %v2417
    %4123 = vmatprep.subr.mxu0 0.0
    %4124 = vmatpush1.msra.mxu0 0.0
    %4125 = vmatprep.subr.mxu0 0.0
    %4126 = vmatpush1.msra.mxu0 0.0
    %4127 = vmatprep.subr.mxu0 0.0
    %4128 = vmatpush1.msra.mxu0 0.0
    %4129 = vmatprep.subr.mxu0 0.0
    %4130 = vmatpush1.msra.mxu0 0.0
    %4131 = vmatprep.subr.mxu0 0.0
    %4132 = vmatpush1.msra.mxu0 0.0
    %4133 = vmatprep.subr.mxu0 0.0
    %4134 = vmatpush1.msra.mxu0 0.0
    %4135 = vmatprep.subr.mxu0 0.0
    %4136 = vmatpush1.msra.mxu0 0.0
    %4137 = vmatprep.subr.mxu0 0.0
    %4138 = vmatpush1.msra.mxu0 0.0
    %4139 = vmatprep.subr.mxu0 0.0
    %4140 = vmatpush1.msra.mxu0 0.0
    %4141 = vmatprep.subr.mxu0 0.0
    %4142 = vmatpush1.msra.mxu0 0.0
    %4143 = vmatprep.subr.mxu0 0.0
    %4144 = vmatpush1.msra.mxu0 0.0
    %4145 = vmatprep.subr.mxu0 0.0
    %4146 = vmatpush1.msra.mxu0 0.0
    %4147 = vmatprep.subr.mxu0 0.0
    %4148 = vmatpush1.msra.mxu0 0.0
    %4149 = vmatprep.subr.mxu0 0.0
    %4150 = vmatpush1.msra.mxu0 0.0
    %4151 = vmatprep.subr.mxu0 0.0
    %4152 = vmatpush1.msra.mxu0 0.0
    %4153 = vmatprep.subr.mxu0 0.0
    %4154 = vmatpush1.msra.mxu0 0.0
    %4155 = vmatprep.subr.mxu0 0.0
    %4156 = vmatpush1.msra.mxu0 0.0
    %4157 = vmatprep.subr.mxu0 0.0
    %4158 = vmatpush1.msra.mxu0 0.0
    %4159 = vmatprep.subr.mxu0 0.0
    %4160 = vmatpush1.msra.mxu0 0.0
    %4161 = vmatprep.subr.mxu0 0.0
    %4162 = vmatpush1.msra.mxu0 0.0
    %4163 = vmatprep.subr.mxu0 0.0
    %4164 = vmatpush1.msra.mxu0 0.0
    %4165 = vmatprep.subr.mxu0 0.0
    %4166 = vmatpush1.msra.mxu0 0.0
    %4167 = vmatprep.subr.mxu0 0.0
    %4168 = vmatpush1.msra.mxu0 0.0
    %4169 = vmatprep.subr.mxu0 0.0
    %4170 = vmatpush1.msra.mxu0 0.0
    %4171 = vmatprep.subr.mxu0 0.0
    %4172 = vmatpush1.msra.mxu0 0.0
    %4173 = vmatprep.subr.mxu0 0.0
    %4174 = vmatpush1.msra.mxu0 0.0
    %4175 = vmatprep.subr.mxu0 0.0
    %4176 = vmatpush1.msra.mxu0 0.0
    %4177 = vmatprep.subr.mxu0 0.0
    %4178 = vmatpush1.msra.mxu0 0.0
    %4179 = vmatprep.subr.mxu0 0.0
    %4180 = vmatpush1.msra.mxu0 0.0
    %4181 = vmatprep.mubr.f32.mxu0 0.0
    %4182 = vmatmul.mubr.f32.gmra.mrb[0].mxu0 %v3339
    %v4183 = vpop.f32.mrb[0].mxu0
    %v4184 = vadd.f32 %v4114, %v4183
    %v4185 = vpop.f32.mrb[0].mxu0
    %4186 = vdwg.mxu0
    %v4190 = vcombine.low %v3763, %v3765
    %4191 = vrot.lane.b32.xlu0 %v4190, 34
    %v4192 = vpop.permute.xlu0 %4191
    %4193 = vrot.lane.b32.xlu0 %v4184, 34
    %v4194 = vpop.permute.xlu0 %4193
    %v4195 = vrot.slane %v4192, 4
    %v4196 = vrot.slane %v4194, 4
    %vm4197 = vcmask 277504
    %v4198 = vsel %vm4197, %v4195, %v4192
    %vm4199 = vcmask 1043456
    %v4200 = vsel %vm4199, %v4195, %v4196
    %v4201 = vsel %vm4197, %v4200, %v4194
    %vm4204 = vcmask 1043728
    %vm4205 = vmor %vm3280, %vm4204
    %4206 = vst.msk [vmem:[#allocation2 + $0xc] sm:$0xff] %vm4205, %v4198
    %vm4207 = vcmask 15364
    %vm4208 = vmor %vm4207, %vm4199
    %4209 = vst.msk [vmem:[#allocation2 + $0x14] sm:$0xff] %vm4208, %v4201
    %s4210 = scalar_lea.vmem %s2, 32
    %v4211 = vld [vmem:[%s4210] sm:$0xff]
    %v4212 = vld [vmem:[#allocation2] sm:$0xff]
    %v4213 = vld [vmem:[#allocation2 + $0x8] sm:$0xff]
    %v4214 = vld [vmem:[#allocation2 + $0x10] sm:$0xff]
    %s4215 = scalar_lea.vmem %s1, 384
    %v4216 = vld [vmem:[%s4215] sm:$0xff]
    %s4217 = scalar_lea.vmem %s1, 416
    %v4218 = vld [vmem:[%s4217] sm:$0xff]
    %v4222 = vcombine.high %v4212, %v4212
    %v4223 = vcombine.high %v4213, %v4213
    %v4224 = vcombine.high %v4214, %v4214
    %4225 = vrot.lane.b32.xlu0 %v4212, 127
    %v4226 = vpop.permute.xlu0 %4225
    %4227 = vrot.lane.b32.xlu0 %v4222, 127
    %v4228 = vpop.permute.xlu0 %4227
    %4229 = vrot.lane.b32.xlu0 %v4213, 127
    %v4230 = vpop.permute.xlu0 %4229
    %4231 = vrot.lane.b32.xlu0 %v4223, 127
    %v4232 = vpop.permute.xlu0 %4231
    %4233 = vrot.lane.b32.xlu0 %v4214, 127
    %v4234 = vpop.permute.xlu0 %4233
    %4235 = vrot.lane.b32.xlu0 %v4224, 127
    %v4236 = vpop.permute.xlu0 %4235
    %v4237 = vsel %vm277, %v4226, %v4228
    %v4238 = vsel %vm277, %v4228, %v4230
    %v4239 = vsel %vm277, %v4230, %v4232
    %v4240 = vsel %vm277, %v4232, %v4234
    %v4241 = vsel %vm277, %v4234, %v4236
    %vm4242 = vcmask 31744
    %v4244 = vsel %vm4242, %v4218, 0
    %v4246 = vsel %vm4199, %v4237, 0
    %v4248 = vsel %vm4199, %v4238, 0
    %v4250 = vsel %vm4199, %v4239, 0
    %v4252 = vsel %vm4199, %v4240, 0
    %v4254 = vsel %vm4199, %v4241, 0
    %v4256 = vsel %vm4199, %v4236, 0
    %4258 = vmatprep.subr.mxu0 %v4248
    %4259 = vmatpush1.msra.mxu0 %v4246
    %4260 = vmatprep.subr.mxu0 0.0
    %4261 = vmatpush1.msra.mxu0 0.0
    %4262 = vmatprep.subr.mxu0 0.0
    %4263 = vmatpush1.msra.mxu0 0.0
    %4264 = vmatprep.subr.mxu0 0.0
    %4265 = vmatpush1.msra.mxu0 0.0
    %4266 = vmatprep.subr.mxu0 0.0
    %4267 = vmatpush1.msra.mxu0 0.0
    %4268 = vmatprep.subr.mxu0 0.0
    %4269 = vmatpush1.msra.mxu0 0.0
    %4270 = vmatprep.subr.mxu0 0.0
    %4271 = vmatpush1.msra.mxu0 0.0
    %4272 = vmatprep.subr.mxu0 0.0
    %4273 = vmatpush1.msra.mxu0 0.0
    %4274 = vmatprep.subr.mxu0 0.0
    %4275 = vmatpush1.msra.mxu0 0.0
    %4276 = vmatprep.subr.mxu0 0.0
    %4277 = vmatpush1.msra.mxu0 0.0
    %4278 = vmatprep.subr.mxu0 0.0
    %4279 = vmatpush1.msra.mxu0 0.0
    %4280 = vmatprep.subr.mxu0 0.0
    %4281 = vmatpush1.msra.mxu0 0.0
    %4282 = vmatprep.subr.mxu0 0.0
    %4283 = vmatpush1.msra.mxu0 0.0
    %4284 = vmatprep.subr.mxu0 0.0
    %4285 = vmatpush1.msra.mxu0 0.0
    %4286 = vmatprep.subr.mxu0 0.0
    %4287 = vmatpush1.msra.mxu0 0.0
    %4288 = vmatprep.subr.mxu0 0.0
    %4289 = vmatpush1.msra.mxu0 0.0
    %4290 = vmatprep.subr.mxu0 0.0
    %4291 = vmatpush1.msra.mxu0 0.0
    %4292 = vmatprep.subr.mxu0 0.0
    %4293 = vmatpush1.msra.mxu0 0.0
    %4294 = vmatprep.subr.mxu0 0.0
    %4295 = vmatpush1.msra.mxu0 0.0
    %4296 = vmatprep.subr.mxu0 0.0
    %4297 = vmatpush1.msra.mxu0 0.0
    %4298 = vmatprep.subr.mxu0 0.0
    %4299 = vmatpush1.msra.mxu0 0.0
    %4300 = vmatprep.subr.mxu0 0.0
    %4301 = vmatpush1.msra.mxu0 0.0
    %4302 = vmatprep.subr.mxu0 0.0
    %4303 = vmatpush1.msra.mxu0 0.0
    %4304 = vmatprep.subr.mxu0 0.0
    %4305 = vmatpush1.msra.mxu0 0.0
    %4306 = vmatprep.subr.mxu0 0.0
    %4307 = vmatpush1.msra.mxu0 0.0
    %4308 = vmatprep.subr.mxu0 0.0
    %4309 = vmatpush1.msra.mxu0 0.0
    %4310 = vmatprep.subr.mxu0 0.0
    %4311 = vmatpush1.msra.mxu0 0.0
    %4312 = vmatprep.subr.mxu0 0.0
    %4313 = vmatpush1.msra.mxu0 0.0
    %4314 = vmatprep.subr.mxu0 0.0
    %4315 = vmatpush1.msra.mxu0 0.0
    %4316 = vmatprep.subr.mxu0 0.0
    %4317 = vmatpush1.msra.mxu0 0.0
    %4318 = vmatprep.subr.mxu0 0.0
    %4319 = vmatpush1.msra.mxu0 0.0
    %4320 = vmatprep.subr.mxu0 0.0
    %4321 = vmatpush1.msra.mxu0 0.0
    %4322 = vmatprep.mubr.f32.mxu0 0.0
    %4323 = vmatmul.mubr.f32.gmra.mrb[0].mxu0 %v4244
    %v4324 = vpop.f32.mrb[0].mxu0
    %v4325 = vadd.f32 0.0, %v4324
    %v4326 = vpop.f32.mrb[0].mxu0
    %v4327 = vadd.f32 0.0, %v4326
    %4328 = vdwg.mxu0
    %4329 = vmatprep.subr.mxu0 %v4252
    %4330 = vmatpush1.msra.mxu0 %v4250
    %4331 = vmatprep.subr.mxu0 0.0
    %4332 = vmatpush1.msra.mxu0 0.0
    %4333 = vmatprep.subr.mxu0 0.0
    %4334 = vmatpush1.msra.mxu0 0.0
    %4335 = vmatprep.subr.mxu0 0.0
    %4336 = vmatpush1.msra.mxu0 0.0
    %4337 = vmatprep.subr.mxu0 0.0
    %4338 = vmatpush1.msra.mxu0 0.0
    %4339 = vmatprep.subr.mxu0 0.0
    %4340 = vmatpush1.msra.mxu0 0.0
    %4341 = vmatprep.subr.mxu0 0.0
    %4342 = vmatpush1.msra.mxu0 0.0
    %4343 = vmatprep.subr.mxu0 0.0
    %4344 = vmatpush1.msra.mxu0 0.0
    %4345 = vmatprep.subr.mxu0 0.0
    %4346 = vmatpush1.msra.mxu0 0.0
    %4347 = vmatprep.subr.mxu0 0.0
    %4348 = vmatpush1.msra.mxu0 0.0
    %4349 = vmatprep.subr.mxu0 0.0
    %4350 = vmatpush1.msra.mxu0 0.0
    %4351 = vmatprep.subr.mxu0 0.0
    %4352 = vmatpush1.msra.mxu0 0.0
    %4353 = vmatprep.subr.mxu0 0.0
    %4354 = vmatpush1.msra.mxu0 0.0
    %4355 = vmatprep.subr.mxu0 0.0
    %4356 = vmatpush1.msra.mxu0 0.0
    %4357 = vmatprep.subr.mxu0 0.0
    %4358 = vmatpush1.msra.mxu0 0.0
    %4359 = vmatprep.subr.mxu0 0.0
    %4360 = vmatpush1.msra.mxu0 0.0
    %4361 = vmatprep.subr.mxu0 0.0
    %4362 = vmatpush1.msra.mxu0 0.0
    %4363 = vmatprep.subr.mxu0 0.0
    %4364 = vmatpush1.msra.mxu0 0.0
    %4365 = vmatprep.subr.mxu0 0.0
    %4366 = vmatpush1.msra.mxu0 0.0
    %4367 = vmatprep.subr.mxu0 0.0
    %4368 = vmatpush1.msra.mxu0 0.0
    %4369 = vmatprep.subr.mxu0 0.0
    %4370 = vmatpush1.msra.mxu0 0.0
    %4371 = vmatprep.subr.mxu0 0.0
    %4372 = vmatpush1.msra.mxu0 0.0
    %4373 = vmatprep.subr.mxu0 0.0
    %4374 = vmatpush1.msra.mxu0 0.0
    %4375 = vmatprep.subr.mxu0 0.0
    %4376 = vmatpush1.msra.mxu0 0.0
    %4377 = vmatprep.subr.mxu0 0.0
    %4378 = vmatpush1.msra.mxu0 0.0
    %4379 = vmatprep.subr.mxu0 0.0
    %4380 = vmatpush1.msra.mxu0 0.0
    %4381 = vmatprep.subr.mxu0 0.0
    %4382 = vmatpush1.msra.mxu0 0.0
    %4383 = vmatprep.subr.mxu0 0.0
    %4384 = vmatpush1.msra.mxu0 0.0
    %4385 = vmatprep.subr.mxu0 0.0
    %4386 = vmatpush1.msra.mxu0 0.0
    %4387 = vmatprep.subr.mxu0 0.0
    %4388 = vmatpush1.msra.mxu0 0.0
    %4389 = vmatprep.subr.mxu0 0.0
    %4390 = vmatpush1.msra.mxu0 0.0
    %4391 = vmatprep.subr.mxu0 0.0
    %4392 = vmatpush1.msra.mxu0 0.0
    %4393 = vmatprep.mubr.f32.mxu0 0.0
    %4394 = vmatmul.mubr.f32.gmra.mrb[0].mxu0 %v4244
    %v4395 = vpop.f32.mrb[0].mxu0
    %v4396 = vadd.f32 0.0, %v4395
    %v4397 = vpop.f32.mrb[0].mxu0
    %v4398 = vadd.f32 0.0, %v4397
    %4399 = vdwg.mxu0
    %4400 = vmatprep.subr.mxu0 %v4256
    %4401 = vmatpush1.msra.mxu0 %v4254
    %4402 = vmatprep.subr.mxu0 0.0
    %4403 = vmatpush1.msra.mxu0 0.0
    %4404 = vmatprep.subr.mxu0 0.0
    %4405 = vmatpush1.msra.mxu0 0.0
    %4406 = vmatprep.subr.mxu0 0.0
    %4407 = vmatpush1.msra.mxu0 0.0
    %4408 = vmatprep.subr.mxu0 0.0
    %4409 = vmatpush1.msra.mxu0 0.0
    %4410 = vmatprep.subr.mxu0 0.0
    %4411 = vmatpush1.msra.mxu0 0.0
    %4412 = vmatprep.subr.mxu0 0.0
    %4413 = vmatpush1.msra.mxu0 0.0
    %4414 = vmatprep.subr.mxu0 0.0
    %4415 = vmatpush1.msra.mxu0 0.0
    %4416 = vmatprep.subr.mxu0 0.0
    %4417 = vmatpush1.msra.mxu0 0.0
    %4418 = vmatprep.subr.mxu0 0.0
    %4419 = vmatpush1.msra.mxu0 0.0
    %4420 = vmatprep.subr.mxu0 0.0
    %4421 = vmatpush1.msra.mxu0 0.0
    %4422 = vmatprep.subr.mxu0 0.0
    %4423 = vmatpush1.msra.mxu0 0.0
    %4424 = vmatprep.subr.mxu0 0.0
    %4425 = vmatpush1.msra.mxu0 0.0
    %4426 = vmatprep.subr.mxu0 0.0
    %4427 = vmatpush1.msra.mxu0 0.0
    %4428 = vmatprep.subr.mxu0 0.0
    %4429 = vmatpush1.msra.mxu0 0.0
    %4430 = vmatprep.subr.mxu0 0.0
    %4431 = vmatpush1.msra.mxu0 0.0
    %4432 = vmatprep.subr.mxu0 0.0
    %4433 = vmatpush1.msra.mxu0 0.0
    %4434 = vmatprep.subr.mxu0 0.0
    %4435 = vmatpush1.msra.mxu0 0.0
    %4436 = vmatprep.subr.mxu0 0.0
    %4437 = vmatpush1.msra.mxu0 0.0
    %4438 = vmatprep.subr.mxu0 0.0
    %4439 = vmatpush1.msra.mxu0 0.0
    %4440 = vmatprep.subr.mxu0 0.0
    %4441 = vmatpush1.msra.mxu0 0.0
    %4442 = vmatprep.subr.mxu0 0.0
    %4443 = vmatpush1.msra.mxu0 0.0
    %4444 = vmatprep.subr.mxu0 0.0
    %4445 = vmatpush1.msra.mxu0 0.0
    %4446 = vmatprep.subr.mxu0 0.0
    %4447 = vmatpush1.msra.mxu0 0.0
    %4448 = vmatprep.subr.mxu0 0.0
    %4449 = vmatpush1.msra.mxu0 0.0
    %4450 = vmatprep.subr.mxu0 0.0
    %4451 = vmatpush1.msra.mxu0 0.0
    %4452 = vmatprep.subr.mxu0 0.0
    %4453 = vmatpush1.msra.mxu0 0.0
    %4454 = vmatprep.subr.mxu0 0.0
    %4455 = vmatpush1.msra.mxu0 0.0
    %4456 = vmatprep.subr.mxu0 0.0
    %4457 = vmatpush1.msra.mxu0 0.0
    %4458 = vmatprep.subr.mxu0 0.0
    %4459 = vmatpush1.msra.mxu0 0.0
    %4460 = vmatprep.subr.mxu0 0.0
    %4461 = vmatpush1.msra.mxu0 0.0
    %4462 = vmatprep.subr.mxu0 0.0
    %4463 = vmatpush1.msra.mxu0 0.0
    %4464 = vmatprep.mubr.f32.mxu0 0.0
    %4465 = vmatmul.mubr.f32.gmra.mrb[0].mxu0 %v4244
    %v4466 = vpop.f32.mrb[0].mxu0
    %v4467 = vadd.f32 0.0, %v4466
    %v4468 = vpop.f32.mrb[0].mxu0
    %v4469 = vadd.f32 0.0, %v4468
    %4470 = vdwg.mxu0
    %v4472 = vsel %vm4242, %v4216, 0
    %v4474 = vsel %vm4199, %v4212, 0
    %v4476 = vsel %vm4199, %v4222, 0
    %v4478 = vsel %vm4199, %v4213, 0
    %v4480 = vsel %vm4199, %v4223, 0
    %v4482 = vsel %vm4199, %v4214, 0
    %v4484 = vsel %vm4199, %v4224, 0
    %4486 = vmatprep.subr.mxu0 %v4476
    %4487 = vmatpush1.msra.mxu0 %v4474
    %4488 = vmatprep.subr.mxu0 0.0
    %4489 = vmatpush1.msra.mxu0 0.0
    %4490 = vmatprep.subr.mxu0 0.0
    %4491 = vmatpush1.msra.mxu0 0.0
    %4492 = vmatprep.subr.mxu0 0.0
    %4493 = vmatpush1.msra.mxu0 0.0
    %4494 = vmatprep.subr.mxu0 0.0
    %4495 = vmatpush1.msra.mxu0 0.0
    %4496 = vmatprep.subr.mxu0 0.0
    %4497 = vmatpush1.msra.mxu0 0.0
    %4498 = vmatprep.subr.mxu0 0.0
    %4499 = vmatpush1.msra.mxu0 0.0
    %4500 = vmatprep.subr.mxu0 0.0
    %4501 = vmatpush1.msra.mxu0 0.0
    %4502 = vmatprep.subr.mxu0 0.0
    %4503 = vmatpush1.msra.mxu0 0.0
    %4504 = vmatprep.subr.mxu0 0.0
    %4505 = vmatpush1.msra.mxu0 0.0
    %4506 = vmatprep.subr.mxu0 0.0
    %4507 = vmatpush1.msra.mxu0 0.0
    %4508 = vmatprep.subr.mxu0 0.0
    %4509 = vmatpush1.msra.mxu0 0.0
    %4510 = vmatprep.subr.mxu0 0.0
    %4511 = vmatpush1.msra.mxu0 0.0
    %4512 = vmatprep.subr.mxu0 0.0
    %4513 = vmatpush1.msra.mxu0 0.0
    %4514 = vmatprep.subr.mxu0 0.0
    %4515 = vmatpush1.msra.mxu0 0.0
    %4516 = vmatprep.subr.mxu0 0.0
    %4517 = vmatpush1.msra.mxu0 0.0
    %4518 = vmatprep.subr.mxu0 0.0
    %4519 = vmatpush1.msra.mxu0 0.0
    %4520 = vmatprep.subr.mxu0 0.0
    %4521 = vmatpush1.msra.mxu0 0.0
    %4522 = vmatprep.subr.mxu0 0.0
    %4523 = vmatpush1.msra.mxu0 0.0
    %4524 = vmatprep.subr.mxu0 0.0
    %4525 = vmatpush1.msra.mxu0 0.0
    %4526 = vmatprep.subr.mxu0 0.0
    %4527 = vmatpush1.msra.mxu0 0.0
    %4528 = vmatprep.subr.mxu0 0.0
    %4529 = vmatpush1.msra.mxu0 0.0
    %4530 = vmatprep.subr.mxu0 0.0
    %4531 = vmatpush1.msra.mxu0 0.0
    %4532 = vmatprep.subr.mxu0 0.0
    %4533 = vmatpush1.msra.mxu0 0.0
    %4534 = vmatprep.subr.mxu0 0.0
    %4535 = vmatpush1.msra.mxu0 0.0
    %4536 = vmatprep.subr.mxu0 0.0
    %4537 = vmatpush1.msra.mxu0 0.0
    %4538 = vmatprep.subr.mxu0 0.0
    %4539 = vmatpush1.msra.mxu0 0.0
    %4540 = vmatprep.subr.mxu0 0.0
    %4541 = vmatpush1.msra.mxu0 0.0
    %4542 = vmatprep.subr.mxu0 0.0
    %4543 = vmatpush1.msra.mxu0 0.0
    %4544 = vmatprep.subr.mxu0 0.0
    %4545 = vmatpush1.msra.mxu0 0.0
    %4546 = vmatprep.subr.mxu0 0.0
    %4547 = vmatpush1.msra.mxu0 0.0
    %4548 = vmatprep.subr.mxu0 0.0
    %4549 = vmatpush1.msra.mxu0 0.0
    %4550 = vmatprep.mubr.f32.mxu0 0.0
    %4551 = vmatmul.mubr.f32.gmra.mrb[0].mxu0 %v4472
    %v4552 = vpop.f32.mrb[0].mxu0
    %v4553 = vadd.f32 %v4325, %v4552
    %v4554 = vpop.f32.mrb[0].mxu0
    %v4555 = vadd.f32 %v4327, %v4554
    %4556 = vdwg.mxu0
    %4557 = vmatprep.subr.mxu0 %v4480
    %4558 = vmatpush1.msra.mxu0 %v4478
    %4559 = vmatprep.subr.mxu0 0.0
    %4560 = vmatpush1.msra.mxu0 0.0
    %4561 = vmatprep.subr.mxu0 0.0
    %4562 = vmatpush1.msra.mxu0 0.0
    %4563 = vmatprep.subr.mxu0 0.0
    %4564 = vmatpush1.msra.mxu0 0.0
    %4565 = vmatprep.subr.mxu0 0.0
    %4566 = vmatpush1.msra.mxu0 0.0
    %4567 = vmatprep.subr.mxu0 0.0
    %4568 = vmatpush1.msra.mxu0 0.0
    %4569 = vmatprep.subr.mxu0 0.0
    %4570 = vmatpush1.msra.mxu0 0.0
    %4571 = vmatprep.subr.mxu0 0.0
    %4572 = vmatpush1.msra.mxu0 0.0
    %4573 = vmatprep.subr.mxu0 0.0
    %4574 = vmatpush1.msra.mxu0 0.0
    %4575 = vmatprep.subr.mxu0 0.0
    %4576 = vmatpush1.msra.mxu0 0.0
    %4577 = vmatprep.subr.mxu0 0.0
    %4578 = vmatpush1.msra.mxu0 0.0
    %4579 = vmatprep.subr.mxu0 0.0
    %4580 = vmatpush1.msra.mxu0 0.0
    %4581 = vmatprep.subr.mxu0 0.0
    %4582 = vmatpush1.msra.mxu0 0.0
    %4583 = vmatprep.subr.mxu0 0.0
    %4584 = vmatpush1.msra.mxu0 0.0
    %4585 = vmatprep.subr.mxu0 0.0
    %4586 = vmatpush1.msra.mxu0 0.0
    %4587 = vmatprep.subr.mxu0 0.0
    %4588 = vmatpush1.msra.mxu0 0.0
    %4589 = vmatprep.subr.mxu0 0.0
    %4590 = vmatpush1.msra.mxu0 0.0
    %4591 = vmatprep.subr.mxu0 0.0
    %4592 = vmatpush1.msra.mxu0 0.0
    %4593 = vmatprep.subr.mxu0 0.0
    %4594 = vmatpush1.msra.mxu0 0.0
    %4595 = vmatprep.subr.mxu0 0.0
    %4596 = vmatpush1.msra.mxu0 0.0
    %4597 = vmatprep.subr.mxu0 0.0
    %4598 = vmatpush1.msra.mxu0 0.0
    %4599 = vmatprep.subr.mxu0 0.0
    %4600 = vmatpush1.msra.mxu0 0.0
    %4601 = vmatprep.subr.mxu0 0.0
    %4602 = vmatpush1.msra.mxu0 0.0
    %4603 = vmatprep.subr.mxu0 0.0
    %4604 = vmatpush1.msra.mxu0 0.0
    %4605 = vmatprep.subr.mxu0 0.0
    %4606 = vmatpush1.msra.mxu0 0.0
    %4607 = vmatprep.subr.mxu0 0.0
    %4608 = vmatpush1.msra.mxu0 0.0
    %4609 = vmatprep.subr.mxu0 0.0
    %4610 = vmatpush1.msra.mxu0 0.0
    %4611 = vmatprep.subr.mxu0 0.0
    %4612 = vmatpush1.msra.mxu0 0.0
    %4613 = vmatprep.subr.mxu0 0.0
    %4614 = vmatpush1.msra.mxu0 0.0
    %4615 = vmatprep.subr.mxu0 0.0
    %4616 = vmatpush1.msra.mxu0 0.0
    %4617 = vmatprep.subr.mxu0 0.0
    %4618 = vmatpush1.msra.mxu0 0.0
    %4619 = vmatprep.subr.mxu0 0.0
    %4620 = vmatpush1.msra.mxu0 0.0
    %4621 = vmatprep.mubr.f32.mxu0 0.0
    %4622 = vmatmul.mubr.f32.gmra.mrb[0].mxu0 %v4472
    %v4623 = vpop.f32.mrb[0].mxu0
    %v4624 = vadd.f32 %v4396, %v4623
    %v4625 = vpop.f32.mrb[0].mxu0
    %v4626 = vadd.f32 %v4398, %v4625
    %4627 = vdwg.mxu0
    %4628 = vmatprep.subr.mxu0 %v4484
    %4629 = vmatpush1.msra.mxu0 %v4482
    %4630 = vmatprep.subr.mxu0 0.0
    %4631 = vmatpush1.msra.mxu0 0.0
    %4632 = vmatprep.subr.mxu0 0.0
    %4633 = vmatpush1.msra.mxu0 0.0
    %4634 = vmatprep.subr.mxu0 0.0
    %4635 = vmatpush1.msra.mxu0 0.0
    %4636 = vmatprep.subr.mxu0 0.0
    %4637 = vmatpush1.msra.mxu0 0.0
    %4638 = vmatprep.subr.mxu0 0.0
    %4639 = vmatpush1.msra.mxu0 0.0
    %4640 = vmatprep.subr.mxu0 0.0
    %4641 = vmatpush1.msra.mxu0 0.0
    %4642 = vmatprep.subr.mxu0 0.0
    %4643 = vmatpush1.msra.mxu0 0.0
    %4644 = vmatprep.subr.mxu0 0.0
    %4645 = vmatpush1.msra.mxu0 0.0
    %4646 = vmatprep.subr.mxu0 0.0
    %4647 = vmatpush1.msra.mxu0 0.0
    %4648 = vmatprep.subr.mxu0 0.0
    %4649 = vmatpush1.msra.mxu0 0.0
    %4650 = vmatprep.subr.mxu0 0.0
    %4651 = vmatpush1.msra.mxu0 0.0
    %4652 = vmatprep.subr.mxu0 0.0
    %4653 = vmatpush1.msra.mxu0 0.0
    %4654 = vmatprep.subr.mxu0 0.0
    %4655 = vmatpush1.msra.mxu0 0.0
    %4656 = vmatprep.subr.mxu0 0.0
    %4657 = vmatpush1.msra.mxu0 0.0
    %4658 = vmatprep.subr.mxu0 0.0
    %4659 = vmatpush1.msra.mxu0 0.0
    %4660 = vmatprep.subr.mxu0 0.0
    %4661 = vmatpush1.msra.mxu0 0.0
    %4662 = vmatprep.subr.mxu0 0.0
    %4663 = vmatpush1.msra.mxu0 0.0
    %4664 = vmatprep.subr.mxu0 0.0
    %4665 = vmatpush1.msra.mxu0 0.0
    %4666 = vmatprep.subr.mxu0 0.0
    %4667 = vmatpush1.msra.mxu0 0.0
    %4668 = vmatprep.subr.mxu0 0.0
    %4669 = vmatpush1.msra.mxu0 0.0
    %4670 = vmatprep.subr.mxu0 0.0
    %4671 = vmatpush1.msra.mxu0 0.0
    %4672 = vmatprep.subr.mxu0 0.0
    %4673 = vmatpush1.msra.mxu0 0.0
    %4674 = vmatprep.subr.mxu0 0.0
    %4675 = vmatpush1.msra.mxu0 0.0
    %4676 = vmatprep.subr.mxu0 0.0
    %4677 = vmatpush1.msra.mxu0 0.0
    %4678 = vmatprep.subr.mxu0 0.0
    %4679 = vmatpush1.msra.mxu0 0.0
    %4680 = vmatprep.subr.mxu0 0.0
    %4681 = vmatpush1.msra.mxu0 0.0
    %4682 = vmatprep.subr.mxu0 0.0
    %4683 = vmatpush1.msra.mxu0 0.0
    %4684 = vmatprep.subr.mxu0 0.0
    %4685 = vmatpush1.msra.mxu0 0.0
    %4686 = vmatprep.subr.mxu0 0.0
    %4687 = vmatpush1.msra.mxu0 0.0
    %4688 = vmatprep.subr.mxu0 0.0
    %4689 = vmatpush1.msra.mxu0 0.0
    %4690 = vmatprep.subr.mxu0 0.0
    %4691 = vmatpush1.msra.mxu0 0.0
    %4692 = vmatprep.mubr.f32.mxu0 0.0
    %4693 = vmatmul.mubr.f32.gmra.mrb[0].mxu0 %v4472
    %v4694 = vpop.f32.mrb[0].mxu0
    %v4695 = vadd.f32 %v4467, %v4694
    %v4696 = vpop.f32.mrb[0].mxu0
    %v4697 = vadd.f32 %v4469, %v4696
    %4698 = vdwg.mxu0
    %v4699 = vld [vmem:[#allocation2] sm:$0xff]
    %v4700 = vld [vmem:[#allocation2 + $0x8] sm:$0xff]
    %v4701 = vld [vmem:[#allocation2 + $0x10] sm:$0xff]
    %s4702 = scalar_lea.vmem %s1, 448
    %v4703 = vld [vmem:[%s4702] sm:$0xff]
    %v4707 = vcombine.high %v4699, %v4699
    %v4708 = vcombine.high %v4700, %v4700
    %v4709 = vcombine.high %v4701, %v4701
    %4710 = vrot.lane.b32.xlu0 %v4699, 126
    %v4711 = vpop.permute.xlu0 %4710
    %4712 = vrot.lane.b32.xlu0 %v4707, 126
    %v4713 = vpop.permute.xlu0 %4712
    %4714 = vrot.lane.b32.xlu0 %v4700, 126
    %v4715 = vpop.permute.xlu0 %4714
    %4716 = vrot.lane.b32.xlu0 %v4708, 126
    %v4717 = vpop.permute.xlu0 %4716
    %4718 = vrot.lane.b32.xlu0 %v4701, 126
    %v4719 = vpop.permute.xlu0 %4718
    %4720 = vrot.lane.b32.xlu0 %v4709, 126
    %v4721 = vpop.permute.xlu0 %4720
    %v4722 = vsel %vm438, %v4711, %v4713
    %v4723 = vsel %vm438, %v4713, %v4715
    %v4724 = vsel %vm438, %v4715, %v4717
    %v4725 = vsel %vm438, %v4717, %v4719
    %v4726 = vsel %vm438, %v4719, %v4721
    %v4728 = vsel %vm4242, %v4703, 0
    %v4730 = vsel %vm4199, %v4722, 0
    %v4732 = vsel %vm4199, %v4723, 0
    %v4734 = vsel %vm4199, %v4724, 0
    %v4736 = vsel %vm4199, %v4725, 0
    %v4738 = vsel %vm4199, %v4726, 0
    %v4740 = vsel %vm4199, %v4721, 0
    %4742 = vmatprep.subr.mxu0 %v4732
    %4743 = vmatpush1.msra.mxu0 %v4730
    %4744 = vmatprep.subr.mxu0 0.0
    %4745 = vmatpush1.msra.mxu0 0.0
    %4746 = vmatprep.subr.mxu0 0.0
    %4747 = vmatpush1.msra.mxu0 0.0
    %4748 = vmatprep.subr.mxu0 0.0
    %4749 = vmatpush1.msra.mxu0 0.0
    %4750 = vmatprep.subr.mxu0 0.0
    %4751 = vmatpush1.msra.mxu0 0.0
    %4752 = vmatprep.subr.mxu0 0.0
    %4753 = vmatpush1.msra.mxu0 0.0
    %4754 = vmatprep.subr.mxu0 0.0
    %4755 = vmatpush1.msra.mxu0 0.0
    %4756 = vmatprep.subr.mxu0 0.0
    %4757 = vmatpush1.msra.mxu0 0.0
    %4758 = vmatprep.subr.mxu0 0.0
    %4759 = vmatpush1.msra.mxu0 0.0
    %4760 = vmatprep.subr.mxu0 0.0
    %4761 = vmatpush1.msra.mxu0 0.0
    %4762 = vmatprep.subr.mxu0 0.0
    %4763 = vmatpush1.msra.mxu0 0.0
    %4764 = vmatprep.subr.mxu0 0.0
    %4765 = vmatpush1.msra.mxu0 0.0
    %4766 = vmatprep.subr.mxu0 0.0
    %4767 = vmatpush1.msra.mxu0 0.0
    %4768 = vmatprep.subr.mxu0 0.0
    %4769 = vmatpush1.msra.mxu0 0.0
    %4770 = vmatprep.subr.mxu0 0.0
    %4771 = vmatpush1.msra.mxu0 0.0
    %4772 = vmatprep.subr.mxu0 0.0
    %4773 = vmatpush1.msra.mxu0 0.0
    %4774 = vmatprep.subr.mxu0 0.0
    %4775 = vmatpush1.msra.mxu0 0.0
    %4776 = vmatprep.subr.mxu0 0.0
    %4777 = vmatpush1.msra.mxu0 0.0
    %4778 = vmatprep.subr.mxu0 0.0
    %4779 = vmatpush1.msra.mxu0 0.0
    %4780 = vmatprep.subr.mxu0 0.0
    %4781 = vmatpush1.msra.mxu0 0.0
    %4782 = vmatprep.subr.mxu0 0.0
    %4783 = vmatpush1.msra.mxu0 0.0
    %4784 = vmatprep.subr.mxu0 0.0
    %4785 = vmatpush1.msra.mxu0 0.0
    %4786 = vmatprep.subr.mxu0 0.0
    %4787 = vmatpush1.msra.mxu0 0.0
    %4788 = vmatprep.subr.mxu0 0.0
    %4789 = vmatpush1.msra.mxu0 0.0
    %4790 = vmatprep.subr.mxu0 0.0
    %4791 = vmatpush1.msra.mxu0 0.0
    %4792 = vmatprep.subr.mxu0 0.0
    %4793 = vmatpush1.msra.mxu0 0.0
    %4794 = vmatprep.subr.mxu0 0.0
    %4795 = vmatpush1.msra.mxu0 0.0
    %4796 = vmatprep.subr.mxu0 0.0
    %4797 = vmatpush1.msra.mxu0 0.0
    %4798 = vmatprep.subr.mxu0 0.0
    %4799 = vmatpush1.msra.mxu0 0.0
    %4800 = vmatprep.subr.mxu0 0.0
    %4801 = vmatpush1.msra.mxu0 0.0
    %4802 = vmatprep.subr.mxu0 0.0
    %4803 = vmatpush1.msra.mxu0 0.0
    %4804 = vmatprep.subr.mxu0 0.0
    %4805 = vmatpush1.msra.mxu0 0.0
    %4806 = vmatprep.mubr.f32.mxu0 0.0
    %4807 = vmatmul.mubr.f32.gmra.mrb[0].mxu0 %v4728
    %v4808 = vpop.f32.mrb[0].mxu0
    %v4809 = vadd.f32 0.0, %v4808
    %v4810 = vpop.f32.mrb[0].mxu0
    %v4811 = vadd.f32 0.0, %v4810
    %4812 = vdwg.mxu0
    %4813 = vmatprep.subr.mxu0 %v4736
    %4814 = vmatpush1.msra.mxu0 %v4734
    %4815 = vmatprep.subr.mxu0 0.0
    %4816 = vmatpush1.msra.mxu0 0.0
    %4817 = vmatprep.subr.mxu0 0.0
    %4818 = vmatpush1.msra.mxu0 0.0
    %4819 = vmatprep.subr.mxu0 0.0
    %4820 = vmatpush1.msra.mxu0 0.0
    %4821 = vmatprep.subr.mxu0 0.0
    %4822 = vmatpush1.msra.mxu0 0.0
    %4823 = vmatprep.subr.mxu0 0.0
    %4824 = vmatpush1.msra.mxu0 0.0
    %4825 = vmatprep.subr.mxu0 0.0
    %4826 = vmatpush1.msra.mxu0 0.0
    %4827 = vmatprep.subr.mxu0 0.0
    %4828 = vmatpush1.msra.mxu0 0.0
    %4829 = vmatprep.subr.mxu0 0.0
    %4830 = vmatpush1.msra.mxu0 0.0
    %4831 = vmatprep.subr.mxu0 0.0
    %4832 = vmatpush1.msra.mxu0 0.0
    %4833 = vmatprep.subr.mxu0 0.0
    %4834 = vmatpush1.msra.mxu0 0.0
    %4835 = vmatprep.subr.mxu0 0.0
    %4836 = vmatpush1.msra.mxu0 0.0
    %4837 = vmatprep.subr.mxu0 0.0
    %4838 = vmatpush1.msra.mxu0 0.0
    %4839 = vmatprep.subr.mxu0 0.0
    %4840 = vmatpush1.msra.mxu0 0.0
    %4841 = vmatprep.subr.mxu0 0.0
    %4842 = vmatpush1.msra.mxu0 0.0
    %4843 = vmatprep.subr.mxu0 0.0
    %4844 = vmatpush1.msra.mxu0 0.0
    %4845 = vmatprep.subr.mxu0 0.0
    %4846 = vmatpush1.msra.mxu0 0.0
    %4847 = vmatprep.subr.mxu0 0.0
    %4848 = vmatpush1.msra.mxu0 0.0
    %4849 = vmatprep.subr.mxu0 0.0
    %4850 = vmatpush1.msra.mxu0 0.0
    %4851 = vmatprep.subr.mxu0 0.0
    %4852 = vmatpush1.msra.mxu0 0.0
    %4853 = vmatprep.subr.mxu0 0.0
    %4854 = vmatpush1.msra.mxu0 0.0
    %4855 = vmatprep.subr.mxu0 0.0
    %4856 = vmatpush1.msra.mxu0 0.0
    %4857 = vmatprep.subr.mxu0 0.0
    %4858 = vmatpush1.msra.mxu0 0.0
    %4859 = vmatprep.subr.mxu0 0.0
    %4860 = vmatpush1.msra.mxu0 0.0
    %4861 = vmatprep.subr.mxu0 0.0
    %4862 = vmatpush1.msra.mxu0 0.0
    %4863 = vmatprep.subr.mxu0 0.0
    %4864 = vmatpush1.msra.mxu0 0.0
    %4865 = vmatprep.subr.mxu0 0.0
    %4866 = vmatpush1.msra.mxu0 0.0
    %4867 = vmatprep.subr.mxu0 0.0
    %4868 = vmatpush1.msra.mxu0 0.0
    %4869 = vmatprep.subr.mxu0 0.0
    %4870 = vmatpush1.msra.mxu0 0.0
    %4871 = vmatprep.subr.mxu0 0.0
    %4872 = vmatpush1.msra.mxu0 0.0
    %4873 = vmatprep.subr.mxu0 0.0
    %4874 = vmatpush1.msra.mxu0 0.0
    %4875 = vmatprep.subr.mxu0 0.0
    %4876 = vmatpush1.msra.mxu0 0.0
    %4877 = vmatprep.mubr.f32.mxu0 0.0
    %4878 = vmatmul.mubr.f32.gmra.mrb[0].mxu0 %v4728
    %v4879 = vpop.f32.mrb[0].mxu0
    %v4880 = vadd.f32 0.0, %v4879
    %v4881 = vpop.f32.mrb[0].mxu0
    %v4882 = vadd.f32 0.0, %v4881
    %4883 = vdwg.mxu0
    %4884 = vmatprep.subr.mxu0 %v4740
    %4885 = vmatpush1.msra.mxu0 %v4738
    %4886 = vmatprep.subr.mxu0 0.0
    %4887 = vmatpush1.msra.mxu0 0.0
    %4888 = vmatprep.subr.mxu0 0.0
    %4889 = vmatpush1.msra.mxu0 0.0
    %4890 = vmatprep.subr.mxu0 0.0
    %4891 = vmatpush1.msra.mxu0 0.0
    %4892 = vmatprep.subr.mxu0 0.0
    %4893 = vmatpush1.msra.mxu0 0.0
    %4894 = vmatprep.subr.mxu0 0.0
    %4895 = vmatpush1.msra.mxu0 0.0
    %4896 = vmatprep.subr.mxu0 0.0
    %4897 = vmatpush1.msra.mxu0 0.0
    %4898 = vmatprep.subr.mxu0 0.0
    %4899 = vmatpush1.msra.mxu0 0.0
    %4900 = vmatprep.subr.mxu0 0.0
    %4901 = vmatpush1.msra.mxu0 0.0
    %4902 = vmatprep.subr.mxu0 0.0
    %4903 = vmatpush1.msra.mxu0 0.0
    %4904 = vmatprep.subr.mxu0 0.0
    %4905 = vmatpush1.msra.mxu0 0.0
    %4906 = vmatprep.subr.mxu0 0.0
    %4907 = vmatpush1.msra.mxu0 0.0
    %4908 = vmatprep.subr.mxu0 0.0
    %4909 = vmatpush1.msra.mxu0 0.0
    %4910 = vmatprep.subr.mxu0 0.0
    %4911 = vmatpush1.msra.mxu0 0.0
    %4912 = vmatprep.subr.mxu0 0.0
    %4913 = vmatpush1.msra.mxu0 0.0
    %4914 = vmatprep.subr.mxu0 0.0
    %4915 = vmatpush1.msra.mxu0 0.0
    %4916 = vmatprep.subr.mxu0 0.0
    %4917 = vmatpush1.msra.mxu0 0.0
    %4918 = vmatprep.subr.mxu0 0.0
    %4919 = vmatpush1.msra.mxu0 0.0
    %4920 = vmatprep.subr.mxu0 0.0
    %4921 = vmatpush1.msra.mxu0 0.0
    %4922 = vmatprep.subr.mxu0 0.0
    %4923 = vmatpush1.msra.mxu0 0.0
    %4924 = vmatprep.subr.mxu0 0.0
    %4925 = vmatpush1.msra.mxu0 0.0
    %4926 = vmatprep.subr.mxu0 0.0
    %4927 = vmatpush1.msra.mxu0 0.0
    %4928 = vmatprep.subr.mxu0 0.0
    %4929 = vmatpush1.msra.mxu0 0.0
    %4930 = vmatprep.subr.mxu0 0.0
    %4931 = vmatpush1.msra.mxu0 0.0
    %4932 = vmatprep.subr.mxu0 0.0
    %4933 = vmatpush1.msra.mxu0 0.0
    %4934 = vmatprep.subr.mxu0 0.0
    %4935 = vmatpush1.msra.mxu0 0.0
    %4936 = vmatprep.subr.mxu0 0.0
    %4937 = vmatpush1.msra.mxu0 0.0
    %4938 = vmatprep.subr.mxu0 0.0
    %4939 = vmatpush1.msra.mxu0 0.0
    %4940 = vmatprep.subr.mxu0 0.0
    %4941 = vmatpush1.msra.mxu0 0.0
    %4942 = vmatprep.subr.mxu0 0.0
    %4943 = vmatpush1.msra.mxu0 0.0
    %4944 = vmatprep.subr.mxu0 0.0
    %4945 = vmatpush1.msra.mxu0 0.0
    %4946 = vmatprep.subr.mxu0 0.0
    %4947 = vmatpush1.msra.mxu0 0.0
    %4948 = vmatprep.mubr.f32.mxu0 0.0
    %4949 = vmatmul.mubr.f32.gmra.mrb[0].mxu0 %v4728
    %v4950 = vpop.f32.mrb[0].mxu0
    %v4951 = vadd.f32 0.0, %v4950
    %v4952 = vpop.f32.mrb[0].mxu0
    %v4953 = vadd.f32 0.0, %v4952
    %4954 = vdwg.mxu0
    %v4955 = vadd.f32 %v4553, %v4809
    %v4956 = vadd.f32 %v4555, %v4811
    %v4957 = vadd.f32 %v4624, %v4880
    %v4958 = vadd.f32 %v4626, %v4882
    %v4959 = vadd.f32 %v4695, %v4951
    %v4960 = vadd.f32 %v4697, %v4953
    %v4961 = vld [vmem:[#allocation2] sm:$0xff]
    %v4962 = vld [vmem:[#allocation2 + $0x8] sm:$0xff]
    %v4963 = vld [vmem:[#allocation2 + $0x10] sm:$0xff]
    %s4964 = scalar_lea.vmem %s1, 480
    %v4965 = vld [vmem:[%s4964] sm:$0xff]
    %v4969 = vcombine.high %v4961, %v4961
    %v4970 = vcombine.high %v4962, %v4962
    %v4971 = vcombine.high %v4963, %v4963
    %4972 = vrot.lane.b32.xlu0 %v4961, 106
    %v4973 = vpop.permute.xlu0 %4972
    %4974 = vrot.lane.b32.xlu0 %v4969, 106
    %v4975 = vpop.permute.xlu0 %4974
    %4976 = vrot.lane.b32.xlu0 %v4962, 106
    %v4977 = vpop.permute.xlu0 %4976
    %4978 = vrot.lane.b32.xlu0 %v4970, 106
    %v4979 = vpop.permute.xlu0 %4978
    %4980 = vrot.lane.b32.xlu0 %v4963, 106
    %v4981 = vpop.permute.xlu0 %4980
    %4982 = vrot.lane.b32.xlu0 %v4971, 106
    %v4983 = vpop.permute.xlu0 %4982
    %vm4984 = vcmask 867328
    %v4985 = vsel %vm4984, %v4973, %v4975
    %v4986 = vsel %vm4984, %v4975, %v4977
    %v4987 = vsel %vm4984, %v4977, %v4979
    %v4988 = vsel %vm4984, %v4979, %v4981
    %v4989 = vsel %vm4984, %v4981, %v4983
    %v4991 = vsel %vm4242, %v4965, 0
    %v4993 = vsel %vm4199, %v4985, 0
    %v4995 = vsel %vm4199, %v4986, 0
    %v4997 = vsel %vm4199, %v4987, 0
    %v4999 = vsel %vm4199, %v4988, 0
    %v5001 = vsel %vm4199, %v4989, 0
    %v5003 = vsel %vm4199, %v4983, 0
    %5005 = vmatprep.subr.mxu0 %v4995
    %5006 = vmatpush1.msra.mxu0 %v4993
    %5007 = vmatprep.subr.mxu0 0.0
    %5008 = vmatpush1.msra.mxu0 0.0
    %5009 = vmatprep.subr.mxu0 0.0
    %5010 = vmatpush1.msra.mxu0 0.0
    %5011 = vmatprep.subr.mxu0 0.0
    %5012 = vmatpush1.msra.mxu0 0.0
    %5013 = vmatprep.subr.mxu0 0.0
    %5014 = vmatpush1.msra.mxu0 0.0
    %5015 = vmatprep.subr.mxu0 0.0
    %5016 = vmatpush1.msra.mxu0 0.0
    %5017 = vmatprep.subr.mxu0 0.0
    %5018 = vmatpush1.msra.mxu0 0.0
    %5019 = vmatprep.subr.mxu0 0.0
    %5020 = vmatpush1.msra.mxu0 0.0
    %5021 = vmatprep.subr.mxu0 0.0
    %5022 = vmatpush1.msra.mxu0 0.0
    %5023 = vmatprep.subr.mxu0 0.0
    %5024 = vmatpush1.msra.mxu0 0.0
    %5025 = vmatprep.subr.mxu0 0.0
    %5026 = vmatpush1.msra.mxu0 0.0
    %5027 = vmatprep.subr.mxu0 0.0
    %5028 = vmatpush1.msra.mxu0 0.0
    %5029 = vmatprep.subr.mxu0 0.0
    %5030 = vmatpush1.msra.mxu0 0.0
    %5031 = vmatprep.subr.mxu0 0.0
    %5032 = vmatpush1.msra.mxu0 0.0
    %5033 = vmatprep.subr.mxu0 0.0
    %5034 = vmatpush1.msra.mxu0 0.0
    %5035 = vmatprep.subr.mxu0 0.0
    %5036 = vmatpush1.msra.mxu0 0.0
    %5037 = vmatprep.subr.mxu0 0.0
    %5038 = vmatpush1.msra.mxu0 0.0
    %5039 = vmatprep.subr.mxu0 0.0
    %5040 = vmatpush1.msra.mxu0 0.0
    %5041 = vmatprep.subr.mxu0 0.0
    %5042 = vmatpush1.msra.mxu0 0.0
    %5043 = vmatprep.subr.mxu0 0.0
    %5044 = vmatpush1.msra.mxu0 0.0
    %5045 = vmatprep.subr.mxu0 0.0
    %5046 = vmatpush1.msra.mxu0 0.0
    %5047 = vmatprep.subr.mxu0 0.0
    %5048 = vmatpush1.msra.mxu0 0.0
    %5049 = vmatprep.subr.mxu0 0.0
    %5050 = vmatpush1.msra.mxu0 0.0
    %5051 = vmatprep.subr.mxu0 0.0
    %5052 = vmatpush1.msra.mxu0 0.0
    %5053 = vmatprep.subr.mxu0 0.0
    %5054 = vmatpush1.msra.mxu0 0.0
    %5055 = vmatprep.subr.mxu0 0.0
    %5056 = vmatpush1.msra.mxu0 0.0
    %5057 = vmatprep.subr.mxu0 0.0
    %5058 = vmatpush1.msra.mxu0 0.0
    %5059 = vmatprep.subr.mxu0 0.0
    %5060 = vmatpush1.msra.mxu0 0.0
    %5061 = vmatprep.subr.mxu0 0.0
    %5062 = vmatpush1.msra.mxu0 0.0
    %5063 = vmatprep.subr.mxu0 0.0
    %5064 = vmatpush1.msra.mxu0 0.0
    %5065 = vmatprep.subr.mxu0 0.0
    %5066 = vmatpush1.msra.mxu0 0.0
    %5067 = vmatprep.subr.mxu0 0.0
    %5068 = vmatpush1.msra.mxu0 0.0
    %5069 = vmatprep.mubr.f32.mxu0 0.0
    %5070 = vmatmul.mubr.f32.gmra.mrb[0].mxu0 %v4991
    %v5071 = vpop.f32.mrb[0].mxu0
    %v5072 = vadd.f32 0.0, %v5071
    %v5073 = vpop.f32.mrb[0].mxu0
    %v5074 = vadd.f32 0.0, %v5073
    %5075 = vdwg.mxu0
    %5076 = vmatprep.subr.mxu0 %v4999
    %5077 = vmatpush1.msra.mxu0 %v4997
    %5078 = vmatprep.subr.mxu0 0.0
    %5079 = vmatpush1.msra.mxu0 0.0
    %5080 = vmatprep.subr.mxu0 0.0
    %5081 = vmatpush1.msra.mxu0 0.0
    %5082 = vmatprep.subr.mxu0 0.0
    %5083 = vmatpush1.msra.mxu0 0.0
    %5084 = vmatprep.subr.mxu0 0.0
    %5085 = vmatpush1.msra.mxu0 0.0
    %5086 = vmatprep.subr.mxu0 0.0
    %5087 = vmatpush1.msra.mxu0 0.0
    %5088 = vmatprep.subr.mxu0 0.0
    %5089 = vmatpush1.msra.mxu0 0.0
    %5090 = vmatprep.subr.mxu0 0.0
    %5091 = vmatpush1.msra.mxu0 0.0
    %5092 = vmatprep.subr.mxu0 0.0
    %5093 = vmatpush1.msra.mxu0 0.0
    %5094 = vmatprep.subr.mxu0 0.0
    %5095 = vmatpush1.msra.mxu0 0.0
    %5096 = vmatprep.subr.mxu0 0.0
    %5097 = vmatpush1.msra.mxu0 0.0
    %5098 = vmatprep.subr.mxu0 0.0
    %5099 = vmatpush1.msra.mxu0 0.0
    %5100 = vmatprep.subr.mxu0 0.0
    %5101 = vmatpush1.msra.mxu0 0.0
    %5102 = vmatprep.subr.mxu0 0.0
    %5103 = vmatpush1.msra.mxu0 0.0
    %5104 = vmatprep.subr.mxu0 0.0
    %5105 = vmatpush1.msra.mxu0 0.0
    %5106 = vmatprep.subr.mxu0 0.0
    %5107 = vmatpush1.msra.mxu0 0.0
    %5108 = vmatprep.subr.mxu0 0.0
    %5109 = vmatpush1.msra.mxu0 0.0
    %5110 = vmatprep.subr.mxu0 0.0
    %5111 = vmatpush1.msra.mxu0 0.0
    %5112 = vmatprep.subr.mxu0 0.0
    %5113 = vmatpush1.msra.mxu0 0.0
    %5114 = vmatprep.subr.mxu0 0.0
    %5115 = vmatpush1.msra.mxu0 0.0
    %5116 = vmatprep.subr.mxu0 0.0
    %5117 = vmatpush1.msra.mxu0 0.0
    %5118 = vmatprep.subr.mxu0 0.0
    %5119 = vmatpush1.msra.mxu0 0.0
    %5120 = vmatprep.subr.mxu0 0.0
    %5121 = vmatpush1.msra.mxu0 0.0
    %5122 = vmatprep.subr.mxu0 0.0
    %5123 = vmatpush1.msra.mxu0 0.0
    %5124 = vmatprep.subr.mxu0 0.0
    %5125 = vmatpush1.msra.mxu0 0.0
    %5126 = vmatprep.subr.mxu0 0.0
    %5127 = vmatpush1.msra.mxu0 0.0
    %5128 = vmatprep.subr.mxu0 0.0
    %5129 = vmatpush1.msra.mxu0 0.0
    %5130 = vmatprep.subr.mxu0 0.0
    %5131 = vmatpush1.msra.mxu0 0.0
    %5132 = vmatprep.subr.mxu0 0.0
    %5133 = vmatpush1.msra.mxu0 0.0
    %5134 = vmatprep.subr.mxu0 0.0
    %5135 = vmatpush1.msra.mxu0 0.0
    %5136 = vmatprep.subr.mxu0 0.0
    %5137 = vmatpush1.msra.mxu0 0.0
    %5138 = vmatprep.subr.mxu0 0.0
    %5139 = vmatpush1.msra.mxu0 0.0
    %5140 = vmatprep.mubr.f32.mxu0 0.0
    %5141 = vmatmul.mubr.f32.gmra.mrb[0].mxu0 %v4991
    %v5142 = vpop.f32.mrb[0].mxu0
    %v5143 = vadd.f32 0.0, %v5142
    %v5144 = vpop.f32.mrb[0].mxu0
    %v5145 = vadd.f32 0.0, %v5144
    %5146 = vdwg.mxu0
    %5147 = vmatprep.subr.mxu0 %v5003
    %5148 = vmatpush1.msra.mxu0 %v5001
    %5149 = vmatprep.subr.mxu0 0.0
    %5150 = vmatpush1.msra.mxu0 0.0
    %5151 = vmatprep.subr.mxu0 0.0
    %5152 = vmatpush1.msra.mxu0 0.0
    %5153 = vmatprep.subr.mxu0 0.0
    %5154 = vmatpush1.msra.mxu0 0.0
    %5155 = vmatprep.subr.mxu0 0.0
    %5156 = vmatpush1.msra.mxu0 0.0
    %5157 = vmatprep.subr.mxu0 0.0
    %5158 = vmatpush1.msra.mxu0 0.0
    %5159 = vmatprep.subr.mxu0 0.0
    %5160 = vmatpush1.msra.mxu0 0.0
    %5161 = vmatprep.subr.mxu0 0.0
    %5162 = vmatpush1.msra.mxu0 0.0
    %5163 = vmatprep.subr.mxu0 0.0
    %5164 = vmatpush1.msra.mxu0 0.0
    %5165 = vmatprep.subr.mxu0 0.0
    %5166 = vmatpush1.msra.mxu0 0.0
    %5167 = vmatprep.subr.mxu0 0.0
    %5168 = vmatpush1.msra.mxu0 0.0
    %5169 = vmatprep.subr.mxu0 0.0
    %5170 = vmatpush1.msra.mxu0 0.0
    %5171 = vmatprep.subr.mxu0 0.0
    %5172 = vmatpush1.msra.mxu0 0.0
    %5173 = vmatprep.subr.mxu0 0.0
    %5174 = vmatpush1.msra.mxu0 0.0
    %5175 = vmatprep.subr.mxu0 0.0
    %5176 = vmatpush1.msra.mxu0 0.0
    %5177 = vmatprep.subr.mxu0 0.0
    %5178 = vmatpush1.msra.mxu0 0.0
    %5179 = vmatprep.subr.mxu0 0.0
    %5180 = vmatpush1.msra.mxu0 0.0
    %5181 = vmatprep.subr.mxu0 0.0
    %5182 = vmatpush1.msra.mxu0 0.0
    %5183 = vmatprep.subr.mxu0 0.0
    %5184 = vmatpush1.msra.mxu0 0.0
    %5185 = vmatprep.subr.mxu0 0.0
    %5186 = vmatpush1.msra.mxu0 0.0
    %5187 = vmatprep.subr.mxu0 0.0
    %5188 = vmatpush1.msra.mxu0 0.0
    %5189 = vmatprep.subr.mxu0 0.0
    %5190 = vmatpush1.msra.mxu0 0.0
    %5191 = vmatprep.subr.mxu0 0.0
    %5192 = vmatpush1.msra.mxu0 0.0
    %5193 = vmatprep.subr.mxu0 0.0
    %5194 = vmatpush1.msra.mxu0 0.0
    %5195 = vmatprep.subr.mxu0 0.0
    %5196 = vmatpush1.msra.mxu0 0.0
    %5197 = vmatprep.subr.mxu0 0.0
    %5198 = vmatpush1.msra.mxu0 0.0
    %5199 = vmatprep.subr.mxu0 0.0
    %5200 = vmatpush1.msra.mxu0 0.0
    %5201 = vmatprep.subr.mxu0 0.0
    %5202 = vmatpush1.msra.mxu0 0.0
    %5203 = vmatprep.subr.mxu0 0.0
    %5204 = vmatpush1.msra.mxu0 0.0
    %5205 = vmatprep.subr.mxu0 0.0
    %5206 = vmatpush1.msra.mxu0 0.0
    %5207 = vmatprep.subr.mxu0 0.0
    %5208 = vmatpush1.msra.mxu0 0.0
    %5209 = vmatprep.subr.mxu0 0.0
    %5210 = vmatpush1.msra.mxu0 0.0
    %5211 = vmatprep.mubr.f32.mxu0 0.0
    %5212 = vmatmul.mubr.f32.gmra.mrb[0].mxu0 %v4991
    %v5213 = vpop.f32.mrb[0].mxu0
    %v5214 = vadd.f32 0.0, %v5213
    %v5215 = vpop.f32.mrb[0].mxu0
    %v5216 = vadd.f32 0.0, %v5215
    %5217 = vdwg.mxu0
    %v5218 = vadd.f32 %v4955, %v5072
    %v5219 = vadd.f32 %v4956, %v5074
    %v5220 = vadd.f32 %v4957, %v5143
    %v5221 = vadd.f32 %v4958, %v5145
    %v5222 = vadd.f32 %v4959, %v5214
    %v5223 = vadd.f32 %v4960, %v5216
    %v5224 = vld [vmem:[#allocation2] sm:$0xff]
    %v5225 = vld [vmem:[#allocation2 + $0x8] sm:$0xff]
    %v5226 = vld [vmem:[#allocation2 + $0x10] sm:$0xff]
    %v5227 = vld [vmem:[#allocation2 + $0x18] sm:$0xf]
    %s5228 = scalar_lea.vmem %s1, 512
    %v5229 = vld [vmem:[%s5228] sm:$0xff]
    %v5234 = vcombine.high %v5224, %v5224
    %v5235 = vcombine.high %v5225, %v5225
    %v5236 = vcombine.high %v5226, %v5226
    %5237 = vrot.lane.b32.xlu0 %v5224, 105
    %v5238 = vpop.permute.xlu0 %5237
    %5239 = vrot.lane.b32.xlu0 %v5234, 105
    %v5240 = vpop.permute.xlu0 %5239
    %5241 = vrot.lane.b32.xlu0 %v5225, 105
    %v5242 = vpop.permute.xlu0 %5241
    %5243 = vrot.lane.b32.xlu0 %v5235, 105
    %v5244 = vpop.permute.xlu0 %5243
    %5245 = vrot.lane.b32.xlu0 %v5226, 105
    %v5246 = vpop.permute.xlu0 %5245
    %5247 = vrot.lane.b32.xlu0 %v5236, 105
    %v5248 = vpop.permute.xlu0 %5247
    %5249 = vrot.lane.b32.xlu0 %v5227, 105
    %v5250 = vpop.permute.xlu0 %5249
    %vm5251 = vcmask 859136
    %v5252 = vsel %vm5251, %v5238, %v5240
    %v5253 = vsel %vm5251, %v5240, %v5242
    %v5254 = vsel %vm5251, %v5242, %v5244
    %v5255 = vsel %vm5251, %v5244, %v5246
    %v5256 = vsel %vm5251, %v5246, %v5248
    %v5257 = vsel %vm5251, %v5248, %v5250
    %v5259 = vsel %vm4242, %v5229, 0
    %v5261 = vsel %vm4199, %v5252, 0
    %v5263 = vsel %vm4199, %v5253, 0
    %v5265 = vsel %vm4199, %v5254, 0
    %v5267 = vsel %vm4199, %v5255, 0
    %v5269 = vsel %vm4199, %v5256, 0
    %v5271 = vsel %vm4199, %v5257, 0
    %5273 = vmatprep.subr.mxu0 %v5263
    %5274 = vmatpush1.msra.mxu0 %v5261
    %5275 = vmatprep.subr.mxu0 0.0
    %5276 = vmatpush1.msra.mxu0 0.0
    %5277 = vmatprep.subr.mxu0 0.0
    %5278 = vmatpush1.msra.mxu0 0.0
    %5279 = vmatprep.subr.mxu0 0.0
    %5280 = vmatpush1.msra.mxu0 0.0
    %5281 = vmatprep.subr.mxu0 0.0
    %5282 = vmatpush1.msra.mxu0 0.0
    %5283 = vmatprep.subr.mxu0 0.0
    %5284 = vmatpush1.msra.mxu0 0.0
    %5285 = vmatprep.subr.mxu0 0.0
    %5286 = vmatpush1.msra.mxu0 0.0
    %5287 = vmatprep.subr.mxu0 0.0
    %5288 = vmatpush1.msra.mxu0 0.0
    %5289 = vmatprep.subr.mxu0 0.0
    %5290 = vmatpush1.msra.mxu0 0.0
    %5291 = vmatprep.subr.mxu0 0.0
    %5292 = vmatpush1.msra.mxu0 0.0
    %5293 = vmatprep.subr.mxu0 0.0
    %5294 = vmatpush1.msra.mxu0 0.0
    %5295 = vmatprep.subr.mxu0 0.0
    %5296 = vmatpush1.msra.mxu0 0.0
    %5297 = vmatprep.subr.mxu0 0.0
    %5298 = vmatpush1.msra.mxu0 0.0
    %5299 = vmatprep.subr.mxu0 0.0
    %5300 = vmatpush1.msra.mxu0 0.0
    %5301 = vmatprep.subr.mxu0 0.0
    %5302 = vmatpush1.msra.mxu0 0.0
    %5303 = vmatprep.subr.mxu0 0.0
    %5304 = vmatpush1.msra.mxu0 0.0
    %5305 = vmatprep.subr.mxu0 0.0
    %5306 = vmatpush1.msra.mxu0 0.0
    %5307 = vmatprep.subr.mxu0 0.0
    %5308 = vmatpush1.msra.mxu0 0.0
    %5309 = vmatprep.subr.mxu0 0.0
    %5310 = vmatpush1.msra.mxu0 0.0
    %5311 = vmatprep.subr.mxu0 0.0
    %5312 = vmatpush1.msra.mxu0 0.0
    %5313 = vmatprep.subr.mxu0 0.0
    %5314 = vmatpush1.msra.mxu0 0.0
    %5315 = vmatprep.subr.mxu0 0.0
    %5316 = vmatpush1.msra.mxu0 0.0
    %5317 = vmatprep.subr.mxu0 0.0
    %5318 = vmatpush1.msra.mxu0 0.0
    %5319 = vmatprep.subr.mxu0 0.0
    %5320 = vmatpush1.msra.mxu0 0.0
    %5321 = vmatprep.subr.mxu0 0.0
    %5322 = vmatpush1.msra.mxu0 0.0
    %5323 = vmatprep.subr.mxu0 0.0
    %5324 = vmatpush1.msra.mxu0 0.0
    %5325 = vmatprep.subr.mxu0 0.0
    %5326 = vmatpush1.msra.mxu0 0.0
    %5327 = vmatprep.subr.mxu0 0.0
    %5328 = vmatpush1.msra.mxu0 0.0
    %5329 = vmatprep.subr.mxu0 0.0
    %5330 = vmatpush1.msra.mxu0 0.0
    %5331 = vmatprep.subr.mxu0 0.0
    %5332 = vmatpush1.msra.mxu0 0.0
    %5333 = vmatprep.subr.mxu0 0.0
    %5334 = vmatpush1.msra.mxu0 0.0
    %5335 = vmatprep.subr.mxu0 0.0
    %5336 = vmatpush1.msra.mxu0 0.0
    %5337 = vmatprep.mubr.f32.mxu0 0.0
    %5338 = vmatmul.mubr.f32.gmra.mrb[0].mxu0 %v5259
    %v5339 = vpop.f32.mrb[0].mxu0
    %v5340 = vadd.f32 0.0, %v5339
    %v5341 = vpop.f32.mrb[0].mxu0
    %v5342 = vadd.f32 0.0, %v5341
    %5343 = vdwg.mxu0
    %5344 = vmatprep.subr.mxu0 %v5267
    %5345 = vmatpush1.msra.mxu0 %v5265
    %5346 = vmatprep.subr.mxu0 0.0
    %5347 = vmatpush1.msra.mxu0 0.0
    %5348 = vmatprep.subr.mxu0 0.0
    %5349 = vmatpush1.msra.mxu0 0.0
    %5350 = vmatprep.subr.mxu0 0.0
    %5351 = vmatpush1.msra.mxu0 0.0
    %5352 = vmatprep.subr.mxu0 0.0
    %5353 = vmatpush1.msra.mxu0 0.0
    %5354 = vmatprep.subr.mxu0 0.0
    %5355 = vmatpush1.msra.mxu0 0.0
    %5356 = vmatprep.subr.mxu0 0.0
    %5357 = vmatpush1.msra.mxu0 0.0
    %5358 = vmatprep.subr.mxu0 0.0
    %5359 = vmatpush1.msra.mxu0 0.0
    %5360 = vmatprep.subr.mxu0 0.0
    %5361 = vmatpush1.msra.mxu0 0.0
    %5362 = vmatprep.subr.mxu0 0.0
    %5363 = vmatpush1.msra.mxu0 0.0
    %5364 = vmatprep.subr.mxu0 0.0
    %5365 = vmatpush1.msra.mxu0 0.0
    %5366 = vmatprep.subr.mxu0 0.0
    %5367 = vmatpush1.msra.mxu0 0.0
    %5368 = vmatprep.subr.mxu0 0.0
    %5369 = vmatpush1.msra.mxu0 0.0
    %5370 = vmatprep.subr.mxu0 0.0
    %5371 = vmatpush1.msra.mxu0 0.0
    %5372 = vmatprep.subr.mxu0 0.0
    %5373 = vmatpush1.msra.mxu0 0.0
    %5374 = vmatprep.subr.mxu0 0.0
    %5375 = vmatpush1.msra.mxu0 0.0
    %5376 = vmatprep.subr.mxu0 0.0
    %5377 = vmatpush1.msra.mxu0 0.0
    %5378 = vmatprep.subr.mxu0 0.0
    %5379 = vmatpush1.msra.mxu0 0.0
    %5380 = vmatprep.subr.mxu0 0.0
    %5381 = vmatpush1.msra.mxu0 0.0
    %5382 = vmatprep.subr.mxu0 0.0
    %5383 = vmatpush1.msra.mxu0 0.0
    %5384 = vmatprep.subr.mxu0 0.0
    %5385 = vmatpush1.msra.mxu0 0.0
    %5386 = vmatprep.subr.mxu0 0.0
    %5387 = vmatpush1.msra.mxu0 0.0
    %5388 = vmatprep.subr.mxu0 0.0
    %5389 = vmatpush1.msra.mxu0 0.0
    %5390 = vmatprep.subr.mxu0 0.0
    %5391 = vmatpush1.msra.mxu0 0.0
    %5392 = vmatprep.subr.mxu0 0.0
    %5393 = vmatpush1.msra.mxu0 0.0
    %5394 = vmatprep.subr.mxu0 0.0
    %5395 = vmatpush1.msra.mxu0 0.0
    %5396 = vmatprep.subr.mxu0 0.0
    %5397 = vmatpush1.msra.mxu0 0.0
    %5398 = vmatprep.subr.mxu0 0.0
    %5399 = vmatpush1.msra.mxu0 0.0
    %5400 = vmatprep.subr.mxu0 0.0
    %5401 = vmatpush1.msra.mxu0 0.0
    %5402 = vmatprep.subr.mxu0 0.0
    %5403 = vmatpush1.msra.mxu0 0.0
    %5404 = vmatprep.subr.mxu0 0.0
    %5405 = vmatpush1.msra.mxu0 0.0
    %5406 = vmatprep.subr.mxu0 0.0
    %5407 = vmatpush1.msra.mxu0 0.0
    %5408 = vmatprep.mubr.f32.mxu0 0.0
    %5409 = vmatmul.mubr.f32.gmra.mrb[0].mxu0 %v5259
    %v5410 = vpop.f32.mrb[0].mxu0
    %v5411 = vadd.f32 0.0, %v5410
    %v5412 = vpop.f32.mrb[0].mxu0
    %v5413 = vadd.f32 0.0, %v5412
    %5414 = vdwg.mxu0
    %5415 = vmatprep.subr.mxu0 %v5271
    %5416 = vmatpush1.msra.mxu0 %v5269
    %5417 = vmatprep.subr.mxu0 0.0
    %5418 = vmatpush1.msra.mxu0 0.0
    %5419 = vmatprep.subr.mxu0 0.0
    %5420 = vmatpush1.msra.mxu0 0.0
    %5421 = vmatprep.subr.mxu0 0.0
    %5422 = vmatpush1.msra.mxu0 0.0
    %5423 = vmatprep.subr.mxu0 0.0
    %5424 = vmatpush1.msra.mxu0 0.0
    %5425 = vmatprep.subr.mxu0 0.0
    %5426 = vmatpush1.msra.mxu0 0.0
    %5427 = vmatprep.subr.mxu0 0.0
    %5428 = vmatpush1.msra.mxu0 0.0
    %5429 = vmatprep.subr.mxu0 0.0
    %5430 = vmatpush1.msra.mxu0 0.0
    %5431 = vmatprep.subr.mxu0 0.0
    %5432 = vmatpush1.msra.mxu0 0.0
    %5433 = vmatprep.subr.mxu0 0.0
    %5434 = vmatpush1.msra.mxu0 0.0
    %5435 = vmatprep.subr.mxu0 0.0
    %5436 = vmatpush1.msra.mxu0 0.0
    %5437 = vmatprep.subr.mxu0 0.0
    %5438 = vmatpush1.msra.mxu0 0.0
    %5439 = vmatprep.subr.mxu0 0.0
    %5440 = vmatpush1.msra.mxu0 0.0
    %5441 = vmatprep.subr.mxu0 0.0
    %5442 = vmatpush1.msra.mxu0 0.0
    %5443 = vmatprep.subr.mxu0 0.0
    %5444 = vmatpush1.msra.mxu0 0.0
    %5445 = vmatprep.subr.mxu0 0.0
    %5446 = vmatpush1.msra.mxu0 0.0
    %5447 = vmatprep.subr.mxu0 0.0
    %5448 = vmatpush1.msra.mxu0 0.0
    %5449 = vmatprep.subr.mxu0 0.0
    %5450 = vmatpush1.msra.mxu0 0.0
    %5451 = vmatprep.subr.mxu0 0.0
    %5452 = vmatpush1.msra.mxu0 0.0
    %5453 = vmatprep.subr.mxu0 0.0
    %5454 = vmatpush1.msra.mxu0 0.0
    %5455 = vmatprep.subr.mxu0 0.0
    %5456 = vmatpush1.msra.mxu0 0.0
    %5457 = vmatprep.subr.mxu0 0.0
    %5458 = vmatpush1.msra.mxu0 0.0
    %5459 = vmatprep.subr.mxu0 0.0
    %5460 = vmatpush1.msra.mxu0 0.0
    %5461 = vmatprep.subr.mxu0 0.0
    %5462 = vmatpush1.msra.mxu0 0.0
    %5463 = vmatprep.subr.mxu0 0.0
    %5464 = vmatpush1.msra.mxu0 0.0
    %5465 = vmatprep.subr.mxu0 0.0
    %5466 = vmatpush1.msra.mxu0 0.0
    %5467 = vmatprep.subr.mxu0 0.0
    %5468 = vmatpush1.msra.mxu0 0.0
    %5469 = vmatprep.subr.mxu0 0.0
    %5470 = vmatpush1.msra.mxu0 0.0
    %5471 = vmatprep.subr.mxu0 0.0
    %5472 = vmatpush1.msra.mxu0 0.0
    %5473 = vmatprep.subr.mxu0 0.0
    %5474 = vmatpush1.msra.mxu0 0.0
    %5475 = vmatprep.subr.mxu0 0.0
    %5476 = vmatpush1.msra.mxu0 0.0
    %5477 = vmatprep.subr.mxu0 0.0
    %5478 = vmatpush1.msra.mxu0 0.0
    %5479 = vmatprep.mubr.f32.mxu0 0.0
    %5480 = vmatmul.mubr.f32.gmra.mrb[0].mxu0 %v5259
    %v5481 = vpop.f32.mrb[0].mxu0
    %v5482 = vadd.f32 0.0, %v5481
    %v5483 = vpop.f32.mrb[0].mxu0
    %v5484 = vadd.f32 0.0, %v5483
    %5485 = vdwg.mxu0
    %v5486 = vadd.f32 %v5218, %v5340
    %v5487 = vadd.f32 %v5219, %v5342
    %v5488 = vadd.f32 %v5220, %v5411
    %v5489 = vadd.f32 %v5221, %v5413
    %v5490 = vadd.f32 %v5222, %v5482
    %v5491 = vadd.f32 %v5223, %v5484
    %v5492 = vld [vmem:[#allocation2] sm:$0xff]
    %v5493 = vld [vmem:[#allocation2 + $0x8] sm:$0xff]
    %v5494 = vld [vmem:[#allocation2 + $0x10] sm:$0xff]
    %v5495 = vld [vmem:[#allocation2 + $0x18] sm:$0xf]
    %s5496 = scalar_lea.vmem %s1, 544
    %v5497 = vld [vmem:[%s5496] sm:$0xff]
    %v5502 = vcombine.high %v5492, %v5492
    %v5503 = vcombine.high %v5493, %v5493
    %v5504 = vcombine.high %v5494, %v5494
    %5505 = vrot.lane.b32.xlu0 %v5492, 104
    %v5506 = vpop.permute.xlu0 %5505
    %5507 = vrot.lane.b32.xlu0 %v5502, 104
    %v5508 = vpop.permute.xlu0 %5507
    %5509 = vrot.lane.b32.xlu0 %v5493, 104
    %v5510 = vpop.permute.xlu0 %5509
    %5511 = vrot.lane.b32.xlu0 %v5503, 104
    %v5512 = vpop.permute.xlu0 %5511
    %5513 = vrot.lane.b32.xlu0 %v5494, 104
    %v5514 = vpop.permute.xlu0 %5513
    %5515 = vrot.lane.b32.xlu0 %v5504, 104
    %v5516 = vpop.permute.xlu0 %5515
    %5517 = vrot.lane.b32.xlu0 %v5495, 104
    %v5518 = vpop.permute.xlu0 %5517
    %vm5519 = vcmask 850944
    %v5520 = vsel %vm5519, %v5506, %v5508
    %v5521 = vsel %vm5519, %v5508, %v5510
    %v5522 = vsel %vm5519, %v5510, %v5512
    %v5523 = vsel %vm5519, %v5512, %v5514
    %v5524 = vsel %vm5519, %v5514, %v5516
    %v5525 = vsel %vm5519, %v5516, %v5518
    %v5527 = vsel %vm4242, %v5497, 0
    %v5529 = vsel %vm4199, %v5520, 0
    %v5531 = vsel %vm4199, %v5521, 0
    %v5533 = vsel %vm4199, %v5522, 0
    %v5535 = vsel %vm4199, %v5523, 0
    %v5537 = vsel %vm4199, %v5524, 0
    %v5539 = vsel %vm4199, %v5525, 0
    %5541 = vmatprep.subr.mxu0 %v5531
    %5542 = vmatpush1.msra.mxu0 %v5529
    %5543 = vmatprep.subr.mxu0 0.0
    %5544 = vmatpush1.msra.mxu0 0.0
    %5545 = vmatprep.subr.mxu0 0.0
    %5546 = vmatpush1.msra.mxu0 0.0
    %5547 = vmatprep.subr.mxu0 0.0
    %5548 = vmatpush1.msra.mxu0 0.0
    %5549 = vmatprep.subr.mxu0 0.0
    %5550 = vmatpush1.msra.mxu0 0.0
    %5551 = vmatprep.subr.mxu0 0.0
    %5552 = vmatpush1.msra.mxu0 0.0
    %5553 = vmatprep.subr.mxu0 0.0
    %5554 = vmatpush1.msra.mxu0 0.0
    %5555 = vmatprep.subr.mxu0 0.0
    %5556 = vmatpush1.msra.mxu0 0.0
    %5557 = vmatprep.subr.mxu0 0.0
    %5558 = vmatpush1.msra.mxu0 0.0
    %5559 = vmatprep.subr.mxu0 0.0
    %5560 = vmatpush1.msra.mxu0 0.0
    %5561 = vmatprep.subr.mxu0 0.0
    %5562 = vmatpush1.msra.mxu0 0.0
    %5563 = vmatprep.subr.mxu0 0.0
    %5564 = vmatpush1.msra.mxu0 0.0
    %5565 = vmatprep.subr.mxu0 0.0
    %5566 = vmatpush1.msra.mxu0 0.0
    %5567 = vmatprep.subr.mxu0 0.0
    %5568 = vmatpush1.msra.mxu0 0.0
    %5569 = vmatprep.subr.mxu0 0.0
    %5570 = vmatpush1.msra.mxu0 0.0
    %5571 = vmatprep.subr.mxu0 0.0
    %5572 = vmatpush1.msra.mxu0 0.0
    %5573 = vmatprep.subr.mxu0 0.0
    %5574 = vmatpush1.msra.mxu0 0.0
    %5575 = vmatprep.subr.mxu0 0.0
    %5576 = vmatpush1.msra.mxu0 0.0
    %5577 = vmatprep.subr.mxu0 0.0
    %5578 = vmatpush1.msra.mxu0 0.0
    %5579 = vmatprep.subr.mxu0 0.0
    %5580 = vmatpush1.msra.mxu0 0.0
    %5581 = vmatprep.subr.mxu0 0.0
    %5582 = vmatpush1.msra.mxu0 0.0
    %5583 = vmatprep.subr.mxu0 0.0
    %5584 = vmatpush1.msra.mxu0 0.0
    %5585 = vmatprep.subr.mxu0 0.0
    %5586 = vmatpush1.msra.mxu0 0.0
    %5587 = vmatprep.subr.mxu0 0.0
    %5588 = vmatpush1.msra.mxu0 0.0
    %5589 = vmatprep.subr.mxu0 0.0
    %5590 = vmatpush1.msra.mxu0 0.0
    %5591 = vmatprep.subr.mxu0 0.0
    %5592 = vmatpush1.msra.mxu0 0.0
    %5593 = vmatprep.subr.mxu0 0.0
    %5594 = vmatpush1.msra.mxu0 0.0
    %5595 = vmatprep.subr.mxu0 0.0
    %5596 = vmatpush1.msra.mxu0 0.0
    %5597 = vmatprep.subr.mxu0 0.0
    %5598 = vmatpush1.msra.mxu0 0.0
    %5599 = vmatprep.subr.mxu0 0.0
    %5600 = vmatpush1.msra.mxu0 0.0
    %5601 = vmatprep.subr.mxu0 0.0
    %5602 = vmatpush1.msra.mxu0 0.0
    %5603 = vmatprep.subr.mxu0 0.0
    %5604 = vmatpush1.msra.mxu0 0.0
    %5605 = vmatprep.mubr.f32.mxu0 0.0
    %5606 = vmatmul.mubr.f32.gmra.mrb[0].mxu0 %v5527
    %v5607 = vpop.f32.mrb[0].mxu0
    %v5608 = vadd.f32 0.0, %v5607
    %v5609 = vpop.f32.mrb[0].mxu0
    %v5610 = vadd.f32 0.0, %v5609
    %5611 = vdwg.mxu0
    %5612 = vmatprep.subr.mxu0 %v5535
    %5613 = vmatpush1.msra.mxu0 %v5533
    %5614 = vmatprep.subr.mxu0 0.0
    %5615 = vmatpush1.msra.mxu0 0.0
    %5616 = vmatprep.subr.mxu0 0.0
    %5617 = vmatpush1.msra.mxu0 0.0
    %5618 = vmatprep.subr.mxu0 0.0
    %5619 = vmatpush1.msra.mxu0 0.0
    %5620 = vmatprep.subr.mxu0 0.0
    %5621 = vmatpush1.msra.mxu0 0.0
    %5622 = vmatprep.subr.mxu0 0.0
    %5623 = vmatpush1.msra.mxu0 0.0
    %5624 = vmatprep.subr.mxu0 0.0
    %5625 = vmatpush1.msra.mxu0 0.0
    %5626 = vmatprep.subr.mxu0 0.0
    %5627 = vmatpush1.msra.mxu0 0.0
    %5628 = vmatprep.subr.mxu0 0.0
    %5629 = vmatpush1.msra.mxu0 0.0
    %5630 = vmatprep.subr.mxu0 0.0
    %5631 = vmatpush1.msra.mxu0 0.0
    %5632 = vmatprep.subr.mxu0 0.0
    %5633 = vmatpush1.msra.mxu0 0.0
    %5634 = vmatprep.subr.mxu0 0.0
    %5635 = vmatpush1.msra.mxu0 0.0
    %5636 = vmatprep.subr.mxu0 0.0
    %5637 = vmatpush1.msra.mxu0 0.0
    %5638 = vmatprep.subr.mxu0 0.0
    %5639 = vmatpush1.msra.mxu0 0.0
    %5640 = vmatprep.subr.mxu0 0.0
    %5641 = vmatpush1.msra.mxu0 0.0
    %5642 = vmatprep.subr.mxu0 0.0
    %5643 = vmatpush1.msra.mxu0 0.0
    %5644 = vmatprep.subr.mxu0 0.0
    %5645 = vmatpush1.msra.mxu0 0.0
    %5646 = vmatprep.subr.mxu0 0.0
    %5647 = vmatpush1.msra.mxu0 0.0
    %5648 = vmatprep.subr.mxu0 0.0
    %5649 = vmatpush1.msra.mxu0 0.0
    %5650 = vmatprep.subr.mxu0 0.0
    %5651 = vmatpush1.msra.mxu0 0.0
    %5652 = vmatprep.subr.mxu0 0.0
    %5653 = vmatpush1.msra.mxu0 0.0
    %5654 = vmatprep.subr.mxu0 0.0
    %5655 = vmatpush1.msra.mxu0 0.0
    %5656 = vmatprep.subr.mxu0 0.0
    %5657 = vmatpush1.msra.mxu0 0.0
    %5658 = vmatprep.subr.mxu0 0.0
    %5659 = vmatpush1.msra.mxu0 0.0
    %5660 = vmatprep.subr.mxu0 0.0
    %5661 = vmatpush1.msra.mxu0 0.0
    %5662 = vmatprep.subr.mxu0 0.0
    %5663 = vmatpush1.msra.mxu0 0.0
    %5664 = vmatprep.subr.mxu0 0.0
    %5665 = vmatpush1.msra.mxu0 0.0
    %5666 = vmatprep.subr.mxu0 0.0
    %5667 = vmatpush1.msra.mxu0 0.0
    %5668 = vmatprep.subr.mxu0 0.0
    %5669 = vmatpush1.msra.mxu0 0.0
    %5670 = vmatprep.subr.mxu0 0.0
    %5671 = vmatpush1.msra.mxu0 0.0
    %5672 = vmatprep.subr.mxu0 0.0
    %5673 = vmatpush1.msra.mxu0 0.0
    %5674 = vmatprep.subr.mxu0 0.0
    %5675 = vmatpush1.msra.mxu0 0.0
    %5676 = vmatprep.mubr.f32.mxu0 0.0
    %5677 = vmatmul.mubr.f32.gmra.mrb[0].mxu0 %v5527
    %v5678 = vpop.f32.mrb[0].mxu0
    %v5679 = vadd.f32 0.0, %v5678
    %v5680 = vpop.f32.mrb[0].mxu0
    %v5681 = vadd.f32 0.0, %v5680
    %5682 = vdwg.mxu0
    %5683 = vmatprep.subr.mxu0 %v5539
    %5684 = vmatpush1.msra.mxu0 %v5537
    %5685 = vmatprep.subr.mxu0 0.0
    %5686 = vmatpush1.msra.mxu0 0.0
    %5687 = vmatprep.subr.mxu0 0.0
    %5688 = vmatpush1.msra.mxu0 0.0
    %5689 = vmatprep.subr.mxu0 0.0
    %5690 = vmatpush1.msra.mxu0 0.0
    %5691 = vmatprep.subr.mxu0 0.0
    %5692 = vmatpush1.msra.mxu0 0.0
    %5693 = vmatprep.subr.mxu0 0.0
    %5694 = vmatpush1.msra.mxu0 0.0
    %5695 = vmatprep.subr.mxu0 0.0
    %5696 = vmatpush1.msra.mxu0 0.0
    %5697 = vmatprep.subr.mxu0 0.0
    %5698 = vmatpush1.msra.mxu0 0.0
    %5699 = vmatprep.subr.mxu0 0.0
    %5700 = vmatpush1.msra.mxu0 0.0
    %5701 = vmatprep.subr.mxu0 0.0
    %5702 = vmatpush1.msra.mxu0 0.0
    %5703 = vmatprep.subr.mxu0 0.0
    %5704 = vmatpush1.msra.mxu0 0.0
    %5705 = vmatprep.subr.mxu0 0.0
    %5706 = vmatpush1.msra.mxu0 0.0
    %5707 = vmatprep.subr.mxu0 0.0
    %5708 = vmatpush1.msra.mxu0 0.0
    %5709 = vmatprep.subr.mxu0 0.0
    %5710 = vmatpush1.msra.mxu0 0.0
    %5711 = vmatprep.subr.mxu0 0.0
    %5712 = vmatpush1.msra.mxu0 0.0
    %5713 = vmatprep.subr.mxu0 0.0
    %5714 = vmatpush1.msra.mxu0 0.0
    %5715 = vmatprep.subr.mxu0 0.0
    %5716 = vmatpush1.msra.mxu0 0.0
    %5717 = vmatprep.subr.mxu0 0.0
    %5718 = vmatpush1.msra.mxu0 0.0
    %5719 = vmatprep.subr.mxu0 0.0
    %5720 = vmatpush1.msra.mxu0 0.0
    %5721 = vmatprep.subr.mxu0 0.0
    %5722 = vmatpush1.msra.mxu0 0.0
    %5723 = vmatprep.subr.mxu0 0.0
    %5724 = vmatpush1.msra.mxu0 0.0
    %5725 = vmatprep.subr.mxu0 0.0
    %5726 = vmatpush1.msra.mxu0 0.0
    %5727 = vmatprep.subr.mxu0 0.0
    %5728 = vmatpush1.msra.mxu0 0.0
    %5729 = vmatprep.subr.mxu0 0.0
    %5730 = vmatpush1.msra.mxu0 0.0
    %5731 = vmatprep.subr.mxu0 0.0
    %5732 = vmatpush1.msra.mxu0 0.0
    %5733 = vmatprep.subr.mxu0 0.0
    %5734 = vmatpush1.msra.mxu0 0.0
    %5735 = vmatprep.subr.mxu0 0.0
    %5736 = vmatpush1.msra.mxu0 0.0
    %5737 = vmatprep.subr.mxu0 0.0
    %5738 = vmatpush1.msra.mxu0 0.0
    %5739 = vmatprep.subr.mxu0 0.0
    %5740 = vmatpush1.msra.mxu0 0.0
    %5741 = vmatprep.subr.mxu0 0.0
    %5742 = vmatpush1.msra.mxu0 0.0
    %5743 = vmatprep.subr.mxu0 0.0
    %5744 = vmatpush1.msra.mxu0 0.0
    %5745 = vmatprep.subr.mxu0 0.0
    %5746 = vmatpush1.msra.mxu0 0.0
    %5747 = vmatprep.mubr.f32.mxu0 0.0
    %5748 = vmatmul.mubr.f32.gmra.mrb[0].mxu0 %v5527
    %v5749 = vpop.f32.mrb[0].mxu0
    %v5750 = vadd.f32 0.0, %v5749
    %v5751 = vpop.f32.mrb[0].mxu0
    %v5752 = vadd.f32 0.0, %v5751
    %5753 = vdwg.mxu0
    %v5754 = vadd.f32 %v5486, %v5608
    %v5755 = vadd.f32 %v5487, %v5610
    %v5756 = vadd.f32 %v5488, %v5679
    %v5757 = vadd.f32 %v5489, %v5681
    %v5758 = vadd.f32 %v5490, %v5750
    %v5759 = vadd.f32 %v5491, %v5752
    %v5760 = vld [vmem:[#allocation2] sm:$0xff]
    %v5761 = vld [vmem:[#allocation2 + $0x8] sm:$0xff]
    %v5762 = vld [vmem:[#allocation2 + $0x10] sm:$0xff]
    %v5763 = vld [vmem:[#allocation2 + $0x18] sm:$0xf]
    %s5764 = scalar_lea.vmem %s1, 576
    %v5765 = vld [vmem:[%s5764] sm:$0xff]
    %v5770 = vcombine.high %v5760, %v5760
    %v5771 = vcombine.high %v5761, %v5761
    %v5772 = vcombine.high %v5762, %v5762
    %5773 = vrot.lane.b32.xlu0 %v5760, 84
    %v5774 = vpop.permute.xlu0 %5773
    %5775 = vrot.lane.b32.xlu0 %v5770, 84
    %v5776 = vpop.permute.xlu0 %5775
    %5777 = vrot.lane.b32.xlu0 %v5761, 84
    %v5778 = vpop.permute.xlu0 %5777
    %5779 = vrot.lane.b32.xlu0 %v5771, 84
    %v5780 = vpop.permute.xlu0 %5779
    %5781 = vrot.lane.b32.xlu0 %v5762, 84
    %v5782 = vpop.permute.xlu0 %5781
    %5783 = vrot.lane.b32.xlu0 %v5772, 84
    %v5784 = vpop.permute.xlu0 %5783
    %5785 = vrot.lane.b32.xlu0 %v5763, 84
    %v5786 = vpop.permute.xlu0 %5785
    %v5787 = vsel %vm34, %v5774, %v5776
    %v5788 = vsel %vm34, %v5776, %v5778
    %v5789 = vsel %vm34, %v5778, %v5780
    %v5790 = vsel %vm34, %v5780, %v5782
    %v5791 = vsel %vm34, %v5782, %v5784
    %v5792 = vsel %vm34, %v5784, %v5786
    %v5794 = vsel %vm4242, %v5765, 0
    %v5796 = vsel %vm4199, %v5787, 0
    %v5798 = vsel %vm4199, %v5788, 0
    %v5800 = vsel %vm4199, %v5789, 0
    %v5802 = vsel %vm4199, %v5790, 0
    %v5804 = vsel %vm4199, %v5791, 0
    %v5806 = vsel %vm4199, %v5792, 0
    %5808 = vmatprep.subr.mxu0 %v5798
    %5809 = vmatpush1.msra.mxu0 %v5796
    %5810 = vmatprep.subr.mxu0 0.0
    %5811 = vmatpush1.msra.mxu0 0.0
    %5812 = vmatprep.subr.mxu0 0.0
    %5813 = vmatpush1.msra.mxu0 0.0
    %5814 = vmatprep.subr.mxu0 0.0
    %5815 = vmatpush1.msra.mxu0 0.0
    %5816 = vmatprep.subr.mxu0 0.0
    %5817 = vmatpush1.msra.mxu0 0.0
    %5818 = vmatprep.subr.mxu0 0.0
    %5819 = vmatpush1.msra.mxu0 0.0
    %5820 = vmatprep.subr.mxu0 0.0
    %5821 = vmatpush1.msra.mxu0 0.0
    %5822 = vmatprep.subr.mxu0 0.0
    %5823 = vmatpush1.msra.mxu0 0.0
    %5824 = vmatprep.subr.mxu0 0.0
    %5825 = vmatpush1.msra.mxu0 0.0
    %5826 = vmatprep.subr.mxu0 0.0
    %5827 = vmatpush1.msra.mxu0 0.0
    %5828 = vmatprep.subr.mxu0 0.0
    %5829 = vmatpush1.msra.mxu0 0.0
    %5830 = vmatprep.subr.mxu0 0.0
    %5831 = vmatpush1.msra.mxu0 0.0
    %5832 = vmatprep.subr.mxu0 0.0
    %5833 = vmatpush1.msra.mxu0 0.0
    %5834 = vmatprep.subr.mxu0 0.0
    %5835 = vmatpush1.msra.mxu0 0.0
    %5836 = vmatprep.subr.mxu0 0.0
    %5837 = vmatpush1.msra.mxu0 0.0
    %5838 = vmatprep.subr.mxu0 0.0
    %5839 = vmatpush1.msra.mxu0 0.0
    %5840 = vmatprep.subr.mxu0 0.0
    %5841 = vmatpush1.msra.mxu0 0.0
    %5842 = vmatprep.subr.mxu0 0.0
    %5843 = vmatpush1.msra.mxu0 0.0
    %5844 = vmatprep.subr.mxu0 0.0
    %5845 = vmatpush1.msra.mxu0 0.0
    %5846 = vmatprep.subr.mxu0 0.0
    %5847 = vmatpush1.msra.mxu0 0.0
    %5848 = vmatprep.subr.mxu0 0.0
    %5849 = vmatpush1.msra.mxu0 0.0
    %5850 = vmatprep.subr.mxu0 0.0
    %5851 = vmatpush1.msra.mxu0 0.0
    %5852 = vmatprep.subr.mxu0 0.0
    %5853 = vmatpush1.msra.mxu0 0.0
    %5854 = vmatprep.subr.mxu0 0.0
    %5855 = vmatpush1.msra.mxu0 0.0
    %5856 = vmatprep.subr.mxu0 0.0
    %5857 = vmatpush1.msra.mxu0 0.0
    %5858 = vmatprep.subr.mxu0 0.0
    %5859 = vmatpush1.msra.mxu0 0.0
    %5860 = vmatprep.subr.mxu0 0.0
    %5861 = vmatpush1.msra.mxu0 0.0
    %5862 = vmatprep.subr.mxu0 0.0
    %5863 = vmatpush1.msra.mxu0 0.0
    %5864 = vmatprep.subr.mxu0 0.0
    %5865 = vmatpush1.msra.mxu0 0.0
    %5866 = vmatprep.subr.mxu0 0.0
    %5867 = vmatpush1.msra.mxu0 0.0
    %5868 = vmatprep.subr.mxu0 0.0
    %5869 = vmatpush1.msra.mxu0 0.0
    %5870 = vmatprep.subr.mxu0 0.0
    %5871 = vmatpush1.msra.mxu0 0.0
    %5872 = vmatprep.mubr.f32.mxu0 0.0
    %5873 = vmatmul.mubr.f32.gmra.mrb[0].mxu0 %v5794
    %v5874 = vpop.f32.mrb[0].mxu0
    %v5875 = vadd.f32 0.0, %v5874
    %v5876 = vpop.f32.mrb[0].mxu0
    %v5877 = vadd.f32 0.0, %v5876
    %5878 = vdwg.mxu0
    %5879 = vmatprep.subr.mxu0 %v5802
    %5880 = vmatpush1.msra.mxu0 %v5800
    %5881 = vmatprep.subr.mxu0 0.0
    %5882 = vmatpush1.msra.mxu0 0.0
    %5883 = vmatprep.subr.mxu0 0.0
    %5884 = vmatpush1.msra.mxu0 0.0
    %5885 = vmatprep.subr.mxu0 0.0
    %5886 = vmatpush1.msra.mxu0 0.0
    %5887 = vmatprep.subr.mxu0 0.0
    %5888 = vmatpush1.msra.mxu0 0.0
    %5889 = vmatprep.subr.mxu0 0.0
    %5890 = vmatpush1.msra.mxu0 0.0
    %5891 = vmatprep.subr.mxu0 0.0
    %5892 = vmatpush1.msra.mxu0 0.0
    %5893 = vmatprep.subr.mxu0 0.0
    %5894 = vmatpush1.msra.mxu0 0.0
    %5895 = vmatprep.subr.mxu0 0.0
    %5896 = vmatpush1.msra.mxu0 0.0
    %5897 = vmatprep.subr.mxu0 0.0
    %5898 = vmatpush1.msra.mxu0 0.0
    %5899 = vmatprep.subr.mxu0 0.0
    %5900 = vmatpush1.msra.mxu0 0.0
    %5901 = vmatprep.subr.mxu0 0.0
    %5902 = vmatpush1.msra.mxu0 0.0
    %5903 = vmatprep.subr.mxu0 0.0
    %5904 = vmatpush1.msra.mxu0 0.0
    %5905 = vmatprep.subr.mxu0 0.0
    %5906 = vmatpush1.msra.mxu0 0.0
    %5907 = vmatprep.subr.mxu0 0.0
    %5908 = vmatpush1.msra.mxu0 0.0
    %5909 = vmatprep.subr.mxu0 0.0
    %5910 = vmatpush1.msra.mxu0 0.0
    %5911 = vmatprep.subr.mxu0 0.0
    %5912 = vmatpush1.msra.mxu0 0.0
    %5913 = vmatprep.subr.mxu0 0.0
    %5914 = vmatpush1.msra.mxu0 0.0
    %5915 = vmatprep.subr.mxu0 0.0
    %5916 = vmatpush1.msra.mxu0 0.0
    %5917 = vmatprep.subr.mxu0 0.0
    %5918 = vmatpush1.msra.mxu0 0.0
    %5919 = vmatprep.subr.mxu0 0.0
    %5920 = vmatpush1.msra.mxu0 0.0
    %5921 = vmatprep.subr.mxu0 0.0
    %5922 = vmatpush1.msra.mxu0 0.0
    %5923 = vmatprep.subr.mxu0 0.0
    %5924 = vmatpush1.msra.mxu0 0.0
    %5925 = vmatprep.subr.mxu0 0.0
    %5926 = vmatpush1.msra.mxu0 0.0
    %5927 = vmatprep.subr.mxu0 0.0
    %5928 = vmatpush1.msra.mxu0 0.0
    %5929 = vmatprep.subr.mxu0 0.0
    %5930 = vmatpush1.msra.mxu0 0.0
    %5931 = vmatprep.subr.mxu0 0.0
    %5932 = vmatpush1.msra.mxu0 0.0
    %5933 = vmatprep.subr.mxu0 0.0
    %5934 = vmatpush1.msra.mxu0 0.0
    %5935 = vmatprep.subr.mxu0 0.0
    %5936 = vmatpush1.msra.mxu0 0.0
    %5937 = vmatprep.subr.mxu0 0.0
    %5938 = vmatpush1.msra.mxu0 0.0
    %5939 = vmatprep.subr.mxu0 0.0
    %5940 = vmatpush1.msra.mxu0 0.0
    %5941 = vmatprep.subr.mxu0 0.0
    %5942 = vmatpush1.msra.mxu0 0.0
    %5943 = vmatprep.mubr.f32.mxu0 0.0
    %5944 = vmatmul.mubr.f32.gmra.mrb[0].mxu0 %v5794
    %v5945 = vpop.f32.mrb[0].mxu0
    %v5946 = vadd.f32 0.0, %v5945
    %v5947 = vpop.f32.mrb[0].mxu0
    %v5948 = vadd.f32 0.0, %v5947
    %5949 = vdwg.mxu0
    %5950 = vmatprep.subr.mxu0 %v5806
    %5951 = vmatpush1.msra.mxu0 %v5804
    %5952 = vmatprep.subr.mxu0 0.0
    %5953 = vmatpush1.msra.mxu0 0.0
    %5954 = vmatprep.subr.mxu0 0.0
    %5955 = vmatpush1.msra.mxu0 0.0
    %5956 = vmatprep.subr.mxu0 0.0
    %5957 = vmatpush1.msra.mxu0 0.0
    %5958 = vmatprep.subr.mxu0 0.0
    %5959 = vmatpush1.msra.mxu0 0.0
    %5960 = vmatprep.subr.mxu0 0.0
    %5961 = vmatpush1.msra.mxu0 0.0
    %5962 = vmatprep.subr.mxu0 0.0
    %5963 = vmatpush1.msra.mxu0 0.0
    %5964 = vmatprep.subr.mxu0 0.0
    %5965 = vmatpush1.msra.mxu0 0.0
    %5966 = vmatprep.subr.mxu0 0.0
    %5967 = vmatpush1.msra.mxu0 0.0
    %5968 = vmatprep.subr.mxu0 0.0
    %5969 = vmatpush1.msra.mxu0 0.0
    %5970 = vmatprep.subr.mxu0 0.0
    %5971 = vmatpush1.msra.mxu0 0.0
    %5972 = vmatprep.subr.mxu0 0.0
    %5973 = vmatpush1.msra.mxu0 0.0
    %5974 = vmatprep.subr.mxu0 0.0
    %5975 = vmatpush1.msra.mxu0 0.0
    %5976 = vmatprep.subr.mxu0 0.0
    %5977 = vmatpush1.msra.mxu0 0.0
    %5978 = vmatprep.subr.mxu0 0.0
    %5979 = vmatpush1.msra.mxu0 0.0
    %5980 = vmatprep.subr.mxu0 0.0
    %5981 = vmatpush1.msra.mxu0 0.0
    %5982 = vmatprep.subr.mxu0 0.0
    %5983 = vmatpush1.msra.mxu0 0.0
    %5984 = vmatprep.subr.mxu0 0.0
    %5985 = vmatpush1.msra.mxu0 0.0
    %5986 = vmatprep.subr.mxu0 0.0
    %5987 = vmatpush1.msra.mxu0 0.0
    %5988 = vmatprep.subr.mxu0 0.0
    %5989 = vmatpush1.msra.mxu0 0.0
    %5990 = vmatprep.subr.mxu0 0.0
    %5991 = vmatpush1.msra.mxu0 0.0
    %5992 = vmatprep.subr.mxu0 0.0
    %5993 = vmatpush1.msra.mxu0 0.0
    %5994 = vmatprep.subr.mxu0 0.0
    %5995 = vmatpush1.msra.mxu0 0.0
    %5996 = vmatprep.subr.mxu0 0.0
    %5997 = vmatpush1.msra.mxu0 0.0
    %5998 = vmatprep.subr.mxu0 0.0
    %5999 = vmatpush1.msra.mxu0 0.0
    %6000 = vmatprep.subr.mxu0 0.0
    %6001 = vmatpush1.msra.mxu0 0.0
    %6002 = vmatprep.subr.mxu0 0.0
    %6003 = vmatpush1.msra.mxu0 0.0
    %6004 = vmatprep.subr.mxu0 0.0
    %6005 = vmatpush1.msra.mxu0 0.0
    %6006 = vmatprep.subr.mxu0 0.0
    %6007 = vmatpush1.msra.mxu0 0.0
    %6008 = vmatprep.subr.mxu0 0.0
    %6009 = vmatpush1.msra.mxu0 0.0
    %6010 = vmatprep.subr.mxu0 0.0
    %6011 = vmatpush1.msra.mxu0 0.0
    %6012 = vmatprep.subr.mxu0 0.0
    %6013 = vmatpush1.msra.mxu0 0.0
    %6014 = vmatprep.mubr.f32.mxu0 0.0
    %6015 = vmatmul.mubr.f32.gmra.mrb[0].mxu0 %v5794
    %v6016 = vpop.f32.mrb[0].mxu0
    %v6017 = vadd.f32 0.0, %v6016
    %v6018 = vpop.f32.mrb[0].mxu0
    %v6019 = vadd.f32 0.0, %v6018
    %6020 = vdwg.mxu0
    %v6021 = vadd.f32 %v5754, %v5875
    %v6022 = vadd.f32 %v5755, %v5877
    %v6023 = vadd.f32 %v5756, %v5946
    %v6024 = vadd.f32 %v5757, %v5948
    %v6025 = vadd.f32 %v5758, %v6017
    %v6026 = vadd.f32 %v5759, %v6019
    %v6027 = vld [vmem:[#allocation2] sm:$0xff]
    %v6028 = vld [vmem:[#allocation2 + $0x8] sm:$0xff]
    %v6029 = vld [vmem:[#allocation2 + $0x10] sm:$0xff]
    %v6030 = vld [vmem:[#allocation2 + $0x18] sm:$0xf]
    %s6031 = scalar_lea.vmem %s1, 608
    %v6032 = vld [vmem:[%s6031] sm:$0xff]
    %v6037 = vcombine.high %v6027, %v6027
    %v6038 = vcombine.high %v6028, %v6028
    %v6039 = vcombine.high %v6029, %v6029
    %6040 = vrot.lane.b32.xlu0 %v6027, 83
    %v6041 = vpop.permute.xlu0 %6040
    %6042 = vrot.lane.b32.xlu0 %v6037, 83
    %v6043 = vpop.permute.xlu0 %6042
    %6044 = vrot.lane.b32.xlu0 %v6028, 83
    %v6045 = vpop.permute.xlu0 %6044
    %6046 = vrot.lane.b32.xlu0 %v6038, 83
    %v6047 = vpop.permute.xlu0 %6046
    %6048 = vrot.lane.b32.xlu0 %v6029, 83
    %v6049 = vpop.permute.xlu0 %6048
    %6050 = vrot.lane.b32.xlu0 %v6039, 83
    %v6051 = vpop.permute.xlu0 %6050
    %6052 = vrot.lane.b32.xlu0 %v6030, 83
    %v6053 = vpop.permute.xlu0 %6052
    %vm6054 = vcmask 678912
    %v6055 = vsel %vm6054, %v6041, %v6043
    %v6056 = vsel %vm6054, %v6043, %v6045
    %v6057 = vsel %vm6054, %v6045, %v6047
    %v6058 = vsel %vm6054, %v6047, %v6049
    %v6059 = vsel %vm6054, %v6049, %v6051
    %v6060 = vsel %vm6054, %v6051, %v6053
    %v6062 = vsel %vm4242, %v6032, 0
    %v6064 = vsel %vm4199, %v6055, 0
    %v6066 = vsel %vm4199, %v6056, 0
    %v6068 = vsel %vm4199, %v6057, 0
    %v6070 = vsel %vm4199, %v6058, 0
    %v6072 = vsel %vm4199, %v6059, 0
    %v6074 = vsel %vm4199, %v6060, 0
    %6076 = vmatprep.subr.mxu0 %v6066
    %6077 = vmatpush1.msra.mxu0 %v6064
    %6078 = vmatprep.subr.mxu0 0.0
    %6079 = vmatpush1.msra.mxu0 0.0
    %6080 = vmatprep.subr.mxu0 0.0
    %6081 = vmatpush1.msra.mxu0 0.0
    %6082 = vmatprep.subr.mxu0 0.0
    %6083 = vmatpush1.msra.mxu0 0.0
    %6084 = vmatprep.subr.mxu0 0.0
    %6085 = vmatpush1.msra.mxu0 0.0
    %6086 = vmatprep.subr.mxu0 0.0
    %6087 = vmatpush1.msra.mxu0 0.0
    %6088 = vmatprep.subr.mxu0 0.0
    %6089 = vmatpush1.msra.mxu0 0.0
    %6090 = vmatprep.subr.mxu0 0.0
    %6091 = vmatpush1.msra.mxu0 0.0
    %6092 = vmatprep.subr.mxu0 0.0
    %6093 = vmatpush1.msra.mxu0 0.0
    %6094 = vmatprep.subr.mxu0 0.0
    %6095 = vmatpush1.msra.mxu0 0.0
    %6096 = vmatprep.subr.mxu0 0.0
    %6097 = vmatpush1.msra.mxu0 0.0
    %6098 = vmatprep.subr.mxu0 0.0
    %6099 = vmatpush1.msra.mxu0 0.0
    %6100 = vmatprep.subr.mxu0 0.0
    %6101 = vmatpush1.msra.mxu0 0.0
    %6102 = vmatprep.subr.mxu0 0.0
    %6103 = vmatpush1.msra.mxu0 0.0
    %6104 = vmatprep.subr.mxu0 0.0
    %6105 = vmatpush1.msra.mxu0 0.0
    %6106 = vmatprep.subr.mxu0 0.0
    %6107 = vmatpush1.msra.mxu0 0.0
    %6108 = vmatprep.subr.mxu0 0.0
    %6109 = vmatpush1.msra.mxu0 0.0
    %6110 = vmatprep.subr.mxu0 0.0
    %6111 = vmatpush1.msra.mxu0 0.0
    %6112 = vmatprep.subr.mxu0 0.0
    %6113 = vmatpush1.msra.mxu0 0.0
    %6114 = vmatprep.subr.mxu0 0.0
    %6115 = vmatpush1.msra.mxu0 0.0
    %6116 = vmatprep.subr.mxu0 0.0
    %6117 = vmatpush1.msra.mxu0 0.0
    %6118 = vmatprep.subr.mxu0 0.0
    %6119 = vmatpush1.msra.mxu0 0.0
    %6120 = vmatprep.subr.mxu0 0.0
    %6121 = vmatpush1.msra.mxu0 0.0
    %6122 = vmatprep.subr.mxu0 0.0
    %6123 = vmatpush1.msra.mxu0 0.0
    %6124 = vmatprep.subr.mxu0 0.0
    %6125 = vmatpush1.msra.mxu0 0.0
    %6126 = vmatprep.subr.mxu0 0.0
    %6127 = vmatpush1.msra.mxu0 0.0
    %6128 = vmatprep.subr.mxu0 0.0
    %6129 = vmatpush1.msra.mxu0 0.0
    %6130 = vmatprep.subr.mxu0 0.0
    %6131 = vmatpush1.msra.mxu0 0.0
    %6132 = vmatprep.subr.mxu0 0.0
    %6133 = vmatpush1.msra.mxu0 0.0
    %6134 = vmatprep.subr.mxu0 0.0
    %6135 = vmatpush1.msra.mxu0 0.0
    %6136 = vmatprep.subr.mxu0 0.0
    %6137 = vmatpush1.msra.mxu0 0.0
    %6138 = vmatprep.subr.mxu0 0.0
    %6139 = vmatpush1.msra.mxu0 0.0
    %6140 = vmatprep.mubr.f32.mxu0 0.0
    %6141 = vmatmul.mubr.f32.gmra.mrb[0].mxu0 %v6062
    %v6142 = vpop.f32.mrb[0].mxu0
    %v6143 = vadd.f32 0.0, %v6142
    %v6144 = vpop.f32.mrb[0].mxu0
    %v6145 = vadd.f32 0.0, %v6144
    %6146 = vdwg.mxu0
    %6147 = vmatprep.subr.mxu0 %v6070
    %6148 = vmatpush1.msra.mxu0 %v6068
    %6149 = vmatprep.subr.mxu0 0.0
    %6150 = vmatpush1.msra.mxu0 0.0
    %6151 = vmatprep.subr.mxu0 0.0
    %6152 = vmatpush1.msra.mxu0 0.0
    %6153 = vmatprep.subr.mxu0 0.0
    %6154 = vmatpush1.msra.mxu0 0.0
    %6155 = vmatprep.subr.mxu0 0.0
    %6156 = vmatpush1.msra.mxu0 0.0
    %6157 = vmatprep.subr.mxu0 0.0
    %6158 = vmatpush1.msra.mxu0 0.0
    %6159 = vmatprep.subr.mxu0 0.0
    %6160 = vmatpush1.msra.mxu0 0.0
    %6161 = vmatprep.subr.mxu0 0.0
    %6162 = vmatpush1.msra.mxu0 0.0
    %6163 = vmatprep.subr.mxu0 0.0
    %6164 = vmatpush1.msra.mxu0 0.0
    %6165 = vmatprep.subr.mxu0 0.0
    %6166 = vmatpush1.msra.mxu0 0.0
    %6167 = vmatprep.subr.mxu0 0.0
    %6168 = vmatpush1.msra.mxu0 0.0
    %6169 = vmatprep.subr.mxu0 0.0
    %6170 = vmatpush1.msra.mxu0 0.0
    %6171 = vmatprep.subr.mxu0 0.0
    %6172 = vmatpush1.msra.mxu0 0.0
    %6173 = vmatprep.subr.mxu0 0.0
    %6174 = vmatpush1.msra.mxu0 0.0
    %6175 = vmatprep.subr.mxu0 0.0
    %6176 = vmatpush1.msra.mxu0 0.0
    %6177 = vmatprep.subr.mxu0 0.0
    %6178 = vmatpush1.msra.mxu0 0.0
    %6179 = vmatprep.subr.mxu0 0.0
    %6180 = vmatpush1.msra.mxu0 0.0
    %6181 = vmatprep.subr.mxu0 0.0
    %6182 = vmatpush1.msra.mxu0 0.0
    %6183 = vmatprep.subr.mxu0 0.0
    %6184 = vmatpush1.msra.mxu0 0.0
    %6185 = vmatprep.subr.mxu0 0.0
    %6186 = vmatpush1.msra.mxu0 0.0
    %6187 = vmatprep.subr.mxu0 0.0
    %6188 = vmatpush1.msra.mxu0 0.0
    %6189 = vmatprep.subr.mxu0 0.0
    %6190 = vmatpush1.msra.mxu0 0.0
    %6191 = vmatprep.subr.mxu0 0.0
    %6192 = vmatpush1.msra.mxu0 0.0
    %6193 = vmatprep.subr.mxu0 0.0
    %6194 = vmatpush1.msra.mxu0 0.0
    %6195 = vmatprep.subr.mxu0 0.0
    %6196 = vmatpush1.msra.mxu0 0.0
    %6197 = vmatprep.subr.mxu0 0.0
    %6198 = vmatpush1.msra.mxu0 0.0
    %6199 = vmatprep.subr.mxu0 0.0
    %6200 = vmatpush1.msra.mxu0 0.0
    %6201 = vmatprep.subr.mxu0 0.0
    %6202 = vmatpush1.msra.mxu0 0.0
    %6203 = vmatprep.subr.mxu0 0.0
    %6204 = vmatpush1.msra.mxu0 0.0
    %6205 = vmatprep.subr.mxu0 0.0
    %6206 = vmatpush1.msra.mxu0 0.0
    %6207 = vmatprep.subr.mxu0 0.0
    %6208 = vmatpush1.msra.mxu0 0.0
    %6209 = vmatprep.subr.mxu0 0.0
    %6210 = vmatpush1.msra.mxu0 0.0
    %6211 = vmatprep.mubr.f32.mxu0 0.0
    %6212 = vmatmul.mubr.f32.gmra.mrb[0].mxu0 %v6062
    %v6213 = vpop.f32.mrb[0].mxu0
    %v6214 = vadd.f32 0.0, %v6213
    %v6215 = vpop.f32.mrb[0].mxu0
    %v6216 = vadd.f32 0.0, %v6215
    %6217 = vdwg.mxu0
    %6218 = vmatprep.subr.mxu0 %v6074
    %6219 = vmatpush1.msra.mxu0 %v6072
    %6220 = vmatprep.subr.mxu0 0.0
    %6221 = vmatpush1.msra.mxu0 0.0
    %6222 = vmatprep.subr.mxu0 0.0
    %6223 = vmatpush1.msra.mxu0 0.0
    %6224 = vmatprep.subr.mxu0 0.0
    %6225 = vmatpush1.msra.mxu0 0.0
    %6226 = vmatprep.subr.mxu0 0.0
    %6227 = vmatpush1.msra.mxu0 0.0
    %6228 = vmatprep.subr.mxu0 0.0
    %6229 = vmatpush1.msra.mxu0 0.0
    %6230 = vmatprep.subr.mxu0 0.0
    %6231 = vmatpush1.msra.mxu0 0.0
    %6232 = vmatprep.subr.mxu0 0.0
    %6233 = vmatpush1.msra.mxu0 0.0
    %6234 = vmatprep.subr.mxu0 0.0
    %6235 = vmatpush1.msra.mxu0 0.0
    %6236 = vmatprep.subr.mxu0 0.0
    %6237 = vmatpush1.msra.mxu0 0.0
    %6238 = vmatprep.subr.mxu0 0.0
    %6239 = vmatpush1.msra.mxu0 0.0
    %6240 = vmatprep.subr.mxu0 0.0
    %6241 = vmatpush1.msra.mxu0 0.0
    %6242 = vmatprep.subr.mxu0 0.0
    %6243 = vmatpush1.msra.mxu0 0.0
    %6244 = vmatprep.subr.mxu0 0.0
    %6245 = vmatpush1.msra.mxu0 0.0
    %6246 = vmatprep.subr.mxu0 0.0
    %6247 = vmatpush1.msra.mxu0 0.0
    %6248 = vmatprep.subr.mxu0 0.0
    %6249 = vmatpush1.msra.mxu0 0.0
    %6250 = vmatprep.subr.mxu0 0.0
    %6251 = vmatpush1.msra.mxu0 0.0
    %6252 = vmatprep.subr.mxu0 0.0
    %6253 = vmatpush1.msra.mxu0 0.0
    %6254 = vmatprep.subr.mxu0 0.0
    %6255 = vmatpush1.msra.mxu0 0.0
    %6256 = vmatprep.subr.mxu0 0.0
    %6257 = vmatpush1.msra.mxu0 0.0
    %6258 = vmatprep.subr.mxu0 0.0
    %6259 = vmatpush1.msra.mxu0 0.0
    %6260 = vmatprep.subr.mxu0 0.0
    %6261 = vmatpush1.msra.mxu0 0.0
    %6262 = vmatprep.subr.mxu0 0.0
    %6263 = vmatpush1.msra.mxu0 0.0
    %6264 = vmatprep.subr.mxu0 0.0
    %6265 = vmatpush1.msra.mxu0 0.0
    %6266 = vmatprep.subr.mxu0 0.0
    %6267 = vmatpush1.msra.mxu0 0.0
    %6268 = vmatprep.subr.mxu0 0.0
    %6269 = vmatpush1.msra.mxu0 0.0
    %6270 = vmatprep.subr.mxu0 0.0
    %6271 = vmatpush1.msra.mxu0 0.0
    %6272 = vmatprep.subr.mxu0 0.0
    %6273 = vmatpush1.msra.mxu0 0.0
    %6274 = vmatprep.subr.mxu0 0.0
    %6275 = vmatpush1.msra.mxu0 0.0
    %6276 = vmatprep.subr.mxu0 0.0
    %6277 = vmatpush1.msra.mxu0 0.0
    %6278 = vmatprep.subr.mxu0 0.0
    %6279 = vmatpush1.msra.mxu0 0.0
    %6280 = vmatprep.subr.mxu0 0.0
    %6281 = vmatpush1.msra.mxu0 0.0
    %6282 = vmatprep.mubr.f32.mxu0 0.0
    %6283 = vmatmul.mubr.f32.gmra.mrb[0].mxu0 %v6062
    %v6284 = vpop.f32.mrb[0].mxu0
    %v6285 = vadd.f32 0.0, %v6284
    %v6286 = vpop.f32.mrb[0].mxu0
    %v6287 = vadd.f32 0.0, %v6286
    %6288 = vdwg.mxu0
    %v6289 = vadd.f32 %v6021, %v6143
    %v6290 = vadd.f32 %v6022, %v6145
    %v6291 = vadd.f32 %v6023, %v6214
    %v6292 = vadd.f32 %v6024, %v6216
    %v6293 = vadd.f32 %v6025, %v6285
    %v6294 = vadd.f32 %v6026, %v6287
    %v6295 = vld [vmem:[#allocation2] sm:$0xff]
    %v6296 = vld [vmem:[#allocation2 + $0x8] sm:$0xff]
    %v6297 = vld [vmem:[#allocation2 + $0x10] sm:$0xff]
    %v6298 = vld [vmem:[#allocation2 + $0x18] sm:$0xf]
    %s6299 = scalar_lea.vmem %s1, 640
    %v6300 = vld [vmem:[%s6299] sm:$0xff]
    %v6305 = vcombine.high %v6295, %v6295
    %v6306 = vcombine.high %v6296, %v6296
    %v6307 = vcombine.high %v6297, %v6297
    %6308 = vrot.lane.b32.xlu0 %v6295, 82
    %v6309 = vpop.permute.xlu0 %6308
    %6310 = vrot.lane.b32.xlu0 %v6305, 82
    %v6311 = vpop.permute.xlu0 %6310
    %6312 = vrot.lane.b32.xlu0 %v6296, 82
    %v6313 = vpop.permute.xlu0 %6312
    %6314 = vrot.lane.b32.xlu0 %v6306, 82
    %v6315 = vpop.permute.xlu0 %6314
    %6316 = vrot.lane.b32.xlu0 %v6297, 82
    %v6317 = vpop.permute.xlu0 %6316
    %6318 = vrot.lane.b32.xlu0 %v6307, 82
    %v6319 = vpop.permute.xlu0 %6318
    %6320 = vrot.lane.b32.xlu0 %v6298, 82
    %v6321 = vpop.permute.xlu0 %6320
    %vm6322 = vcmask 670720
    %v6323 = vsel %vm6322, %v6309, %v6311
    %v6324 = vsel %vm6322, %v6311, %v6313
    %v6325 = vsel %vm6322, %v6313, %v6315
    %v6326 = vsel %vm6322, %v6315, %v6317
    %v6327 = vsel %vm6322, %v6317, %v6319
    %v6328 = vsel %vm6322, %v6319, %v6321
    %v6330 = vsel %vm4242, %v6300, 0
    %v6332 = vsel %vm4199, %v6323, 0
    %v6334 = vsel %vm4199, %v6324, 0
    %v6336 = vsel %vm4199, %v6325, 0
    %v6338 = vsel %vm4199, %v6326, 0
    %v6340 = vsel %vm4199, %v6327, 0
    %v6342 = vsel %vm4199, %v6328, 0
    %6344 = vmatprep.subr.mxu0 %v6334
    %6345 = vmatpush1.msra.mxu0 %v6332
    %6346 = vmatprep.subr.mxu0 0.0
    %6347 = vmatpush1.msra.mxu0 0.0
    %6348 = vmatprep.subr.mxu0 0.0
    %6349 = vmatpush1.msra.mxu0 0.0
    %6350 = vmatprep.subr.mxu0 0.0
    %6351 = vmatpush1.msra.mxu0 0.0
    %6352 = vmatprep.subr.mxu0 0.0
    %6353 = vmatpush1.msra.mxu0 0.0
    %6354 = vmatprep.subr.mxu0 0.0
    %6355 = vmatpush1.msra.mxu0 0.0
    %6356 = vmatprep.subr.mxu0 0.0
    %6357 = vmatpush1.msra.mxu0 0.0
    %6358 = vmatprep.subr.mxu0 0.0
    %6359 = vmatpush1.msra.mxu0 0.0
    %6360 = vmatprep.subr.mxu0 0.0
    %6361 = vmatpush1.msra.mxu0 0.0
    %6362 = vmatprep.subr.mxu0 0.0
    %6363 = vmatpush1.msra.mxu0 0.0
    %6364 = vmatprep.subr.mxu0 0.0
    %6365 = vmatpush1.msra.mxu0 0.0
    %6366 = vmatprep.subr.mxu0 0.0
    %6367 = vmatpush1.msra.mxu0 0.0
    %6368 = vmatprep.subr.mxu0 0.0
    %6369 = vmatpush1.msra.mxu0 0.0
    %6370 = vmatprep.subr.mxu0 0.0
    %6371 = vmatpush1.msra.mxu0 0.0
    %6372 = vmatprep.subr.mxu0 0.0
    %6373 = vmatpush1.msra.mxu0 0.0
    %6374 = vmatprep.subr.mxu0 0.0
    %6375 = vmatpush1.msra.mxu0 0.0
    %6376 = vmatprep.subr.mxu0 0.0
    %6377 = vmatpush1.msra.mxu0 0.0
    %6378 = vmatprep.subr.mxu0 0.0
    %6379 = vmatpush1.msra.mxu0 0.0
    %6380 = vmatprep.subr.mxu0 0.0
    %6381 = vmatpush1.msra.mxu0 0.0
    %6382 = vmatprep.subr.mxu0 0.0
    %6383 = vmatpush1.msra.mxu0 0.0
    %6384 = vmatprep.subr.mxu0 0.0
    %6385 = vmatpush1.msra.mxu0 0.0
    %6386 = vmatprep.subr.mxu0 0.0
    %6387 = vmatpush1.msra.mxu0 0.0
    %6388 = vmatprep.subr.mxu0 0.0
    %6389 = vmatpush1.msra.mxu0 0.0
    %6390 = vmatprep.subr.mxu0 0.0
    %6391 = vmatpush1.msra.mxu0 0.0
    %6392 = vmatprep.subr.mxu0 0.0
    %6393 = vmatpush1.msra.mxu0 0.0
    %6394 = vmatprep.subr.mxu0 0.0
    %6395 = vmatpush1.msra.mxu0 0.0
    %6396 = vmatprep.subr.mxu0 0.0
    %6397 = vmatpush1.msra.mxu0 0.0
    %6398 = vmatprep.subr.mxu0 0.0
    %6399 = vmatpush1.msra.mxu0 0.0
    %6400 = vmatprep.subr.mxu0 0.0
    %6401 = vmatpush1.msra.mxu0 0.0
    %6402 = vmatprep.subr.mxu0 0.0
    %6403 = vmatpush1.msra.mxu0 0.0
    %6404 = vmatprep.subr.mxu0 0.0
    %6405 = vmatpush1.msra.mxu0 0.0
    %6406 = vmatprep.subr.mxu0 0.0
    %6407 = vmatpush1.msra.mxu0 0.0
    %6408 = vmatprep.mubr.f32.mxu0 0.0
    %6409 = vmatmul.mubr.f32.gmra.mrb[0].mxu0 %v6330
    %v6410 = vpop.f32.mrb[0].mxu0
    %v6411 = vadd.f32 0.0, %v6410
    %v6412 = vpop.f32.mrb[0].mxu0
    %v6413 = vadd.f32 0.0, %v6412
    %6414 = vdwg.mxu0
    %6415 = vmatprep.subr.mxu0 %v6338
    %6416 = vmatpush1.msra.mxu0 %v6336
    %6417 = vmatprep.subr.mxu0 0.0
    %6418 = vmatpush1.msra.mxu0 0.0
    %6419 = vmatprep.subr.mxu0 0.0
    %6420 = vmatpush1.msra.mxu0 0.0
    %6421 = vmatprep.subr.mxu0 0.0
    %6422 = vmatpush1.msra.mxu0 0.0
    %6423 = vmatprep.subr.mxu0 0.0
    %6424 = vmatpush1.msra.mxu0 0.0
    %6425 = vmatprep.subr.mxu0 0.0
    %6426 = vmatpush1.msra.mxu0 0.0
    %6427 = vmatprep.subr.mxu0 0.0
    %6428 = vmatpush1.msra.mxu0 0.0
    %6429 = vmatprep.subr.mxu0 0.0
    %6430 = vmatpush1.msra.mxu0 0.0
    %6431 = vmatprep.subr.mxu0 0.0
    %6432 = vmatpush1.msra.mxu0 0.0
    %6433 = vmatprep.subr.mxu0 0.0
    %6434 = vmatpush1.msra.mxu0 0.0
    %6435 = vmatprep.subr.mxu0 0.0
    %6436 = vmatpush1.msra.mxu0 0.0
    %6437 = vmatprep.subr.mxu0 0.0
    %6438 = vmatpush1.msra.mxu0 0.0
    %6439 = vmatprep.subr.mxu0 0.0
    %6440 = vmatpush1.msra.mxu0 0.0
    %6441 = vmatprep.subr.mxu0 0.0
    %6442 = vmatpush1.msra.mxu0 0.0
    %6443 = vmatprep.subr.mxu0 0.0
    %6444 = vmatpush1.msra.mxu0 0.0
    %6445 = vmatprep.subr.mxu0 0.0
    %6446 = vmatpush1.msra.mxu0 0.0
    %6447 = vmatprep.subr.mxu0 0.0
    %6448 = vmatpush1.msra.mxu0 0.0
    %6449 = vmatprep.subr.mxu0 0.0
    %6450 = vmatpush1.msra.mxu0 0.0
    %6451 = vmatprep.subr.mxu0 0.0
    %6452 = vmatpush1.msra.mxu0 0.0
    %6453 = vmatprep.subr.mxu0 0.0
    %6454 = vmatpush1.msra.mxu0 0.0
    %6455 = vmatprep.subr.mxu0 0.0
    %6456 = vmatpush1.msra.mxu0 0.0
    %6457 = vmatprep.subr.mxu0 0.0
    %6458 = vmatpush1.msra.mxu0 0.0
    %6459 = vmatprep.subr.mxu0 0.0
    %6460 = vmatpush1.msra.mxu0 0.0
    %6461 = vmatprep.subr.mxu0 0.0
    %6462 = vmatpush1.msra.mxu0 0.0
    %6463 = vmatprep.subr.mxu0 0.0
    %6464 = vmatpush1.msra.mxu0 0.0
    %6465 = vmatprep.subr.mxu0 0.0
    %6466 = vmatpush1.msra.mxu0 0.0
    %6467 = vmatprep.subr.mxu0 0.0
    %6468 = vmatpush1.msra.mxu0 0.0
    %6469 = vmatprep.subr.mxu0 0.0
    %6470 = vmatpush1.msra.mxu0 0.0
    %6471 = vmatprep.subr.mxu0 0.0
    %6472 = vmatpush1.msra.mxu0 0.0
    %6473 = vmatprep.subr.mxu0 0.0
    %6474 = vmatpush1.msra.mxu0 0.0
    %6475 = vmatprep.subr.mxu0 0.0
    %6476 = vmatpush1.msra.mxu0 0.0
    %6477 = vmatprep.subr.mxu0 0.0
    %6478 = vmatpush1.msra.mxu0 0.0
    %6479 = vmatprep.mubr.f32.mxu0 0.0
    %6480 = vmatmul.mubr.f32.gmra.mrb[0].mxu0 %v6330
    %v6481 = vpop.f32.mrb[0].mxu0
    %v6482 = vadd.f32 0.0, %v6481
    %v6483 = vpop.f32.mrb[0].mxu0
    %v6484 = vadd.f32 0.0, %v6483
    %6485 = vdwg.mxu0
    %6486 = vmatprep.subr.mxu0 %v6342
    %6487 = vmatpush1.msra.mxu0 %v6340
    %6488 = vmatprep.subr.mxu0 0.0
    %6489 = vmatpush1.msra.mxu0 0.0
    %6490 = vmatprep.subr.mxu0 0.0
    %6491 = vmatpush1.msra.mxu0 0.0
    %6492 = vmatprep.subr.mxu0 0.0
    %6493 = vmatpush1.msra.mxu0 0.0
    %6494 = vmatprep.subr.mxu0 0.0
    %6495 = vmatpush1.msra.mxu0 0.0
    %6496 = vmatprep.subr.mxu0 0.0
    %6497 = vmatpush1.msra.mxu0 0.0
    %6498 = vmatprep.subr.mxu0 0.0
    %6499 = vmatpush1.msra.mxu0 0.0
    %6500 = vmatprep.subr.mxu0 0.0
    %6501 = vmatpush1.msra.mxu0 0.0
    %6502 = vmatprep.subr.mxu0 0.0
    %6503 = vmatpush1.msra.mxu0 0.0
    %6504 = vmatprep.subr.mxu0 0.0
    %6505 = vmatpush1.msra.mxu0 0.0
    %6506 = vmatprep.subr.mxu0 0.0
    %6507 = vmatpush1.msra.mxu0 0.0
    %6508 = vmatprep.subr.mxu0 0.0
    %6509 = vmatpush1.msra.mxu0 0.0
    %6510 = vmatprep.subr.mxu0 0.0
    %6511 = vmatpush1.msra.mxu0 0.0
    %6512 = vmatprep.subr.mxu0 0.0
    %6513 = vmatpush1.msra.mxu0 0.0
    %6514 = vmatprep.subr.mxu0 0.0
    %6515 = vmatpush1.msra.mxu0 0.0
    %6516 = vmatprep.subr.mxu0 0.0
    %6517 = vmatpush1.msra.mxu0 0.0
    %6518 = vmatprep.subr.mxu0 0.0
    %6519 = vmatpush1.msra.mxu0 0.0
    %6520 = vmatprep.subr.mxu0 0.0
    %6521 = vmatpush1.msra.mxu0 0.0
    %6522 = vmatprep.subr.mxu0 0.0
    %6523 = vmatpush1.msra.mxu0 0.0
    %6524 = vmatprep.subr.mxu0 0.0
    %6525 = vmatpush1.msra.mxu0 0.0
    %6526 = vmatprep.subr.mxu0 0.0
    %6527 = vmatpush1.msra.mxu0 0.0
    %6528 = vmatprep.subr.mxu0 0.0
    %6529 = vmatpush1.msra.mxu0 0.0
    %6530 = vmatprep.subr.mxu0 0.0
    %6531 = vmatpush1.msra.mxu0 0.0
    %6532 = vmatprep.subr.mxu0 0.0
    %6533 = vmatpush1.msra.mxu0 0.0
    %6534 = vmatprep.subr.mxu0 0.0
    %6535 = vmatpush1.msra.mxu0 0.0
    %6536 = vmatprep.subr.mxu0 0.0
    %6537 = vmatpush1.msra.mxu0 0.0
    %6538 = vmatprep.subr.mxu0 0.0
    %6539 = vmatpush1.msra.mxu0 0.0
    %6540 = vmatprep.subr.mxu0 0.0
    %6541 = vmatpush1.msra.mxu0 0.0
    %6542 = vmatprep.subr.mxu0 0.0
    %6543 = vmatpush1.msra.mxu0 0.0
    %6544 = vmatprep.subr.mxu0 0.0
    %6545 = vmatpush1.msra.mxu0 0.0
    %6546 = vmatprep.subr.mxu0 0.0
    %6547 = vmatpush1.msra.mxu0 0.0
    %6548 = vmatprep.subr.mxu0 0.0
    %6549 = vmatpush1.msra.mxu0 0.0
    %6550 = vmatprep.mubr.f32.mxu0 0.0
    %6551 = vmatmul.mubr.f32.gmra.mrb[0].mxu0 %v6330
    %v6552 = vpop.f32.mrb[0].mxu0
    %v6553 = vadd.f32 0.0, %v6552
    %v6554 = vpop.f32.mrb[0].mxu0
    %v6555 = vadd.f32 0.0, %v6554
    %6556 = vdwg.mxu0
    %v6557 = vadd.f32 %v6289, %v6411
    %v6558 = vadd.f32 %v6290, %v6413
    %v6559 = vadd.f32 %v6291, %v6482
    %v6560 = vadd.f32 %v6292, %v6484
    %v6561 = vadd.f32 %v6293, %v6553
    %v6562 = vadd.f32 %v6294, %v6555
    %6564 = vset.pattern.permute.xlu0 0
    %6565 = vperm.xlu0 %6564, %v4211
    %v6566 = vpop.permute.xlu0 %6565
    %v6568 = vadd.f32 %v6557, %v6566
    %v6569 = vadd.f32 %v6558, %v6566
    %v6570 = vadd.f32 %v6559, %v6566
    %v6571 = vadd.f32 %v6560, %v6566
    %v6572 = vadd.f32 %v6561, %v6566
    %v6573 = vadd.f32 %v6562, %v6566
    %v6574 = vmax.f32 %v6568, 0.0
    %v6575 = vmax.f32 %v6569, 0.0
    %v6576 = vmax.f32 %v6570, 0.0
    %v6577 = vmax.f32 %v6571, 0.0
    %v6578 = vmax.f32 %v6572, 0.0
    %v6579 = vmax.f32 %v6573, 0.0
    %6586 = vrot.lane.b32.xlu0 %v6574, 106
    %v6587 = vpop.permute.xlu0 %6586
    %6588 = vrot.lane.b32.xlu0 %v6575, 106
    %v6589 = vpop.permute.xlu0 %6588
    %6590 = vrot.lane.b32.xlu0 %v6576, 106
    %v6591 = vpop.permute.xlu0 %6590
    %6592 = vrot.lane.b32.xlu0 %v6577, 106
    %v6593 = vpop.permute.xlu0 %6592
    %6594 = vrot.lane.b32.xlu0 %v6578, 106
    %v6595 = vpop.permute.xlu0 %6594
    %6596 = vrot.lane.b32.xlu0 %v6579, 106
    %v6597 = vpop.permute.xlu0 %6596
    %v6598 = vsel %vm4984, %v6587, %v6589
    %v6599 = vsel %vm4984, %v6589, %v6591
    %v6600 = vsel %vm4984, %v6591, %v6593
    %v6601 = vsel %vm4984, %v6593, %v6595
    %v6602 = vsel %vm4984, %v6595, %v6597
    %v6609 = vmax.f32 %v6574, %v6598
    %v6610 = vmax.f32 %v6575, %v6599
    %v6611 = vmax.f32 %v6576, %v6600
    %v6612 = vmax.f32 %v6577, %v6601
    %v6613 = vmax.f32 %v6578, %v6602
    %v6614 = vmax.f32 %v6579, %v6597
    %6621 = vrot.lane.b32.xlu0 %v6609, 127
    %v6622 = vpop.permute.xlu0 %6621
    %6623 = vrot.lane.b32.xlu0 %v6610, 127
    %v6624 = vpop.permute.xlu0 %6623
    %6625 = vrot.lane.b32.xlu0 %v6611, 127
    %v6626 = vpop.permute.xlu0 %6625
    %6627 = vrot.lane.b32.xlu0 %v6612, 127
    %v6628 = vpop.permute.xlu0 %6627
    %6629 = vrot.lane.b32.xlu0 %v6613, 127
    %v6630 = vpop.permute.xlu0 %6629
    %6631 = vrot.lane.b32.xlu0 %v6614, 127
    %v6632 = vpop.permute.xlu0 %6631
    %v6633 = vsel %vm277, %v6622, %v6624
    %v6634 = vsel %vm277, %v6624, %v6626
    %v6635 = vsel %vm277, %v6626, %v6628
    %v6636 = vsel %vm277, %v6628, %v6630
    %v6637 = vsel %vm277, %v6630, %v6632
    %v6644 = vmax.f32 %v6609, %v6633
    %v6645 = vmax.f32 %v6610, %v6634
    %v6646 = vmax.f32 %v6611, %v6635
    %v6647 = vmax.f32 %v6612, %v6636
    %v6648 = vmax.f32 %v6613, %v6637
    %v6649 = vmax.f32 %v6614, %v6632
    %v6650 = vld [vmem:[%s3 + $0xf48] sm:$0xff]
    %v6651 = vld [vmem:[%s3 + $0xf60] sm:$0xff]
    %v6652 = vld [vmem:[%s3 + $0xf78] sm:$0xff]
    %v6653 = vld [vmem:[%s3 + $0xf90] sm:$0xff]
    %v6654 = vld [vmem:[%s3 + $0xfa8] sm:$0xff]
    %v6655 = vld [vmem:[%s3 + $0xfc0] sm:$0xff]
    %v6656 = vld [vmem:[%s3 + $0xfd8] sm:$0xff]
    %v6657 = vld [vmem:[%s3 + $0xff0] sm:$0xff]
    %v6658 = vld [vmem:[%s3 + $0x1008] sm:$0xff]
    %v6659 = vld [vmem:[%s3 + $0x1020] sm:$0xff]
    %v6660 = vld [vmem:[%s3 + $0x1038] sm:$0xff]
    %v6661 = vld [vmem:[%s3 + $0x1050] sm:$0xff]
    %v6662 = vld [vmem:[%s3 + $0x1068] sm:$0xff]
    %v6663 = vld [vmem:[%s3 + $0x1080] sm:$0xff]
    %v6664 = vld [vmem:[%s3 + $0x1098] sm:$0xff]
    %v6665 = vld [vmem:[%s3 + $0x10b0] sm:$0xff]
    %v6666 = vld [vmem:[%s3 + $0x10c8] sm:$0xff]
    %v6667 = vld [vmem:[%s3 + $0x10e0] sm:$0xff]
    %v6668 = vld [vmem:[%s3 + $0x10f8] sm:$0xff]
    %v6669 = vld [vmem:[%s3 + $0x1110] sm:$0xff]
    %v6670 = vld [vmem:[%s3 + $0x1128] sm:$0xff]
    %v6671 = vld [vmem:[%s3 + $0x1140] sm:$0xff]
    %v6672 = vld [vmem:[%s3 + $0x1158] sm:$0xff]
    %v6673 = vld [vmem:[%s3 + $0x1170] sm:$0xff]
    %v6674 = vld [vmem:[%s3 + $0x1188] sm:$0xff]
    %v6675 = vld [vmem:[%s3 + $0x11a0] sm:$0xff]
    %v6676 = vld [vmem:[%s3 + $0x11b8] sm:$0xff]
    %v6677 = vld [vmem:[%s3 + $0x11d0] sm:$0xff]
    %v6678 = vld [vmem:[%s3 + $0x11e8] sm:$0xff]
    %v6679 = vld [vmem:[%s3 + $0x1200] sm:$0xff]
    %v6680 = vld [vmem:[%s3 + $0x1218] sm:$0xff]
    %v6681 = vld [vmem:[%s3 + $0x1230] sm:$0xff]
    %v6682 = vld [vmem:[%s3 + $0x1248] sm:$0xff]
    %v6683 = vld [vmem:[%s3 + $0x1260] sm:$0xff]
    %v6684 = vld [vmem:[%s3 + $0x1278] sm:$0xff]
    %v6685 = vld [vmem:[%s3 + $0x1290] sm:$0xff]
    %v6686 = vld [vmem:[%s3 + $0x12a8] sm:$0xff]
    %v6687 = vld [vmem:[%s3 + $0x12c0] sm:$0xff]
    %v6688 = vld [vmem:[%s3 + $0x12d8] sm:$0xff]
    %v6689 = vld [vmem:[%s3 + $0x12f0] sm:$0xff]
    %v6690 = vld [vmem:[%s3 + $0x1308] sm:$0x7f]
    %vm6691 = vcmask 580608
    %v6693 = vsel %vm6691, %v6646, 0
    %vm6695 = vcmask 1046528
    %v6697 = vsel %vm6695, %v6690, 0
    %6699 = vmatprep.subr.mxu0 0.0
    %6700 = vmatpush1.msra.mxu0 %v6650
    %6701 = vmatprep.subr.mxu0 0.0
    %6702 = vmatpush1.msra.mxu0 %v6651
    %6703 = vmatprep.subr.mxu0 0.0
    %6704 = vmatpush1.msra.mxu0 %v6652
    %6705 = vmatprep.subr.mxu0 0.0
    %6706 = vmatpush1.msra.mxu0 %v6653
    %6707 = vmatprep.subr.mxu0 0.0
    %6708 = vmatpush1.msra.mxu0 %v6654
    %6709 = vmatprep.subr.mxu0 0.0
    %6710 = vmatpush1.msra.mxu0 %v6655
    %6711 = vmatprep.subr.mxu0 0.0
    %6712 = vmatpush1.msra.mxu0 %v6656
    %6713 = vmatprep.subr.mxu0 0.0
    %6714 = vmatpush1.msra.mxu0 %v6657
    %6715 = vmatprep.subr.mxu0 0.0
    %6716 = vmatpush1.msra.mxu0 %v6658
    %6717 = vmatprep.subr.mxu0 0.0
    %6718 = vmatpush1.msra.mxu0 %v6659
    %6719 = vmatprep.subr.mxu0 0.0
    %6720 = vmatpush1.msra.mxu0 %v6660
    %6721 = vmatprep.subr.mxu0 0.0
    %6722 = vmatpush1.msra.mxu0 %v6661
    %6723 = vmatprep.subr.mxu0 0.0
    %6724 = vmatpush1.msra.mxu0 %v6662
    %6725 = vmatprep.subr.mxu0 0.0
    %6726 = vmatpush1.msra.mxu0 %v6663
    %6727 = vmatprep.subr.mxu0 0.0
    %6728 = vmatpush1.msra.mxu0 %v6664
    %6729 = vmatprep.subr.mxu0 0.0
    %6730 = vmatpush1.msra.mxu0 %v6665
    %6731 = vmatprep.subr.mxu0 0.0
    %6732 = vmatpush1.msra.mxu0 %v6666
    %6733 = vmatprep.subr.mxu0 0.0
    %6734 = vmatpush1.msra.mxu0 %v6667
    %6735 = vmatprep.subr.mxu0 0.0
    %6736 = vmatpush1.msra.mxu0 %v6668
    %6737 = vmatprep.subr.mxu0 0.0
    %6738 = vmatpush1.msra.mxu0 %v6669
    %6739 = vmatprep.subr.mxu0 0.0
    %6740 = vmatpush1.msra.mxu0 %v6670
    %6741 = vmatprep.subr.mxu0 0.0
    %6742 = vmatpush1.msra.mxu0 %v6671
    %6743 = vmatprep.subr.mxu0 0.0
    %6744 = vmatpush1.msra.mxu0 %v6672
    %6745 = vmatprep.subr.mxu0 0.0
    %6746 = vmatpush1.msra.mxu0 %v6673
    %6747 = vmatprep.subr.mxu0 0.0
    %6748 = vmatpush1.msra.mxu0 %v6674
    %6749 = vmatprep.subr.mxu0 0.0
    %6750 = vmatpush1.msra.mxu0 %v6675
    %6751 = vmatprep.subr.mxu0 0.0
    %6752 = vmatpush1.msra.mxu0 %v6676
    %6753 = vmatprep.subr.mxu0 0.0
    %6754 = vmatpush1.msra.mxu0 %v6677
    %6755 = vmatprep.subr.mxu0 0.0
    %6756 = vmatpush1.msra.mxu0 %v6678
    %6757 = vmatprep.subr.mxu0 0.0
    %6758 = vmatpush1.msra.mxu0 %v6679
    %6759 = vmatprep.subr.mxu0 0.0
    %6760 = vmatpush1.msra.mxu0 %v6680
    %6761 = vmatprep.subr.mxu0 0.0
    %6762 = vmatpush1.msra.mxu0 %v6681
    %6763 = vmatprep.mubr.f32.mxu0 %v6645
    %6764 = vmatmul.mubr.f32.gmra.mrb[0].mxu0 %v6644
    %v6765 = vpop.f32.mrb[0].mxu0
    %v6766 = vadd.f32 0.0, %v6765
    %v6767 = vpop.f32.mrb[0].mxu0
    %6768 = vdwg.mxu0
    %6769 = vmatprep.subr.mxu0 0.0
    %6770 = vmatpush1.msra.mxu0 %v6682
    %6771 = vmatprep.subr.mxu0 0.0
    %6772 = vmatpush1.msra.mxu0 %v6683
    %6773 = vmatprep.subr.mxu0 0.0
    %6774 = vmatpush1.msra.mxu0 %v6684
    %6775 = vmatprep.subr.mxu0 0.0
    %6776 = vmatpush1.msra.mxu0 %v6685
    %6777 = vmatprep.subr.mxu0 0.0
    %6778 = vmatpush1.msra.mxu0 %v6686
    %6779 = vmatprep.subr.mxu0 0.0
    %6780 = vmatpush1.msra.mxu0 %v6687
    %6781 = vmatprep.subr.mxu0 0.0
    %6782 = vmatpush1.msra.mxu0 %v6688
    %6783 = vmatprep.subr.mxu0 0.0
    %6784 = vmatpush1.msra.mxu0 %v6689
    %6785 = vmatprep.subr.mxu0 0.0
    %6786 = vmatpush1.msra.mxu0 %v6697
    %6787 = vmatprep.subr.mxu0 0.0
    %6788 = vmatpush1.msra.mxu0 0.0
    %6789 = vmatprep.subr.mxu0 0.0
    %6790 = vmatpush1.msra.mxu0 0.0
    %6791 = vmatprep.subr.mxu0 0.0
    %6792 = vmatpush1.msra.mxu0 0.0
    %6793 = vmatprep.subr.mxu0 0.0
    %6794 = vmatpush1.msra.mxu0 0.0
    %6795 = vmatprep.subr.mxu0 0.0
    %6796 = vmatpush1.msra.mxu0 0.0
    %6797 = vmatprep.subr.mxu0 0.0
    %6798 = vmatpush1.msra.mxu0 0.0
    %6799 = vmatprep.subr.mxu0 0.0
    %6800 = vmatpush1.msra.mxu0 0.0
    %6801 = vmatprep.subr.mxu0 0.0
    %6802 = vmatpush1.msra.mxu0 0.0
    %6803 = vmatprep.subr.mxu0 0.0
    %6804 = vmatpush1.msra.mxu0 0.0
    %6805 = vmatprep.subr.mxu0 0.0
    %6806 = vmatpush1.msra.mxu0 0.0
    %6807 = vmatprep.subr.mxu0 0.0
    %6808 = vmatpush1.msra.mxu0 0.0
    %6809 = vmatprep.subr.mxu0 0.0
    %6810 = vmatpush1.msra.mxu0 0.0
    %6811 = vmatprep.subr.mxu0 0.0
    %6812 = vmatpush1.msra.mxu0 0.0
    %6813 = vmatprep.subr.mxu0 0.0
    %6814 = vmatpush1.msra.mxu0 0.0
    %6815 = vmatprep.subr.mxu0 0.0
    %6816 = vmatpush1.msra.mxu0 0.0
    %6817 = vmatprep.subr.mxu0 0.0
    %6818 = vmatpush1.msra.mxu0 0.0
    %6819 = vmatprep.subr.mxu0 0.0
    %6820 = vmatpush1.msra.mxu0 0.0
    %6821 = vmatprep.subr.mxu0 0.0
    %6822 = vmatpush1.msra.mxu0 0.0
    %6823 = vmatprep.subr.mxu0 0.0
    %6824 = vmatpush1.msra.mxu0 0.0
    %6825 = vmatprep.subr.mxu0 0.0
    %6826 = vmatpush1.msra.mxu0 0.0
    %6827 = vmatprep.subr.mxu0 0.0
    %6828 = vmatpush1.msra.mxu0 0.0
    %6829 = vmatprep.subr.mxu0 0.0
    %6830 = vmatpush1.msra.mxu0 0.0
    %6831 = vmatprep.subr.mxu0 0.0
    %6832 = vmatpush1.msra.mxu0 0.0
    %6833 = vmatprep.mubr.f32.mxu0 0.0
    %6834 = vmatmul.mubr.f32.gmra.mrb[0].mxu0 %v6693
    %v6835 = vpop.f32.mrb[0].mxu0
    %v6836 = vadd.f32 %v6766, %v6835
    %v6837 = vpop.f32.mrb[0].mxu0
    %6838 = vdwg.mxu0
    %6840 = vrot.lane.b32.xlu0 %v6836, 12
    %v6841 = vpop.permute.xlu0 %6840
    %vm6843 = vcmask 883808
    %6844 = vst.msk [vmem:[#allocation3] sm:$0xff] %vm6843, %v6841
    %6848 = vrot.lane.b32.xlu0 %v6647, 116
    %v6849 = vpop.permute.xlu0 %6848
    %6850 = vrot.lane.b32.xlu0 %v6648, 116
    %v6851 = vpop.permute.xlu0 %6850
    %6852 = vrot.lane.b32.xlu0 %v6649, 116
    %v6853 = vpop.permute.xlu0 %6852
    %vm6854 = vcmask 949248
    %v6855 = vsel %vm6854, %v6849, %v6851
    %v6856 = vsel %vm6854, %v6851, %v6853
    %v6859 = vsel %vm6691, %v6853, 0
    %6861 = vmatprep.subr.mxu0 0.0
    %6862 = vmatpush1.msra.mxu0 %v6650
    %6863 = vmatprep.subr.mxu0 0.0
    %6864 = vmatpush1.msra.mxu0 %v6651
    %6865 = vmatprep.subr.mxu0 0.0
    %6866 = vmatpush1.msra.mxu0 %v6652
    %6867 = vmatprep.subr.mxu0 0.0
    %6868 = vmatpush1.msra.mxu0 %v6653
    %6869 = vmatprep.subr.mxu0 0.0
    %6870 = vmatpush1.msra.mxu0 %v6654
    %6871 = vmatprep.subr.mxu0 0.0
    %6872 = vmatpush1.msra.mxu0 %v6655
    %6873 = vmatprep.subr.mxu0 0.0
    %6874 = vmatpush1.msra.mxu0 %v6656
    %6875 = vmatprep.subr.mxu0 0.0
    %6876 = vmatpush1.msra.mxu0 %v6657
    %6877 = vmatprep.subr.mxu0 0.0
    %6878 = vmatpush1.msra.mxu0 %v6658
    %6879 = vmatprep.subr.mxu0 0.0
    %6880 = vmatpush1.msra.mxu0 %v6659
    %6881 = vmatprep.subr.mxu0 0.0
    %6882 = vmatpush1.msra.mxu0 %v6660
    %6883 = vmatprep.subr.mxu0 0.0
    %6884 = vmatpush1.msra.mxu0 %v6661
    %6885 = vmatprep.subr.mxu0 0.0
    %6886 = vmatpush1.msra.mxu0 %v6662
    %6887 = vmatprep.subr.mxu0 0.0
    %6888 = vmatpush1.msra.mxu0 %v6663
    %6889 = vmatprep.subr.mxu0 0.0
    %6890 = vmatpush1.msra.mxu0 %v6664
    %6891 = vmatprep.subr.mxu0 0.0
    %6892 = vmatpush1.msra.mxu0 %v6665
    %6893 = vmatprep.subr.mxu0 0.0
    %6894 = vmatpush1.msra.mxu0 %v6666
    %6895 = vmatprep.subr.mxu0 0.0
    %6896 = vmatpush1.msra.mxu0 %v6667
    %6897 = vmatprep.subr.mxu0 0.0
    %6898 = vmatpush1.msra.mxu0 %v6668
    %6899 = vmatprep.subr.mxu0 0.0
    %6900 = vmatpush1.msra.mxu0 %v6669
    %6901 = vmatprep.subr.mxu0 0.0
    %6902 = vmatpush1.msra.mxu0 %v6670
    %6903 = vmatprep.subr.mxu0 0.0
    %6904 = vmatpush1.msra.mxu0 %v6671
    %6905 = vmatprep.subr.mxu0 0.0
    %6906 = vmatpush1.msra.mxu0 %v6672
    %6907 = vmatprep.subr.mxu0 0.0
    %6908 = vmatpush1.msra.mxu0 %v6673
    %6909 = vmatprep.subr.mxu0 0.0
    %6910 = vmatpush1.msra.mxu0 %v6674
    %6911 = vmatprep.subr.mxu0 0.0
    %6912 = vmatpush1.msra.mxu0 %v6675
    %6913 = vmatprep.subr.mxu0 0.0
    %6914 = vmatpush1.msra.mxu0 %v6676
    %6915 = vmatprep.subr.mxu0 0.0
    %6916 = vmatpush1.msra.mxu0 %v6677
    %6917 = vmatprep.subr.mxu0 0.0
    %6918 = vmatpush1.msra.mxu0 %v6678
    %6919 = vmatprep.subr.mxu0 0.0
    %6920 = vmatpush1.msra.mxu0 %v6679
    %6921 = vmatprep.subr.mxu0 0.0
    %6922 = vmatpush1.msra.mxu0 %v6680
    %6923 = vmatprep.subr.mxu0 0.0
    %6924 = vmatpush1.msra.mxu0 %v6681
    %6925 = vmatprep.mubr.f32.mxu0 %v6856
    %6926 = vmatmul.mubr.f32.gmra.mrb[0].mxu0 %v6855
    %v6927 = vpop.f32.mrb[0].mxu0
    %v6928 = vadd.f32 0.0, %v6927
    %v6929 = vpop.f32.mrb[0].mxu0
    %6930 = vdwg.mxu0
    %6931 = vmatprep.subr.mxu0 0.0
    %6932 = vmatpush1.msra.mxu0 %v6682
    %6933 = vmatprep.subr.mxu0 0.0
    %6934 = vmatpush1.msra.mxu0 %v6683
    %6935 = vmatprep.subr.mxu0 0.0
    %6936 = vmatpush1.msra.mxu0 %v6684
    %6937 = vmatprep.subr.mxu0 0.0
    %6938 = vmatpush1.msra.mxu0 %v6685
    %6939 = vmatprep.subr.mxu0 0.0
    %6940 = vmatpush1.msra.mxu0 %v6686
    %6941 = vmatprep.subr.mxu0 0.0
    %6942 = vmatpush1.msra.mxu0 %v6687
    %6943 = vmatprep.subr.mxu0 0.0
    %6944 = vmatpush1.msra.mxu0 %v6688
    %6945 = vmatprep.subr.mxu0 0.0
    %6946 = vmatpush1.msra.mxu0 %v6689
    %6947 = vmatprep.subr.mxu0 0.0
    %6948 = vmatpush1.msra.mxu0 %v6697
    %6949 = vmatprep.subr.mxu0 0.0
    %6950 = vmatpush1.msra.mxu0 0.0
    %6951 = vmatprep.subr.mxu0 0.0
    %6952 = vmatpush1.msra.mxu0 0.0
    %6953 = vmatprep.subr.mxu0 0.0
    %6954 = vmatpush1.msra.mxu0 0.0
    %6955 = vmatprep.subr.mxu0 0.0
    %6956 = vmatpush1.msra.mxu0 0.0
    %6957 = vmatprep.subr.mxu0 0.0
    %6958 = vmatpush1.msra.mxu0 0.0
    %6959 = vmatprep.subr.mxu0 0.0
    %6960 = vmatpush1.msra.mxu0 0.0
    %6961 = vmatprep.subr.mxu0 0.0
    %6962 = vmatpush1.msra.mxu0 0.0
    %6963 = vmatprep.subr.mxu0 0.0
    %6964 = vmatpush1.msra.mxu0 0.0
    %6965 = vmatprep.subr.mxu0 0.0
    %6966 = vmatpush1.msra.mxu0 0.0
    %6967 = vmatprep.subr.mxu0 0.0
    %6968 = vmatpush1.msra.mxu0 0.0
    %6969 = vmatprep.subr.mxu0 0.0
    %6970 = vmatpush1.msra.mxu0 0.0
    %6971 = vmatprep.subr.mxu0 0.0
    %6972 = vmatpush1.msra.mxu0 0.0
    %6973 = vmatprep.subr.mxu0 0.0
    %6974 = vmatpush1.msra.mxu0 0.0
    %6975 = vmatprep.subr.mxu0 0.0
    %6976 = vmatpush1.msra.mxu0 0.0
    %6977 = vmatprep.subr.mxu0 0.0
    %6978 = vmatpush1.msra.mxu0 0.0
    %6979 = vmatprep.subr.mxu0 0.0
    %6980 = vmatpush1.msra.mxu0 0.0
    %6981 = vmatprep.subr.mxu0 0.0
    %6982 = vmatpush1.msra.mxu0 0.0
    %6983 = vmatprep.subr.mxu0 0.0
    %6984 = vmatpush1.msra.mxu0 0.0
    %6985 = vmatprep.subr.mxu0 0.0
    %6986 = vmatpush1.msra.mxu0 0.0
    %6987 = vmatprep.subr.mxu0 0.0
    %6988 = vmatpush1.msra.mxu0 0.0
    %6989 = vmatprep.subr.mxu0 0.0
    %6990 = vmatpush1.msra.mxu0 0.0
    %6991 = vmatprep.subr.mxu0 0.0
    %6992 = vmatpush1.msra.mxu0 0.0
    %6993 = vmatprep.subr.mxu0 0.0
    %6994 = vmatpush1.msra.mxu0 0.0
    %6995 = vmatprep.mubr.f32.mxu0 0.0
    %6996 = vmatmul.mubr.f32.gmra.mrb[0].mxu0 %v6859
    %v6997 = vpop.f32.mrb[0].mxu0
    %v6998 = vadd.f32 %v6928, %v6997
    %v6999 = vpop.f32.mrb[0].mxu0
    %7000 = vdwg.mxu0
    %7002 = vrot.lane.b32.xlu0 %v6998, 4
    %v7003 = vpop.permute.xlu0 %7002
    %vm7005 = vcmask 818208
    %7006 = vst.msk [vmem:[#allocation3 + $0x8] sm:$0xff] %vm7005, %v7003
    %s7007 = scalar_lea.vmem %s2, 64
    %v7008 = vld [vmem:[%s7007] sm:$0xff]
    %v7009 = vld [vmem:[%s7007 + $0x8] sm:$0xff]
    %v7010 = vld [vmem:[#allocation3] sm:$0xff]
    %v7011 = vld [vmem:[#allocation3 + $0x8] sm:$0xff]
    %s7012 = scalar_lea.vmem %s1, 768
    %v7013 = vld [vmem:[%s7012] sm:$0xff]
    %v7014 = vld [vmem:[%s7012 + $0x8] sm:$0xff]
    %s7015 = scalar_lea.vmem %s1, 800
    %v7016 = vld [vmem:[%s7015] sm:$0xff]
    %v7017 = vld [vmem:[%s7015 + $0x8] sm:$0xff]
    %7020 = vrot.lane.b32.xlu0 %v7010, 127
    %v7021 = vpop.permute.xlu0 %7020
    %7022 = vrot.lane.b32.xlu0 %v7011, 127
    %v7023 = vpop.permute.xlu0 %7022
    %v7024 = vsel %vm277, %v7021, %v7023
    %vm7027 = vcmask 64512
    %v7029 = vsel %vm7027, %v7016, 0
    %v7032 = vsel %vm7027, %v7017, 0
    %7034 = vmatprep.subr.mxu0 %v7023
    %7035 = vmatpush1.msra.mxu0 %v7024
    %7036 = vmatprep.subr.mxu0 0.0
    %7037 = vmatpush1.msra.mxu0 0.0
    %7038 = vmatprep.subr.mxu0 0.0
    %7039 = vmatpush1.msra.mxu0 0.0
    %7040 = vmatprep.subr.mxu0 0.0
    %7041 = vmatpush1.msra.mxu0 0.0
    %7042 = vmatprep.subr.mxu0 0.0
    %7043 = vmatpush1.msra.mxu0 0.0
    %7044 = vmatprep.subr.mxu0 0.0
    %7045 = vmatpush1.msra.mxu0 0.0
    %7046 = vmatprep.subr.mxu0 0.0
    %7047 = vmatpush1.msra.mxu0 0.0
    %7048 = vmatprep.subr.mxu0 0.0
    %7049 = vmatpush1.msra.mxu0 0.0
    %7050 = vmatprep.subr.mxu0 0.0
    %7051 = vmatpush1.msra.mxu0 0.0
    %7052 = vmatprep.subr.mxu0 0.0
    %7053 = vmatpush1.msra.mxu0 0.0
    %7054 = vmatprep.subr.mxu0 0.0
    %7055 = vmatpush1.msra.mxu0 0.0
    %7056 = vmatprep.subr.mxu0 0.0
    %7057 = vmatpush1.msra.mxu0 0.0
    %7058 = vmatprep.subr.mxu0 0.0
    %7059 = vmatpush1.msra.mxu0 0.0
    %7060 = vmatprep.subr.mxu0 0.0
    %7061 = vmatpush1.msra.mxu0 0.0
    %7062 = vmatprep.subr.mxu0 0.0
    %7063 = vmatpush1.msra.mxu0 0.0
    %7064 = vmatprep.subr.mxu0 0.0
    %7065 = vmatpush1.msra.mxu0 0.0
    %7066 = vmatprep.subr.mxu0 0.0
    %7067 = vmatpush1.msra.mxu0 0.0
    %7068 = vmatprep.subr.mxu0 0.0
    %7069 = vmatpush1.msra.mxu0 0.0
    %7070 = vmatprep.subr.mxu0 0.0
    %7071 = vmatpush1.msra.mxu0 0.0
    %7072 = vmatprep.subr.mxu0 0.0
    %7073 = vmatpush1.msra.mxu0 0.0
    %7074 = vmatprep.subr.mxu0 0.0
    %7075 = vmatpush1.msra.mxu0 0.0
    %7076 = vmatprep.subr.mxu0 0.0
    %7077 = vmatpush1.msra.mxu0 0.0
    %7078 = vmatprep.subr.mxu0 0.0
    %7079 = vmatpush1.msra.mxu0 0.0
    %7080 = vmatprep.subr.mxu0 0.0
    %7081 = vmatpush1.msra.mxu0 0.0
    %7082 = vmatprep.subr.mxu0 0.0
    %7083 = vmatpush1.msra.mxu0 0.0
    %7084 = vmatprep.subr.mxu0 0.0
    %7085 = vmatpush1.msra.mxu0 0.0
    %7086 = vmatprep.subr.mxu0 0.0
    %7087 = vmatpush1.msra.mxu0 0.0
    %7088 = vmatprep.subr.mxu0 0.0
    %7089 = vmatpush1.msra.mxu0 0.0
    %7090 = vmatprep.subr.mxu0 0.0
    %7091 = vmatpush1.msra.mxu0 0.0
    %7092 = vmatprep.subr.mxu0 0.0
    %7093 = vmatpush1.msra.mxu0 0.0
    %7094 = vmatprep.subr.mxu0 0.0
    %7095 = vmatpush1.msra.mxu0 0.0
    %7096 = vmatprep.subr.mxu0 0.0
    %7097 = vmatpush1.msra.mxu0 0.0
    %7098 = vmatprep.mubr.f32.mxu0 0.0
    %7099 = vmatmul.mubr.f32.gmra.mrb[0].mxu0 %v7029
    %v7100 = vpop.f32.mrb[0].mxu0
    %v7101 = vadd.f32 0.0, %v7100
    %v7102 = vpop.f32.mrb[0].mxu0
    %v7103 = vadd.f32 0.0, %v7102
    %7104 = vmatprep.mubr.f32.mxu0 0.0
    %7105 = vmatmul.mubr.f32.gmra.mrb[0].mxu0 %v7032
    %v7106 = vpop.f32.mrb[0].mxu0
    %v7107 = vadd.f32 0.0, %v7106
    %v7108 = vpop.f32.mrb[0].mxu0
    %v7109 = vadd.f32 0.0, %v7108
    %7110 = vdwg.mxu0
    %v7112 = vsel %vm7027, %v7013, 0
    %v7115 = vsel %vm7027, %v7014, 0
    %7117 = vmatprep.subr.mxu0 %v7011
    %7118 = vmatpush1.msra.mxu0 %v7010
    %7119 = vmatprep.subr.mxu0 0.0
    %7120 = vmatpush1.msra.mxu0 0.0
    %7121 = vmatprep.subr.mxu0 0.0
    %7122 = vmatpush1.msra.mxu0 0.0
    %7123 = vmatprep.subr.mxu0 0.0
    %7124 = vmatpush1.msra.mxu0 0.0
    %7125 = vmatprep.subr.mxu0 0.0
    %7126 = vmatpush1.msra.mxu0 0.0
    %7127 = vmatprep.subr.mxu0 0.0
    %7128 = vmatpush1.msra.mxu0 0.0
    %7129 = vmatprep.subr.mxu0 0.0
    %7130 = vmatpush1.msra.mxu0 0.0
    %7131 = vmatprep.subr.mxu0 0.0
    %7132 = vmatpush1.msra.mxu0 0.0
    %7133 = vmatprep.subr.mxu0 0.0
    %7134 = vmatpush1.msra.mxu0 0.0
    %7135 = vmatprep.subr.mxu0 0.0
    %7136 = vmatpush1.msra.mxu0 0.0
    %7137 = vmatprep.subr.mxu0 0.0
    %7138 = vmatpush1.msra.mxu0 0.0
    %7139 = vmatprep.subr.mxu0 0.0
    %7140 = vmatpush1.msra.mxu0 0.0
    %7141 = vmatprep.subr.mxu0 0.0
    %7142 = vmatpush1.msra.mxu0 0.0
    %7143 = vmatprep.subr.mxu0 0.0
    %7144 = vmatpush1.msra.mxu0 0.0
    %7145 = vmatprep.subr.mxu0 0.0
    %7146 = vmatpush1.msra.mxu0 0.0
    %7147 = vmatprep.subr.mxu0 0.0
    %7148 = vmatpush1.msra.mxu0 0.0
    %7149 = vmatprep.subr.mxu0 0.0
    %7150 = vmatpush1.msra.mxu0 0.0
    %7151 = vmatprep.subr.mxu0 0.0
    %7152 = vmatpush1.msra.mxu0 0.0
    %7153 = vmatprep.subr.mxu0 0.0
    %7154 = vmatpush1.msra.mxu0 0.0
    %7155 = vmatprep.subr.mxu0 0.0
    %7156 = vmatpush1.msra.mxu0 0.0
    %7157 = vmatprep.subr.mxu0 0.0
    %7158 = vmatpush1.msra.mxu0 0.0
    %7159 = vmatprep.subr.mxu0 0.0
    %7160 = vmatpush1.msra.mxu0 0.0
    %7161 = vmatprep.subr.mxu0 0.0
    %7162 = vmatpush1.msra.mxu0 0.0
    %7163 = vmatprep.subr.mxu0 0.0
    %7164 = vmatpush1.msra.mxu0 0.0
    %7165 = vmatprep.subr.mxu0 0.0
    %7166 = vmatpush1.msra.mxu0 0.0
    %7167 = vmatprep.subr.mxu0 0.0
    %7168 = vmatpush1.msra.mxu0 0.0
    %7169 = vmatprep.subr.mxu0 0.0
    %7170 = vmatpush1.msra.mxu0 0.0
    %7171 = vmatprep.subr.mxu0 0.0
    %7172 = vmatpush1.msra.mxu0 0.0
    %7173 = vmatprep.subr.mxu0 0.0
    %7174 = vmatpush1.msra.mxu0 0.0
    %7175 = vmatprep.subr.mxu0 0.0
    %7176 = vmatpush1.msra.mxu0 0.0
    %7177 = vmatprep.subr.mxu0 0.0
    %7178 = vmatpush1.msra.mxu0 0.0
    %7179 = vmatprep.subr.mxu0 0.0
    %7180 = vmatpush1.msra.mxu0 0.0
    %7181 = vmatprep.mubr.f32.mxu0 0.0
    %7182 = vmatmul.mubr.f32.gmra.mrb[0].mxu0 %v7112
    %v7183 = vpop.f32.mrb[0].mxu0
    %v7184 = vadd.f32 %v7101, %v7183
    %v7185 = vpop.f32.mrb[0].mxu0
    %v7186 = vadd.f32 %v7103, %v7185
    %7187 = vmatprep.mubr.f32.mxu0 0.0
    %7188 = vmatmul.mubr.f32.gmra.mrb[0].mxu0 %v7115
    %v7189 = vpop.f32.mrb[0].mxu0
    %v7190 = vadd.f32 %v7107, %v7189
    %v7191 = vpop.f32.mrb[0].mxu0
    %v7192 = vadd.f32 %v7109, %v7191
    %7193 = vdwg.mxu0
    %s7194 = scalar_lea.vmem %s1, 832
    %v7195 = vld [vmem:[%s7194] sm:$0xff]
    %v7196 = vld [vmem:[%s7194 + $0x8] sm:$0xff]
    %7197 = vrot.lane.b32.xlu0 %v7010, 126
    %v7198 = vpop.permute.xlu0 %7197
    %7199 = vrot.lane.b32.xlu0 %v7011, 126
    %v7200 = vpop.permute.xlu0 %7199
    %v7201 = vsel %vm438, %v7198, %v7200
    %v7205 = vsel %vm7027, %v7195, 0
    %v7208 = vsel %vm7027, %v7196, 0
    %7210 = vmatprep.subr.mxu0 %v7200
    %7211 = vmatpush1.msra.mxu0 %v7201
    %7212 = vmatprep.subr.mxu0 0.0
    %7213 = vmatpush1.msra.mxu0 0.0
    %7214 = vmatprep.subr.mxu0 0.0
    %7215 = vmatpush1.msra.mxu0 0.0
    %7216 = vmatprep.subr.mxu0 0.0
    %7217 = vmatpush1.msra.mxu0 0.0
    %7218 = vmatprep.subr.mxu0 0.0
    %7219 = vmatpush1.msra.mxu0 0.0
    %7220 = vmatprep.subr.mxu0 0.0
    %7221 = vmatpush1.msra.mxu0 0.0
    %7222 = vmatprep.subr.mxu0 0.0
    %7223 = vmatpush1.msra.mxu0 0.0
    %7224 = vmatprep.subr.mxu0 0.0
    %7225 = vmatpush1.msra.mxu0 0.0
    %7226 = vmatprep.subr.mxu0 0.0
    %7227 = vmatpush1.msra.mxu0 0.0
    %7228 = vmatprep.subr.mxu0 0.0
    %7229 = vmatpush1.msra.mxu0 0.0
    %7230 = vmatprep.subr.mxu0 0.0
    %7231 = vmatpush1.msra.mxu0 0.0
    %7232 = vmatprep.subr.mxu0 0.0
    %7233 = vmatpush1.msra.mxu0 0.0
    %7234 = vmatprep.subr.mxu0 0.0
    %7235 = vmatpush1.msra.mxu0 0.0
    %7236 = vmatprep.subr.mxu0 0.0
    %7237 = vmatpush1.msra.mxu0 0.0
    %7238 = vmatprep.subr.mxu0 0.0
    %7239 = vmatpush1.msra.mxu0 0.0
    %7240 = vmatprep.subr.mxu0 0.0
    %7241 = vmatpush1.msra.mxu0 0.0
    %7242 = vmatprep.subr.mxu0 0.0
    %7243 = vmatpush1.msra.mxu0 0.0
    %7244 = vmatprep.subr.mxu0 0.0
    %7245 = vmatpush1.msra.mxu0 0.0
    %7246 = vmatprep.subr.mxu0 0.0
    %7247 = vmatpush1.msra.mxu0 0.0
    %7248 = vmatprep.subr.mxu0 0.0
    %7249 = vmatpush1.msra.mxu0 0.0
    %7250 = vmatprep.subr.mxu0 0.0
    %7251 = vmatpush1.msra.mxu0 0.0
    %7252 = vmatprep.subr.mxu0 0.0
    %7253 = vmatpush1.msra.mxu0 0.0
    %7254 = vmatprep.subr.mxu0 0.0
    %7255 = vmatpush1.msra.mxu0 0.0
    %7256 = vmatprep.subr.mxu0 0.0
    %7257 = vmatpush1.msra.mxu0 0.0
    %7258 = vmatprep.subr.mxu0 0.0
    %7259 = vmatpush1.msra.mxu0 0.0
    %7260 = vmatprep.subr.mxu0 0.0
    %7261 = vmatpush1.msra.mxu0 0.0
    %7262 = vmatprep.subr.mxu0 0.0
    %7263 = vmatpush1.msra.mxu0 0.0
    %7264 = vmatprep.subr.mxu0 0.0
    %7265 = vmatpush1.msra.mxu0 0.0
    %7266 = vmatprep.subr.mxu0 0.0
    %7267 = vmatpush1.msra.mxu0 0.0
    %7268 = vmatprep.subr.mxu0 0.0
    %7269 = vmatpush1.msra.mxu0 0.0
    %7270 = vmatprep.subr.mxu0 0.0
    %7271 = vmatpush1.msra.mxu0 0.0
    %7272 = vmatprep.subr.mxu0 0.0
    %7273 = vmatpush1.msra.mxu0 0.0
    %7274 = vmatprep.mubr.f32.mxu0 0.0
    %7275 = vmatmul.mubr.f32.gmra.mrb[0].mxu0 %v7205
    %v7276 = vpop.f32.mrb[0].mxu0
    %v7277 = vadd.f32 0.0, %v7276
    %v7278 = vpop.f32.mrb[0].mxu0
    %v7279 = vadd.f32 0.0, %v7278
    %7280 = vmatprep.mubr.f32.mxu0 0.0
    %7281 = vmatmul.mubr.f32.gmra.mrb[0].mxu0 %v7208
    %v7282 = vpop.f32.mrb[0].mxu0
    %v7283 = vadd.f32 0.0, %v7282
    %v7284 = vpop.f32.mrb[0].mxu0
    %v7285 = vadd.f32 0.0, %v7284
    %7286 = vdwg.mxu0
    %v7287 = vadd.f32 %v7184, %v7277
    %v7288 = vadd.f32 %v7186, %v7279
    %v7289 = vadd.f32 %v7190, %v7283
    %v7290 = vadd.f32 %v7192, %v7285
    %s7291 = scalar_lea.vmem %s1, 864
    %v7292 = vld [vmem:[%s7291] sm:$0xff]
    %v7293 = vld [vmem:[%s7291 + $0x8] sm:$0xff]
    %7294 = vrot.lane.b32.xlu0 %v7010, 116
    %v7295 = vpop.permute.xlu0 %7294
    %7296 = vrot.lane.b32.xlu0 %v7011, 116
    %v7297 = vpop.permute.xlu0 %7296
    %v7298 = vsel %vm6854, %v7295, %v7297
    %v7302 = vsel %vm7027, %v7292, 0
    %v7305 = vsel %vm7027, %v7293, 0
    %7307 = vmatprep.subr.mxu0 %v7297
    %7308 = vmatpush1.msra.mxu0 %v7298
    %7309 = vmatprep.subr.mxu0 0.0
    %7310 = vmatpush1.msra.mxu0 0.0
    %7311 = vmatprep.subr.mxu0 0.0
    %7312 = vmatpush1.msra.mxu0 0.0
    %7313 = vmatprep.subr.mxu0 0.0
    %7314 = vmatpush1.msra.mxu0 0.0
    %7315 = vmatprep.subr.mxu0 0.0
    %7316 = vmatpush1.msra.mxu0 0.0
    %7317 = vmatprep.subr.mxu0 0.0
    %7318 = vmatpush1.msra.mxu0 0.0
    %7319 = vmatprep.subr.mxu0 0.0
    %7320 = vmatpush1.msra.mxu0 0.0
    %7321 = vmatprep.subr.mxu0 0.0
    %7322 = vmatpush1.msra.mxu0 0.0
    %7323 = vmatprep.subr.mxu0 0.0
    %7324 = vmatpush1.msra.mxu0 0.0
    %7325 = vmatprep.subr.mxu0 0.0
    %7326 = vmatpush1.msra.mxu0 0.0
    %7327 = vmatprep.subr.mxu0 0.0
    %7328 = vmatpush1.msra.mxu0 0.0
    %7329 = vmatprep.subr.mxu0 0.0
    %7330 = vmatpush1.msra.mxu0 0.0
    %7331 = vmatprep.subr.mxu0 0.0
    %7332 = vmatpush1.msra.mxu0 0.0
    %7333 = vmatprep.subr.mxu0 0.0
    %7334 = vmatpush1.msra.mxu0 0.0
    %7335 = vmatprep.subr.mxu0 0.0
    %7336 = vmatpush1.msra.mxu0 0.0
    %7337 = vmatprep.subr.mxu0 0.0
    %7338 = vmatpush1.msra.mxu0 0.0
    %7339 = vmatprep.subr.mxu0 0.0
    %7340 = vmatpush1.msra.mxu0 0.0
    %7341 = vmatprep.subr.mxu0 0.0
    %7342 = vmatpush1.msra.mxu0 0.0
    %7343 = vmatprep.subr.mxu0 0.0
    %7344 = vmatpush1.msra.mxu0 0.0
    %7345 = vmatprep.subr.mxu0 0.0
    %7346 = vmatpush1.msra.mxu0 0.0
    %7347 = vmatprep.subr.mxu0 0.0
    %7348 = vmatpush1.msra.mxu0 0.0
    %7349 = vmatprep.subr.mxu0 0.0
    %7350 = vmatpush1.msra.mxu0 0.0
    %7351 = vmatprep.subr.mxu0 0.0
    %7352 = vmatpush1.msra.mxu0 0.0
    %7353 = vmatprep.subr.mxu0 0.0
    %7354 = vmatpush1.msra.mxu0 0.0
    %7355 = vmatprep.subr.mxu0 0.0
    %7356 = vmatpush1.msra.mxu0 0.0
    %7357 = vmatprep.subr.mxu0 0.0
    %7358 = vmatpush1.msra.mxu0 0.0
    %7359 = vmatprep.subr.mxu0 0.0
    %7360 = vmatpush1.msra.mxu0 0.0
    %7361 = vmatprep.subr.mxu0 0.0
    %7362 = vmatpush1.msra.mxu0 0.0
    %7363 = vmatprep.subr.mxu0 0.0
    %7364 = vmatpush1.msra.mxu0 0.0
    %7365 = vmatprep.subr.mxu0 0.0
    %7366 = vmatpush1.msra.mxu0 0.0
    %7367 = vmatprep.subr.mxu0 0.0
    %7368 = vmatpush1.msra.mxu0 0.0
    %7369 = vmatprep.subr.mxu0 0.0
    %7370 = vmatpush1.msra.mxu0 0.0
    %7371 = vmatprep.mubr.f32.mxu0 0.0
    %7372 = vmatmul.mubr.f32.gmra.mrb[0].mxu0 %v7302
    %v7373 = vpop.f32.mrb[0].mxu0
    %v7374 = vadd.f32 0.0, %v7373
    %v7375 = vpop.f32.mrb[0].mxu0
    %v7376 = vadd.f32 0.0, %v7375
    %7377 = vmatprep.mubr.f32.mxu0 0.0
    %7378 = vmatmul.mubr.f32.gmra.mrb[0].mxu0 %v7305
    %v7379 = vpop.f32.mrb[0].mxu0
    %v7380 = vadd.f32 0.0, %v7379
    %v7381 = vpop.f32.mrb[0].mxu0
    %v7382 = vadd.f32 0.0, %v7381
    %7383 = vdwg.mxu0
    %v7384 = vadd.f32 %v7287, %v7374
    %v7385 = vadd.f32 %v7288, %v7376
    %v7386 = vadd.f32 %v7289, %v7380
    %v7387 = vadd.f32 %v7290, %v7382
    %s7388 = scalar_lea.vmem %s1, 896
    %v7389 = vld [vmem:[%s7388] sm:$0xff]
    %v7390 = vld [vmem:[%s7388 + $0x8] sm:$0xff]
    %7391 = vrot.lane.b32.xlu0 %v7010, 115
    %v7392 = vpop.permute.xlu0 %7391
    %7393 = vrot.lane.b32.xlu0 %v7011, 115
    %v7394 = vpop.permute.xlu0 %7393
    %vm7395 = vcmask 941056
    %v7396 = vsel %vm7395, %v7392, %v7394
    %v7400 = vsel %vm7027, %v7389, 0
    %v7403 = vsel %vm7027, %v7390, 0
    %7405 = vmatprep.subr.mxu0 %v7394
    %7406 = vmatpush1.msra.mxu0 %v7396
    %7407 = vmatprep.subr.mxu0 0.0
    %7408 = vmatpush1.msra.mxu0 0.0
    %7409 = vmatprep.subr.mxu0 0.0
    %7410 = vmatpush1.msra.mxu0 0.0
    %7411 = vmatprep.subr.mxu0 0.0
    %7412 = vmatpush1.msra.mxu0 0.0
    %7413 = vmatprep.subr.mxu0 0.0
    %7414 = vmatpush1.msra.mxu0 0.0
    %7415 = vmatprep.subr.mxu0 0.0
    %7416 = vmatpush1.msra.mxu0 0.0
    %7417 = vmatprep.subr.mxu0 0.0
    %7418 = vmatpush1.msra.mxu0 0.0
    %7419 = vmatprep.subr.mxu0 0.0
    %7420 = vmatpush1.msra.mxu0 0.0
    %7421 = vmatprep.subr.mxu0 0.0
    %7422 = vmatpush1.msra.mxu0 0.0
    %7423 = vmatprep.subr.mxu0 0.0
    %7424 = vmatpush1.msra.mxu0 0.0
    %7425 = vmatprep.subr.mxu0 0.0
    %7426 = vmatpush1.msra.mxu0 0.0
    %7427 = vmatprep.subr.mxu0 0.0
    %7428 = vmatpush1.msra.mxu0 0.0
    %7429 = vmatprep.subr.mxu0 0.0
    %7430 = vmatpush1.msra.mxu0 0.0
    %7431 = vmatprep.subr.mxu0 0.0
    %7432 = vmatpush1.msra.mxu0 0.0
    %7433 = vmatprep.subr.mxu0 0.0
    %7434 = vmatpush1.msra.mxu0 0.0
    %7435 = vmatprep.subr.mxu0 0.0
    %7436 = vmatpush1.msra.mxu0 0.0
    %7437 = vmatprep.subr.mxu0 0.0
    %7438 = vmatpush1.msra.mxu0 0.0
    %7439 = vmatprep.subr.mxu0 0.0
    %7440 = vmatpush1.msra.mxu0 0.0
    %7441 = vmatprep.subr.mxu0 0.0
    %7442 = vmatpush1.msra.mxu0 0.0
    %7443 = vmatprep.subr.mxu0 0.0
    %7444 = vmatpush1.msra.mxu0 0.0
    %7445 = vmatprep.subr.mxu0 0.0
    %7446 = vmatpush1.msra.mxu0 0.0
    %7447 = vmatprep.subr.mxu0 0.0
    %7448 = vmatpush1.msra.mxu0 0.0
    %7449 = vmatprep.subr.mxu0 0.0
    %7450 = vmatpush1.msra.mxu0 0.0
    %7451 = vmatprep.subr.mxu0 0.0
    %7452 = vmatpush1.msra.mxu0 0.0
    %7453 = vmatprep.subr.mxu0 0.0
    %7454 = vmatpush1.msra.mxu0 0.0
    %7455 = vmatprep.subr.mxu0 0.0
    %7456 = vmatpush1.msra.mxu0 0.0
    %7457 = vmatprep.subr.mxu0 0.0
    %7458 = vmatpush1.msra.mxu0 0.0
    %7459 = vmatprep.subr.mxu0 0.0
    %7460 = vmatpush1.msra.mxu0 0.0
    %7461 = vmatprep.subr.mxu0 0.0
    %7462 = vmatpush1.msra.mxu0 0.0
    %7463 = vmatprep.subr.mxu0 0.0
    %7464 = vmatpush1.msra.mxu0 0.0
    %7465 = vmatprep.subr.mxu0 0.0
    %7466 = vmatpush1.msra.mxu0 0.0
    %7467 = vmatprep.subr.mxu0 0.0
    %7468 = vmatpush1.msra.mxu0 0.0
    %7469 = vmatprep.mubr.f32.mxu0 0.0
    %7470 = vmatmul.mubr.f32.gmra.mrb[0].mxu0 %v7400
    %v7471 = vpop.f32.mrb[0].mxu0
    %v7472 = vadd.f32 0.0, %v7471
    %v7473 = vpop.f32.mrb[0].mxu0
    %v7474 = vadd.f32 0.0, %v7473
    %7475 = vmatprep.mubr.f32.mxu0 0.0
    %7476 = vmatmul.mubr.f32.gmra.mrb[0].mxu0 %v7403
    %v7477 = vpop.f32.mrb[0].mxu0
    %v7478 = vadd.f32 0.0, %v7477
    %v7479 = vpop.f32.mrb[0].mxu0
    %v7480 = vadd.f32 0.0, %v7479
    %7481 = vdwg.mxu0
    %v7482 = vadd.f32 %v7384, %v7472
    %v7483 = vadd.f32 %v7385, %v7474
    %v7484 = vadd.f32 %v7386, %v7478
    %v7485 = vadd.f32 %v7387, %v7480
    %s7486 = scalar_lea.vmem %s1, 928
    %v7487 = vld [vmem:[%s7486] sm:$0xff]
    %v7488 = vld [vmem:[%s7486 + $0x8] sm:$0xff]
    %7489 = vrot.lane.b32.xlu0 %v7010, 114
    %v7490 = vpop.permute.xlu0 %7489
    %7491 = vrot.lane.b32.xlu0 %v7011, 114
    %v7492 = vpop.permute.xlu0 %7491
    %vm7493 = vcmask 932864
    %v7494 = vsel %vm7493, %v7490, %v7492
    %v7498 = vsel %vm7027, %v7487, 0
    %v7501 = vsel %vm7027, %v7488, 0
    %7503 = vmatprep.subr.mxu0 %v7492
    %7504 = vmatpush1.msra.mxu0 %v7494
    %7505 = vmatprep.subr.mxu0 0.0
    %7506 = vmatpush1.msra.mxu0 0.0
    %7507 = vmatprep.subr.mxu0 0.0
    %7508 = vmatpush1.msra.mxu0 0.0
    %7509 = vmatprep.subr.mxu0 0.0
    %7510 = vmatpush1.msra.mxu0 0.0
    %7511 = vmatprep.subr.mxu0 0.0
    %7512 = vmatpush1.msra.mxu0 0.0
    %7513 = vmatprep.subr.mxu0 0.0
    %7514 = vmatpush1.msra.mxu0 0.0
    %7515 = vmatprep.subr.mxu0 0.0
    %7516 = vmatpush1.msra.mxu0 0.0
    %7517 = vmatprep.subr.mxu0 0.0
    %7518 = vmatpush1.msra.mxu0 0.0
    %7519 = vmatprep.subr.mxu0 0.0
    %7520 = vmatpush1.msra.mxu0 0.0
    %7521 = vmatprep.subr.mxu0 0.0
    %7522 = vmatpush1.msra.mxu0 0.0
    %7523 = vmatprep.subr.mxu0 0.0
    %7524 = vmatpush1.msra.mxu0 0.0
    %7525 = vmatprep.subr.mxu0 0.0
    %7526 = vmatpush1.msra.mxu0 0.0
    %7527 = vmatprep.subr.mxu0 0.0
    %7528 = vmatpush1.msra.mxu0 0.0
    %7529 = vmatprep.subr.mxu0 0.0
    %7530 = vmatpush1.msra.mxu0 0.0
    %7531 = vmatprep.subr.mxu0 0.0
    %7532 = vmatpush1.msra.mxu0 0.0
    %7533 = vmatprep.subr.mxu0 0.0
    %7534 = vmatpush1.msra.mxu0 0.0
    %7535 = vmatprep.subr.mxu0 0.0
    %7536 = vmatpush1.msra.mxu0 0.0
    %7537 = vmatprep.subr.mxu0 0.0
    %7538 = vmatpush1.msra.mxu0 0.0
    %7539 = vmatprep.subr.mxu0 0.0
    %7540 = vmatpush1.msra.mxu0 0.0
    %7541 = vmatprep.subr.mxu0 0.0
    %7542 = vmatpush1.msra.mxu0 0.0
    %7543 = vmatprep.subr.mxu0 0.0
    %7544 = vmatpush1.msra.mxu0 0.0
    %7545 = vmatprep.subr.mxu0 0.0
    %7546 = vmatpush1.msra.mxu0 0.0
    %7547 = vmatprep.subr.mxu0 0.0
    %7548 = vmatpush1.msra.mxu0 0.0
    %7549 = vmatprep.subr.mxu0 0.0
    %7550 = vmatpush1.msra.mxu0 0.0
    %7551 = vmatprep.subr.mxu0 0.0
    %7552 = vmatpush1.msra.mxu0 0.0
    %7553 = vmatprep.subr.mxu0 0.0
    %7554 = vmatpush1.msra.mxu0 0.0
    %7555 = vmatprep.subr.mxu0 0.0
    %7556 = vmatpush1.msra.mxu0 0.0
    %7557 = vmatprep.subr.mxu0 0.0
    %7558 = vmatpush1.msra.mxu0 0.0
    %7559 = vmatprep.subr.mxu0 0.0
    %7560 = vmatpush1.msra.mxu0 0.0
    %7561 = vmatprep.subr.mxu0 0.0
    %7562 = vmatpush1.msra.mxu0 0.0
    %7563 = vmatprep.subr.mxu0 0.0
    %7564 = vmatpush1.msra.mxu0 0.0
    %7565 = vmatprep.subr.mxu0 0.0
    %7566 = vmatpush1.msra.mxu0 0.0
    %7567 = vmatprep.mubr.f32.mxu0 0.0
    %7568 = vmatmul.mubr.f32.gmra.mrb[0].mxu0 %v7498
    %v7569 = vpop.f32.mrb[0].mxu0
    %v7570 = vadd.f32 0.0, %v7569
    %v7571 = vpop.f32.mrb[0].mxu0
    %v7572 = vadd.f32 0.0, %v7571
    %7573 = vmatprep.mubr.f32.mxu0 0.0
    %7574 = vmatmul.mubr.f32.gmra.mrb[0].mxu0 %v7501
    %v7575 = vpop.f32.mrb[0].mxu0
    %v7576 = vadd.f32 0.0, %v7575
    %v7577 = vpop.f32.mrb[0].mxu0
    %v7578 = vadd.f32 0.0, %v7577
    %7579 = vdwg.mxu0
    %v7580 = vadd.f32 %v7482, %v7570
    %v7581 = vadd.f32 %v7483, %v7572
    %v7582 = vadd.f32 %v7484, %v7576
    %v7583 = vadd.f32 %v7485, %v7578
    %s7584 = scalar_lea.vmem %s1, 960
    %v7585 = vld [vmem:[%s7584] sm:$0xff]
    %v7586 = vld [vmem:[%s7584 + $0x8] sm:$0xff]
    %7587 = vrot.lane.b32.xlu0 %v7010, 104
    %v7588 = vpop.permute.xlu0 %7587
    %7589 = vrot.lane.b32.xlu0 %v7011, 104
    %v7590 = vpop.permute.xlu0 %7589
    %v7591 = vsel %vm5519, %v7588, %v7590
    %v7595 = vsel %vm7027, %v7585, 0
    %v7598 = vsel %vm7027, %v7586, 0
    %7600 = vmatprep.subr.mxu0 %v7590
    %7601 = vmatpush1.msra.mxu0 %v7591
    %7602 = vmatprep.subr.mxu0 0.0
    %7603 = vmatpush1.msra.mxu0 0.0
    %7604 = vmatprep.subr.mxu0 0.0
    %7605 = vmatpush1.msra.mxu0 0.0
    %7606 = vmatprep.subr.mxu0 0.0
    %7607 = vmatpush1.msra.mxu0 0.0
    %7608 = vmatprep.subr.mxu0 0.0
    %7609 = vmatpush1.msra.mxu0 0.0
    %7610 = vmatprep.subr.mxu0 0.0
    %7611 = vmatpush1.msra.mxu0 0.0
    %7612 = vmatprep.subr.mxu0 0.0
    %7613 = vmatpush1.msra.mxu0 0.0
    %7614 = vmatprep.subr.mxu0 0.0
    %7615 = vmatpush1.msra.mxu0 0.0
    %7616 = vmatprep.subr.mxu0 0.0
    %7617 = vmatpush1.msra.mxu0 0.0
    %7618 = vmatprep.subr.mxu0 0.0
    %7619 = vmatpush1.msra.mxu0 0.0
    %7620 = vmatprep.subr.mxu0 0.0
    %7621 = vmatpush1.msra.mxu0 0.0
    %7622 = vmatprep.subr.mxu0 0.0
    %7623 = vmatpush1.msra.mxu0 0.0
    %7624 = vmatprep.subr.mxu0 0.0
    %7625 = vmatpush1.msra.mxu0 0.0
    %7626 = vmatprep.subr.mxu0 0.0
    %7627 = vmatpush1.msra.mxu0 0.0
    %7628 = vmatprep.subr.mxu0 0.0
    %7629 = vmatpush1.msra.mxu0 0.0
    %7630 = vmatprep.subr.mxu0 0.0
    %7631 = vmatpush1.msra.mxu0 0.0
    %7632 = vmatprep.subr.mxu0 0.0
    %7633 = vmatpush1.msra.mxu0 0.0
    %7634 = vmatprep.subr.mxu0 0.0
    %7635 = vmatpush1.msra.mxu0 0.0
    %7636 = vmatprep.subr.mxu0 0.0
    %7637 = vmatpush1.msra.mxu0 0.0
    %7638 = vmatprep.subr.mxu0 0.0
    %7639 = vmatpush1.msra.mxu0 0.0
    %7640 = vmatprep.subr.mxu0 0.0
    %7641 = vmatpush1.msra.mxu0 0.0
    %7642 = vmatprep.subr.mxu0 0.0
    %7643 = vmatpush1.msra.mxu0 0.0
    %7644 = vmatprep.subr.mxu0 0.0
    %7645 = vmatpush1.msra.mxu0 0.0
    %7646 = vmatprep.subr.mxu0 0.0
    %7647 = vmatpush1.msra.mxu0 0.0
    %7648 = vmatprep.subr.mxu0 0.0
    %7649 = vmatpush1.msra.mxu0 0.0
    %7650 = vmatprep.subr.mxu0 0.0
    %7651 = vmatpush1.msra.mxu0 0.0
    %7652 = vmatprep.subr.mxu0 0.0
    %7653 = vmatpush1.msra.mxu0 0.0
    %7654 = vmatprep.subr.mxu0 0.0
    %7655 = vmatpush1.msra.mxu0 0.0
    %7656 = vmatprep.subr.mxu0 0.0
    %7657 = vmatpush1.msra.mxu0 0.0
    %7658 = vmatprep.subr.mxu0 0.0
    %7659 = vmatpush1.msra.mxu0 0.0
    %7660 = vmatprep.subr.mxu0 0.0
    %7661 = vmatpush1.msra.mxu0 0.0
    %7662 = vmatprep.subr.mxu0 0.0
    %7663 = vmatpush1.msra.mxu0 0.0
    %7664 = vmatprep.mubr.f32.mxu0 0.0
    %7665 = vmatmul.mubr.f32.gmra.mrb[0].mxu0 %v7595
    %v7666 = vpop.f32.mrb[0].mxu0
    %v7667 = vadd.f32 0.0, %v7666
    %v7668 = vpop.f32.mrb[0].mxu0
    %v7669 = vadd.f32 0.0, %v7668
    %7670 = vmatprep.mubr.f32.mxu0 0.0
    %7671 = vmatmul.mubr.f32.gmra.mrb[0].mxu0 %v7598
    %v7672 = vpop.f32.mrb[0].mxu0
    %v7673 = vadd.f32 0.0, %v7672
    %v7674 = vpop.f32.mrb[0].mxu0
    %v7675 = vadd.f32 0.0, %v7674
    %7676 = vdwg.mxu0
    %v7677 = vadd.f32 %v7580, %v7667
    %v7678 = vadd.f32 %v7581, %v7669
    %v7679 = vadd.f32 %v7582, %v7673
    %v7680 = vadd.f32 %v7583, %v7675
    %s7681 = scalar_lea.vmem %s1, 992
    %v7682 = vld [vmem:[%s7681] sm:$0xff]
    %v7683 = vld [vmem:[%s7681 + $0x8] sm:$0xff]
    %7684 = vrot.lane.b32.xlu0 %v7010, 103
    %v7685 = vpop.permute.xlu0 %7684
    %7686 = vrot.lane.b32.xlu0 %v7011, 103
    %v7687 = vpop.permute.xlu0 %7686
    %vm7688 = vcmask 842752
    %v7689 = vsel %vm7688, %v7685, %v7687
    %v7693 = vsel %vm7027, %v7682, 0
    %v7696 = vsel %vm7027, %v7683, 0
    %7698 = vmatprep.subr.mxu0 %v7687
    %7699 = vmatpush1.msra.mxu0 %v7689
    %7700 = vmatprep.subr.mxu0 0.0
    %7701 = vmatpush1.msra.mxu0 0.0
    %7702 = vmatprep.subr.mxu0 0.0
    %7703 = vmatpush1.msra.mxu0 0.0
    %7704 = vmatprep.subr.mxu0 0.0
    %7705 = vmatpush1.msra.mxu0 0.0
    %7706 = vmatprep.subr.mxu0 0.0
    %7707 = vmatpush1.msra.mxu0 0.0
    %7708 = vmatprep.subr.mxu0 0.0
    %7709 = vmatpush1.msra.mxu0 0.0
    %7710 = vmatprep.subr.mxu0 0.0
    %7711 = vmatpush1.msra.mxu0 0.0
    %7712 = vmatprep.subr.mxu0 0.0
    %7713 = vmatpush1.msra.mxu0 0.0
    %7714 = vmatprep.subr.mxu0 0.0
    %7715 = vmatpush1.msra.mxu0 0.0
    %7716 = vmatprep.subr.mxu0 0.0
    %7717 = vmatpush1.msra.mxu0 0.0
    %7718 = vmatprep.subr.mxu0 0.0
    %7719 = vmatpush1.msra.mxu0 0.0
    %7720 = vmatprep.subr.mxu0 0.0
    %7721 = vmatpush1.msra.mxu0 0.0
    %7722 = vmatprep.subr.mxu0 0.0
    %7723 = vmatpush1.msra.mxu0 0.0
    %7724 = vmatprep.subr.mxu0 0.0
    %7725 = vmatpush1.msra.mxu0 0.0
    %7726 = vmatprep.subr.mxu0 0.0
    %7727 = vmatpush1.msra.mxu0 0.0
    %7728 = vmatprep.subr.mxu0 0.0
    %7729 = vmatpush1.msra.mxu0 0.0
    %7730 = vmatprep.subr.mxu0 0.0
    %7731 = vmatpush1.msra.mxu0 0.0
    %7732 = vmatprep.subr.mxu0 0.0
    %7733 = vmatpush1.msra.mxu0 0.0
    %7734 = vmatprep.subr.mxu0 0.0
    %7735 = vmatpush1.msra.mxu0 0.0
    %7736 = vmatprep.subr.mxu0 0.0
    %7737 = vmatpush1.msra.mxu0 0.0
    %7738 = vmatprep.subr.mxu0 0.0
    %7739 = vmatpush1.msra.mxu0 0.0
    %7740 = vmatprep.subr.mxu0 0.0
    %7741 = vmatpush1.msra.mxu0 0.0
    %7742 = vmatprep.subr.mxu0 0.0
    %7743 = vmatpush1.msra.mxu0 0.0
    %7744 = vmatprep.subr.mxu0 0.0
    %7745 = vmatpush1.msra.mxu0 0.0
    %7746 = vmatprep.subr.mxu0 0.0
    %7747 = vmatpush1.msra.mxu0 0.0
    %7748 = vmatprep.subr.mxu0 0.0
    %7749 = vmatpush1.msra.mxu0 0.0
    %7750 = vmatprep.subr.mxu0 0.0
    %7751 = vmatpush1.msra.mxu0 0.0
    %7752 = vmatprep.subr.mxu0 0.0
    %7753 = vmatpush1.msra.mxu0 0.0
    %7754 = vmatprep.subr.mxu0 0.0
    %7755 = vmatpush1.msra.mxu0 0.0
    %7756 = vmatprep.subr.mxu0 0.0
    %7757 = vmatpush1.msra.mxu0 0.0
    %7758 = vmatprep.subr.mxu0 0.0
    %7759 = vmatpush1.msra.mxu0 0.0
    %7760 = vmatprep.subr.mxu0 0.0
    %7761 = vmatpush1.msra.mxu0 0.0
    %7762 = vmatprep.mubr.f32.mxu0 0.0
    %7763 = vmatmul.mubr.f32.gmra.mrb[0].mxu0 %v7693
    %v7764 = vpop.f32.mrb[0].mxu0
    %v7765 = vadd.f32 0.0, %v7764
    %v7766 = vpop.f32.mrb[0].mxu0
    %v7767 = vadd.f32 0.0, %v7766
    %7768 = vmatprep.mubr.f32.mxu0 0.0
    %7769 = vmatmul.mubr.f32.gmra.mrb[0].mxu0 %v7696
    %v7770 = vpop.f32.mrb[0].mxu0
    %v7771 = vadd.f32 0.0, %v7770
    %v7772 = vpop.f32.mrb[0].mxu0
    %v7773 = vadd.f32 0.0, %v7772
    %7774 = vdwg.mxu0
    %v7775 = vadd.f32 %v7677, %v7765
    %v7776 = vadd.f32 %v7678, %v7767
    %v7777 = vadd.f32 %v7679, %v7771
    %v7778 = vadd.f32 %v7680, %v7773
    %s7779 = scalar_lea.vmem %s1, 1024
    %v7780 = vld [vmem:[%s7779] sm:$0xff]
    %v7781 = vld [vmem:[%s7779 + $0x8] sm:$0xff]
    %7782 = vrot.lane.b32.xlu0 %v7010, 102
    %v7783 = vpop.permute.xlu0 %7782
    %7784 = vrot.lane.b32.xlu0 %v7011, 102
    %v7785 = vpop.permute.xlu0 %7784
    %vm7786 = vcmask 834560
    %v7787 = vsel %vm7786, %v7783, %v7785
    %v7791 = vsel %vm7027, %v7780, 0
    %v7794 = vsel %vm7027, %v7781, 0
    %7796 = vmatprep.subr.mxu0 %v7785
    %7797 = vmatpush1.msra.mxu0 %v7787
    %7798 = vmatprep.subr.mxu0 0.0
    %7799 = vmatpush1.msra.mxu0 0.0
    %7800 = vmatprep.subr.mxu0 0.0
    %7801 = vmatpush1.msra.mxu0 0.0
    %7802 = vmatprep.subr.mxu0 0.0
    %7803 = vmatpush1.msra.mxu0 0.0
    %7804 = vmatprep.subr.mxu0 0.0
    %7805 = vmatpush1.msra.mxu0 0.0
    %7806 = vmatprep.subr.mxu0 0.0
    %7807 = vmatpush1.msra.mxu0 0.0
    %7808 = vmatprep.subr.mxu0 0.0
    %7809 = vmatpush1.msra.mxu0 0.0
    %7810 = vmatprep.subr.mxu0 0.0
    %7811 = vmatpush1.msra.mxu0 0.0
    %7812 = vmatprep.subr.mxu0 0.0
    %7813 = vmatpush1.msra.mxu0 0.0
    %7814 = vmatprep.subr.mxu0 0.0
    %7815 = vmatpush1.msra.mxu0 0.0
    %7816 = vmatprep.subr.mxu0 0.0
    %7817 = vmatpush1.msra.mxu0 0.0
    %7818 = vmatprep.subr.mxu0 0.0
    %7819 = vmatpush1.msra.mxu0 0.0
    %7820 = vmatprep.subr.mxu0 0.0
    %7821 = vmatpush1.msra.mxu0 0.0
    %7822 = vmatprep.subr.mxu0 0.0
    %7823 = vmatpush1.msra.mxu0 0.0
    %7824 = vmatprep.subr.mxu0 0.0
    %7825 = vmatpush1.msra.mxu0 0.0
    %7826 = vmatprep.subr.mxu0 0.0
    %7827 = vmatpush1.msra.mxu0 0.0
    %7828 = vmatprep.subr.mxu0 0.0
    %7829 = vmatpush1.msra.mxu0 0.0
    %7830 = vmatprep.subr.mxu0 0.0
    %7831 = vmatpush1.msra.mxu0 0.0
    %7832 = vmatprep.subr.mxu0 0.0
    %7833 = vmatpush1.msra.mxu0 0.0
    %7834 = vmatprep.subr.mxu0 0.0
    %7835 = vmatpush1.msra.mxu0 0.0
    %7836 = vmatprep.subr.mxu0 0.0
    %7837 = vmatpush1.msra.mxu0 0.0
    %7838 = vmatprep.subr.mxu0 0.0
    %7839 = vmatpush1.msra.mxu0 0.0
    %7840 = vmatprep.subr.mxu0 0.0
    %7841 = vmatpush1.msra.mxu0 0.0
    %7842 = vmatprep.subr.mxu0 0.0
    %7843 = vmatpush1.msra.mxu0 0.0
    %7844 = vmatprep.subr.mxu0 0.0
    %7845 = vmatpush1.msra.mxu0 0.0
    %7846 = vmatprep.subr.mxu0 0.0
    %7847 = vmatpush1.msra.mxu0 0.0
    %7848 = vmatprep.subr.mxu0 0.0
    %7849 = vmatpush1.msra.mxu0 0.0
    %7850 = vmatprep.subr.mxu0 0.0
    %7851 = vmatpush1.msra.mxu0 0.0
    %7852 = vmatprep.subr.mxu0 0.0
    %7853 = vmatpush1.msra.mxu0 0.0
    %7854 = vmatprep.subr.mxu0 0.0
    %7855 = vmatpush1.msra.mxu0 0.0
    %7856 = vmatprep.subr.mxu0 0.0
    %7857 = vmatpush1.msra.mxu0 0.0
    %7858 = vmatprep.subr.mxu0 0.0
    %7859 = vmatpush1.msra.mxu0 0.0
    %7860 = vmatprep.mubr.f32.mxu0 0.0
    %7861 = vmatmul.mubr.f32.gmra.mrb[0].mxu0 %v7791
    %v7862 = vpop.f32.mrb[0].mxu0
    %v7863 = vadd.f32 0.0, %v7862
    %v7864 = vpop.f32.mrb[0].mxu0
    %v7865 = vadd.f32 0.0, %v7864
    %7866 = vmatprep.mubr.f32.mxu0 0.0
    %7867 = vmatmul.mubr.f32.gmra.mrb[0].mxu0 %v7794
    %v7868 = vpop.f32.mrb[0].mxu0
    %v7869 = vadd.f32 0.0, %v7868
    %v7870 = vpop.f32.mrb[0].mxu0
    %v7871 = vadd.f32 0.0, %v7870
    %7872 = vdwg.mxu0
    %v7873 = vadd.f32 %v7775, %v7863
    %v7874 = vadd.f32 %v7776, %v7865
    %v7875 = vadd.f32 %v7777, %v7869
    %v7876 = vadd.f32 %v7778, %v7871
    %7878 = vset.pattern.permute.xlu0 0
    %7879 = vperm.xlu0 %7878, %v7008
    %v7880 = vpop.permute.xlu0 %7879
    %7883 = vset.pattern.permute.xlu0 0
    %7884 = vperm.xlu0 %7883, %v7009
    %v7885 = vpop.permute.xlu0 %7884
    %v7887 = vadd.f32 %v7873, %v7880
    %v7888 = vadd.f32 %v7874, %v7880
    %v7889 = vadd.f32 %v7875, %v7885
    %v7890 = vadd.f32 %v7876, %v7885
    %v7891 = vmax.f32 %v7887, 0.0
    %v7892 = vmax.f32 %v7888, 0.0
    %v7893 = vmax.f32 %v7889, 0.0
    %v7894 = vmax.f32 %v7890, 0.0
    %7899 = vrot.lane.b32.xlu0 %v7891, 116
    %v7900 = vpop.permute.xlu0 %7899
    %7901 = vrot.lane.b32.xlu0 %v7892, 116
    %v7902 = vpop.permute.xlu0 %7901
    %7903 = vrot.lane.b32.xlu0 %v7893, 116
    %v7904 = vpop.permute.xlu0 %7903
    %7905 = vrot.lane.b32.xlu0 %v7894, 116
    %v7906 = vpop.permute.xlu0 %7905
    %v7907 = vsel %vm6854, %v7900, %v7902
    %v7908 = vsel %vm6854, %v7904, %v7906
    %v7913 = vmax.f32 %v7891, %v7907
    %v7914 = vmax.f32 %v7892, %v7902
    %v7915 = vmax.f32 %v7893, %v7908
    %v7916 = vmax.f32 %v7894, %v7906
    %7921 = vrot.lane.b32.xlu0 %v7913, 127
    %v7922 = vpop.permute.xlu0 %7921
    %7923 = vrot.lane.b32.xlu0 %v7914, 127
    %v7924 = vpop.permute.xlu0 %7923
    %7925 = vrot.lane.b32.xlu0 %v7915, 127
    %v7926 = vpop.permute.xlu0 %7925
    %7927 = vrot.lane.b32.xlu0 %v7916, 127
    %v7928 = vpop.permute.xlu0 %7927
    %v7929 = vsel %vm277, %v7922, %v7924
    %v7930 = vsel %vm277, %v7926, %v7928
    %v7935 = vmax.f32 %v7913, %v7929
    %v7936 = vmax.f32 %v7914, %v7924
    %v7937 = vmax.f32 %v7915, %v7930
    %v7938 = vmax.f32 %v7916, %v7928
    %v7939 = vld [vmem:[%s3 + $0x1320] sm:$0xff]
    %v7940 = vld [vmem:[%s3 + $0x1338] sm:$0xff]
    %v7941 = vld [vmem:[%s3 + $0x1350] sm:$0xff]
    %v7942 = vld [vmem:[%s3 + $0x1368] sm:$0xff]
    %v7943 = vld [vmem:[%s3 + $0x1380] sm:$0xff]
    %v7944 = vld [vmem:[%s3 + $0x1398] sm:$0xff]
    %v7945 = vld [vmem:[%s3 + $0x13b0] sm:$0xff]
    %v7946 = vld [vmem:[%s3 + $0x13c8] sm:$0xff]
    %v7947 = vld [vmem:[%s3 + $0x13e0] sm:$0xff]
    %v7948 = vld [vmem:[%s3 + $0x13f8] sm:$0xff]
    %v7949 = vld [vmem:[%s3 + $0x1410] sm:$0x1]
    %vm7950 = vcmask 662528
    %v7952 = vsel %vm7950, %v7935, 0
    %v7955 = vsel %vm7950, %v7937, 0
    %vm7957 = vcmask 1040384
    %v7959 = vsel %vm7957, %v7949, 0
    %7961 = vmatprep.subr.mxu0 0.0
    %7962 = vmatpush1.msra.mxu0 %v7939
    %7963 = vmatprep.subr.mxu0 0.0
    %7964 = vmatpush1.msra.mxu0 %v7940
    %7965 = vmatprep.subr.mxu0 0.0
    %7966 = vmatpush1.msra.mxu0 %v7941
    %7967 = vmatprep.subr.mxu0 0.0
    %7968 = vmatpush1.msra.mxu0 %v7942
    %7969 = vmatprep.subr.mxu0 0.0
    %7970 = vmatpush1.msra.mxu0 %v7943
    %7971 = vmatprep.subr.mxu0 0.0
    %7972 = vmatpush1.msra.mxu0 %v7944
    %7973 = vmatprep.subr.mxu0 0.0
    %7974 = vmatpush1.msra.mxu0 %v7945
    %7975 = vmatprep.subr.mxu0 0.0
    %7976 = vmatpush1.msra.mxu0 %v7946
    %7977 = vmatprep.subr.mxu0 0.0
    %7978 = vmatpush1.msra.mxu0 %v7947
    %7979 = vmatprep.subr.mxu0 0.0
    %7980 = vmatpush1.msra.mxu0 %v7948
    %7981 = vmatprep.subr.mxu0 0.0
    %7982 = vmatpush1.msra.mxu0 %v7959
    %7983 = vmatprep.subr.mxu0 0.0
    %7984 = vmatpush1.msra.mxu0 0.0
    %7985 = vmatprep.subr.mxu0 0.0
    %7986 = vmatpush1.msra.mxu0 0.0
    %7987 = vmatprep.subr.mxu0 0.0
    %7988 = vmatpush1.msra.mxu0 0.0
    %7989 = vmatprep.subr.mxu0 0.0
    %7990 = vmatpush1.msra.mxu0 0.0
    %7991 = vmatprep.subr.mxu0 0.0
    %7992 = vmatpush1.msra.mxu0 0.0
    %7993 = vmatprep.subr.mxu0 0.0
    %7994 = vmatpush1.msra.mxu0 0.0
    %7995 = vmatprep.subr.mxu0 0.0
    %7996 = vmatpush1.msra.mxu0 0.0
    %7997 = vmatprep.subr.mxu0 0.0
    %7998 = vmatpush1.msra.mxu0 0.0
    %7999 = vmatprep.subr.mxu0 0.0
    %8000 = vmatpush1.msra.mxu0 0.0
    %8001 = vmatprep.subr.mxu0 0.0
    %8002 = vmatpush1.msra.mxu0 0.0
    %8003 = vmatprep.subr.mxu0 0.0
    %8004 = vmatpush1.msra.mxu0 0.0
    %8005 = vmatprep.subr.mxu0 0.0
    %8006 = vmatpush1.msra.mxu0 0.0
    %8007 = vmatprep.subr.mxu0 0.0
    %8008 = vmatpush1.msra.mxu0 0.0
    %8009 = vmatprep.subr.mxu0 0.0
    %8010 = vmatpush1.msra.mxu0 0.0
    %8011 = vmatprep.subr.mxu0 0.0
    %8012 = vmatpush1.msra.mxu0 0.0
    %8013 = vmatprep.subr.mxu0 0.0
    %8014 = vmatpush1.msra.mxu0 0.0
    %8015 = vmatprep.subr.mxu0 0.0
    %8016 = vmatpush1.msra.mxu0 0.0
    %8017 = vmatprep.subr.mxu0 0.0
    %8018 = vmatpush1.msra.mxu0 0.0
    %8019 = vmatprep.subr.mxu0 0.0
    %8020 = vmatpush1.msra.mxu0 0.0
    %8021 = vmatprep.subr.mxu0 0.0
    %8022 = vmatpush1.msra.mxu0 0.0
    %8023 = vmatprep.subr.mxu0 0.0
    %8024 = vmatpush1.msra.mxu0 0.0
    %8025 = vmatprep.mubr.f32.mxu0 0.0
    %8026 = vmatmul.mubr.f32.gmra.mrb[0].mxu0 %v7952
    %v8027 = vpop.f32.mrb[0].mxu0
    %v8028 = vadd.f32 0.0, %v8027
    %v8029 = vpop.f32.mrb[0].mxu0
    %8030 = vmatprep.mubr.f32.mxu0 0.0
    %8031 = vmatmul.mubr.f32.gmra.mrb[0].mxu0 %v7955
    %v8032 = vpop.f32.mrb[0].mxu0
    %v8033 = vadd.f32 0.0, %v8032
    %v8034 = vpop.f32.mrb[0].mxu0
    %8035 = vdwg.mxu0
    %8038 = vrot.lane.b32.xlu0 %v8028, 7
    %v8039 = vpop.permute.xlu0 %8038
    %8040 = vrot.lane.b32.xlu0 %v8033, 7
    %v8041 = vpop.permute.xlu0 %8040
    %vm8044 = vcmask 285752
    %8045 = vst.msk [vmem:[#allocation4] sm:$0xff] %vm8044, %v8039
    %8046 = vst.msk [vmem:[#allocation4 + $0x8] sm:$0xff] %vm8044, %v8041
    %8049 = vrot.lane.b32.xlu0 %v7935, 8
    %v8050 = vpop.permute.xlu0 %8049
    %8051 = vrot.lane.b32.xlu0 %v7936, 8
    %v8052 = vpop.permute.xlu0 %8051
    %8053 = vrot.lane.b32.xlu0 %v7937, 8
    %v8054 = vpop.permute.xlu0 %8053
    %8055 = vrot.lane.b32.xlu0 %v7938, 8
    %v8056 = vpop.permute.xlu0 %8055
    %v8057 = vsel %vm7027, %v8050, %v8052
    %v8058 = vsel %vm7027, %v8054, %v8056
    %v8059 = vsel %vm7950, %v8057, 0
    %v8061 = vsel %vm7950, %v8058, 0
    %8063 = vmatprep.subr.mxu0 0.0
    %8064 = vmatpush1.msra.mxu0 %v7939
    %8065 = vmatprep.subr.mxu0 0.0
    %8066 = vmatpush1.msra.mxu0 %v7940
    %8067 = vmatprep.subr.mxu0 0.0
    %8068 = vmatpush1.msra.mxu0 %v7941
    %8069 = vmatprep.subr.mxu0 0.0
    %8070 = vmatpush1.msra.mxu0 %v7942
    %8071 = vmatprep.subr.mxu0 0.0
    %8072 = vmatpush1.msra.mxu0 %v7943
    %8073 = vmatprep.subr.mxu0 0.0
    %8074 = vmatpush1.msra.mxu0 %v7944
    %8075 = vmatprep.subr.mxu0 0.0
    %8076 = vmatpush1.msra.mxu0 %v7945
    %8077 = vmatprep.subr.mxu0 0.0
    %8078 = vmatpush1.msra.mxu0 %v7946
    %8079 = vmatprep.subr.mxu0 0.0
    %8080 = vmatpush1.msra.mxu0 %v7947
    %8081 = vmatprep.subr.mxu0 0.0
    %8082 = vmatpush1.msra.mxu0 %v7948
    %8083 = vmatprep.subr.mxu0 0.0
    %8084 = vmatpush1.msra.mxu0 %v7959
    %8085 = vmatprep.subr.mxu0 0.0
    %8086 = vmatpush1.msra.mxu0 0.0
    %8087 = vmatprep.subr.mxu0 0.0
    %8088 = vmatpush1.msra.mxu0 0.0
    %8089 = vmatprep.subr.mxu0 0.0
    %8090 = vmatpush1.msra.mxu0 0.0
    %8091 = vmatprep.subr.mxu0 0.0
    %8092 = vmatpush1.msra.mxu0 0.0
    %8093 = vmatprep.subr.mxu0 0.0
    %8094 = vmatpush1.msra.mxu0 0.0
    %8095 = vmatprep.subr.mxu0 0.0
    %8096 = vmatpush1.msra.mxu0 0.0
    %8097 = vmatprep.subr.mxu0 0.0
    %8098 = vmatpush1.msra.mxu0 0.0
    %8099 = vmatprep.subr.mxu0 0.0
    %8100 = vmatpush1.msra.mxu0 0.0
    %8101 = vmatprep.subr.mxu0 0.0
    %8102 = vmatpush1.msra.mxu0 0.0
    %8103 = vmatprep.subr.mxu0 0.0
    %8104 = vmatpush1.msra.mxu0 0.0
    %8105 = vmatprep.subr.mxu0 0.0
    %8106 = vmatpush1.msra.mxu0 0.0
    %8107 = vmatprep.subr.mxu0 0.0
    %8108 = vmatpush1.msra.mxu0 0.0
    %8109 = vmatprep.subr.mxu0 0.0
    %8110 = vmatpush1.msra.mxu0 0.0
    %8111 = vmatprep.subr.mxu0 0.0
    %8112 = vmatpush1.msra.mxu0 0.0
    %8113 = vmatprep.subr.mxu0 0.0
    %8114 = vmatpush1.msra.mxu0 0.0
    %8115 = vmatprep.subr.mxu0 0.0
    %8116 = vmatpush1.msra.mxu0 0.0
    %8117 = vmatprep.subr.mxu0 0.0
    %8118 = vmatpush1.msra.mxu0 0.0
    %8119 = vmatprep.subr.mxu0 0.0
    %8120 = vmatpush1.msra.mxu0 0.0
    %8121 = vmatprep.subr.mxu0 0.0
    %8122 = vmatpush1.msra.mxu0 0.0
    %8123 = vmatprep.subr.mxu0 0.0
    %8124 = vmatpush1.msra.mxu0 0.0
    %8125 = vmatprep.subr.mxu0 0.0
    %8126 = vmatpush1.msra.mxu0 0.0
    %8127 = vmatprep.mubr.f32.mxu0 0.0
    %8128 = vmatmul.mubr.f32.gmra.mrb[0].mxu0 %v8059
    %v8129 = vpop.f32.mrb[0].mxu0
    %v8130 = vadd.f32 0.0, %v8129
    %v8131 = vpop.f32.mrb[0].mxu0
    %8132 = vmatprep.mubr.f32.mxu0 0.0
    %8133 = vmatmul.mubr.f32.gmra.mrb[0].mxu0 %v8061
    %v8134 = vpop.f32.mrb[0].mxu0
    %v8135 = vadd.f32 0.0, %v8134
    %v8136 = vpop.f32.mrb[0].mxu0
    %8137 = vdwg.mxu0
    %8140 = vrot.lane.b32.xlu0 %v8130, 49
    %v8141 = vpop.permute.xlu0 %8140
    %8142 = vrot.lane.b32.xlu0 %v8135, 49
    %v8143 = vpop.permute.xlu0 %8142
    %vm8146 = vcmask 630152
    %8147 = vst.msk [vmem:[#allocation4] sm:$0xff] %vm8146, %v8141
    %8148 = vst.msk [vmem:[#allocation4 + $0x8] sm:$0xff] %vm8146, %v8143
    %s8149 = scalar_lea.vmem %s2, 96
    %v8150 = vld [vmem:[%s8149] sm:$0xff]
    %v8151 = vld [vmem:[%s8149 + $0x8] sm:$0xff]
    %v8152 = vld [vmem:[%s8149 + $0x10] sm:$0xff]
    %v8153 = vld [vmem:[%s8149 + $0x18] sm:$0xff]
    %v8154 = vld [vmem:[#allocation4] sm:$0xff]
    %v8155 = vld [vmem:[#allocation4 + $0x8] sm:$0xff]
    %s8156 = scalar_lea.vmem %s1, 1152
    %v8157 = vld [vmem:[%s8156] sm:$0xff]
    %v8158 = vld [vmem:[%s8156 + $0x8] sm:$0xff]
    %v8159 = vld [vmem:[%s8156 + $0x10] sm:$0xff]
    %v8160 = vld [vmem:[%s8156 + $0x18] sm:$0xff]
    %s8161 = scalar_lea.vmem %s1, 1184
    %v8162 = vld [vmem:[%s8161] sm:$0xff]
    %v8163 = vld [vmem:[%s8161 + $0x8] sm:$0xff]
    %v8164 = vld [vmem:[%s8161 + $0x10] sm:$0xff]
    %v8165 = vld [vmem:[%s8161 + $0x18] sm:$0xff]
    %8168 = vrot.lane.b32.xlu0 %v8154, 127
    %v8169 = vpop.permute.xlu0 %8168
    %8170 = vrot.lane.b32.xlu0 %v8155, 127
    %v8171 = vpop.permute.xlu0 %8170
    %vm8174 = vcmask 130048
    %v8176 = vsel %vm8174, %v8162, 0
    %v8179 = vsel %vm8174, %v8163, 0
    %v8182 = vsel %vm8174, %v8164, 0
    %v8185 = vsel %vm8174, %v8165, 0
    %8187 = vmatprep.subr.mxu0 0.0
    %8188 = vmatpush1.msra.mxu0 %v8169
    %8189 = vmatprep.subr.mxu0 0.0
    %8190 = vmatpush1.msra.mxu0 %v8171
    %8191 = vmatprep.subr.mxu0 0.0
    %8192 = vmatpush1.msra.mxu0 0.0
    %8193 = vmatprep.subr.mxu0 0.0
    %8194 = vmatpush1.msra.mxu0 0.0
    %8195 = vmatprep.subr.mxu0 0.0
    %8196 = vmatpush1.msra.mxu0 0.0
    %8197 = vmatprep.subr.mxu0 0.0
    %8198 = vmatpush1.msra.mxu0 0.0
    %8199 = vmatprep.subr.mxu0 0.0
    %8200 = vmatpush1.msra.mxu0 0.0
    %8201 = vmatprep.subr.mxu0 0.0
    %8202 = vmatpush1.msra.mxu0 0.0
    %8203 = vmatprep.subr.mxu0 0.0
    %8204 = vmatpush1.msra.mxu0 0.0
    %8205 = vmatprep.subr.mxu0 0.0
    %8206 = vmatpush1.msra.mxu0 0.0
    %8207 = vmatprep.subr.mxu0 0.0
    %8208 = vmatpush1.msra.mxu0 0.0
    %8209 = vmatprep.subr.mxu0 0.0
    %8210 = vmatpush1.msra.mxu0 0.0
    %8211 = vmatprep.subr.mxu0 0.0
    %8212 = vmatpush1.msra.mxu0 0.0
    %8213 = vmatprep.subr.mxu0 0.0
    %8214 = vmatpush1.msra.mxu0 0.0
    %8215 = vmatprep.subr.mxu0 0.0
    %8216 = vmatpush1.msra.mxu0 0.0
    %8217 = vmatprep.subr.mxu0 0.0
    %8218 = vmatpush1.msra.mxu0 0.0
    %8219 = vmatprep.subr.mxu0 0.0
    %8220 = vmatpush1.msra.mxu0 0.0
    %8221 = vmatprep.subr.mxu0 0.0
    %8222 = vmatpush1.msra.mxu0 0.0
    %8223 = vmatprep.subr.mxu0 0.0
    %8224 = vmatpush1.msra.mxu0 0.0
    %8225 = vmatprep.subr.mxu0 0.0
    %8226 = vmatpush1.msra.mxu0 0.0
    %8227 = vmatprep.subr.mxu0 0.0
    %8228 = vmatpush1.msra.mxu0 0.0
    %8229 = vmatprep.subr.mxu0 0.0
    %8230 = vmatpush1.msra.mxu0 0.0
    %8231 = vmatprep.subr.mxu0 0.0
    %8232 = vmatpush1.msra.mxu0 0.0
    %8233 = vmatprep.subr.mxu0 0.0
    %8234 = vmatpush1.msra.mxu0 0.0
    %8235 = vmatprep.subr.mxu0 0.0
    %8236 = vmatpush1.msra.mxu0 0.0
    %8237 = vmatprep.subr.mxu0 0.0
    %8238 = vmatpush1.msra.mxu0 0.0
    %8239 = vmatprep.subr.mxu0 0.0
    %8240 = vmatpush1.msra.mxu0 0.0
    %8241 = vmatprep.subr.mxu0 0.0
    %8242 = vmatpush1.msra.mxu0 0.0
    %8243 = vmatprep.subr.mxu0 0.0
    %8244 = vmatpush1.msra.mxu0 0.0
    %8245 = vmatprep.subr.mxu0 0.0
    %8246 = vmatpush1.msra.mxu0 0.0
    %8247 = vmatprep.subr.mxu0 0.0
    %8248 = vmatpush1.msra.mxu0 0.0
    %8249 = vmatprep.subr.mxu0 0.0
    %8250 = vmatpush1.msra.mxu0 0.0
    %8251 = vmatprep.mubr.f32.mxu0 0.0
    %8252 = vmatmul.mubr.f32.gmra.mrb[0].mxu0 %v8176
    %v8253 = vpop.f32.mrb[0].mxu0
    %v8254 = vadd.f32 0.0, %v8253
    %v8255 = vpop.f32.mrb[0].mxu0
    %8256 = vmatprep.mubr.f32.mxu0 0.0
    %8257 = vmatmul.mubr.f32.gmra.mrb[0].mxu0 %v8179
    %v8258 = vpop.f32.mrb[0].mxu0
    %v8259 = vadd.f32 0.0, %v8258
    %v8260 = vpop.f32.mrb[0].mxu0
    %8261 = vmatprep.mubr.f32.mxu0 0.0
    %8262 = vmatmul.mubr.f32.gmra.mrb[0].mxu0 %v8182
    %v8263 = vpop.f32.mrb[0].mxu0
    %v8264 = vadd.f32 0.0, %v8263
    %v8265 = vpop.f32.mrb[0].mxu0
    %8266 = vmatprep.mubr.f32.mxu0 0.0
    %8267 = vmatmul.mubr.f32.gmra.mrb[0].mxu0 %v8185
    %v8268 = vpop.f32.mrb[0].mxu0
    %v8269 = vadd.f32 0.0, %v8268
    %v8270 = vpop.f32.mrb[0].mxu0
    %8271 = vdwg.mxu0
    %v8273 = vsel %vm8174, %v8157, 0
    %v8276 = vsel %vm8174, %v8158, 0
    %v8279 = vsel %vm8174, %v8159, 0
    %v8282 = vsel %vm8174, %v8160, 0
    %8284 = vmatprep.subr.mxu0 0.0
    %8285 = vmatpush1.msra.mxu0 %v8154
    %8286 = vmatprep.subr.mxu0 0.0
    %8287 = vmatpush1.msra.mxu0 %v8155
    %8288 = vmatprep.subr.mxu0 0.0
    %8289 = vmatpush1.msra.mxu0 0.0
    %8290 = vmatprep.subr.mxu0 0.0
    %8291 = vmatpush1.msra.mxu0 0.0
    %8292 = vmatprep.subr.mxu0 0.0
    %8293 = vmatpush1.msra.mxu0 0.0
    %8294 = vmatprep.subr.mxu0 0.0
    %8295 = vmatpush1.msra.mxu0 0.0
    %8296 = vmatprep.subr.mxu0 0.0
    %8297 = vmatpush1.msra.mxu0 0.0
    %8298 = vmatprep.subr.mxu0 0.0
    %8299 = vmatpush1.msra.mxu0 0.0
    %8300 = vmatprep.subr.mxu0 0.0
    %8301 = vmatpush1.msra.mxu0 0.0
    %8302 = vmatprep.subr.mxu0 0.0
    %8303 = vmatpush1.msra.mxu0 0.0
    %8304 = vmatprep.subr.mxu0 0.0
    %8305 = vmatpush1.msra.mxu0 0.0
    %8306 = vmatprep.subr.mxu0 0.0
    %8307 = vmatpush1.msra.mxu0 0.0
    %8308 = vmatprep.subr.mxu0 0.0
    %8309 = vmatpush1.msra.mxu0 0.0
    %8310 = vmatprep.subr.mxu0 0.0
    %8311 = vmatpush1.msra.mxu0 0.0
    %8312 = vmatprep.subr.mxu0 0.0
    %8313 = vmatpush1.msra.mxu0 0.0
    %8314 = vmatprep.subr.mxu0 0.0
    %8315 = vmatpush1.msra.mxu0 0.0
    %8316 = vmatprep.subr.mxu0 0.0
    %8317 = vmatpush1.msra.mxu0 0.0
    %8318 = vmatprep.subr.mxu0 0.0
    %8319 = vmatpush1.msra.mxu0 0.0
    %8320 = vmatprep.subr.mxu0 0.0
    %8321 = vmatpush1.msra.mxu0 0.0
    %8322 = vmatprep.subr.mxu0 0.0
    %8323 = vmatpush1.msra.mxu0 0.0
    %8324 = vmatprep.subr.mxu0 0.0
    %8325 = vmatpush1.msra.mxu0 0.0
    %8326 = vmatprep.subr.mxu0 0.0
    %8327 = vmatpush1.msra.mxu0 0.0
    %8328 = vmatprep.subr.mxu0 0.0
    %8329 = vmatpush1.msra.mxu0 0.0
    %8330 = vmatprep.subr.mxu0 0.0
    %8331 = vmatpush1.msra.mxu0 0.0
    %8332 = vmatprep.subr.mxu0 0.0
    %8333 = vmatpush1.msra.mxu0 0.0
    %8334 = vmatprep.subr.mxu0 0.0
    %8335 = vmatpush1.msra.mxu0 0.0
    %8336 = vmatprep.subr.mxu0 0.0
    %8337 = vmatpush1.msra.mxu0 0.0
    %8338 = vmatprep.subr.mxu0 0.0
    %8339 = vmatpush1.msra.mxu0 0.0
    %8340 = vmatprep.subr.mxu0 0.0
    %8341 = vmatpush1.msra.mxu0 0.0
    %8342 = vmatprep.subr.mxu0 0.0
    %8343 = vmatpush1.msra.mxu0 0.0
    %8344 = vmatprep.subr.mxu0 0.0
    %8345 = vmatpush1.msra.mxu0 0.0
    %8346 = vmatprep.subr.mxu0 0.0
    %8347 = vmatpush1.msra.mxu0 0.0
    %8348 = vmatprep.mubr.f32.mxu0 0.0
    %8349 = vmatmul.mubr.f32.gmra.mrb[0].mxu0 %v8273
    %v8350 = vpop.f32.mrb[0].mxu0
    %v8351 = vadd.f32 %v8254, %v8350
    %v8352 = vpop.f32.mrb[0].mxu0
    %8353 = vmatprep.mubr.f32.mxu0 0.0
    %8354 = vmatmul.mubr.f32.gmra.mrb[0].mxu0 %v8276
    %v8355 = vpop.f32.mrb[0].mxu0
    %v8356 = vadd.f32 %v8259, %v8355
    %v8357 = vpop.f32.mrb[0].mxu0
    %8358 = vmatprep.mubr.f32.mxu0 0.0
    %8359 = vmatmul.mubr.f32.gmra.mrb[0].mxu0 %v8279
    %v8360 = vpop.f32.mrb[0].mxu0
    %v8361 = vadd.f32 %v8264, %v8360
    %v8362 = vpop.f32.mrb[0].mxu0
    %8363 = vmatprep.mubr.f32.mxu0 0.0
    %8364 = vmatmul.mubr.f32.gmra.mrb[0].mxu0 %v8282
    %v8365 = vpop.f32.mrb[0].mxu0
    %v8366 = vadd.f32 %v8269, %v8365
    %v8367 = vpop.f32.mrb[0].mxu0
    %8368 = vdwg.mxu0
    %s8369 = scalar_lea.vmem %s1, 1216
    %v8370 = vld [vmem:[%s8369] sm:$0xff]
    %v8371 = vld [vmem:[%s8369 + $0x8] sm:$0xff]
    %v8372 = vld [vmem:[%s8369 + $0x10] sm:$0xff]
    %v8373 = vld [vmem:[%s8369 + $0x18] sm:$0xff]
    %8374 = vrot.lane.b32.xlu0 %v8154, 126
    %v8375 = vpop.permute.xlu0 %8374
    %8376 = vrot.lane.b32.xlu0 %v8155, 126
    %v8377 = vpop.permute.xlu0 %8376
    %v8381 = vsel %vm8174, %v8370, 0
    %v8384 = vsel %vm8174, %v8371, 0
    %v8387 = vsel %vm8174, %v8372, 0
    %v8390 = vsel %vm8174, %v8373, 0
    %8392 = vmatprep.subr.mxu0 0.0
    %8393 = vmatpush1.msra.mxu0 %v8375
    %8394 = vmatprep.subr.mxu0 0.0
    %8395 = vmatpush1.msra.mxu0 %v8377
    %8396 = vmatprep.subr.mxu0 0.0
    %8397 = vmatpush1.msra.mxu0 0.0
    %8398 = vmatprep.subr.mxu0 0.0
    %8399 = vmatpush1.msra.mxu0 0.0
    %8400 = vmatprep.subr.mxu0 0.0
    %8401 = vmatpush1.msra.mxu0 0.0
    %8402 = vmatprep.subr.mxu0 0.0
    %8403 = vmatpush1.msra.mxu0 0.0
    %8404 = vmatprep.subr.mxu0 0.0
    %8405 = vmatpush1.msra.mxu0 0.0
    %8406 = vmatprep.subr.mxu0 0.0
    %8407 = vmatpush1.msra.mxu0 0.0
    %8408 = vmatprep.subr.mxu0 0.0
    %8409 = vmatpush1.msra.mxu0 0.0
    %8410 = vmatprep.subr.mxu0 0.0
    %8411 = vmatpush1.msra.mxu0 0.0
    %8412 = vmatprep.subr.mxu0 0.0
    %8413 = vmatpush1.msra.mxu0 0.0
    %8414 = vmatprep.subr.mxu0 0.0
    %8415 = vmatpush1.msra.mxu0 0.0
    %8416 = vmatprep.subr.mxu0 0.0
    %8417 = vmatpush1.msra.mxu0 0.0
    %8418 = vmatprep.subr.mxu0 0.0
    %8419 = vmatpush1.msra.mxu0 0.0
    %8420 = vmatprep.subr.mxu0 0.0
    %8421 = vmatpush1.msra.mxu0 0.0
    %8422 = vmatprep.subr.mxu0 0.0
    %8423 = vmatpush1.msra.mxu0 0.0
    %8424 = vmatprep.subr.mxu0 0.0
    %8425 = vmatpush1.msra.mxu0 0.0
    %8426 = vmatprep.subr.mxu0 0.0
    %8427 = vmatpush1.msra.mxu0 0.0
    %8428 = vmatprep.subr.mxu0 0.0
    %8429 = vmatpush1.msra.mxu0 0.0
    %8430 = vmatprep.subr.mxu0 0.0
    %8431 = vmatpush1.msra.mxu0 0.0
    %8432 = vmatprep.subr.mxu0 0.0
    %8433 = vmatpush1.msra.mxu0 0.0
    %8434 = vmatprep.subr.mxu0 0.0
    %8435 = vmatpush1.msra.mxu0 0.0
    %8436 = vmatprep.subr.mxu0 0.0
    %8437 = vmatpush1.msra.mxu0 0.0
    %8438 = vmatprep.subr.mxu0 0.0
    %8439 = vmatpush1.msra.mxu0 0.0
    %8440 = vmatprep.subr.mxu0 0.0
    %8441 = vmatpush1.msra.mxu0 0.0
    %8442 = vmatprep.subr.mxu0 0.0
    %8443 = vmatpush1.msra.mxu0 0.0
    %8444 = vmatprep.subr.mxu0 0.0
    %8445 = vmatpush1.msra.mxu0 0.0
    %8446 = vmatprep.subr.mxu0 0.0
    %8447 = vmatpush1.msra.mxu0 0.0
    %8448 = vmatprep.subr.mxu0 0.0
    %8449 = vmatpush1.msra.mxu0 0.0
    %8450 = vmatprep.subr.mxu0 0.0
    %8451 = vmatpush1.msra.mxu0 0.0
    %8452 = vmatprep.subr.mxu0 0.0
    %8453 = vmatpush1.msra.mxu0 0.0
    %8454 = vmatprep.subr.mxu0 0.0
    %8455 = vmatpush1.msra.mxu0 0.0
    %8456 = vmatprep.mubr.f32.mxu0 0.0
    %8457 = vmatmul.mubr.f32.gmra.mrb[0].mxu0 %v8381
    %v8458 = vpop.f32.mrb[0].mxu0
    %v8459 = vadd.f32 0.0, %v8458
    %v8460 = vpop.f32.mrb[0].mxu0
    %8461 = vmatprep.mubr.f32.mxu0 0.0
    %8462 = vmatmul.mubr.f32.gmra.mrb[0].mxu0 %v8384
    %v8463 = vpop.f32.mrb[0].mxu0
    %v8464 = vadd.f32 0.0, %v8463
    %v8465 = vpop.f32.mrb[0].mxu0
    %8466 = vmatprep.mubr.f32.mxu0 0.0
    %8467 = vmatmul.mubr.f32.gmra.mrb[0].mxu0 %v8387
    %v8468 = vpop.f32.mrb[0].mxu0
    %v8469 = vadd.f32 0.0, %v8468
    %v8470 = vpop.f32.mrb[0].mxu0
    %8471 = vmatprep.mubr.f32.mxu0 0.0
    %8472 = vmatmul.mubr.f32.gmra.mrb[0].mxu0 %v8390
    %v8473 = vpop.f32.mrb[0].mxu0
    %v8474 = vadd.f32 0.0, %v8473
    %v8475 = vpop.f32.mrb[0].mxu0
    %8476 = vdwg.mxu0
    %v8477 = vadd.f32 %v8351, %v8459
    %v8478 = vadd.f32 %v8356, %v8464
    %v8479 = vadd.f32 %v8361, %v8469
    %v8480 = vadd.f32 %v8366, %v8474
    %s8481 = scalar_lea.vmem %s1, 1248
    %v8482 = vld [vmem:[%s8481] sm:$0xff]
    %v8483 = vld [vmem:[%s8481 + $0x8] sm:$0xff]
    %v8484 = vld [vmem:[%s8481 + $0x10] sm:$0xff]
    %v8485 = vld [vmem:[%s8481 + $0x18] sm:$0xff]
    %8486 = vrot.lane.b32.xlu0 %v8154, 125
    %v8487 = vpop.permute.xlu0 %8486
    %8488 = vrot.lane.b32.xlu0 %v8155, 125
    %v8489 = vpop.permute.xlu0 %8488
    %v8493 = vsel %vm8174, %v8482, 0
    %v8496 = vsel %vm8174, %v8483, 0
    %v8499 = vsel %vm8174, %v8484, 0
    %v8502 = vsel %vm8174, %v8485, 0
    %8504 = vmatprep.subr.mxu0 0.0
    %8505 = vmatpush1.msra.mxu0 %v8487
    %8506 = vmatprep.subr.mxu0 0.0
    %8507 = vmatpush1.msra.mxu0 %v8489
    %8508 = vmatprep.subr.mxu0 0.0
    %8509 = vmatpush1.msra.mxu0 0.0
    %8510 = vmatprep.subr.mxu0 0.0
    %8511 = vmatpush1.msra.mxu0 0.0
    %8512 = vmatprep.subr.mxu0 0.0
    %8513 = vmatpush1.msra.mxu0 0.0
    %8514 = vmatprep.subr.mxu0 0.0
    %8515 = vmatpush1.msra.mxu0 0.0
    %8516 = vmatprep.subr.mxu0 0.0
    %8517 = vmatpush1.msra.mxu0 0.0
    %8518 = vmatprep.subr.mxu0 0.0
    %8519 = vmatpush1.msra.mxu0 0.0
    %8520 = vmatprep.subr.mxu0 0.0
    %8521 = vmatpush1.msra.mxu0 0.0
    %8522 = vmatprep.subr.mxu0 0.0
    %8523 = vmatpush1.msra.mxu0 0.0
    %8524 = vmatprep.subr.mxu0 0.0
    %8525 = vmatpush1.msra.mxu0 0.0
    %8526 = vmatprep.subr.mxu0 0.0
    %8527 = vmatpush1.msra.mxu0 0.0
    %8528 = vmatprep.subr.mxu0 0.0
    %8529 = vmatpush1.msra.mxu0 0.0
    %8530 = vmatprep.subr.mxu0 0.0
    %8531 = vmatpush1.msra.mxu0 0.0
    %8532 = vmatprep.subr.mxu0 0.0
    %8533 = vmatpush1.msra.mxu0 0.0
    %8534 = vmatprep.subr.mxu0 0.0
    %8535 = vmatpush1.msra.mxu0 0.0
    %8536 = vmatprep.subr.mxu0 0.0
    %8537 = vmatpush1.msra.mxu0 0.0
    %8538 = vmatprep.subr.mxu0 0.0
    %8539 = vmatpush1.msra.mxu0 0.0
    %8540 = vmatprep.subr.mxu0 0.0
    %8541 = vmatpush1.msra.mxu0 0.0
    %8542 = vmatprep.subr.mxu0 0.0
    %8543 = vmatpush1.msra.mxu0 0.0
    %8544 = vmatprep.subr.mxu0 0.0
    %8545 = vmatpush1.msra.mxu0 0.0
    %8546 = vmatprep.subr.mxu0 0.0
    %8547 = vmatpush1.msra.mxu0 0.0
    %8548 = vmatprep.subr.mxu0 0.0
    %8549 = vmatpush1.msra.mxu0 0.0
    %8550 = vmatprep.subr.mxu0 0.0
    %8551 = vmatpush1.msra.mxu0 0.0
    %8552 = vmatprep.subr.mxu0 0.0
    %8553 = vmatpush1.msra.mxu0 0.0
    %8554 = vmatprep.subr.mxu0 0.0
    %8555 = vmatpush1.msra.mxu0 0.0
    %8556 = vmatprep.subr.mxu0 0.0
    %8557 = vmatpush1.msra.mxu0 0.0
    %8558 = vmatprep.subr.mxu0 0.0
    %8559 = vmatpush1.msra.mxu0 0.0
    %8560 = vmatprep.subr.mxu0 0.0
    %8561 = vmatpush1.msra.mxu0 0.0
    %8562 = vmatprep.subr.mxu0 0.0
    %8563 = vmatpush1.msra.mxu0 0.0
    %8564 = vmatprep.subr.mxu0 0.0
    %8565 = vmatpush1.msra.mxu0 0.0
    %8566 = vmatprep.subr.mxu0 0.0
    %8567 = vmatpush1.msra.mxu0 0.0
    %8568 = vmatprep.mubr.f32.mxu0 0.0
    %8569 = vmatmul.mubr.f32.gmra.mrb[0].mxu0 %v8493
    %v8570 = vpop.f32.mrb[0].mxu0
    %v8571 = vadd.f32 0.0, %v8570
    %v8572 = vpop.f32.mrb[0].mxu0
    %8573 = vmatprep.mubr.f32.mxu0 0.0
    %8574 = vmatmul.mubr.f32.gmra.mrb[0].mxu0 %v8496
    %v8575 = vpop.f32.mrb[0].mxu0
    %v8576 = vadd.f32 0.0, %v8575
    %v8577 = vpop.f32.mrb[0].mxu0
    %8578 = vmatprep.mubr.f32.mxu0 0.0
    %8579 = vmatmul.mubr.f32.gmra.mrb[0].mxu0 %v8499
    %v8580 = vpop.f32.mrb[0].mxu0
    %v8581 = vadd.f32 0.0, %v8580
    %v8582 = vpop.f32.mrb[0].mxu0
    %8583 = vmatprep.mubr.f32.mxu0 0.0
    %8584 = vmatmul.mubr.f32.gmra.mrb[0].mxu0 %v8502
    %v8585 = vpop.f32.mrb[0].mxu0
    %v8586 = vadd.f32 0.0, %v8585
    %v8587 = vpop.f32.mrb[0].mxu0
    %8588 = vdwg.mxu0
    %v8589 = vadd.f32 %v8477, %v8571
    %v8590 = vadd.f32 %v8478, %v8576
    %v8591 = vadd.f32 %v8479, %v8581
    %v8592 = vadd.f32 %v8480, %v8586
    %s8593 = scalar_lea.vmem %s1, 1280
    %v8594 = vld [vmem:[%s8593] sm:$0xff]
    %v8595 = vld [vmem:[%s8593 + $0x8] sm:$0xff]
    %v8596 = vld [vmem:[%s8593 + $0x10] sm:$0xff]
    %v8597 = vld [vmem:[%s8593 + $0x18] sm:$0xff]
    %8598 = vrot.lane.b32.xlu0 %v8154, 121
    %v8599 = vpop.permute.xlu0 %8598
    %8600 = vrot.lane.b32.xlu0 %v8155, 121
    %v8601 = vpop.permute.xlu0 %8600
    %v8605 = vsel %vm8174, %v8594, 0
    %v8608 = vsel %vm8174, %v8595, 0
    %v8611 = vsel %vm8174, %v8596, 0
    %v8614 = vsel %vm8174, %v8597, 0
    %8616 = vmatprep.subr.mxu0 0.0
    %8617 = vmatpush1.msra.mxu0 %v8599
    %8618 = vmatprep.subr.mxu0 0.0
    %8619 = vmatpush1.msra.mxu0 %v8601
    %8620 = vmatprep.subr.mxu0 0.0
    %8621 = vmatpush1.msra.mxu0 0.0
    %8622 = vmatprep.subr.mxu0 0.0
    %8623 = vmatpush1.msra.mxu0 0.0
    %8624 = vmatprep.subr.mxu0 0.0
    %8625 = vmatpush1.msra.mxu0 0.0
    %8626 = vmatprep.subr.mxu0 0.0
    %8627 = vmatpush1.msra.mxu0 0.0
    %8628 = vmatprep.subr.mxu0 0.0
    %8629 = vmatpush1.msra.mxu0 0.0
    %8630 = vmatprep.subr.mxu0 0.0
    %8631 = vmatpush1.msra.mxu0 0.0
    %8632 = vmatprep.subr.mxu0 0.0
    %8633 = vmatpush1.msra.mxu0 0.0
    %8634 = vmatprep.subr.mxu0 0.0
    %8635 = vmatpush1.msra.mxu0 0.0
    %8636 = vmatprep.subr.mxu0 0.0
    %8637 = vmatpush1.msra.mxu0 0.0
    %8638 = vmatprep.subr.mxu0 0.0
    %8639 = vmatpush1.msra.mxu0 0.0
    %8640 = vmatprep.subr.mxu0 0.0
    %8641 = vmatpush1.msra.mxu0 0.0
    %8642 = vmatprep.subr.mxu0 0.0
    %8643 = vmatpush1.msra.mxu0 0.0
    %8644 = vmatprep.subr.mxu0 0.0
    %8645 = vmatpush1.msra.mxu0 0.0
    %8646 = vmatprep.subr.mxu0 0.0
    %8647 = vmatpush1.msra.mxu0 0.0
    %8648 = vmatprep.subr.mxu0 0.0
    %8649 = vmatpush1.msra.mxu0 0.0
    %8650 = vmatprep.subr.mxu0 0.0
    %8651 = vmatpush1.msra.mxu0 0.0
    %8652 = vmatprep.subr.mxu0 0.0
    %8653 = vmatpush1.msra.mxu0 0.0
    %8654 = vmatprep.subr.mxu0 0.0
    %8655 = vmatpush1.msra.mxu0 0.0
    %8656 = vmatprep.subr.mxu0 0.0
    %8657 = vmatpush1.msra.mxu0 0.0
    %8658 = vmatprep.subr.mxu0 0.0
    %8659 = vmatpush1.msra.mxu0 0.0
    %8660 = vmatprep.subr.mxu0 0.0
    %8661 = vmatpush1.msra.mxu0 0.0
    %8662 = vmatprep.subr.mxu0 0.0
    %8663 = vmatpush1.msra.mxu0 0.0
    %8664 = vmatprep.subr.mxu0 0.0
    %8665 = vmatpush1.msra.mxu0 0.0
    %8666 = vmatprep.subr.mxu0 0.0
    %8667 = vmatpush1.msra.mxu0 0.0
    %8668 = vmatprep.subr.mxu0 0.0
    %8669 = vmatpush1.msra.mxu0 0.0
    %8670 = vmatprep.subr.mxu0 0.0
    %8671 = vmatpush1.msra.mxu0 0.0
    %8672 = vmatprep.subr.mxu0 0.0
    %8673 = vmatpush1.msra.mxu0 0.0
    %8674 = vmatprep.subr.mxu0 0.0
    %8675 = vmatpush1.msra.mxu0 0.0
    %8676 = vmatprep.subr.mxu0 0.0
    %8677 = vmatpush1.msra.mxu0 0.0
    %8678 = vmatprep.subr.mxu0 0.0
    %8679 = vmatpush1.msra.mxu0 0.0
    %8680 = vmatprep.mubr.f32.mxu0 0.0
    %8681 = vmatmul.mubr.f32.gmra.mrb[0].mxu0 %v8605
    %v8682 = vpop.f32.mrb[0].mxu0
    %v8683 = vadd.f32 0.0, %v8682
    %v8684 = vpop.f32.mrb[0].mxu0
    %8685 = vmatprep.mubr.f32.mxu0 0.0
    %8686 = vmatmul.mubr.f32.gmra.mrb[0].mxu0 %v8608
    %v8687 = vpop.f32.mrb[0].mxu0
    %v8688 = vadd.f32 0.0, %v8687
    %v8689 = vpop.f32.mrb[0].mxu0
    %8690 = vmatprep.mubr.f32.mxu0 0.0
    %8691 = vmatmul.mubr.f32.gmra.mrb[0].mxu0 %v8611
    %v8692 = vpop.f32.mrb[0].mxu0
    %v8693 = vadd.f32 0.0, %v8692
    %v8694 = vpop.f32.mrb[0].mxu0
    %8695 = vmatprep.mubr.f32.mxu0 0.0
    %8696 = vmatmul.mubr.f32.gmra.mrb[0].mxu0 %v8614
    %v8697 = vpop.f32.mrb[0].mxu0
    %v8698 = vadd.f32 0.0, %v8697
    %v8699 = vpop.f32.mrb[0].mxu0
    %8700 = vdwg.mxu0
    %v8701 = vadd.f32 %v8589, %v8683
    %v8702 = vadd.f32 %v8590, %v8688
    %v8703 = vadd.f32 %v8591, %v8693
    %v8704 = vadd.f32 %v8592, %v8698
    %s8705 = scalar_lea.vmem %s1, 1312
    %v8706 = vld [vmem:[%s8705] sm:$0xff]
    %v8707 = vld [vmem:[%s8705 + $0x8] sm:$0xff]
    %v8708 = vld [vmem:[%s8705 + $0x10] sm:$0xff]
    %v8709 = vld [vmem:[%s8705 + $0x18] sm:$0xff]
    %8710 = vrot.lane.b32.xlu0 %v8154, 120
    %v8711 = vpop.permute.xlu0 %8710
    %8712 = vrot.lane.b32.xlu0 %v8155, 120
    %v8713 = vpop.permute.xlu0 %8712
    %v8717 = vsel %vm8174, %v8706, 0
    %v8720 = vsel %vm8174, %v8707, 0
    %v8723 = vsel %vm8174, %v8708, 0
    %v8726 = vsel %vm8174, %v8709, 0
    %8728 = vmatprep.subr.mxu0 0.0
    %8729 = vmatpush1.msra.mxu0 %v8711
    %8730 = vmatprep.subr.mxu0 0.0
    %8731 = vmatpush1.msra.mxu0 %v8713
    %8732 = vmatprep.subr.mxu0 0.0
    %8733 = vmatpush1.msra.mxu0 0.0
    %8734 = vmatprep.subr.mxu0 0.0
    %8735 = vmatpush1.msra.mxu0 0.0
    %8736 = vmatprep.subr.mxu0 0.0
    %8737 = vmatpush1.msra.mxu0 0.0
    %8738 = vmatprep.subr.mxu0 0.0
    %8739 = vmatpush1.msra.mxu0 0.0
    %8740 = vmatprep.subr.mxu0 0.0
    %8741 = vmatpush1.msra.mxu0 0.0
    %8742 = vmatprep.subr.mxu0 0.0
    %8743 = vmatpush1.msra.mxu0 0.0
    %8744 = vmatprep.subr.mxu0 0.0
    %8745 = vmatpush1.msra.mxu0 0.0
    %8746 = vmatprep.subr.mxu0 0.0
    %8747 = vmatpush1.msra.mxu0 0.0
    %8748 = vmatprep.subr.mxu0 0.0
    %8749 = vmatpush1.msra.mxu0 0.0
    %8750 = vmatprep.subr.mxu0 0.0
    %8751 = vmatpush1.msra.mxu0 0.0
    %8752 = vmatprep.subr.mxu0 0.0
    %8753 = vmatpush1.msra.mxu0 0.0
    %8754 = vmatprep.subr.mxu0 0.0
    %8755 = vmatpush1.msra.mxu0 0.0
    %8756 = vmatprep.subr.mxu0 0.0
    %8757 = vmatpush1.msra.mxu0 0.0
    %8758 = vmatprep.subr.mxu0 0.0
    %8759 = vmatpush1.msra.mxu0 0.0
    %8760 = vmatprep.subr.mxu0 0.0
    %8761 = vmatpush1.msra.mxu0 0.0
    %8762 = vmatprep.subr.mxu0 0.0
    %8763 = vmatpush1.msra.mxu0 0.0
    %8764 = vmatprep.subr.mxu0 0.0
    %8765 = vmatpush1.msra.mxu0 0.0
    %8766 = vmatprep.subr.mxu0 0.0
    %8767 = vmatpush1.msra.mxu0 0.0
    %8768 = vmatprep.subr.mxu0 0.0
    %8769 = vmatpush1.msra.mxu0 0.0
    %8770 = vmatprep.subr.mxu0 0.0
    %8771 = vmatpush1.msra.mxu0 0.0
    %8772 = vmatprep.subr.mxu0 0.0
    %8773 = vmatpush1.msra.mxu0 0.0
    %8774 = vmatprep.subr.mxu0 0.0
    %8775 = vmatpush1.msra.mxu0 0.0
    %8776 = vmatprep.subr.mxu0 0.0
    %8777 = vmatpush1.msra.mxu0 0.0
    %8778 = vmatprep.subr.mxu0 0.0
    %8779 = vmatpush1.msra.mxu0 0.0
    %8780 = vmatprep.subr.mxu0 0.0
    %8781 = vmatpush1.msra.mxu0 0.0
    %8782 = vmatprep.subr.mxu0 0.0
    %8783 = vmatpush1.msra.mxu0 0.0
    %8784 = vmatprep.subr.mxu0 0.0
    %8785 = vmatpush1.msra.mxu0 0.0
    %8786 = vmatprep.subr.mxu0 0.0
    %8787 = vmatpush1.msra.mxu0 0.0
    %8788 = vmatprep.subr.mxu0 0.0
    %8789 = vmatpush1.msra.mxu0 0.0
    %8790 = vmatprep.subr.mxu0 0.0
    %8791 = vmatpush1.msra.mxu0 0.0
    %8792 = vmatprep.mubr.f32.mxu0 0.0
    %8793 = vmatmul.mubr.f32.gmra.mrb[0].mxu0 %v8717
    %v8794 = vpop.f32.mrb[0].mxu0
    %v8795 = vadd.f32 0.0, %v8794
    %v8796 = vpop.f32.mrb[0].mxu0
    %8797 = vmatprep.mubr.f32.mxu0 0.0
    %8798 = vmatmul.mubr.f32.gmra.mrb[0].mxu0 %v8720
    %v8799 = vpop.f32.mrb[0].mxu0
    %v8800 = vadd.f32 0.0, %v8799
    %v8801 = vpop.f32.mrb[0].mxu0
    %8802 = vmatprep.mubr.f32.mxu0 0.0
    %8803 = vmatmul.mubr.f32.gmra.mrb[0].mxu0 %v8723
    %v8804 = vpop.f32.mrb[0].mxu0
    %v8805 = vadd.f32 0.0, %v8804
    %v8806 = vpop.f32.mrb[0].mxu0
    %8807 = vmatprep.mubr.f32.mxu0 0.0
    %8808 = vmatmul.mubr.f32.gmra.mrb[0].mxu0 %v8726
    %v8809 = vpop.f32.mrb[0].mxu0
    %v8810 = vadd.f32 0.0, %v8809
    %v8811 = vpop.f32.mrb[0].mxu0
    %8812 = vdwg.mxu0
    %v8813 = vadd.f32 %v8701, %v8795
    %v8814 = vadd.f32 %v8702, %v8800
    %v8815 = vadd.f32 %v8703, %v8805
    %v8816 = vadd.f32 %v8704, %v8810
    %s8817 = scalar_lea.vmem %s1, 1344
    %v8818 = vld [vmem:[%s8817] sm:$0xff]
    %v8819 = vld [vmem:[%s8817 + $0x8] sm:$0xff]
    %v8820 = vld [vmem:[%s8817 + $0x10] sm:$0xff]
    %v8821 = vld [vmem:[%s8817 + $0x18] sm:$0xff]
    %8822 = vrot.lane.b32.xlu0 %v8154, 119
    %v8823 = vpop.permute.xlu0 %8822
    %8824 = vrot.lane.b32.xlu0 %v8155, 119
    %v8825 = vpop.permute.xlu0 %8824
    %v8829 = vsel %vm8174, %v8818, 0
    %v8832 = vsel %vm8174, %v8819, 0
    %v8835 = vsel %vm8174, %v8820, 0
    %v8838 = vsel %vm8174, %v8821, 0
    %8840 = vmatprep.subr.mxu0 0.0
    %8841 = vmatpush1.msra.mxu0 %v8823
    %8842 = vmatprep.subr.mxu0 0.0
    %8843 = vmatpush1.msra.mxu0 %v8825
    %8844 = vmatprep.subr.mxu0 0.0
    %8845 = vmatpush1.msra.mxu0 0.0
    %8846 = vmatprep.subr.mxu0 0.0
    %8847 = vmatpush1.msra.mxu0 0.0
    %8848 = vmatprep.subr.mxu0 0.0
    %8849 = vmatpush1.msra.mxu0 0.0
    %8850 = vmatprep.subr.mxu0 0.0
    %8851 = vmatpush1.msra.mxu0 0.0
    %8852 = vmatprep.subr.mxu0 0.0
    %8853 = vmatpush1.msra.mxu0 0.0
    %8854 = vmatprep.subr.mxu0 0.0
    %8855 = vmatpush1.msra.mxu0 0.0
    %8856 = vmatprep.subr.mxu0 0.0
    %8857 = vmatpush1.msra.mxu0 0.0
    %8858 = vmatprep.subr.mxu0 0.0
    %8859 = vmatpush1.msra.mxu0 0.0
    %8860 = vmatprep.subr.mxu0 0.0
    %8861 = vmatpush1.msra.mxu0 0.0
    %8862 = vmatprep.subr.mxu0 0.0
    %8863 = vmatpush1.msra.mxu0 0.0
    %8864 = vmatprep.subr.mxu0 0.0
    %8865 = vmatpush1.msra.mxu0 0.0
    %8866 = vmatprep.subr.mxu0 0.0
    %8867 = vmatpush1.msra.mxu0 0.0
    %8868 = vmatprep.subr.mxu0 0.0
    %8869 = vmatpush1.msra.mxu0 0.0
    %8870 = vmatprep.subr.mxu0 0.0
    %8871 = vmatpush1.msra.mxu0 0.0
    %8872 = vmatprep.subr.mxu0 0.0
    %8873 = vmatpush1.msra.mxu0 0.0
    %8874 = vmatprep.subr.mxu0 0.0
    %8875 = vmatpush1.msra.mxu0 0.0
    %8876 = vmatprep.subr.mxu0 0.0
    %8877 = vmatpush1.msra.mxu0 0.0
    %8878 = vmatprep.subr.mxu0 0.0
    %8879 = vmatpush1.msra.mxu0 0.0
    %8880 = vmatprep.subr.mxu0 0.0
    %8881 = vmatpush1.msra.mxu0 0.0
    %8882 = vmatprep.subr.mxu0 0.0
    %8883 = vmatpush1.msra.mxu0 0.0
    %8884 = vmatprep.subr.mxu0 0.0
    %8885 = vmatpush1.msra.mxu0 0.0
    %8886 = vmatprep.subr.mxu0 0.0
    %8887 = vmatpush1.msra.mxu0 0.0
    %8888 = vmatprep.subr.mxu0 0.0
    %8889 = vmatpush1.msra.mxu0 0.0
    %8890 = vmatprep.subr.mxu0 0.0
    %8891 = vmatpush1.msra.mxu0 0.0
    %8892 = vmatprep.subr.mxu0 0.0
    %8893 = vmatpush1.msra.mxu0 0.0
    %8894 = vmatprep.subr.mxu0 0.0
    %8895 = vmatpush1.msra.mxu0 0.0
    %8896 = vmatprep.subr.mxu0 0.0
    %8897 = vmatpush1.msra.mxu0 0.0
    %8898 = vmatprep.subr.mxu0 0.0
    %8899 = vmatpush1.msra.mxu0 0.0
    %8900 = vmatprep.subr.mxu0 0.0
    %8901 = vmatpush1.msra.mxu0 0.0
    %8902 = vmatprep.subr.mxu0 0.0
    %8903 = vmatpush1.msra.mxu0 0.0
    %8904 = vmatprep.mubr.f32.mxu0 0.0
    %8905 = vmatmul.mubr.f32.gmra.mrb[0].mxu0 %v8829
    %v8906 = vpop.f32.mrb[0].mxu0
    %v8907 = vadd.f32 0.0, %v8906
    %v8908 = vpop.f32.mrb[0].mxu0
    %8909 = vmatprep.mubr.f32.mxu0 0.0
    %8910 = vmatmul.mubr.f32.gmra.mrb[0].mxu0 %v8832
    %v8911 = vpop.f32.mrb[0].mxu0
    %v8912 = vadd.f32 0.0, %v8911
    %v8913 = vpop.f32.mrb[0].mxu0
    %8914 = vmatprep.mubr.f32.mxu0 0.0
    %8915 = vmatmul.mubr.f32.gmra.mrb[0].mxu0 %v8835
    %v8916 = vpop.f32.mrb[0].mxu0
    %v8917 = vadd.f32 0.0, %v8916
    %v8918 = vpop.f32.mrb[0].mxu0
    %8919 = vmatprep.mubr.f32.mxu0 0.0
    %8920 = vmatmul.mubr.f32.gmra.mrb[0].mxu0 %v8838
    %v8921 = vpop.f32.mrb[0].mxu0
    %v8922 = vadd.f32 0.0, %v8921
    %v8923 = vpop.f32.mrb[0].mxu0
    %8924 = vdwg.mxu0
    %v8925 = vadd.f32 %v8813, %v8907
    %v8926 = vadd.f32 %v8814, %v8912
    %v8927 = vadd.f32 %v8815, %v8917
    %v8928 = vadd.f32 %v8816, %v8922
    %s8929 = scalar_lea.vmem %s1, 1376
    %v8930 = vld [vmem:[%s8929] sm:$0xff]
    %v8931 = vld [vmem:[%s8929 + $0x8] sm:$0xff]
    %v8932 = vld [vmem:[%s8929 + $0x10] sm:$0xff]
    %v8933 = vld [vmem:[%s8929 + $0x18] sm:$0xff]
    %8934 = vrot.lane.b32.xlu0 %v8154, 118
    %v8935 = vpop.permute.xlu0 %8934
    %8936 = vrot.lane.b32.xlu0 %v8155, 118
    %v8937 = vpop.permute.xlu0 %8936
    %v8941 = vsel %vm8174, %v8930, 0
    %v8944 = vsel %vm8174, %v8931, 0
    %v8947 = vsel %vm8174, %v8932, 0
    %v8950 = vsel %vm8174, %v8933, 0
    %8952 = vmatprep.subr.mxu0 0.0
    %8953 = vmatpush1.msra.mxu0 %v8935
    %8954 = vmatprep.subr.mxu0 0.0
    %8955 = vmatpush1.msra.mxu0 %v8937
    %8956 = vmatprep.subr.mxu0 0.0
    %8957 = vmatpush1.msra.mxu0 0.0
    %8958 = vmatprep.subr.mxu0 0.0
    %8959 = vmatpush1.msra.mxu0 0.0
    %8960 = vmatprep.subr.mxu0 0.0
    %8961 = vmatpush1.msra.mxu0 0.0
    %8962 = vmatprep.subr.mxu0 0.0
    %8963 = vmatpush1.msra.mxu0 0.0
    %8964 = vmatprep.subr.mxu0 0.0
    %8965 = vmatpush1.msra.mxu0 0.0
    %8966 = vmatprep.subr.mxu0 0.0
    %8967 = vmatpush1.msra.mxu0 0.0
    %8968 = vmatprep.subr.mxu0 0.0
    %8969 = vmatpush1.msra.mxu0 0.0
    %8970 = vmatprep.subr.mxu0 0.0
    %8971 = vmatpush1.msra.mxu0 0.0
    %8972 = vmatprep.subr.mxu0 0.0
    %8973 = vmatpush1.msra.mxu0 0.0
    %8974 = vmatprep.subr.mxu0 0.0
    %8975 = vmatpush1.msra.mxu0 0.0
    %8976 = vmatprep.subr.mxu0 0.0
    %8977 = vmatpush1.msra.mxu0 0.0
    %8978 = vmatprep.subr.mxu0 0.0
    %8979 = vmatpush1.msra.mxu0 0.0
    %8980 = vmatprep.subr.mxu0 0.0
    %8981 = vmatpush1.msra.mxu0 0.0
    %8982 = vmatprep.subr.mxu0 0.0
    %8983 = vmatpush1.msra.mxu0 0.0
    %8984 = vmatprep.subr.mxu0 0.0
    %8985 = vmatpush1.msra.mxu0 0.0
    %8986 = vmatprep.subr.mxu0 0.0
    %8987 = vmatpush1.msra.mxu0 0.0
    %8988 = vmatprep.subr.mxu0 0.0
    %8989 = vmatpush1.msra.mxu0 0.0
    %8990 = vmatprep.subr.mxu0 0.0
    %8991 = vmatpush1.msra.mxu0 0.0
    %8992 = vmatprep.subr.mxu0 0.0
    %8993 = vmatpush1.msra.mxu0 0.0
    %8994 = vmatprep.subr.mxu0 0.0
    %8995 = vmatpush1.msra.mxu0 0.0
    %8996 = vmatprep.subr.mxu0 0.0
    %8997 = vmatpush1.msra.mxu0 0.0
    %8998 = vmatprep.subr.mxu0 0.0
    %8999 = vmatpush1.msra.mxu0 0.0
    %9000 = vmatprep.subr.mxu0 0.0
    %9001 = vmatpush1.msra.mxu0 0.0
    %9002 = vmatprep.subr.mxu0 0.0
    %9003 = vmatpush1.msra.mxu0 0.0
    %9004 = vmatprep.subr.mxu0 0.0
    %9005 = vmatpush1.msra.mxu0 0.0
    %9006 = vmatprep.subr.mxu0 0.0
    %9007 = vmatpush1.msra.mxu0 0.0
    %9008 = vmatprep.subr.mxu0 0.0
    %9009 = vmatpush1.msra.mxu0 0.0
    %9010 = vmatprep.subr.mxu0 0.0
    %9011 = vmatpush1.msra.mxu0 0.0
    %9012 = vmatprep.subr.mxu0 0.0
    %9013 = vmatpush1.msra.mxu0 0.0
    %9014 = vmatprep.subr.mxu0 0.0
    %9015 = vmatpush1.msra.mxu0 0.0
    %9016 = vmatprep.mubr.f32.mxu0 0.0
    %9017 = vmatmul.mubr.f32.gmra.mrb[0].mxu0 %v8941
    %v9018 = vpop.f32.mrb[0].mxu0
    %v9019 = vadd.f32 0.0, %v9018
    %v9020 = vpop.f32.mrb[0].mxu0
    %9021 = vmatprep.mubr.f32.mxu0 0.0
    %9022 = vmatmul.mubr.f32.gmra.mrb[0].mxu0 %v8944
    %v9023 = vpop.f32.mrb[0].mxu0
    %v9024 = vadd.f32 0.0, %v9023
    %v9025 = vpop.f32.mrb[0].mxu0
    %9026 = vmatprep.mubr.f32.mxu0 0.0
    %9027 = vmatmul.mubr.f32.gmra.mrb[0].mxu0 %v8947
    %v9028 = vpop.f32.mrb[0].mxu0
    %v9029 = vadd.f32 0.0, %v9028
    %v9030 = vpop.f32.mrb[0].mxu0
    %9031 = vmatprep.mubr.f32.mxu0 0.0
    %9032 = vmatmul.mubr.f32.gmra.mrb[0].mxu0 %v8950
    %v9033 = vpop.f32.mrb[0].mxu0
    %v9034 = vadd.f32 0.0, %v9033
    %v9035 = vpop.f32.mrb[0].mxu0
    %9036 = vdwg.mxu0
    %v9037 = vadd.f32 %v8925, %v9019
    %v9038 = vadd.f32 %v8926, %v9024
    %v9039 = vadd.f32 %v8927, %v9029
    %v9040 = vadd.f32 %v8928, %v9034
    %s9041 = scalar_lea.vmem %s1, 1408
    %v9042 = vld [vmem:[%s9041] sm:$0xff]
    %v9043 = vld [vmem:[%s9041 + $0x8] sm:$0xff]
    %v9044 = vld [vmem:[%s9041 + $0x10] sm:$0xff]
    %v9045 = vld [vmem:[%s9041 + $0x18] sm:$0xff]
    %9046 = vrot.lane.b32.xlu0 %v8154, 114
    %v9047 = vpop.permute.xlu0 %9046
    %9048 = vrot.lane.b32.xlu0 %v8155, 114
    %v9049 = vpop.permute.xlu0 %9048
    %v9053 = vsel %vm8174, %v9042, 0
    %v9056 = vsel %vm8174, %v9043, 0
    %v9059 = vsel %vm8174, %v9044, 0
    %v9062 = vsel %vm8174, %v9045, 0
    %9064 = vmatprep.subr.mxu0 0.0
    %9065 = vmatpush1.msra.mxu0 %v9047
    %9066 = vmatprep.subr.mxu0 0.0
    %9067 = vmatpush1.msra.mxu0 %v9049
    %9068 = vmatprep.subr.mxu0 0.0
    %9069 = vmatpush1.msra.mxu0 0.0
    %9070 = vmatprep.subr.mxu0 0.0
    %9071 = vmatpush1.msra.mxu0 0.0
    %9072 = vmatprep.subr.mxu0 0.0
    %9073 = vmatpush1.msra.mxu0 0.0
    %9074 = vmatprep.subr.mxu0 0.0
    %9075 = vmatpush1.msra.mxu0 0.0
    %9076 = vmatprep.subr.mxu0 0.0
    %9077 = vmatpush1.msra.mxu0 0.0
    %9078 = vmatprep.subr.mxu0 0.0
    %9079 = vmatpush1.msra.mxu0 0.0
    %9080 = vmatprep.subr.mxu0 0.0
    %9081 = vmatpush1.msra.mxu0 0.0
    %9082 = vmatprep.subr.mxu0 0.0
    %9083 = vmatpush1.msra.mxu0 0.0
    %9084 = vmatprep.subr.mxu0 0.0
    %9085 = vmatpush1.msra.mxu0 0.0
    %9086 = vmatprep.subr.mxu0 0.0
    %9087 = vmatpush1.msra.mxu0 0.0
    %9088 = vmatprep.subr.mxu0 0.0
    %9089 = vmatpush1.msra.mxu0 0.0
    %9090 = vmatprep.subr.mxu0 0.0
    %9091 = vmatpush1.msra.mxu0 0.0
    %9092 = vmatprep.subr.mxu0 0.0
    %9093 = vmatpush1.msra.mxu0 0.0
    %9094 = vmatprep.subr.mxu0 0.0
    %9095 = vmatpush1.msra.mxu0 0.0
    %9096 = vmatprep.subr.mxu0 0.0
    %9097 = vmatpush1.msra.mxu0 0.0
    %9098 = vmatprep.subr.mxu0 0.0
    %9099 = vmatpush1.msra.mxu0 0.0
    %9100 = vmatprep.subr.mxu0 0.0
    %9101 = vmatpush1.msra.mxu0 0.0
    %9102 = vmatprep.subr.mxu0 0.0
    %9103 = vmatpush1.msra.mxu0 0.0
    %9104 = vmatprep.subr.mxu0 0.0
    %9105 = vmatpush1.msra.mxu0 0.0
    %9106 = vmatprep.subr.mxu0 0.0
    %9107 = vmatpush1.msra.mxu0 0.0
    %9108 = vmatprep.subr.mxu0 0.0
    %9109 = vmatpush1.msra.mxu0 0.0
    %9110 = vmatprep.subr.mxu0 0.0
    %9111 = vmatpush1.msra.mxu0 0.0
    %9112 = vmatprep.subr.mxu0 0.0
    %9113 = vmatpush1.msra.mxu0 0.0
    %9114 = vmatprep.subr.mxu0 0.0
    %9115 = vmatpush1.msra.mxu0 0.0
    %9116 = vmatprep.subr.mxu0 0.0
    %9117 = vmatpush1.msra.mxu0 0.0
    %9118 = vmatprep.subr.mxu0 0.0
    %9119 = vmatpush1.msra.mxu0 0.0
    %9120 = vmatprep.subr.mxu0 0.0
    %9121 = vmatpush1.msra.mxu0 0.0
    %9122 = vmatprep.subr.mxu0 0.0
    %9123 = vmatpush1.msra.mxu0 0.0
    %9124 = vmatprep.subr.mxu0 0.0
    %9125 = vmatpush1.msra.mxu0 0.0
    %9126 = vmatprep.subr.mxu0 0.0
    %9127 = vmatpush1.msra.mxu0 0.0
    %9128 = vmatprep.mubr.f32.mxu0 0.0
    %9129 = vmatmul.mubr.f32.gmra.mrb[0].mxu0 %v9053
    %v9130 = vpop.f32.mrb[0].mxu0
    %v9131 = vadd.f32 0.0, %v9130
    %v9132 = vpop.f32.mrb[0].mxu0
    %9133 = vmatprep.mubr.f32.mxu0 0.0
    %9134 = vmatmul.mubr.f32.gmra.mrb[0].mxu0 %v9056
    %v9135 = vpop.f32.mrb[0].mxu0
    %v9136 = vadd.f32 0.0, %v9135
    %v9137 = vpop.f32.mrb[0].mxu0
    %9138 = vmatprep.mubr.f32.mxu0 0.0
    %9139 = vmatmul.mubr.f32.gmra.mrb[0].mxu0 %v9059
    %v9140 = vpop.f32.mrb[0].mxu0
    %v9141 = vadd.f32 0.0, %v9140
    %v9142 = vpop.f32.mrb[0].mxu0
    %9143 = vmatprep.mubr.f32.mxu0 0.0
    %9144 = vmatmul.mubr.f32.gmra.mrb[0].mxu0 %v9062
    %v9145 = vpop.f32.mrb[0].mxu0
    %v9146 = vadd.f32 0.0, %v9145
    %v9147 = vpop.f32.mrb[0].mxu0
    %9148 = vdwg.mxu0
    %v9149 = vadd.f32 %v9037, %v9131
    %v9150 = vadd.f32 %v9038, %v9136
    %v9151 = vadd.f32 %v9039, %v9141
    %v9152 = vadd.f32 %v9040, %v9146
    %s9153 = scalar_lea.vmem %s1, 1440
    %v9154 = vld [vmem:[%s9153] sm:$0xff]
    %v9155 = vld [vmem:[%s9153 + $0x8] sm:$0xff]
    %v9156 = vld [vmem:[%s9153 + $0x10] sm:$0xff]
    %v9157 = vld [vmem:[%s9153 + $0x18] sm:$0xff]
    %9158 = vrot.lane.b32.xlu0 %v8154, 113
    %v9159 = vpop.permute.xlu0 %9158
    %9160 = vrot.lane.b32.xlu0 %v8155, 113
    %v9161 = vpop.permute.xlu0 %9160
    %v9165 = vsel %vm8174, %v9154, 0
    %v9168 = vsel %vm8174, %v9155, 0
    %v9171 = vsel %vm8174, %v9156, 0
    %v9174 = vsel %vm8174, %v9157, 0
    %9176 = vmatprep.subr.mxu0 0.0
    %9177 = vmatpush1.msra.mxu0 %v9159
    %9178 = vmatprep.subr.mxu0 0.0
    %9179 = vmatpush1.msra.mxu0 %v9161
    %9180 = vmatprep.subr.mxu0 0.0
    %9181 = vmatpush1.msra.mxu0 0.0
    %9182 = vmatprep.subr.mxu0 0.0
    %9183 = vmatpush1.msra.mxu0 0.0
    %9184 = vmatprep.subr.mxu0 0.0
    %9185 = vmatpush1.msra.mxu0 0.0
    %9186 = vmatprep.subr.mxu0 0.0
    %9187 = vmatpush1.msra.mxu0 0.0
    %9188 = vmatprep.subr.mxu0 0.0
    %9189 = vmatpush1.msra.mxu0 0.0
    %9190 = vmatprep.subr.mxu0 0.0
    %9191 = vmatpush1.msra.mxu0 0.0
    %9192 = vmatprep.subr.mxu0 0.0
    %9193 = vmatpush1.msra.mxu0 0.0
    %9194 = vmatprep.subr.mxu0 0.0
    %9195 = vmatpush1.msra.mxu0 0.0
    %9196 = vmatprep.subr.mxu0 0.0
    %9197 = vmatpush1.msra.mxu0 0.0
    %9198 = vmatprep.subr.mxu0 0.0
    %9199 = vmatpush1.msra.mxu0 0.0
    %9200 = vmatprep.subr.mxu0 0.0
    %9201 = vmatpush1.msra.mxu0 0.0
    %9202 = vmatprep.subr.mxu0 0.0
    %9203 = vmatpush1.msra.mxu0 0.0
    %9204 = vmatprep.subr.mxu0 0.0
    %9205 = vmatpush1.msra.mxu0 0.0
    %9206 = vmatprep.subr.mxu0 0.0
    %9207 = vmatpush1.msra.mxu0 0.0
    %9208 = vmatprep.subr.mxu0 0.0
    %9209 = vmatpush1.msra.mxu0 0.0
    %9210 = vmatprep.subr.mxu0 0.0
    %9211 = vmatpush1.msra.mxu0 0.0
    %9212 = vmatprep.subr.mxu0 0.0
    %9213 = vmatpush1.msra.mxu0 0.0
    %9214 = vmatprep.subr.mxu0 0.0
    %9215 = vmatpush1.msra.mxu0 0.0
    %9216 = vmatprep.subr.mxu0 0.0
    %9217 = vmatpush1.msra.mxu0 0.0
    %9218 = vmatprep.subr.mxu0 0.0
    %9219 = vmatpush1.msra.mxu0 0.0
    %9220 = vmatprep.subr.mxu0 0.0
    %9221 = vmatpush1.msra.mxu0 0.0
    %9222 = vmatprep.subr.mxu0 0.0
    %9223 = vmatpush1.msra.mxu0 0.0
    %9224 = vmatprep.subr.mxu0 0.0
    %9225 = vmatpush1.msra.mxu0 0.0
    %9226 = vmatprep.subr.mxu0 0.0
    %9227 = vmatpush1.msra.mxu0 0.0
    %9228 = vmatprep.subr.mxu0 0.0
    %9229 = vmatpush1.msra.mxu0 0.0
    %9230 = vmatprep.subr.mxu0 0.0
    %9231 = vmatpush1.msra.mxu0 0.0
    %9232 = vmatprep.subr.mxu0 0.0
    %9233 = vmatpush1.msra.mxu0 0.0
    %9234 = vmatprep.subr.mxu0 0.0
    %9235 = vmatpush1.msra.mxu0 0.0
    %9236 = vmatprep.subr.mxu0 0.0
    %9237 = vmatpush1.msra.mxu0 0.0
    %9238 = vmatprep.subr.mxu0 0.0
    %9239 = vmatpush1.msra.mxu0 0.0
    %9240 = vmatprep.mubr.f32.mxu0 0.0
    %9241 = vmatmul.mubr.f32.gmra.mrb[0].mxu0 %v9165
    %v9242 = vpop.f32.mrb[0].mxu0
    %v9243 = vadd.f32 0.0, %v9242
    %v9244 = vpop.f32.mrb[0].mxu0
    %9245 = vmatprep.mubr.f32.mxu0 0.0
    %9246 = vmatmul.mubr.f32.gmra.mrb[0].mxu0 %v9168
    %v9247 = vpop.f32.mrb[0].mxu0
    %v9248 = vadd.f32 0.0, %v9247
    %v9249 = vpop.f32.mrb[0].mxu0
    %9250 = vmatprep.mubr.f32.mxu0 0.0
    %9251 = vmatmul.mubr.f32.gmra.mrb[0].mxu0 %v9171
    %v9252 = vpop.f32.mrb[0].mxu0
    %v9253 = vadd.f32 0.0, %v9252
    %v9254 = vpop.f32.mrb[0].mxu0
    %9255 = vmatprep.mubr.f32.mxu0 0.0
    %9256 = vmatmul.mubr.f32.gmra.mrb[0].mxu0 %v9174
    %v9257 = vpop.f32.mrb[0].mxu0
    %v9258 = vadd.f32 0.0, %v9257
    %v9259 = vpop.f32.mrb[0].mxu0
    %9260 = vdwg.mxu0
    %v9261 = vadd.f32 %v9149, %v9243
    %v9262 = vadd.f32 %v9150, %v9248
    %v9263 = vadd.f32 %v9151, %v9253
    %v9264 = vadd.f32 %v9152, %v9258
    %s9265 = scalar_lea.vmem %s1, 1472
    %v9266 = vld [vmem:[%s9265] sm:$0xff]
    %v9267 = vld [vmem:[%s9265 + $0x8] sm:$0xff]
    %v9268 = vld [vmem:[%s9265 + $0x10] sm:$0xff]
    %v9269 = vld [vmem:[%s9265 + $0x18] sm:$0xff]
    %9270 = vrot.lane.b32.xlu0 %v8154, 112
    %v9271 = vpop.permute.xlu0 %9270
    %9272 = vrot.lane.b32.xlu0 %v8155, 112
    %v9273 = vpop.permute.xlu0 %9272
    %v9277 = vsel %vm8174, %v9266, 0
    %v9280 = vsel %vm8174, %v9267, 0
    %v9283 = vsel %vm8174, %v9268, 0
    %v9286 = vsel %vm8174, %v9269, 0
    %9288 = vmatprep.subr.mxu0 0.0
    %9289 = vmatpush1.msra.mxu0 %v9271
    %9290 = vmatprep.subr.mxu0 0.0
    %9291 = vmatpush1.msra.mxu0 %v9273
    %9292 = vmatprep.subr.mxu0 0.0
    %9293 = vmatpush1.msra.mxu0 0.0
    %9294 = vmatprep.subr.mxu0 0.0
    %9295 = vmatpush1.msra.mxu0 0.0
    %9296 = vmatprep.subr.mxu0 0.0
    %9297 = vmatpush1.msra.mxu0 0.0
    %9298 = vmatprep.subr.mxu0 0.0
    %9299 = vmatpush1.msra.mxu0 0.0
    %9300 = vmatprep.subr.mxu0 0.0
    %9301 = vmatpush1.msra.mxu0 0.0
    %9302 = vmatprep.subr.mxu0 0.0
    %9303 = vmatpush1.msra.mxu0 0.0
    %9304 = vmatprep.subr.mxu0 0.0
    %9305 = vmatpush1.msra.mxu0 0.0
    %9306 = vmatprep.subr.mxu0 0.0
    %9307 = vmatpush1.msra.mxu0 0.0
    %9308 = vmatprep.subr.mxu0 0.0
    %9309 = vmatpush1.msra.mxu0 0.0
    %9310 = vmatprep.subr.mxu0 0.0
    %9311 = vmatpush1.msra.mxu0 0.0
    %9312 = vmatprep.subr.mxu0 0.0
    %9313 = vmatpush1.msra.mxu0 0.0
    %9314 = vmatprep.subr.mxu0 0.0
    %9315 = vmatpush1.msra.mxu0 0.0
    %9316 = vmatprep.subr.mxu0 0.0
    %9317 = vmatpush1.msra.mxu0 0.0
    %9318 = vmatprep.subr.mxu0 0.0
    %9319 = vmatpush1.msra.mxu0 0.0
    %9320 = vmatprep.subr.mxu0 0.0
    %9321 = vmatpush1.msra.mxu0 0.0
    %9322 = vmatprep.subr.mxu0 0.0
    %9323 = vmatpush1.msra.mxu0 0.0
    %9324 = vmatprep.subr.mxu0 0.0
    %9325 = vmatpush1.msra.mxu0 0.0
    %9326 = vmatprep.subr.mxu0 0.0
    %9327 = vmatpush1.msra.mxu0 0.0
    %9328 = vmatprep.subr.mxu0 0.0
    %9329 = vmatpush1.msra.mxu0 0.0
    %9330 = vmatprep.subr.mxu0 0.0
    %9331 = vmatpush1.msra.mxu0 0.0
    %9332 = vmatprep.subr.mxu0 0.0
    %9333 = vmatpush1.msra.mxu0 0.0
    %9334 = vmatprep.subr.mxu0 0.0
    %9335 = vmatpush1.msra.mxu0 0.0
    %9336 = vmatprep.subr.mxu0 0.0
    %9337 = vmatpush1.msra.mxu0 0.0
    %9338 = vmatprep.subr.mxu0 0.0
    %9339 = vmatpush1.msra.mxu0 0.0
    %9340 = vmatprep.subr.mxu0 0.0
    %9341 = vmatpush1.msra.mxu0 0.0
    %9342 = vmatprep.subr.mxu0 0.0
    %9343 = vmatpush1.msra.mxu0 0.0
    %9344 = vmatprep.subr.mxu0 0.0
    %9345 = vmatpush1.msra.mxu0 0.0
    %9346 = vmatprep.subr.mxu0 0.0
    %9347 = vmatpush1.msra.mxu0 0.0
    %9348 = vmatprep.subr.mxu0 0.0
    %9349 = vmatpush1.msra.mxu0 0.0
    %9350 = vmatprep.subr.mxu0 0.0
    %9351 = vmatpush1.msra.mxu0 0.0
    %9352 = vmatprep.mubr.f32.mxu0 0.0
    %9353 = vmatmul.mubr.f32.gmra.mrb[0].mxu0 %v9277
    %v9354 = vpop.f32.mrb[0].mxu0
    %v9355 = vadd.f32 0.0, %v9354
    %v9356 = vpop.f32.mrb[0].mxu0
    %9357 = vmatprep.mubr.f32.mxu0 0.0
    %9358 = vmatmul.mubr.f32.gmra.mrb[0].mxu0 %v9280
    %v9359 = vpop.f32.mrb[0].mxu0
    %v9360 = vadd.f32 0.0, %v9359
    %v9361 = vpop.f32.mrb[0].mxu0
    %9362 = vmatprep.mubr.f32.mxu0 0.0
    %9363 = vmatmul.mubr.f32.gmra.mrb[0].mxu0 %v9283
    %v9364 = vpop.f32.mrb[0].mxu0
    %v9365 = vadd.f32 0.0, %v9364
    %v9366 = vpop.f32.mrb[0].mxu0
    %9367 = vmatprep.mubr.f32.mxu0 0.0
    %9368 = vmatmul.mubr.f32.gmra.mrb[0].mxu0 %v9286
    %v9369 = vpop.f32.mrb[0].mxu0
    %v9370 = vadd.f32 0.0, %v9369
    %v9371 = vpop.f32.mrb[0].mxu0
    %9372 = vdwg.mxu0
    %v9373 = vadd.f32 %v9261, %v9355
    %v9374 = vadd.f32 %v9262, %v9360
    %v9375 = vadd.f32 %v9263, %v9365
    %v9376 = vadd.f32 %v9264, %v9370
    %s9377 = scalar_lea.vmem %s1, 1504
    %v9378 = vld [vmem:[%s9377] sm:$0xff]
    %v9379 = vld [vmem:[%s9377 + $0x8] sm:$0xff]
    %v9380 = vld [vmem:[%s9377 + $0x10] sm:$0xff]
    %v9381 = vld [vmem:[%s9377 + $0x18] sm:$0xff]
    %9382 = vrot.lane.b32.xlu0 %v8154, 111
    %v9383 = vpop.permute.xlu0 %9382
    %9384 = vrot.lane.b32.xlu0 %v8155, 111
    %v9385 = vpop.permute.xlu0 %9384
    %v9389 = vsel %vm8174, %v9378, 0
    %v9392 = vsel %vm8174, %v9379, 0
    %v9395 = vsel %vm8174, %v9380, 0
    %v9398 = vsel %vm8174, %v9381, 0
    %9400 = vmatprep.subr.mxu0 0.0
    %9401 = vmatpush1.msra.mxu0 %v9383
    %9402 = vmatprep.subr.mxu0 0.0
    %9403 = vmatpush1.msra.mxu0 %v9385
    %9404 = vmatprep.subr.mxu0 0.0
    %9405 = vmatpush1.msra.mxu0 0.0
    %9406 = vmatprep.subr.mxu0 0.0
    %9407 = vmatpush1.msra.mxu0 0.0
    %9408 = vmatprep.subr.mxu0 0.0
    %9409 = vmatpush1.msra.mxu0 0.0
    %9410 = vmatprep.subr.mxu0 0.0
    %9411 = vmatpush1.msra.mxu0 0.0
    %9412 = vmatprep.subr.mxu0 0.0
    %9413 = vmatpush1.msra.mxu0 0.0
    %9414 = vmatprep.subr.mxu0 0.0
    %9415 = vmatpush1.msra.mxu0 0.0
    %9416 = vmatprep.subr.mxu0 0.0
    %9417 = vmatpush1.msra.mxu0 0.0
    %9418 = vmatprep.subr.mxu0 0.0
    %9419 = vmatpush1.msra.mxu0 0.0
    %9420 = vmatprep.subr.mxu0 0.0
    %9421 = vmatpush1.msra.mxu0 0.0
    %9422 = vmatprep.subr.mxu0 0.0
    %9423 = vmatpush1.msra.mxu0 0.0
    %9424 = vmatprep.subr.mxu0 0.0
    %9425 = vmatpush1.msra.mxu0 0.0
    %9426 = vmatprep.subr.mxu0 0.0
    %9427 = vmatpush1.msra.mxu0 0.0
    %9428 = vmatprep.subr.mxu0 0.0
    %9429 = vmatpush1.msra.mxu0 0.0
    %9430 = vmatprep.subr.mxu0 0.0
    %9431 = vmatpush1.msra.mxu0 0.0
    %9432 = vmatprep.subr.mxu0 0.0
    %9433 = vmatpush1.msra.mxu0 0.0
    %9434 = vmatprep.subr.mxu0 0.0
    %9435 = vmatpush1.msra.mxu0 0.0
    %9436 = vmatprep.subr.mxu0 0.0
    %9437 = vmatpush1.msra.mxu0 0.0
    %9438 = vmatprep.subr.mxu0 0.0
    %9439 = vmatpush1.msra.mxu0 0.0
    %9440 = vmatprep.subr.mxu0 0.0
    %9441 = vmatpush1.msra.mxu0 0.0
    %9442 = vmatprep.subr.mxu0 0.0
    %9443 = vmatpush1.msra.mxu0 0.0
    %9444 = vmatprep.subr.mxu0 0.0
    %9445 = vmatpush1.msra.mxu0 0.0
    %9446 = vmatprep.subr.mxu0 0.0
    %9447 = vmatpush1.msra.mxu0 0.0
    %9448 = vmatprep.subr.mxu0 0.0
    %9449 = vmatpush1.msra.mxu0 0.0
    %9450 = vmatprep.subr.mxu0 0.0
    %9451 = vmatpush1.msra.mxu0 0.0
    %9452 = vmatprep.subr.mxu0 0.0
    %9453 = vmatpush1.msra.mxu0 0.0
    %9454 = vmatprep.subr.mxu0 0.0
    %9455 = vmatpush1.msra.mxu0 0.0
    %9456 = vmatprep.subr.mxu0 0.0
    %9457 = vmatpush1.msra.mxu0 0.0
    %9458 = vmatprep.subr.mxu0 0.0
    %9459 = vmatpush1.msra.mxu0 0.0
    %9460 = vmatprep.subr.mxu0 0.0
    %9461 = vmatpush1.msra.mxu0 0.0
    %9462 = vmatprep.subr.mxu0 0.0
    %9463 = vmatpush1.msra.mxu0 0.0
    %9464 = vmatprep.mubr.f32.mxu0 0.0
    %9465 = vmatmul.mubr.f32.gmra.mrb[0].mxu0 %v9389
    %v9466 = vpop.f32.mrb[0].mxu0
    %v9467 = vadd.f32 0.0, %v9466
    %v9468 = vpop.f32.mrb[0].mxu0
    %9469 = vmatprep.mubr.f32.mxu0 0.0
    %9470 = vmatmul.mubr.f32.gmra.mrb[0].mxu0 %v9392
    %v9471 = vpop.f32.mrb[0].mxu0
    %v9472 = vadd.f32 0.0, %v9471
    %v9473 = vpop.f32.mrb[0].mxu0
    %9474 = vmatprep.mubr.f32.mxu0 0.0
    %9475 = vmatmul.mubr.f32.gmra.mrb[0].mxu0 %v9395
    %v9476 = vpop.f32.mrb[0].mxu0
    %v9477 = vadd.f32 0.0, %v9476
    %v9478 = vpop.f32.mrb[0].mxu0
    %9479 = vmatprep.mubr.f32.mxu0 0.0
    %9480 = vmatmul.mubr.f32.gmra.mrb[0].mxu0 %v9398
    %v9481 = vpop.f32.mrb[0].mxu0
    %v9482 = vadd.f32 0.0, %v9481
    %v9483 = vpop.f32.mrb[0].mxu0
    %9484 = vdwg.mxu0
    %v9485 = vadd.f32 %v9373, %v9467
    %v9486 = vadd.f32 %v9374, %v9472
    %v9487 = vadd.f32 %v9375, %v9477
    %v9488 = vadd.f32 %v9376, %v9482
    %9490 = vset.pattern.permute.xlu0 0
    %9491 = vperm.xlu0 %9490, %v8150
    %v9492 = vpop.permute.xlu0 %9491
    %9495 = vset.pattern.permute.xlu0 0
    %9496 = vperm.xlu0 %9495, %v8151
    %v9497 = vpop.permute.xlu0 %9496
    %9500 = vset.pattern.permute.xlu0 0
    %9501 = vperm.xlu0 %9500, %v8152
    %v9502 = vpop.permute.xlu0 %9501
    %9505 = vset.pattern.permute.xlu0 0
    %9506 = vperm.xlu0 %9505, %v8153
    %v9507 = vpop.permute.xlu0 %9506
    %v9509 = vadd.f32 %v9485, %v9492
    %v9510 = vadd.f32 %v9486, %v9497
    %v9511 = vadd.f32 %v9487, %v9502
    %v9512 = vadd.f32 %v9488, %v9507
    %v9513 = vmax.f32 %v9509, 0.0
    %v9514 = vmax.f32 %v9510, 0.0
    %v9515 = vmax.f32 %v9511, 0.0
    %v9516 = vmax.f32 %v9512, 0.0
    %9521 = vrot.lane.b32.xlu0 %v9513, 121
    %v9522 = vpop.permute.xlu0 %9521
    %9523 = vrot.lane.b32.xlu0 %v9514, 121
    %v9524 = vpop.permute.xlu0 %9523
    %9525 = vrot.lane.b32.xlu0 %v9515, 121
    %v9526 = vpop.permute.xlu0 %9525
    %9527 = vrot.lane.b32.xlu0 %v9516, 121
    %v9528 = vpop.permute.xlu0 %9527
    %v9533 = vmax.f32 %v9513, %v9522
    %v9534 = vmax.f32 %v9514, %v9524
    %v9535 = vmax.f32 %v9515, %v9526
    %v9536 = vmax.f32 %v9516, %v9528
    %9541 = vrot.lane.b32.xlu0 %v9533, 127
    %v9542 = vpop.permute.xlu0 %9541
    %9543 = vrot.lane.b32.xlu0 %v9534, 127
    %v9544 = vpop.permute.xlu0 %9543
    %9545 = vrot.lane.b32.xlu0 %v9535, 127
    %v9546 = vpop.permute.xlu0 %9545
    %9547 = vrot.lane.b32.xlu0 %v9536, 127
    %v9548 = vpop.permute.xlu0 %9547
    %v9553 = vmax.f32 %v9533, %v9542
    %v9554 = vmax.f32 %v9534, %v9544
    %v9555 = vmax.f32 %v9535, %v9546
    %v9556 = vmax.f32 %v9536, %v9548
    %v9557 = vld [vmem:[%s3 + $0x1428] sm:$0xff]
    %v9558 = vld [vmem:[%s3 + $0x1440] sm:$0xff]
    %v9559 = vld [vmem:[%s3 + $0x1458] sm:$0xff]
    %v9560 = vld [vmem:[%s3 + $0x1470] sm:$0xff]
    %v9561 = vld [vmem:[%s3 + $0x1488] sm:$0xff]
    %v9562 = vld [vmem:[%s3 + $0x14a0] sm:$0xff]
    %v9563 = vld [vmem:[%s3 + $0x14b8] sm:$0xff]
    %v9564 = vld [vmem:[%s3 + $0x14d0] sm:$0x7]
    %v9565 = vld [vmem:[%s4] sm:$0xff]
    %v9566 = vld [vmem:[%s4 + $0x8] sm:$0xff]
    %v9567 = vld [vmem:[%s4 + $0x10] sm:$0xff]
    %v9568 = vld [vmem:[%s4 + $0x18] sm:$0xff]
    %v9569 = vmul.f32 %v9553, %v9565
    %v9570 = vmul.f32 %v9554, %v9566
    %v9571 = vmul.f32 %v9555, %v9567
    %v9572 = vmul.f32 %v9556, %v9568
    %vm9573 = vcmask 482304
    %v9574 = vsel %vm9573, %v9569, 0.0
    %v9575 = vsel %vm9573, %v9570, 0.0
    %v9576 = vadd.f32 %v9574, %v9575
    %v9577 = vsel %vm9573, %v9571, 0.0
    %v9578 = vadd.f32 %v9576, %v9577
    %v9579 = vsel %vm9573, %v9572, 0.0
    %v9580 = vadd.f32 %v9578, %v9579
    %v9581 = vrot.slane %v9580, 4
    %v9582 = vadd.f32 %v9580, %v9581
    %v9583 = vrot.slane %v9582, 2
    %v9584 = vadd.f32 %v9582, %v9583
    %v9585 = vrot.slane %v9584, 1
    %v9586 = vadd.f32 %v9584, %v9585
    %v9587 = vld [vmem:[#allocation5] sm:$0x1]
    %9589 = vset.pattern.permute.xlu0 0
    %9590 = vperm.xlu0 %9589, %v9587
    %v9591 = vpop.permute.xlu0 %9590
    %v9593 = vlaneseq
    %v9594 = vshrl.u32 %v9593, 7
    %v9595 = vsub.s32 0, %v9594
    %v9596 = vrot.slane %v9591, %v9595
    %v9598 = vsel %vm9573, %v9586, 0
    %v9601 = vsel %vm2409, %v9564, 0
    %9603 = vmatprep.subr.mxu0 0.0
    %9604 = vmatpush1.msra.mxu0 %v9557
    %9605 = vmatprep.subr.mxu0 0.0
    %9606 = vmatpush1.msra.mxu0 %v9558
    %9607 = vmatprep.subr.mxu0 0.0
    %9608 = vmatpush1.msra.mxu0 %v9559
    %9609 = vmatprep.subr.mxu0 0.0
    %9610 = vmatpush1.msra.mxu0 %v9560
    %9611 = vmatprep.subr.mxu0 0.0
    %9612 = vmatpush1.msra.mxu0 %v9561
    %9613 = vmatprep.subr.mxu0 0.0
    %9614 = vmatpush1.msra.mxu0 %v9562
    %9615 = vmatprep.subr.mxu0 0.0
    %9616 = vmatpush1.msra.mxu0 %v9563
    %9617 = vmatprep.subr.mxu0 0.0
    %9618 = vmatpush1.msra.mxu0 %v9601
    %9619 = vmatprep.subr.mxu0 0.0
    %9620 = vmatpush1.msra.mxu0 0.0
    %9621 = vmatprep.subr.mxu0 0.0
    %9622 = vmatpush1.msra.mxu0 0.0
    %9623 = vmatprep.subr.mxu0 0.0
    %9624 = vmatpush1.msra.mxu0 0.0
    %9625 = vmatprep.subr.mxu0 0.0
    %9626 = vmatpush1.msra.mxu0 0.0
    %9627 = vmatprep.subr.mxu0 0.0
    %9628 = vmatpush1.msra.mxu0 0.0
    %9629 = vmatprep.subr.mxu0 0.0
    %9630 = vmatpush1.msra.mxu0 0.0
    %9631 = vmatprep.subr.mxu0 0.0
    %9632 = vmatpush1.msra.mxu0 0.0
    %9633 = vmatprep.subr.mxu0 0.0
    %9634 = vmatpush1.msra.mxu0 0.0
    %9635 = vmatprep.subr.mxu0 0.0
    %9636 = vmatpush1.msra.mxu0 0.0
    %9637 = vmatprep.subr.mxu0 0.0
    %9638 = vmatpush1.msra.mxu0 0.0
    %9639 = vmatprep.subr.mxu0 0.0
    %9640 = vmatpush1.msra.mxu0 0.0
    %9641 = vmatprep.subr.mxu0 0.0
    %9642 = vmatpush1.msra.mxu0 0.0
    %9643 = vmatprep.subr.mxu0 0.0
    %9644 = vmatpush1.msra.mxu0 0.0
    %9645 = vmatprep.subr.mxu0 0.0
    %9646 = vmatpush1.msra.mxu0 0.0
    %9647 = vmatprep.subr.mxu0 0.0
    %9648 = vmatpush1.msra.mxu0 0.0
    %9649 = vmatprep.subr.mxu0 0.0
    %9650 = vmatpush1.msra.mxu0 0.0
    %9651 = vmatprep.subr.mxu0 0.0
    %9652 = vmatpush1.msra.mxu0 0.0
    %9653 = vmatprep.subr.mxu0 0.0
    %9654 = vmatpush1.msra.mxu0 0.0
    %9655 = vmatprep.subr.mxu0 0.0
    %9656 = vmatpush1.msra.mxu0 0.0
    %9657 = vmatprep.subr.mxu0 0.0
    %9658 = vmatpush1.msra.mxu0 0.0
    %9659 = vmatprep.subr.mxu0 0.0
    %9660 = vmatpush1.msra.mxu0 0.0
    %9661 = vmatprep.subr.mxu0 0.0
    %9662 = vmatpush1.msra.mxu0 0.0
    %9663 = vmatprep.subr.mxu0 0.0
    %9664 = vmatpush1.msra.mxu0 0.0
    %9665 = vmatprep.subr.mxu0 0.0
    %9666 = vmatpush1.msra.mxu0 0.0
    %9667 = vmatprep.mubr.f32.mxu0 0.0
    %9668 = vmatmul.mubr.f32.gmra.mrb[0].mxu0 %v9598
    %v9669 = vpop.f32.mrb[0].mxu0
    %v9670 = vadd.f32 %v9596, %v9669
    %v9671 = vpop.f32.mrb[0].mxu0
    %9672 = vdwg.mxu0
    %vm9673 = vcmask 8192
    %9674 = vst.msk [vmem:[#allocation6] sm:$0x1] %vm9673, %v9670
    // Predicated region
    $region26: #{wakeup_forward.1} parent=1 // pred_check
      _
    $region27: #{wakeup_forward.1} parent=1 // pred_check_branch
      %9676 = sbr.rel (0) target = $region29
    $region28: #{wakeup_forward.1} parent=1 // pred_region
      %s9678 = ssub.s32 16, 16
      %9679 = vsyncadd [#allocation7], %s9678
      %s9681 = sshll.u32 [#allocation6], 4
      %s9682 = int_to_ptr.vmem [resolvable:$true] %s9681
      %9684 = dma.vmem_to_hbm [thread:$0]  %s9682, 16, %s6, [#allocation7]
    $region29: #{wakeup_forward.1} parent=1 // pred_fallthru
      _
    // Predicated region
    $region30: #{wakeup_forward.1} parent=1 // pred_check
      _
    $region31: #{wakeup_forward.1} parent=1 // pred_check_branch
      %9686 = sbr.rel (0) target = $region33
    $region32: #{wakeup_forward.1} parent=1 // pred_region
      %9687 = dma.done [#allocation7], 16
    $region33: #{wakeup_forward.1} parent=1 // pred_fallthru
      _
    %9688 = vsyncpa [#allocation7], 1

</llo_original>
